<compile_context>
chip_gen: v7x
topology: tpu7x:2x2x1
jax: 0.10.0
libtpu: 0.0.40
codegen_flags: <defaults>
</compile_context>

<pallas_src>
import functools

import jax
import jax.numpy as jnp
from jax.experimental import pallas as pl
from jax.experimental.pallas import tpu as pltpu


def _round_up(x, m):
    return ((x + m - 1) // m) * m


# ----------------------------- Pallas kernel -----------------------------

def _t2v_sin_kernel(tau_ref, w_ref, b_ref, mask_ref, o_ref, *, use_matmul, fin):
    tau = tau_ref[...]                                   # (bm, fin)
    w = w_ref[...]                                       # (fin, d_pad)
    if use_matmul:
        lin = jnp.dot(tau, w, preferred_element_type=jnp.float32)
    else:
        # fin <= 8: unrolled VPU multiply-add; avoids a K-thin MXU matmul.
        lin = tau[:, 0:1] * w[0:1, :]
        for k in range(1, fin):
            lin = lin + tau[:, k:k + 1] * w[k:k + 1, :]
    lin = lin + b_ref[...]                               # (1,d_pad) or (bm,d_pad) bias
    sin_lin = jnp.sin(lin)                               # VPU polynomial expansion
    # mask == 1.0 -> periodic sin branch, 0.0 -> linear branch / zero padding.
    o_ref[...] = jnp.where(mask_ref[...] != 0.0, sin_lin, lin).astype(o_ref.dtype)


# ----------------------------- wrapper -----------------------------

def sine_activation(tau, w, b, w0, b0, *, block_rows=1024, out_dtype=jnp.float32):
    """Pallas equivalent of SineActivation.forward(tau).

    tau: (N, in_features)   w,b: (in_features, out_features-1)
    w0,b0: (in_features, 1) ->  (N, out_features) then .squeeze()
    """
    tau = jnp.asarray(tau, jnp.float32)
    n, fin = tau.shape
    d = w.shape[1] + 1                                   # out_features
    d_pad = _round_up(d, 128)                            # lane-dense output width

    # Fused + zero-padded parameter slabs: [w | w0 | 0...], [b | b0 | 0...].
    w_full = jnp.zeros((fin, d_pad), jnp.float32)
    w_full = w_full.at[:, :d - 1].set(jnp.asarray(w, jnp.float32))
    w_full = w_full.at[:, d - 1:d].set(jnp.asarray(w0, jnp.float32))
    b_full = jnp.zeros((fin, d_pad), jnp.float32)
    b_full = b_full.at[:, :d - 1].set(jnp.asarray(b, jnp.float32))
    b_full = b_full.at[:, d - 1:d].set(jnp.asarray(b0, jnp.float32))

    # Precomputed column selector (resident in VMEM, not rebuilt per tile).
    mask = (jnp.arange(d_pad) < d - 1).astype(jnp.float32).reshape(1, d_pad)

    # ---- row-tile selection ----
    try:
        kind = jax.devices()[0].device_kind.lower()
    except Exception:  # pragma: no cover - defensive
        kind = ""
    multi_tc = any(t in kind for t in ("v7", "v4", "v5p"))
    num_tc = 2 if multi_tc else 1

    target = max(8, (int(block_rows) // 8) * 8)
    if num_tc > 1 and n >= 16:
        # Ensure >= num_tc grid steps so every TensorCore gets work.
        bm = min(target, _round_up(pl.cdiv(n, num_tc), 8))
    elif n > target:
        bm = target
    else:
        bm = n                                           # single full-extent block

    # ---- VMEM budget (double-buffered pipeline); respects v7x's 64 MiB VMEM ----
    bias_tiled = (fin == n and fin != 1)

    def vmem_bytes(rows):
        tau_b = 2 * rows * fin * 4
        out_b = 2 * rows * d_pad * 4
        w_b = 2 * fin * d_pad * 4
        b_b = 2 * (rows if bias_tiled else 1) * d_pad * 4
        m_b = 2 * d_pad * 4
        return tau_b + out_b + w_b + b_b + m_b

    vmem_budget = 40 * 1024 * 1024
    while bm > 8 and vmem_bytes(bm) > vmem_budget:
        bm = max(8, _round_up(bm // 2, 8))
    vmem_limit = int(min(48 * 1024 * 1024,
                         max(vmem_bytes(bm) + 8 * 1024 * 1024, 32 * 1024 * 1024)))

    grid = (pl.cdiv(n, bm),)

    # Bias broadcast exactly as torch does: (fin, D-1) against (N, D-1)
    # requires fin == 1 (row broadcast) or fin == N (elementwise).
    if fin == 1:
        b_spec = pl.BlockSpec((1, d_pad), lambda i: (0, 0))
    elif fin == n:
        b_spec = pl.BlockSpec((bm, d_pad), lambda i: (i, 0))
    else:
        raise ValueError(
            "bias of shape (in_features, out_features-1) does not broadcast "
            "against (N, out_features-1); need in_features in {1, N}")

    out = pl.pallas_call(
        functools.partial(_t2v_sin_kernel, use_matmul=(fin > 8), fin=fin),
        out_shape=jax.ShapeDtypeStruct((n, d_pad), out_dtype),
        grid=grid,
        in_specs=[
            pl.BlockSpec((bm, fin), lambda i: (i, 0)),     # tau rows, tiled
            pl.BlockSpec((fin, d_pad), lambda i: (0, 0)),  # fused weights, resident
            b_spec,                                        # fused bias
            pl.BlockSpec((1, d_pad), lambda i: (0, 0)),    # sin/linear selector
        ],
        out_specs=pl.BlockSpec((bm, d_pad), lambda i: (i, 0)),
        compiler_params=pltpu.CompilerParams(
            dimension_semantics=("parallel",),
            vmem_limit_bytes=vmem_limit),
    )(tau, w_full, b_full, mask)

    if d_pad != d:
        out = out[:, :d]                                   # drop zero padding
    # torch.cat([...], 1).squeeze()
    return jnp.squeeze(out)


# ----------------------------- reference (pure JAX) -----------------------------

def sine_activation_ref(tau, w, b, w0, b0):
    v1 = jnp.sin(jnp.matmul(tau, w) + b)
    v2 = jnp.matmul(tau, w0) + b0
    return jnp.squeeze(jnp.concatenate([v1, v2], axis=1))


# ----------------------------- main -----------------------------

if __name__ == "__main__":
    key = jax.random.PRNGKey(0)
    keys = jax.random.split(key, 11)

    # Case 1: canonical Time2Vec (scalar time per row), lane-dense width.
    IN1, OUT1, N1 = 1, 128, 512
    tau1 = jax.random.uniform(keys[0], (N1, IN1), dtype=jnp.float32)
    w1 = jax.random.normal(keys[1], (IN1, OUT1 - 1), dtype=jnp.float32)
    b1 = jax.random.normal(keys[2], (IN1, OUT1 - 1), dtype=jnp.float32)
    w01 = jax.random.normal(keys[3], (IN1, 1), dtype=jnp.float32)
    b01 = jax.random.normal(keys[4], (IN1, 1), dtype=jnp.float32)

    out1 = sine_activation(tau1, w1, b1, w01, b01, block_rows=1024)
    jax.block_until_ready(out1)
    ref1 = sine_activation_ref(tau1, w1, b1, w01, b01)
    assert out1.shape == (N1, OUT1), out1.shape
    assert bool(jnp.isfinite(out1).all())
    assert bool(jnp.allclose(out1, ref1, atol=1e-5, rtol=1e-5))

    # Case 2: small in_features > 1 (unrolled VPU path) + out_features that is
    # not a multiple of 128 (exercises zero-padding + post-slice).  torch's
    # bias broadcast of (fin, D-1) against (N, D-1) requires N == fin here.
    IN2, OUT2, N2 = 3, 96, 3
    tau2 = jax.random.uniform(keys[5], (N2, IN2), dtype=jnp.float32)
    w2 = jax.random.normal(keys[6], (IN2, OUT2 - 1), dtype=jnp.float32)
    b2 = jax.random.normal(keys[7], (IN2, OUT2 - 1), dtype=jnp.float32)
    w02 = jax.random.normal(keys[8], (IN2, 1), dtype=jnp.float32)
    b02 = jax.random.normal(keys[9], (IN2, 1), dtype=jnp.float32)

    out2 = sine_activation(tau2, w2, b2, w02, b02, block_rows=1024)
    jax.block_until_ready(out2)
    ref2 = sine_activation_ref(tau2, w2, b2, w02, b02)
    assert out2.shape == (N2, OUT2), out2.shape
    assert bool(jnp.isfinite(out2).all())
    assert bool(jnp.allclose(out2, ref2, atol=1e-5, rtol=1e-5))

    print("KERNEL_OK")
</pallas_src>

<mosaic_0001>
module attributes {stable_mosaic.version = 11 : i64} {
  func.func @_t2v_sin_kernel(%arg0: i32, %arg1: memref<512x1xf32, #tpu.memory_space<vmem>>, %arg2: memref<1x128xf32, #tpu.memory_space<vmem>>, %arg3: memref<1x128xf32, #tpu.memory_space<vmem>>, %arg4: memref<1x128xf32, #tpu.memory_space<vmem>>, %arg5: memref<512x128xf32, #tpu.memory_space<vmem>>) attributes {dimension_semantics = [#tpu.dimension_semantics<parallel>], iteration_bounds = array<i64: 1>, scalar_prefetch = 0 : i64, scratch_operands = 0 : i64, tpu.core_type = #tpu.core_type<tc>, window_params = [{transform_indices = @transform_0, window_bounds = array<i64: 512, 1>}, {pipeline_mode = #tpu.pipeline_mode<synchronous>, transform_indices = @transform_1, window_bounds = array<i64: 1, 128>}, {pipeline_mode = #tpu.pipeline_mode<synchronous>, transform_indices = @transform_2, window_bounds = array<i64: 1, 128>}, {pipeline_mode = #tpu.pipeline_mode<synchronous>, transform_indices = @transform_3, window_bounds = array<i64: 1, 128>}, {transform_indices = @transform_4, window_bounds = array<i64: 512, 128>}]} {
    %c0 = arith.constant 0 : index
    %c0_0 = arith.constant 0 : index
    %0 = vector.load %arg1[%c0, %c0_0] : memref<512x1xf32, #tpu.memory_space<vmem>>, vector<512x1xf32>
    %c0_1 = arith.constant 0 : index
    %c0_2 = arith.constant 0 : index
    %1 = vector.load %arg2[%c0_1, %c0_2] : memref<1x128xf32, #tpu.memory_space<vmem>>, vector<1x128xf32>
    %2 = vector.broadcast %0 : vector<512x1xf32> to vector<512x128xf32>
    %3 = vector.broadcast %1 : vector<1x128xf32> to vector<512x128xf32>
    %4 = arith.mulf %2, %3 : vector<512x128xf32>
    %c0_3 = arith.constant 0 : index
    %c0_4 = arith.constant 0 : index
    %5 = vector.load %arg3[%c0_3, %c0_4] : memref<1x128xf32, #tpu.memory_space<vmem>>, vector<1x128xf32>
    %6 = vector.broadcast %5 : vector<1x128xf32> to vector<512x128xf32>
    %7 = arith.addf %4, %6 : vector<512x128xf32>
    %8 = math.sin %7 : vector<512x128xf32>
    %c0_5 = arith.constant 0 : index
    %c0_6 = arith.constant 0 : index
    %9 = vector.load %arg4[%c0_5, %c0_6] : memref<1x128xf32, #tpu.memory_space<vmem>>, vector<1x128xf32>
    %cst = arith.constant 0.000000e+00 : f32
    %10 = vector.broadcast %cst : f32 to vector<1x128xf32>
    %11 = arith.cmpf one, %9, %10 : vector<1x128xf32>
    %12 = vector.shape_cast %11 : vector<1x128xi1> to vector<1x128xi1>
    %13 = vector.broadcast %12 : vector<1x128xi1> to vector<512x128xi1>
    %14 = arith.select %13, %8, %7 : vector<512x128xi1>, vector<512x128xf32>
    %c0_7 = arith.constant 0 : index
    %c0_8 = arith.constant 0 : index
    %15 = vector.load %arg5[%c0_7, %c0_8] : memref<512x128xf32, #tpu.memory_space<vmem>>, vector<512x128xf32>
    tpu.vector_store %arg5[%c0_7, %c0_8], %14 {strides = array<i32>} : memref<512x128xf32, #tpu.memory_space<vmem>>, vector<512x128xf32>,
    return
  }
  func.func @transform_0(%arg0: i32) -> (i32, i32) {
    %c0_i32 = arith.constant 0 : i32
    %c0_i32_0 = arith.constant 0 : i32
    return %arg0, %c0_i32 : i32, i32
  }
  func.func @transform_1(%arg0: i32) -> (i32, i32) {
    %c0_i32 = arith.constant 0 : i32
    %c0_i32_0 = arith.constant 0 : i32
    %c0_i32_1 = arith.constant 0 : i32
    return %c0_i32, %c0_i32_0 : i32, i32
  }
  func.func @transform_2(%arg0: i32) -> (i32, i32) {
    %c0_i32 = arith.constant 0 : i32
    %c0_i32_0 = arith.constant 0 : i32
    %c0_i32_1 = arith.constant 0 : i32
    return %c0_i32, %c0_i32_0 : i32, i32
  }
  func.func @transform_3(%arg0: i32) -> (i32, i32) {
    %c0_i32 = arith.constant 0 : i32
    %c0_i32_0 = arith.constant 0 : i32
    %c0_i32_1 = arith.constant 0 : i32
    return %c0_i32, %c0_i32_0 : i32, i32
  }
  func.func @transform_4(%arg0: i32) -> (i32, i32) {
    %c0_i32 = arith.constant 0 : i32
    %c0_i32_0 = arith.constant 0 : i32
    return %arg0, %c0_i32 : i32, i32
  }
}

</mosaic_0001>

<llo_original>
// kernel: tpu_custom_call.1
$region0: #{tpu_custom_call.1}
  #allocation0 [shape = 'u32[]', space=smem, size = 0x4, offset = 0x4, fixed_abs, tag = 'smem constant byte address 0x4 - core index']
  #allocation1 [shape = 'u32[144,128]{1,0:T(1,128)}', space=vmem, size = 0x12000, scoped, tag = 'internal scratch']
  %s0 = inlined_call_operand.vmem [shape: f32[512,1], index: 0, kind: input, shape index: {}]
  %s1 = inlined_call_operand.vmem [shape: f32[1,128], index: 1, kind: input, shape index: {}]
  %s2 = inlined_call_operand.vmem [shape: f32[1,128], index: 2, kind: input, shape index: {}]
  %s3 = inlined_call_operand.vmem [shape: f32[1,128], index: 3, kind: input, shape index: {}]
  %s4 = inlined_call_operand.hbm [shape: f32[512,128], index: 4, kind: output, shape index: {}]
  %s5 = sld [smem:[#allocation0]]
  $region26: #{tpu_custom_call.1} parent=0
    _
  %s7 = ssub.s32 1, %s5
  %s8 = scalar_select 0, %s7, %s5
  $region1: #{tpu_custom_call.1} parent=0
    #allocation2 [shape = 'u8[262144]{0}', space=vmem, size = 0x40000, scoped, tag = 'output window, operand 0, single buffered']
    #allocation3 [shape = 's32[1]{0}', space=sflag, size = 0x4, scoped, tag = 'scoped memory for tpu_custom_call.1']
    %9 = vsyncpa [#allocation3], 0
    // Predicated region
    $region2: #{tpu_custom_call.1} parent=1 // pred_check
      _
    $region3: #{tpu_custom_call.1} parent=1 // pred_check_branch
      %11 = sbr.rel (0) target = $region5
    $region4: #{tpu_custom_call.1} parent=1 // pred_region
      _
    $region5: #{tpu_custom_call.1} parent=1 // pred_fallthru
      _
    // Predicated region
    $region6: #{tpu_custom_call.1} parent=1 // pred_check
      _
    $region7: #{tpu_custom_call.1} parent=1 // pred_check_branch
      %13 = sbr.rel (0) target = $region9
    $region8: #{tpu_custom_call.1} parent=1 // pred_region
      _
    $region9: #{tpu_custom_call.1} parent=1 // pred_fallthru
      _
    // Predicated region
    $region10: #{tpu_custom_call.1} parent=1 // pred_check
      _
    $region11: #{tpu_custom_call.1} parent=1 // pred_check_branch
      %15 = sbr.rel (0) target = $region13
    $region12: #{tpu_custom_call.1} parent=1 // pred_region
      _
    $region13: #{tpu_custom_call.1} parent=1 // pred_fallthru
      _
    // Predicated region
    $region14: #{tpu_custom_call.1} parent=1 // pred_check
      _
    $region15: #{tpu_custom_call.1} parent=1 // pred_check_branch
      %17 = sbr.rel (0) target = $region17
    $region16: #{tpu_custom_call.1} parent=1 // pred_region
      _
    $region17: #{tpu_custom_call.1} parent=1 // pred_fallthru
      _
    %v18 = vld [vmem:[%s0] sm:$0xff]
    %v19 = vld [vmem:[%s0 + $0x8] sm:$0xff]
    %v20 = vld [vmem:[%s0 + $0x10] sm:$0xff]
    %v21 = vld [vmem:[%s0 + $0x18] sm:$0xff]
    %v22 = vld [vmem:[%s0 + $0x20] sm:$0xff]
    %v23 = vld [vmem:[%s0 + $0x28] sm:$0xff]
    %v24 = vld [vmem:[%s0 + $0x30] sm:$0xff]
    %v25 = vld [vmem:[%s0 + $0x38] sm:$0xff]
    %v26 = vld [vmem:[%s0 + $0x40] sm:$0xff]
    %v27 = vld [vmem:[%s0 + $0x48] sm:$0xff]
    %v28 = vld [vmem:[%s0 + $0x50] sm:$0xff]
    %v29 = vld [vmem:[%s0 + $0x58] sm:$0xff]
    %v30 = vld [vmem:[%s0 + $0x60] sm:$0xff]
    %v31 = vld [vmem:[%s0 + $0x68] sm:$0xff]
    %v32 = vld [vmem:[%s0 + $0x70] sm:$0xff]
    %v33 = vld [vmem:[%s0 + $0x78] sm:$0xff]
    %v34 = vld [vmem:[%s0 + $0x80] sm:$0xff]
    %v35 = vld [vmem:[%s0 + $0x88] sm:$0xff]
    %v36 = vld [vmem:[%s0 + $0x90] sm:$0xff]
    %v37 = vld [vmem:[%s0 + $0x98] sm:$0xff]
    %v38 = vld [vmem:[%s0 + $0xa0] sm:$0xff]
    %v39 = vld [vmem:[%s0 + $0xa8] sm:$0xff]
    %v40 = vld [vmem:[%s0 + $0xb0] sm:$0xff]
    %v41 = vld [vmem:[%s0 + $0xb8] sm:$0xff]
    %v42 = vld [vmem:[%s0 + $0xc0] sm:$0xff]
    %v43 = vld [vmem:[%s0 + $0xc8] sm:$0xff]
    %v44 = vld [vmem:[%s0 + $0xd0] sm:$0xff]
    %v45 = vld [vmem:[%s0 + $0xd8] sm:$0xff]
    %v46 = vld [vmem:[%s0 + $0xe0] sm:$0xff]
    %v47 = vld [vmem:[%s0 + $0xe8] sm:$0xff]
    %v48 = vld [vmem:[%s0 + $0xf0] sm:$0xff]
    %v49 = vld [vmem:[%s0 + $0xf8] sm:$0xff]
    %v50 = vld [vmem:[%s0 + $0x100] sm:$0xff]
    %v51 = vld [vmem:[%s0 + $0x108] sm:$0xff]
    %v52 = vld [vmem:[%s0 + $0x110] sm:$0xff]
    %v53 = vld [vmem:[%s0 + $0x118] sm:$0xff]
    %v54 = vld [vmem:[%s0 + $0x120] sm:$0xff]
    %v55 = vld [vmem:[%s0 + $0x128] sm:$0xff]
    %v56 = vld [vmem:[%s0 + $0x130] sm:$0xff]
    %v57 = vld [vmem:[%s0 + $0x138] sm:$0xff]
    %v58 = vld [vmem:[%s0 + $0x140] sm:$0xff]
    %v59 = vld [vmem:[%s0 + $0x148] sm:$0xff]
    %v60 = vld [vmem:[%s0 + $0x150] sm:$0xff]
    %v61 = vld [vmem:[%s0 + $0x158] sm:$0xff]
    %v62 = vld [vmem:[%s0 + $0x160] sm:$0xff]
    %v63 = vld [vmem:[%s0 + $0x168] sm:$0xff]
    %v64 = vld [vmem:[%s0 + $0x170] sm:$0xff]
    %v65 = vld [vmem:[%s0 + $0x178] sm:$0xff]
    %v66 = vld [vmem:[%s0 + $0x180] sm:$0xff]
    %v67 = vld [vmem:[%s0 + $0x188] sm:$0xff]
    %v68 = vld [vmem:[%s0 + $0x190] sm:$0xff]
    %v69 = vld [vmem:[%s0 + $0x198] sm:$0xff]
    %v70 = vld [vmem:[%s0 + $0x1a0] sm:$0xff]
    %v71 = vld [vmem:[%s0 + $0x1a8] sm:$0xff]
    %v72 = vld [vmem:[%s0 + $0x1b0] sm:$0xff]
    %v73 = vld [vmem:[%s0 + $0x1b8] sm:$0xff]
    %v74 = vld [vmem:[%s0 + $0x1c0] sm:$0xff]
    %v75 = vld [vmem:[%s0 + $0x1c8] sm:$0xff]
    %v76 = vld [vmem:[%s0 + $0x1d0] sm:$0xff]
    %v77 = vld [vmem:[%s0 + $0x1d8] sm:$0xff]
    %v78 = vld [vmem:[%s0 + $0x1e0] sm:$0xff]
    %v79 = vld [vmem:[%s0 + $0x1e8] sm:$0xff]
    %v80 = vld [vmem:[%s0 + $0x1f0] sm:$0xff]
    %v81 = vld [vmem:[%s0 + $0x1f8] sm:$0xff]
    %v82 = vld [vmem:[%s1] sm:$0x1]
    %84 = vset.pattern.permute.xlu0 0
    %85 = vperm.xlu0 %84, %v18
    %v86 = vpop.permute.xlu0 %85
    %89 = vset.pattern.permute.xlu0 0
    %90 = vperm.xlu0 %89, %v19
    %v91 = vpop.permute.xlu0 %90
    %94 = vset.pattern.permute.xlu0 0
    %95 = vperm.xlu0 %94, %v20
    %v96 = vpop.permute.xlu0 %95
    %99 = vset.pattern.permute.xlu0 0
    %100 = vperm.xlu0 %99, %v21
    %v101 = vpop.permute.xlu0 %100
    %104 = vset.pattern.permute.xlu0 0
    %105 = vperm.xlu0 %104, %v22
    %v106 = vpop.permute.xlu0 %105
    %109 = vset.pattern.permute.xlu0 0
    %110 = vperm.xlu0 %109, %v23
    %v111 = vpop.permute.xlu0 %110
    %114 = vset.pattern.permute.xlu0 0
    %115 = vperm.xlu0 %114, %v24
    %v116 = vpop.permute.xlu0 %115
    %119 = vset.pattern.permute.xlu0 0
    %120 = vperm.xlu0 %119, %v25
    %v121 = vpop.permute.xlu0 %120
    %124 = vset.pattern.permute.xlu0 0
    %125 = vperm.xlu0 %124, %v26
    %v126 = vpop.permute.xlu0 %125
    %129 = vset.pattern.permute.xlu0 0
    %130 = vperm.xlu0 %129, %v27
    %v131 = vpop.permute.xlu0 %130
    %134 = vset.pattern.permute.xlu0 0
    %135 = vperm.xlu0 %134, %v28
    %v136 = vpop.permute.xlu0 %135
    %139 = vset.pattern.permute.xlu0 0
    %140 = vperm.xlu0 %139, %v29
    %v141 = vpop.permute.xlu0 %140
    %144 = vset.pattern.permute.xlu0 0
    %145 = vperm.xlu0 %144, %v30
    %v146 = vpop.permute.xlu0 %145
    %149 = vset.pattern.permute.xlu0 0
    %150 = vperm.xlu0 %149, %v31
    %v151 = vpop.permute.xlu0 %150
    %154 = vset.pattern.permute.xlu0 0
    %155 = vperm.xlu0 %154, %v32
    %v156 = vpop.permute.xlu0 %155
    %159 = vset.pattern.permute.xlu0 0
    %160 = vperm.xlu0 %159, %v33
    %v161 = vpop.permute.xlu0 %160
    %164 = vset.pattern.permute.xlu0 0
    %165 = vperm.xlu0 %164, %v34
    %v166 = vpop.permute.xlu0 %165
    %169 = vset.pattern.permute.xlu0 0
    %170 = vperm.xlu0 %169, %v35
    %v171 = vpop.permute.xlu0 %170
    %174 = vset.pattern.permute.xlu0 0
    %175 = vperm.xlu0 %174, %v36
    %v176 = vpop.permute.xlu0 %175
    %179 = vset.pattern.permute.xlu0 0
    %180 = vperm.xlu0 %179, %v37
    %v181 = vpop.permute.xlu0 %180
    %184 = vset.pattern.permute.xlu0 0
    %185 = vperm.xlu0 %184, %v38
    %v186 = vpop.permute.xlu0 %185
    %189 = vset.pattern.permute.xlu0 0
    %190 = vperm.xlu0 %189, %v39
    %v191 = vpop.permute.xlu0 %190
    %194 = vset.pattern.permute.xlu0 0
    %195 = vperm.xlu0 %194, %v40
    %v196 = vpop.permute.xlu0 %195
    %199 = vset.pattern.permute.xlu0 0
    %200 = vperm.xlu0 %199, %v41
    %v201 = vpop.permute.xlu0 %200
    %204 = vset.pattern.permute.xlu0 0
    %205 = vperm.xlu0 %204, %v42
    %v206 = vpop.permute.xlu0 %205
    %209 = vset.pattern.permute.xlu0 0
    %210 = vperm.xlu0 %209, %v43
    %v211 = vpop.permute.xlu0 %210
    %214 = vset.pattern.permute.xlu0 0
    %215 = vperm.xlu0 %214, %v44
    %v216 = vpop.permute.xlu0 %215
    %219 = vset.pattern.permute.xlu0 0
    %220 = vperm.xlu0 %219, %v45
    %v221 = vpop.permute.xlu0 %220
    %224 = vset.pattern.permute.xlu0 0
    %225 = vperm.xlu0 %224, %v46
    %v226 = vpop.permute.xlu0 %225
    %229 = vset.pattern.permute.xlu0 0
    %230 = vperm.xlu0 %229, %v47
    %v231 = vpop.permute.xlu0 %230
    %234 = vset.pattern.permute.xlu0 0
    %235 = vperm.xlu0 %234, %v48
    %v236 = vpop.permute.xlu0 %235
    %239 = vset.pattern.permute.xlu0 0
    %240 = vperm.xlu0 %239, %v49
    %v241 = vpop.permute.xlu0 %240
    %244 = vset.pattern.permute.xlu0 0
    %245 = vperm.xlu0 %244, %v50
    %v246 = vpop.permute.xlu0 %245
    %249 = vset.pattern.permute.xlu0 0
    %250 = vperm.xlu0 %249, %v51
    %v251 = vpop.permute.xlu0 %250
    %254 = vset.pattern.permute.xlu0 0
    %255 = vperm.xlu0 %254, %v52
    %v256 = vpop.permute.xlu0 %255
    %259 = vset.pattern.permute.xlu0 0
    %260 = vperm.xlu0 %259, %v53
    %v261 = vpop.permute.xlu0 %260
    %264 = vset.pattern.permute.xlu0 0
    %265 = vperm.xlu0 %264, %v54
    %v266 = vpop.permute.xlu0 %265
    %269 = vset.pattern.permute.xlu0 0
    %270 = vperm.xlu0 %269, %v55
    %v271 = vpop.permute.xlu0 %270
    %274 = vset.pattern.permute.xlu0 0
    %275 = vperm.xlu0 %274, %v56
    %v276 = vpop.permute.xlu0 %275
    %279 = vset.pattern.permute.xlu0 0
    %280 = vperm.xlu0 %279, %v57
    %v281 = vpop.permute.xlu0 %280
    %284 = vset.pattern.permute.xlu0 0
    %285 = vperm.xlu0 %284, %v58
    %v286 = vpop.permute.xlu0 %285
    %289 = vset.pattern.permute.xlu0 0
    %290 = vperm.xlu0 %289, %v59
    %v291 = vpop.permute.xlu0 %290
    %294 = vset.pattern.permute.xlu0 0
    %295 = vperm.xlu0 %294, %v60
    %v296 = vpop.permute.xlu0 %295
    %299 = vset.pattern.permute.xlu0 0
    %300 = vperm.xlu0 %299, %v61
    %v301 = vpop.permute.xlu0 %300
    %304 = vset.pattern.permute.xlu0 0
    %305 = vperm.xlu0 %304, %v62
    %v306 = vpop.permute.xlu0 %305
    %309 = vset.pattern.permute.xlu0 0
    %310 = vperm.xlu0 %309, %v63
    %v311 = vpop.permute.xlu0 %310
    %314 = vset.pattern.permute.xlu0 0
    %315 = vperm.xlu0 %314, %v64
    %v316 = vpop.permute.xlu0 %315
    %319 = vset.pattern.permute.xlu0 0
    %320 = vperm.xlu0 %319, %v65
    %v321 = vpop.permute.xlu0 %320
    %324 = vset.pattern.permute.xlu0 0
    %325 = vperm.xlu0 %324, %v66
    %v326 = vpop.permute.xlu0 %325
    %329 = vset.pattern.permute.xlu0 0
    %330 = vperm.xlu0 %329, %v67
    %v331 = vpop.permute.xlu0 %330
    %334 = vset.pattern.permute.xlu0 0
    %335 = vperm.xlu0 %334, %v68
    %v336 = vpop.permute.xlu0 %335
    %339 = vset.pattern.permute.xlu0 0
    %340 = vperm.xlu0 %339, %v69
    %v341 = vpop.permute.xlu0 %340
    %344 = vset.pattern.permute.xlu0 0
    %345 = vperm.xlu0 %344, %v70
    %v346 = vpop.permute.xlu0 %345
    %349 = vset.pattern.permute.xlu0 0
    %350 = vperm.xlu0 %349, %v71
    %v351 = vpop.permute.xlu0 %350
    %354 = vset.pattern.permute.xlu0 0
    %355 = vperm.xlu0 %354, %v72
    %v356 = vpop.permute.xlu0 %355
    %359 = vset.pattern.permute.xlu0 0
    %360 = vperm.xlu0 %359, %v73
    %v361 = vpop.permute.xlu0 %360
    %364 = vset.pattern.permute.xlu0 0
    %365 = vperm.xlu0 %364, %v74
    %v366 = vpop.permute.xlu0 %365
    %369 = vset.pattern.permute.xlu0 0
    %370 = vperm.xlu0 %369, %v75
    %v371 = vpop.permute.xlu0 %370
    %374 = vset.pattern.permute.xlu0 0
    %375 = vperm.xlu0 %374, %v76
    %v376 = vpop.permute.xlu0 %375
    %379 = vset.pattern.permute.xlu0 0
    %380 = vperm.xlu0 %379, %v77
    %v381 = vpop.permute.xlu0 %380
    %384 = vset.pattern.permute.xlu0 0
    %385 = vperm.xlu0 %384, %v78
    %v386 = vpop.permute.xlu0 %385
    %389 = vset.pattern.permute.xlu0 0
    %390 = vperm.xlu0 %389, %v79
    %v391 = vpop.permute.xlu0 %390
    %394 = vset.pattern.permute.xlu0 0
    %395 = vperm.xlu0 %394, %v80
    %v396 = vpop.permute.xlu0 %395
    %399 = vset.pattern.permute.xlu0 0
    %400 = vperm.xlu0 %399, %v81
    %v401 = vpop.permute.xlu0 %400
    %v404 = vlaneseq
    %v405 = vshrl.u32 %v404, 7
    %v406 = vsub.s32 0, %v405
    %v407 = vrot.slane %v82, %v406
    %v409 = vmul.f32 %v86, %v407
    %v410 = vmul.f32 %v91, %v407
    %v411 = vmul.f32 %v96, %v407
    %v412 = vmul.f32 %v101, %v407
    %v413 = vmul.f32 %v106, %v407
    %v414 = vmul.f32 %v111, %v407
    %v415 = vmul.f32 %v116, %v407
    %v416 = vmul.f32 %v121, %v407
    %v417 = vmul.f32 %v126, %v407
    %v418 = vmul.f32 %v131, %v407
    %v419 = vmul.f32 %v136, %v407
    %v420 = vmul.f32 %v141, %v407
    %v421 = vmul.f32 %v146, %v407
    %v422 = vmul.f32 %v151, %v407
    %v423 = vmul.f32 %v156, %v407
    %v424 = vmul.f32 %v161, %v407
    %v425 = vmul.f32 %v166, %v407
    %v426 = vmul.f32 %v171, %v407
    %v427 = vmul.f32 %v176, %v407
    %v428 = vmul.f32 %v181, %v407
    %v429 = vmul.f32 %v186, %v407
    %v430 = vmul.f32 %v191, %v407
    %v431 = vmul.f32 %v196, %v407
    %v432 = vmul.f32 %v201, %v407
    %v433 = vmul.f32 %v206, %v407
    %v434 = vmul.f32 %v211, %v407
    %v435 = vmul.f32 %v216, %v407
    %v436 = vmul.f32 %v221, %v407
    %v437 = vmul.f32 %v226, %v407
    %v438 = vmul.f32 %v231, %v407
    %v439 = vmul.f32 %v236, %v407
    %v440 = vmul.f32 %v241, %v407
    %v441 = vmul.f32 %v246, %v407
    %v442 = vmul.f32 %v251, %v407
    %v443 = vmul.f32 %v256, %v407
    %v444 = vmul.f32 %v261, %v407
    %v445 = vmul.f32 %v266, %v407
    %v446 = vmul.f32 %v271, %v407
    %v447 = vmul.f32 %v276, %v407
    %v448 = vmul.f32 %v281, %v407
    %v449 = vmul.f32 %v286, %v407
    %v450 = vmul.f32 %v291, %v407
    %v451 = vmul.f32 %v296, %v407
    %v452 = vmul.f32 %v301, %v407
    %v453 = vmul.f32 %v306, %v407
    %v454 = vmul.f32 %v311, %v407
    %v455 = vmul.f32 %v316, %v407
    %v456 = vmul.f32 %v321, %v407
    %v457 = vmul.f32 %v326, %v407
    %v458 = vmul.f32 %v331, %v407
    %v459 = vmul.f32 %v336, %v407
    %v460 = vmul.f32 %v341, %v407
    %v461 = vmul.f32 %v346, %v407
    %v462 = vmul.f32 %v351, %v407
    %v463 = vmul.f32 %v356, %v407
    %v464 = vmul.f32 %v361, %v407
    %v465 = vmul.f32 %v366, %v407
    %v466 = vmul.f32 %v371, %v407
    %v467 = vmul.f32 %v376, %v407
    %v468 = vmul.f32 %v381, %v407
    %v469 = vmul.f32 %v386, %v407
    %v470 = vmul.f32 %v391, %v407
    %v471 = vmul.f32 %v396, %v407
    %v472 = vmul.f32 %v401, %v407
    %v473 = vld [vmem:[%s2] sm:$0x1]
    %v475 = vlaneseq
    %v476 = vshrl.u32 %v475, 7
    %v477 = vsub.s32 0, %v476
    %v478 = vrot.slane %v473, %v477
    %v480 = vadd.f32 %v409, %v478
    %v481 = vadd.f32 %v410, %v478
    %v482 = vadd.f32 %v411, %v478
    %v483 = vadd.f32 %v412, %v478
    %v484 = vadd.f32 %v413, %v478
    %v485 = vadd.f32 %v414, %v478
    %v486 = vadd.f32 %v415, %v478
    %v487 = vadd.f32 %v416, %v478
    %v488 = vadd.f32 %v417, %v478
    %v489 = vadd.f32 %v418, %v478
    %v490 = vadd.f32 %v419, %v478
    %v491 = vadd.f32 %v420, %v478
    %v492 = vadd.f32 %v421, %v478
    %v493 = vadd.f32 %v422, %v478
    %v494 = vadd.f32 %v423, %v478
    %v495 = vadd.f32 %v424, %v478
    %v496 = vadd.f32 %v425, %v478
    %v497 = vadd.f32 %v426, %v478
    %v498 = vadd.f32 %v427, %v478
    %v499 = vadd.f32 %v428, %v478
    %v500 = vadd.f32 %v429, %v478
    %v501 = vadd.f32 %v430, %v478
    %v502 = vadd.f32 %v431, %v478
    %v503 = vadd.f32 %v432, %v478
    %v504 = vadd.f32 %v433, %v478
    %v505 = vadd.f32 %v434, %v478
    %v506 = vadd.f32 %v435, %v478
    %v507 = vadd.f32 %v436, %v478
    %v508 = vadd.f32 %v437, %v478
    %v509 = vadd.f32 %v438, %v478
    %v510 = vadd.f32 %v439, %v478
    %v511 = vadd.f32 %v440, %v478
    %v512 = vadd.f32 %v441, %v478
    %v513 = vadd.f32 %v442, %v478
    %v514 = vadd.f32 %v443, %v478
    %v515 = vadd.f32 %v444, %v478
    %v516 = vadd.f32 %v445, %v478
    %v517 = vadd.f32 %v446, %v478
    %v518 = vadd.f32 %v447, %v478
    %v519 = vadd.f32 %v448, %v478
    %v520 = vadd.f32 %v449, %v478
    %v521 = vadd.f32 %v450, %v478
    %v522 = vadd.f32 %v451, %v478
    %v523 = vadd.f32 %v452, %v478
    %v524 = vadd.f32 %v453, %v478
    %v525 = vadd.f32 %v454, %v478
    %v526 = vadd.f32 %v455, %v478
    %v527 = vadd.f32 %v456, %v478
    %v528 = vadd.f32 %v457, %v478
    %v529 = vadd.f32 %v458, %v478
    %v530 = vadd.f32 %v459, %v478
    %v531 = vadd.f32 %v460, %v478
    %v532 = vadd.f32 %v461, %v478
    %v533 = vadd.f32 %v462, %v478
    %v534 = vadd.f32 %v463, %v478
    %v535 = vadd.f32 %v464, %v478
    %v536 = vadd.f32 %v465, %v478
    %v537 = vadd.f32 %v466, %v478
    %v538 = vadd.f32 %v467, %v478
    %v539 = vadd.f32 %v468, %v478
    %v540 = vadd.f32 %v469, %v478
    %v541 = vadd.f32 %v470, %v478
    %v542 = vadd.f32 %v471, %v478
    %v543 = vadd.f32 %v472, %v478
    %v544 = vand.u32 2147483647, %v480
    %vm545 = vcmp.le.f32.partialorder %v544, 0.7853982
    %vm546 = vcmp.lt.s32.totalorder %v480, 0
    %v547 = vand.u32 %v480, 2139095040
    %v548 = vshrl.u32 %v547, 23
    %v549 = vsub.s32 %v548, 127
    %v550 = vand.u32 2147483647, %v480
    %v551 = vand.u32 %v550, 8388607
    %v552 = vor.u32 %v551, 8388608
    %v553 = vsub.s32 0, %v552
    %v554 = vadd.s32 %v549, 1
    %vm555 = vcmp.gt.s32.totalorder %v554, 0
    %v556 = vsel %vm555, %v554, 0
    %v557 = vshrl.u32 %v556, 5
    %v558 = vand.u32 %v556, 31
    %v559 = vsub.s32 32, %v558
    %v560 = vshrl.u32 683565275, %v559
    %v561 = vshll.u32 683565275, %v558
    %v562 = vshrl.u32 2475754826, %v559
    %v563 = vor.u32 %v561, %v562
    %v564 = vshll.u32 2475754826, %v558
    %v565 = vshrl.u32 2131351028, %v559
    %v566 = vor.u32 %v564, %v565
    %v567 = vshll.u32 2131351028, %v558
    %v568 = vshrl.u32 2102212464, %v559
    %v569 = vor.u32 %v567, %v568
    %v570 = vshll.u32 2102212464, %v558
    %v571 = vshrl.u32 920167782, %v559
    %v572 = vor.u32 %v570, %v571
    %v573 = vshll.u32 920167782, %v558
    %v574 = vshrl.u32 1326507024, %v559
    %v575 = vor.u32 %v573, %v574
    %vm576 = vcmp.lt.s32.totalorder %v557, 1
    %vm577 = vcmp.lt.s32.totalorder %v557, 2
    %vm578 = vcmp.lt.s32.totalorder %v557, 3
    %vm579 = vcmp.lt.s32.totalorder %v557, 4
    %v580 = vsel %vm576, %v560, %v563
    %v581 = vsel %vm579, %v569, 2102212464
    %v582 = vsel %vm578, %v566, %v581
    %v583 = vsel %vm577, %v580, %v582
    %v584 = vsel %vm576, %v563, %v566
    %v585 = vsel %vm579, %v572, 920167782
    %v586 = vsel %vm578, %v569, %v585
    %v587 = vsel %vm577, %v584, %v586
    %v588 = vsel %vm576, %v566, %v569
    %v589 = vsel %vm579, %v575, 1326507024
    %v590 = vsel %vm578, %v572, %v589
    %v591 = vsel %vm577, %v588, %v590
    %v592 = vshll.u32 %v552, 8
    %v593 = vmul.u32.u64.compose %v592, %v591
    %v594 = vextract.low.u32 %v593
    %v595 = vextract.high.u32 %v593
    %v596 = vmul.u32.u64.compose %v592, %v587
    %v597 = vextract.low.u32 %v596
    %v598 = vextract.high.u32 %v596
    %v599 = vmul.u32 %v592, %v583
    %v600 = vadd.s32 %v595, %v597
    %vm601 = vc.u32 %v595, %v597
    %v602 = vadd.s32 %v598, 1
    %v603 = vsel %vm601, %v602, %v598
    %v604 = vadd.s32 %v599, %v603
    %v605 = vadd.s32 %v604, 536870912
    %v606 = vshrl.u32 %v605, 30
    %v607 = vshll.u32 %v606, 30
    %v608 = vsub.s32 %v604, %v607
    %vm609 = vcmp.lt.s32.totalorder %v608, 0
    %v610 = vsub.s32 0, %v608
    %v611 = vsel %vm609, %v610, %v608
    %v612 = vclz %v611
    %v613 = vsub.s32 %v612, 2
    %vm614 = vcmp.gt.s32.totalorder 0, %v613
    %v615 = vsel %vm614, 0, %v613
    %v616 = vsub.s32 32, %v615
    %v617 = vshll.u32 %v608, %v615
    %v618 = vshrl.u32 %v600, %v616
    %v619 = vor.u32 %v617, %v618
    %v620 = vsub.s32 4294967266, %v615
    %v621 = vadd.s32 %v620, 127
    %v622 = vshll.u32 %v621, 23
    %v623 = vor.u32 4788187, %v622
    %v624 = vand.u32 2147483647, %v623
    %v626 = vcvt.s32.f32 %v619
    %v627 = vmul.f32 %v626, %v624
    %v628 = vxor.u32 %v627, 2147483648
    %v629 = vsel %vm546, %v628, %v627
    %v630 = vsub.s32 4, %v606
    %v631 = vsel %vm546, %v630, %v606
    %v632 = vsel %vm545, %v480, %v629
    %v633 = vsel %vm545, 0, %v631
    %v634 = vcosq.f32.pop %v632
    %v635 = vsinq.f32.pop %v632
    %vm636 = vweird.f32 %v480
    %v637 = vadd.s32 %v633, 3
    %v638 = vand.u32 %v637, 3
    %vm639 = vcmp.lt.s32.totalorder %v638, 2
    %vm640 = vcmp.eq.s32.totalorder %v638, 0
    %v641 = vxor.u32 %v635, 2147483648
    %v642 = vsel %vm640, %v634, %v641
    %vm643 = vcmp.eq.s32.totalorder %v638, 2
    %v644 = vxor.u32 %v634, 2147483648
    %v645 = vsel %vm643, %v644, %v635
    %v646 = vsel %vm639, %v642, %v645
    %v647 = vsel %vm636, nan, %v646
    %v648 = vand.u32 2147483647, %v481
    %vm649 = vcmp.le.f32.partialorder %v648, 0.7853982
    %vm650 = vcmp.lt.s32.totalorder %v481, 0
    %v651 = vand.u32 %v481, 2139095040
    %v652 = vshrl.u32 %v651, 23
    %v653 = vsub.s32 %v652, 127
    %v654 = vand.u32 2147483647, %v481
    %v655 = vand.u32 %v654, 8388607
    %v656 = vor.u32 %v655, 8388608
    %v657 = vsub.s32 0, %v656
    %v658 = vadd.s32 %v653, 1
    %vm659 = vcmp.gt.s32.totalorder %v658, 0
    %v660 = vsel %vm659, %v658, 0
    %v661 = vshrl.u32 %v660, 5
    %v662 = vand.u32 %v660, 31
    %v663 = vsub.s32 32, %v662
    %v664 = vshrl.u32 683565275, %v663
    %v665 = vshll.u32 683565275, %v662
    %v666 = vshrl.u32 2475754826, %v663
    %v667 = vor.u32 %v665, %v666
    %v668 = vshll.u32 2475754826, %v662
    %v669 = vshrl.u32 2131351028, %v663
    %v670 = vor.u32 %v668, %v669
    %v671 = vshll.u32 2131351028, %v662
    %v672 = vshrl.u32 2102212464, %v663
    %v673 = vor.u32 %v671, %v672
    %v674 = vshll.u32 2102212464, %v662
    %v675 = vshrl.u32 920167782, %v663
    %v676 = vor.u32 %v674, %v675
    %v677 = vshll.u32 920167782, %v662
    %v678 = vshrl.u32 1326507024, %v663
    %v679 = vor.u32 %v677, %v678
    %vm680 = vcmp.lt.s32.totalorder %v661, 1
    %vm681 = vcmp.lt.s32.totalorder %v661, 2
    %vm682 = vcmp.lt.s32.totalorder %v661, 3
    %vm683 = vcmp.lt.s32.totalorder %v661, 4
    %v684 = vsel %vm680, %v664, %v667
    %v685 = vsel %vm683, %v673, 2102212464
    %v686 = vsel %vm682, %v670, %v685
    %v687 = vsel %vm681, %v684, %v686
    %v688 = vsel %vm680, %v667, %v670
    %v689 = vsel %vm683, %v676, 920167782
    %v690 = vsel %vm682, %v673, %v689
    %v691 = vsel %vm681, %v688, %v690
    %v692 = vsel %vm680, %v670, %v673
    %v693 = vsel %vm683, %v679, 1326507024
    %v694 = vsel %vm682, %v676, %v693
    %v695 = vsel %vm681, %v692, %v694
    %v696 = vshll.u32 %v656, 8
    %v697 = vmul.u32.u64.compose %v696, %v695
    %v698 = vextract.low.u32 %v697
    %v699 = vextract.high.u32 %v697
    %v700 = vmul.u32.u64.compose %v696, %v691
    %v701 = vextract.low.u32 %v700
    %v702 = vextract.high.u32 %v700
    %v703 = vmul.u32 %v696, %v687
    %v704 = vadd.s32 %v699, %v701
    %vm705 = vc.u32 %v699, %v701
    %v706 = vadd.s32 %v702, 1
    %v707 = vsel %vm705, %v706, %v702
    %v708 = vadd.s32 %v703, %v707
    %v709 = vadd.s32 %v708, 536870912
    %v710 = vshrl.u32 %v709, 30
    %v711 = vshll.u32 %v710, 30
    %v712 = vsub.s32 %v708, %v711
    %vm713 = vcmp.lt.s32.totalorder %v712, 0
    %v714 = vsub.s32 0, %v712
    %v715 = vsel %vm713, %v714, %v712
    %v716 = vclz %v715
    %v717 = vsub.s32 %v716, 2
    %vm718 = vcmp.gt.s32.totalorder 0, %v717
    %v719 = vsel %vm718, 0, %v717
    %v720 = vsub.s32 32, %v719
    %v721 = vshll.u32 %v712, %v719
    %v722 = vshrl.u32 %v704, %v720
    %v723 = vor.u32 %v721, %v722
    %v724 = vsub.s32 4294967266, %v719
    %v725 = vadd.s32 %v724, 127
    %v726 = vshll.u32 %v725, 23
    %v727 = vor.u32 4788187, %v726
    %v728 = vand.u32 2147483647, %v727
    %v730 = vcvt.s32.f32 %v723
    %v731 = vmul.f32 %v730, %v728
    %v732 = vxor.u32 %v731, 2147483648
    %v733 = vsel %vm650, %v732, %v731
    %v734 = vsub.s32 4, %v710
    %v735 = vsel %vm650, %v734, %v710
    %v736 = vsel %vm649, %v481, %v733
    %v737 = vsel %vm649, 0, %v735
    %v738 = vcosq.f32.pop %v736
    %v739 = vsinq.f32.pop %v736
    %vm740 = vweird.f32 %v481
    %v741 = vadd.s32 %v737, 3
    %v742 = vand.u32 %v741, 3
    %vm743 = vcmp.lt.s32.totalorder %v742, 2
    %vm744 = vcmp.eq.s32.totalorder %v742, 0
    %v745 = vxor.u32 %v739, 2147483648
    %v746 = vsel %vm744, %v738, %v745
    %vm747 = vcmp.eq.s32.totalorder %v742, 2
    %v748 = vxor.u32 %v738, 2147483648
    %v749 = vsel %vm747, %v748, %v739
    %v750 = vsel %vm743, %v746, %v749
    %v751 = vsel %vm740, nan, %v750
    %v752 = vand.u32 2147483647, %v482
    %vm753 = vcmp.le.f32.partialorder %v752, 0.7853982
    %vm754 = vcmp.lt.s32.totalorder %v482, 0
    %v755 = vand.u32 %v482, 2139095040
    %v756 = vshrl.u32 %v755, 23
    %v757 = vsub.s32 %v756, 127
    %v758 = vand.u32 2147483647, %v482
    %v759 = vand.u32 %v758, 8388607
    %v760 = vor.u32 %v759, 8388608
    %v761 = vsub.s32 0, %v760
    %v762 = vadd.s32 %v757, 1
    %vm763 = vcmp.gt.s32.totalorder %v762, 0
    %v764 = vsel %vm763, %v762, 0
    %v765 = vshrl.u32 %v764, 5
    %v766 = vand.u32 %v764, 31
    %v767 = vsub.s32 32, %v766
    %v768 = vshrl.u32 683565275, %v767
    %v769 = vshll.u32 683565275, %v766
    %v770 = vshrl.u32 2475754826, %v767
    %v771 = vor.u32 %v769, %v770
    %v772 = vshll.u32 2475754826, %v766
    %v773 = vshrl.u32 2131351028, %v767
    %v774 = vor.u32 %v772, %v773
    %v775 = vshll.u32 2131351028, %v766
    %v776 = vshrl.u32 2102212464, %v767
    %v777 = vor.u32 %v775, %v776
    %v778 = vshll.u32 2102212464, %v766
    %v779 = vshrl.u32 920167782, %v767
    %v780 = vor.u32 %v778, %v779
    %v781 = vshll.u32 920167782, %v766
    %v782 = vshrl.u32 1326507024, %v767
    %v783 = vor.u32 %v781, %v782
    %vm784 = vcmp.lt.s32.totalorder %v765, 1
    %vm785 = vcmp.lt.s32.totalorder %v765, 2
    %vm786 = vcmp.lt.s32.totalorder %v765, 3
    %vm787 = vcmp.lt.s32.totalorder %v765, 4
    %v788 = vsel %vm784, %v768, %v771
    %v789 = vsel %vm787, %v777, 2102212464
    %v790 = vsel %vm786, %v774, %v789
    %v791 = vsel %vm785, %v788, %v790
    %v792 = vsel %vm784, %v771, %v774
    %v793 = vsel %vm787, %v780, 920167782
    %v794 = vsel %vm786, %v777, %v793
    %v795 = vsel %vm785, %v792, %v794
    %v796 = vsel %vm784, %v774, %v777
    %v797 = vsel %vm787, %v783, 1326507024
    %v798 = vsel %vm786, %v780, %v797
    %v799 = vsel %vm785, %v796, %v798
    %v800 = vshll.u32 %v760, 8
    %v801 = vmul.u32.u64.compose %v800, %v799
    %v802 = vextract.low.u32 %v801
    %v803 = vextract.high.u32 %v801
    %v804 = vmul.u32.u64.compose %v800, %v795
    %v805 = vextract.low.u32 %v804
    %v806 = vextract.high.u32 %v804
    %v807 = vmul.u32 %v800, %v791
    %v808 = vadd.s32 %v803, %v805
    %vm809 = vc.u32 %v803, %v805
    %v810 = vadd.s32 %v806, 1
    %v811 = vsel %vm809, %v810, %v806
    %v812 = vadd.s32 %v807, %v811
    %v813 = vadd.s32 %v812, 536870912
    %v814 = vshrl.u32 %v813, 30
    %v815 = vshll.u32 %v814, 30
    %v816 = vsub.s32 %v812, %v815
    %vm817 = vcmp.lt.s32.totalorder %v816, 0
    %v818 = vsub.s32 0, %v816
    %v819 = vsel %vm817, %v818, %v816
    %v820 = vclz %v819
    %v821 = vsub.s32 %v820, 2
    %vm822 = vcmp.gt.s32.totalorder 0, %v821
    %v823 = vsel %vm822, 0, %v821
    %v824 = vsub.s32 32, %v823
    %v825 = vshll.u32 %v816, %v823
    %v826 = vshrl.u32 %v808, %v824
    %v827 = vor.u32 %v825, %v826
    %v828 = vsub.s32 4294967266, %v823
    %v829 = vadd.s32 %v828, 127
    %v830 = vshll.u32 %v829, 23
    %v831 = vor.u32 4788187, %v830
    %v832 = vand.u32 2147483647, %v831
    %v834 = vcvt.s32.f32 %v827
    %v835 = vmul.f32 %v834, %v832
    %v836 = vxor.u32 %v835, 2147483648
    %v837 = vsel %vm754, %v836, %v835
    %v838 = vsub.s32 4, %v814
    %v839 = vsel %vm754, %v838, %v814
    %v840 = vsel %vm753, %v482, %v837
    %v841 = vsel %vm753, 0, %v839
    %v842 = vcosq.f32.pop %v840
    %v843 = vsinq.f32.pop %v840
    %vm844 = vweird.f32 %v482
    %v845 = vadd.s32 %v841, 3
    %v846 = vand.u32 %v845, 3
    %vm847 = vcmp.lt.s32.totalorder %v846, 2
    %vm848 = vcmp.eq.s32.totalorder %v846, 0
    %v849 = vxor.u32 %v843, 2147483648
    %v850 = vsel %vm848, %v842, %v849
    %vm851 = vcmp.eq.s32.totalorder %v846, 2
    %v852 = vxor.u32 %v842, 2147483648
    %v853 = vsel %vm851, %v852, %v843
    %v854 = vsel %vm847, %v850, %v853
    %v855 = vsel %vm844, nan, %v854
    %v856 = vand.u32 2147483647, %v483
    %vm857 = vcmp.le.f32.partialorder %v856, 0.7853982
    %vm858 = vcmp.lt.s32.totalorder %v483, 0
    %v859 = vand.u32 %v483, 2139095040
    %v860 = vshrl.u32 %v859, 23
    %v861 = vsub.s32 %v860, 127
    %v862 = vand.u32 2147483647, %v483
    %v863 = vand.u32 %v862, 8388607
    %v864 = vor.u32 %v863, 8388608
    %v865 = vsub.s32 0, %v864
    %v866 = vadd.s32 %v861, 1
    %vm867 = vcmp.gt.s32.totalorder %v866, 0
    %v868 = vsel %vm867, %v866, 0
    %v869 = vshrl.u32 %v868, 5
    %v870 = vand.u32 %v868, 31
    %v871 = vsub.s32 32, %v870
    %v872 = vshrl.u32 683565275, %v871
    %v873 = vshll.u32 683565275, %v870
    %v874 = vshrl.u32 2475754826, %v871
    %v875 = vor.u32 %v873, %v874
    %v876 = vshll.u32 2475754826, %v870
    %v877 = vshrl.u32 2131351028, %v871
    %v878 = vor.u32 %v876, %v877
    %v879 = vshll.u32 2131351028, %v870
    %v880 = vshrl.u32 2102212464, %v871
    %v881 = vor.u32 %v879, %v880
    %v882 = vshll.u32 2102212464, %v870
    %v883 = vshrl.u32 920167782, %v871
    %v884 = vor.u32 %v882, %v883
    %v885 = vshll.u32 920167782, %v870
    %v886 = vshrl.u32 1326507024, %v871
    %v887 = vor.u32 %v885, %v886
    %vm888 = vcmp.lt.s32.totalorder %v869, 1
    %vm889 = vcmp.lt.s32.totalorder %v869, 2
    %vm890 = vcmp.lt.s32.totalorder %v869, 3
    %vm891 = vcmp.lt.s32.totalorder %v869, 4
    %v892 = vsel %vm888, %v872, %v875
    %v893 = vsel %vm891, %v881, 2102212464
    %v894 = vsel %vm890, %v878, %v893
    %v895 = vsel %vm889, %v892, %v894
    %v896 = vsel %vm888, %v875, %v878
    %v897 = vsel %vm891, %v884, 920167782
    %v898 = vsel %vm890, %v881, %v897
    %v899 = vsel %vm889, %v896, %v898
    %v900 = vsel %vm888, %v878, %v881
    %v901 = vsel %vm891, %v887, 1326507024
    %v902 = vsel %vm890, %v884, %v901
    %v903 = vsel %vm889, %v900, %v902
    %v904 = vshll.u32 %v864, 8
    %v905 = vmul.u32.u64.compose %v904, %v903
    %v906 = vextract.low.u32 %v905
    %v907 = vextract.high.u32 %v905
    %v908 = vmul.u32.u64.compose %v904, %v899
    %v909 = vextract.low.u32 %v908
    %v910 = vextract.high.u32 %v908
    %v911 = vmul.u32 %v904, %v895
    %v912 = vadd.s32 %v907, %v909
    %vm913 = vc.u32 %v907, %v909
    %v914 = vadd.s32 %v910, 1
    %v915 = vsel %vm913, %v914, %v910
    %v916 = vadd.s32 %v911, %v915
    %v917 = vadd.s32 %v916, 536870912
    %v918 = vshrl.u32 %v917, 30
    %v919 = vshll.u32 %v918, 30
    %v920 = vsub.s32 %v916, %v919
    %vm921 = vcmp.lt.s32.totalorder %v920, 0
    %v922 = vsub.s32 0, %v920
    %v923 = vsel %vm921, %v922, %v920
    %v924 = vclz %v923
    %v925 = vsub.s32 %v924, 2
    %vm926 = vcmp.gt.s32.totalorder 0, %v925
    %v927 = vsel %vm926, 0, %v925
    %v928 = vsub.s32 32, %v927
    %v929 = vshll.u32 %v920, %v927
    %v930 = vshrl.u32 %v912, %v928
    %v931 = vor.u32 %v929, %v930
    %v932 = vsub.s32 4294967266, %v927
    %v933 = vadd.s32 %v932, 127
    %v934 = vshll.u32 %v933, 23
    %v935 = vor.u32 4788187, %v934
    %v936 = vand.u32 2147483647, %v935
    %v938 = vcvt.s32.f32 %v931
    %v939 = vmul.f32 %v938, %v936
    %v940 = vxor.u32 %v939, 2147483648
    %v941 = vsel %vm858, %v940, %v939
    %v942 = vsub.s32 4, %v918
    %v943 = vsel %vm858, %v942, %v918
    %v944 = vsel %vm857, %v483, %v941
    %v945 = vsel %vm857, 0, %v943
    %v946 = vcosq.f32.pop %v944
    %v947 = vsinq.f32.pop %v944
    %vm948 = vweird.f32 %v483
    %v949 = vadd.s32 %v945, 3
    %v950 = vand.u32 %v949, 3
    %vm951 = vcmp.lt.s32.totalorder %v950, 2
    %vm952 = vcmp.eq.s32.totalorder %v950, 0
    %v953 = vxor.u32 %v947, 2147483648
    %v954 = vsel %vm952, %v946, %v953
    %vm955 = vcmp.eq.s32.totalorder %v950, 2
    %v956 = vxor.u32 %v946, 2147483648
    %v957 = vsel %vm955, %v956, %v947
    %v958 = vsel %vm951, %v954, %v957
    %v959 = vsel %vm948, nan, %v958
    %v960 = vand.u32 2147483647, %v484
    %vm961 = vcmp.le.f32.partialorder %v960, 0.7853982
    %vm962 = vcmp.lt.s32.totalorder %v484, 0
    %v963 = vand.u32 %v484, 2139095040
    %v964 = vshrl.u32 %v963, 23
    %v965 = vsub.s32 %v964, 127
    %v966 = vand.u32 2147483647, %v484
    %v967 = vand.u32 %v966, 8388607
    %v968 = vor.u32 %v967, 8388608
    %v969 = vsub.s32 0, %v968
    %v970 = vadd.s32 %v965, 1
    %vm971 = vcmp.gt.s32.totalorder %v970, 0
    %v972 = vsel %vm971, %v970, 0
    %v973 = vshrl.u32 %v972, 5
    %v974 = vand.u32 %v972, 31
    %v975 = vsub.s32 32, %v974
    %v976 = vshrl.u32 683565275, %v975
    %v977 = vshll.u32 683565275, %v974
    %v978 = vshrl.u32 2475754826, %v975
    %v979 = vor.u32 %v977, %v978
    %v980 = vshll.u32 2475754826, %v974
    %v981 = vshrl.u32 2131351028, %v975
    %v982 = vor.u32 %v980, %v981
    %v983 = vshll.u32 2131351028, %v974
    %v984 = vshrl.u32 2102212464, %v975
    %v985 = vor.u32 %v983, %v984
    %v986 = vshll.u32 2102212464, %v974
    %v987 = vshrl.u32 920167782, %v975
    %v988 = vor.u32 %v986, %v987
    %v989 = vshll.u32 920167782, %v974
    %v990 = vshrl.u32 1326507024, %v975
    %v991 = vor.u32 %v989, %v990
    %vm992 = vcmp.lt.s32.totalorder %v973, 1
    %vm993 = vcmp.lt.s32.totalorder %v973, 2
    %vm994 = vcmp.lt.s32.totalorder %v973, 3
    %vm995 = vcmp.lt.s32.totalorder %v973, 4
    %v996 = vsel %vm992, %v976, %v979
    %v997 = vsel %vm995, %v985, 2102212464
    %v998 = vsel %vm994, %v982, %v997
    %v999 = vsel %vm993, %v996, %v998
    %v1000 = vsel %vm992, %v979, %v982
    %v1001 = vsel %vm995, %v988, 920167782
    %v1002 = vsel %vm994, %v985, %v1001
    %v1003 = vsel %vm993, %v1000, %v1002
    %v1004 = vsel %vm992, %v982, %v985
    %v1005 = vsel %vm995, %v991, 1326507024
    %v1006 = vsel %vm994, %v988, %v1005
    %v1007 = vsel %vm993, %v1004, %v1006
    %v1008 = vshll.u32 %v968, 8
    %v1009 = vmul.u32.u64.compose %v1008, %v1007
    %v1010 = vextract.low.u32 %v1009
    %v1011 = vextract.high.u32 %v1009
    %v1012 = vmul.u32.u64.compose %v1008, %v1003
    %v1013 = vextract.low.u32 %v1012
    %v1014 = vextract.high.u32 %v1012
    %v1015 = vmul.u32 %v1008, %v999
    %v1016 = vadd.s32 %v1011, %v1013
    %vm1017 = vc.u32 %v1011, %v1013
    %v1018 = vadd.s32 %v1014, 1
    %v1019 = vsel %vm1017, %v1018, %v1014
    %v1020 = vadd.s32 %v1015, %v1019
    %v1021 = vadd.s32 %v1020, 536870912
    %v1022 = vshrl.u32 %v1021, 30
    %v1023 = vshll.u32 %v1022, 30
    %v1024 = vsub.s32 %v1020, %v1023
    %vm1025 = vcmp.lt.s32.totalorder %v1024, 0
    %v1026 = vsub.s32 0, %v1024
    %v1027 = vsel %vm1025, %v1026, %v1024
    %v1028 = vclz %v1027
    %v1029 = vsub.s32 %v1028, 2
    %vm1030 = vcmp.gt.s32.totalorder 0, %v1029
    %v1031 = vsel %vm1030, 0, %v1029
    %v1032 = vsub.s32 32, %v1031
    %v1033 = vshll.u32 %v1024, %v1031
    %v1034 = vshrl.u32 %v1016, %v1032
    %v1035 = vor.u32 %v1033, %v1034
    %v1036 = vsub.s32 4294967266, %v1031
    %v1037 = vadd.s32 %v1036, 127
    %v1038 = vshll.u32 %v1037, 23
    %v1039 = vor.u32 4788187, %v1038
    %v1040 = vand.u32 2147483647, %v1039
    %v1042 = vcvt.s32.f32 %v1035
    %v1043 = vmul.f32 %v1042, %v1040
    %v1044 = vxor.u32 %v1043, 2147483648
    %v1045 = vsel %vm962, %v1044, %v1043
    %v1046 = vsub.s32 4, %v1022
    %v1047 = vsel %vm962, %v1046, %v1022
    %v1048 = vsel %vm961, %v484, %v1045
    %v1049 = vsel %vm961, 0, %v1047
    %v1050 = vcosq.f32.pop %v1048
    %v1051 = vsinq.f32.pop %v1048
    %vm1052 = vweird.f32 %v484
    %v1053 = vadd.s32 %v1049, 3
    %v1054 = vand.u32 %v1053, 3
    %vm1055 = vcmp.lt.s32.totalorder %v1054, 2
    %vm1056 = vcmp.eq.s32.totalorder %v1054, 0
    %v1057 = vxor.u32 %v1051, 2147483648
    %v1058 = vsel %vm1056, %v1050, %v1057
    %vm1059 = vcmp.eq.s32.totalorder %v1054, 2
    %v1060 = vxor.u32 %v1050, 2147483648
    %v1061 = vsel %vm1059, %v1060, %v1051
    %v1062 = vsel %vm1055, %v1058, %v1061
    %v1063 = vsel %vm1052, nan, %v1062
    %v1064 = vand.u32 2147483647, %v485
    %vm1065 = vcmp.le.f32.partialorder %v1064, 0.7853982
    %vm1066 = vcmp.lt.s32.totalorder %v485, 0
    %v1067 = vand.u32 %v485, 2139095040
    %v1068 = vshrl.u32 %v1067, 23
    %v1069 = vsub.s32 %v1068, 127
    %v1070 = vand.u32 2147483647, %v485
    %v1071 = vand.u32 %v1070, 8388607
    %v1072 = vor.u32 %v1071, 8388608
    %v1073 = vsub.s32 0, %v1072
    %v1074 = vadd.s32 %v1069, 1
    %vm1075 = vcmp.gt.s32.totalorder %v1074, 0
    %v1076 = vsel %vm1075, %v1074, 0
    %v1077 = vshrl.u32 %v1076, 5
    %v1078 = vand.u32 %v1076, 31
    %v1079 = vsub.s32 32, %v1078
    %v1080 = vshrl.u32 683565275, %v1079
    %v1081 = vshll.u32 683565275, %v1078
    %v1082 = vshrl.u32 2475754826, %v1079
    %v1083 = vor.u32 %v1081, %v1082
    %v1084 = vshll.u32 2475754826, %v1078
    %v1085 = vshrl.u32 2131351028, %v1079
    %v1086 = vor.u32 %v1084, %v1085
    %v1087 = vshll.u32 2131351028, %v1078
    %v1088 = vshrl.u32 2102212464, %v1079
    %v1089 = vor.u32 %v1087, %v1088
    %v1090 = vshll.u32 2102212464, %v1078
    %v1091 = vshrl.u32 920167782, %v1079
    %v1092 = vor.u32 %v1090, %v1091
    %v1093 = vshll.u32 920167782, %v1078
    %v1094 = vshrl.u32 1326507024, %v1079
    %v1095 = vor.u32 %v1093, %v1094
    %vm1096 = vcmp.lt.s32.totalorder %v1077, 1
    %vm1097 = vcmp.lt.s32.totalorder %v1077, 2
    %vm1098 = vcmp.lt.s32.totalorder %v1077, 3
    %vm1099 = vcmp.lt.s32.totalorder %v1077, 4
    %v1100 = vsel %vm1096, %v1080, %v1083
    %v1101 = vsel %vm1099, %v1089, 2102212464
    %v1102 = vsel %vm1098, %v1086, %v1101
    %v1103 = vsel %vm1097, %v1100, %v1102
    %v1104 = vsel %vm1096, %v1083, %v1086
    %v1105 = vsel %vm1099, %v1092, 920167782
    %v1106 = vsel %vm1098, %v1089, %v1105
    %v1107 = vsel %vm1097, %v1104, %v1106
    %v1108 = vsel %vm1096, %v1086, %v1089
    %v1109 = vsel %vm1099, %v1095, 1326507024
    %v1110 = vsel %vm1098, %v1092, %v1109
    %v1111 = vsel %vm1097, %v1108, %v1110
    %v1112 = vshll.u32 %v1072, 8
    %v1113 = vmul.u32.u64.compose %v1112, %v1111
    %v1114 = vextract.low.u32 %v1113
    %v1115 = vextract.high.u32 %v1113
    %v1116 = vmul.u32.u64.compose %v1112, %v1107
    %v1117 = vextract.low.u32 %v1116
    %v1118 = vextract.high.u32 %v1116
    %v1119 = vmul.u32 %v1112, %v1103
    %v1120 = vadd.s32 %v1115, %v1117
    %vm1121 = vc.u32 %v1115, %v1117
    %v1122 = vadd.s32 %v1118, 1
    %v1123 = vsel %vm1121, %v1122, %v1118
    %v1124 = vadd.s32 %v1119, %v1123
    %v1125 = vadd.s32 %v1124, 536870912
    %v1126 = vshrl.u32 %v1125, 30
    %v1127 = vshll.u32 %v1126, 30
    %v1128 = vsub.s32 %v1124, %v1127
    %vm1129 = vcmp.lt.s32.totalorder %v1128, 0
    %v1130 = vsub.s32 0, %v1128
    %v1131 = vsel %vm1129, %v1130, %v1128
    %v1132 = vclz %v1131
    %v1133 = vsub.s32 %v1132, 2
    %vm1134 = vcmp.gt.s32.totalorder 0, %v1133
    %v1135 = vsel %vm1134, 0, %v1133
    %v1136 = vsub.s32 32, %v1135
    %v1137 = vshll.u32 %v1128, %v1135
    %v1138 = vshrl.u32 %v1120, %v1136
    %v1139 = vor.u32 %v1137, %v1138
    %v1140 = vsub.s32 4294967266, %v1135
    %v1141 = vadd.s32 %v1140, 127
    %v1142 = vshll.u32 %v1141, 23
    %v1143 = vor.u32 4788187, %v1142
    %v1144 = vand.u32 2147483647, %v1143
    %v1146 = vcvt.s32.f32 %v1139
    %v1147 = vmul.f32 %v1146, %v1144
    %v1148 = vxor.u32 %v1147, 2147483648
    %v1149 = vsel %vm1066, %v1148, %v1147
    %v1150 = vsub.s32 4, %v1126
    %v1151 = vsel %vm1066, %v1150, %v1126
    %v1152 = vsel %vm1065, %v485, %v1149
    %v1153 = vsel %vm1065, 0, %v1151
    %v1154 = vcosq.f32.pop %v1152
    %v1155 = vsinq.f32.pop %v1152
    %vm1156 = vweird.f32 %v485
    %v1157 = vadd.s32 %v1153, 3
    %v1158 = vand.u32 %v1157, 3
    %vm1159 = vcmp.lt.s32.totalorder %v1158, 2
    %vm1160 = vcmp.eq.s32.totalorder %v1158, 0
    %v1161 = vxor.u32 %v1155, 2147483648
    %v1162 = vsel %vm1160, %v1154, %v1161
    %vm1163 = vcmp.eq.s32.totalorder %v1158, 2
    %v1164 = vxor.u32 %v1154, 2147483648
    %v1165 = vsel %vm1163, %v1164, %v1155
    %v1166 = vsel %vm1159, %v1162, %v1165
    %v1167 = vsel %vm1156, nan, %v1166
    %v1168 = vand.u32 2147483647, %v486
    %vm1169 = vcmp.le.f32.partialorder %v1168, 0.7853982
    %vm1170 = vcmp.lt.s32.totalorder %v486, 0
    %v1171 = vand.u32 %v486, 2139095040
    %v1172 = vshrl.u32 %v1171, 23
    %v1173 = vsub.s32 %v1172, 127
    %v1174 = vand.u32 2147483647, %v486
    %v1175 = vand.u32 %v1174, 8388607
    %v1176 = vor.u32 %v1175, 8388608
    %v1177 = vsub.s32 0, %v1176
    %v1178 = vadd.s32 %v1173, 1
    %vm1179 = vcmp.gt.s32.totalorder %v1178, 0
    %v1180 = vsel %vm1179, %v1178, 0
    %v1181 = vshrl.u32 %v1180, 5
    %v1182 = vand.u32 %v1180, 31
    %v1183 = vsub.s32 32, %v1182
    %v1184 = vshrl.u32 683565275, %v1183
    %v1185 = vshll.u32 683565275, %v1182
    %v1186 = vshrl.u32 2475754826, %v1183
    %v1187 = vor.u32 %v1185, %v1186
    %v1188 = vshll.u32 2475754826, %v1182
    %v1189 = vshrl.u32 2131351028, %v1183
    %v1190 = vor.u32 %v1188, %v1189
    %v1191 = vshll.u32 2131351028, %v1182
    %v1192 = vshrl.u32 2102212464, %v1183
    %v1193 = vor.u32 %v1191, %v1192
    %v1194 = vshll.u32 2102212464, %v1182
    %v1195 = vshrl.u32 920167782, %v1183
    %v1196 = vor.u32 %v1194, %v1195
    %v1197 = vshll.u32 920167782, %v1182
    %v1198 = vshrl.u32 1326507024, %v1183
    %v1199 = vor.u32 %v1197, %v1198
    %vm1200 = vcmp.lt.s32.totalorder %v1181, 1
    %vm1201 = vcmp.lt.s32.totalorder %v1181, 2
    %vm1202 = vcmp.lt.s32.totalorder %v1181, 3
    %vm1203 = vcmp.lt.s32.totalorder %v1181, 4
    %v1204 = vsel %vm1200, %v1184, %v1187
    %v1205 = vsel %vm1203, %v1193, 2102212464
    %v1206 = vsel %vm1202, %v1190, %v1205
    %v1207 = vsel %vm1201, %v1204, %v1206
    %v1208 = vsel %vm1200, %v1187, %v1190
    %v1209 = vsel %vm1203, %v1196, 920167782
    %v1210 = vsel %vm1202, %v1193, %v1209
    %v1211 = vsel %vm1201, %v1208, %v1210
    %v1212 = vsel %vm1200, %v1190, %v1193
    %v1213 = vsel %vm1203, %v1199, 1326507024
    %v1214 = vsel %vm1202, %v1196, %v1213
    %v1215 = vsel %vm1201, %v1212, %v1214
    %v1216 = vshll.u32 %v1176, 8
    %v1217 = vmul.u32.u64.compose %v1216, %v1215
    %v1218 = vextract.low.u32 %v1217
    %v1219 = vextract.high.u32 %v1217
    %v1220 = vmul.u32.u64.compose %v1216, %v1211
    %v1221 = vextract.low.u32 %v1220
    %v1222 = vextract.high.u32 %v1220
    %v1223 = vmul.u32 %v1216, %v1207
    %v1224 = vadd.s32 %v1219, %v1221
    %vm1225 = vc.u32 %v1219, %v1221
    %v1226 = vadd.s32 %v1222, 1
    %v1227 = vsel %vm1225, %v1226, %v1222
    %v1228 = vadd.s32 %v1223, %v1227
    %v1229 = vadd.s32 %v1228, 536870912
    %v1230 = vshrl.u32 %v1229, 30
    %v1231 = vshll.u32 %v1230, 30
    %v1232 = vsub.s32 %v1228, %v1231
    %vm1233 = vcmp.lt.s32.totalorder %v1232, 0
    %v1234 = vsub.s32 0, %v1232
    %v1235 = vsel %vm1233, %v1234, %v1232
    %v1236 = vclz %v1235
    %v1237 = vsub.s32 %v1236, 2
    %vm1238 = vcmp.gt.s32.totalorder 0, %v1237
    %v1239 = vsel %vm1238, 0, %v1237
    %v1240 = vsub.s32 32, %v1239
    %v1241 = vshll.u32 %v1232, %v1239
    %v1242 = vshrl.u32 %v1224, %v1240
    %v1243 = vor.u32 %v1241, %v1242
    %v1244 = vsub.s32 4294967266, %v1239
    %v1245 = vadd.s32 %v1244, 127
    %v1246 = vshll.u32 %v1245, 23
    %v1247 = vor.u32 4788187, %v1246
    %v1248 = vand.u32 2147483647, %v1247
    %v1250 = vcvt.s32.f32 %v1243
    %v1251 = vmul.f32 %v1250, %v1248
    %v1252 = vxor.u32 %v1251, 2147483648
    %v1253 = vsel %vm1170, %v1252, %v1251
    %v1254 = vsub.s32 4, %v1230
    %v1255 = vsel %vm1170, %v1254, %v1230
    %v1256 = vsel %vm1169, %v486, %v1253
    %v1257 = vsel %vm1169, 0, %v1255
    %v1258 = vcosq.f32.pop %v1256
    %v1259 = vsinq.f32.pop %v1256
    %vm1260 = vweird.f32 %v486
    %v1261 = vadd.s32 %v1257, 3
    %v1262 = vand.u32 %v1261, 3
    %vm1263 = vcmp.lt.s32.totalorder %v1262, 2
    %vm1264 = vcmp.eq.s32.totalorder %v1262, 0
    %v1265 = vxor.u32 %v1259, 2147483648
    %v1266 = vsel %vm1264, %v1258, %v1265
    %vm1267 = vcmp.eq.s32.totalorder %v1262, 2
    %v1268 = vxor.u32 %v1258, 2147483648
    %v1269 = vsel %vm1267, %v1268, %v1259
    %v1270 = vsel %vm1263, %v1266, %v1269
    %v1271 = vsel %vm1260, nan, %v1270
    %v1272 = vand.u32 2147483647, %v487
    %vm1273 = vcmp.le.f32.partialorder %v1272, 0.7853982
    %vm1274 = vcmp.lt.s32.totalorder %v487, 0
    %v1275 = vand.u32 %v487, 2139095040
    %v1276 = vshrl.u32 %v1275, 23
    %v1277 = vsub.s32 %v1276, 127
    %v1278 = vand.u32 2147483647, %v487
    %v1279 = vand.u32 %v1278, 8388607
    %v1280 = vor.u32 %v1279, 8388608
    %v1281 = vsub.s32 0, %v1280
    %v1282 = vadd.s32 %v1277, 1
    %vm1283 = vcmp.gt.s32.totalorder %v1282, 0
    %v1284 = vsel %vm1283, %v1282, 0
    %v1285 = vshrl.u32 %v1284, 5
    %v1286 = vand.u32 %v1284, 31
    %v1287 = vsub.s32 32, %v1286
    %v1288 = vshrl.u32 683565275, %v1287
    %v1289 = vshll.u32 683565275, %v1286
    %v1290 = vshrl.u32 2475754826, %v1287
    %v1291 = vor.u32 %v1289, %v1290
    %v1292 = vshll.u32 2475754826, %v1286
    %v1293 = vshrl.u32 2131351028, %v1287
    %v1294 = vor.u32 %v1292, %v1293
    %v1295 = vshll.u32 2131351028, %v1286
    %v1296 = vshrl.u32 2102212464, %v1287
    %v1297 = vor.u32 %v1295, %v1296
    %v1298 = vshll.u32 2102212464, %v1286
    %v1299 = vshrl.u32 920167782, %v1287
    %v1300 = vor.u32 %v1298, %v1299
    %v1301 = vshll.u32 920167782, %v1286
    %v1302 = vshrl.u32 1326507024, %v1287
    %v1303 = vor.u32 %v1301, %v1302
    %vm1304 = vcmp.lt.s32.totalorder %v1285, 1
    %vm1305 = vcmp.lt.s32.totalorder %v1285, 2
    %vm1306 = vcmp.lt.s32.totalorder %v1285, 3
    %vm1307 = vcmp.lt.s32.totalorder %v1285, 4
    %v1308 = vsel %vm1304, %v1288, %v1291
    %v1309 = vsel %vm1307, %v1297, 2102212464
    %v1310 = vsel %vm1306, %v1294, %v1309
    %v1311 = vsel %vm1305, %v1308, %v1310
    %v1312 = vsel %vm1304, %v1291, %v1294
    %v1313 = vsel %vm1307, %v1300, 920167782
    %v1314 = vsel %vm1306, %v1297, %v1313
    %v1315 = vsel %vm1305, %v1312, %v1314
    %v1316 = vsel %vm1304, %v1294, %v1297
    %v1317 = vsel %vm1307, %v1303, 1326507024
    %v1318 = vsel %vm1306, %v1300, %v1317
    %v1319 = vsel %vm1305, %v1316, %v1318
    %v1320 = vshll.u32 %v1280, 8
    %v1321 = vmul.u32.u64.compose %v1320, %v1319
    %v1322 = vextract.low.u32 %v1321
    %v1323 = vextract.high.u32 %v1321
    %v1324 = vmul.u32.u64.compose %v1320, %v1315
    %v1325 = vextract.low.u32 %v1324
    %v1326 = vextract.high.u32 %v1324
    %v1327 = vmul.u32 %v1320, %v1311
    %v1328 = vadd.s32 %v1323, %v1325
    %vm1329 = vc.u32 %v1323, %v1325
    %v1330 = vadd.s32 %v1326, 1
    %v1331 = vsel %vm1329, %v1330, %v1326
    %v1332 = vadd.s32 %v1327, %v1331
    %v1333 = vadd.s32 %v1332, 536870912
    %v1334 = vshrl.u32 %v1333, 30
    %v1335 = vshll.u32 %v1334, 30
    %v1336 = vsub.s32 %v1332, %v1335
    %vm1337 = vcmp.lt.s32.totalorder %v1336, 0
    %v1338 = vsub.s32 0, %v1336
    %v1339 = vsel %vm1337, %v1338, %v1336
    %v1340 = vclz %v1339
    %v1341 = vsub.s32 %v1340, 2
    %vm1342 = vcmp.gt.s32.totalorder 0, %v1341
    %v1343 = vsel %vm1342, 0, %v1341
    %v1344 = vsub.s32 32, %v1343
    %v1345 = vshll.u32 %v1336, %v1343
    %v1346 = vshrl.u32 %v1328, %v1344
    %v1347 = vor.u32 %v1345, %v1346
    %v1348 = vsub.s32 4294967266, %v1343
    %v1349 = vadd.s32 %v1348, 127
    %v1350 = vshll.u32 %v1349, 23
    %v1351 = vor.u32 4788187, %v1350
    %v1352 = vand.u32 2147483647, %v1351
    %v1354 = vcvt.s32.f32 %v1347
    %v1355 = vmul.f32 %v1354, %v1352
    %v1356 = vxor.u32 %v1355, 2147483648
    %v1357 = vsel %vm1274, %v1356, %v1355
    %v1358 = vsub.s32 4, %v1334
    %v1359 = vsel %vm1274, %v1358, %v1334
    %v1360 = vsel %vm1273, %v487, %v1357
    %v1361 = vsel %vm1273, 0, %v1359
    %v1362 = vcosq.f32.pop %v1360
    %v1363 = vsinq.f32.pop %v1360
    %vm1364 = vweird.f32 %v487
    %v1365 = vadd.s32 %v1361, 3
    %v1366 = vand.u32 %v1365, 3
    %vm1367 = vcmp.lt.s32.totalorder %v1366, 2
    %vm1368 = vcmp.eq.s32.totalorder %v1366, 0
    %v1369 = vxor.u32 %v1363, 2147483648
    %v1370 = vsel %vm1368, %v1362, %v1369
    %vm1371 = vcmp.eq.s32.totalorder %v1366, 2
    %v1372 = vxor.u32 %v1362, 2147483648
    %v1373 = vsel %vm1371, %v1372, %v1363
    %v1374 = vsel %vm1367, %v1370, %v1373
    %v1375 = vsel %vm1364, nan, %v1374
    %v1376 = vand.u32 2147483647, %v488
    %vm1377 = vcmp.le.f32.partialorder %v1376, 0.7853982
    %vm1378 = vcmp.lt.s32.totalorder %v488, 0
    %v1379 = vand.u32 %v488, 2139095040
    %v1380 = vshrl.u32 %v1379, 23
    %v1381 = vsub.s32 %v1380, 127
    %v1382 = vand.u32 2147483647, %v488
    %v1383 = vand.u32 %v1382, 8388607
    %v1384 = vor.u32 %v1383, 8388608
    %v1385 = vsub.s32 0, %v1384
    %v1386 = vadd.s32 %v1381, 1
    %vm1387 = vcmp.gt.s32.totalorder %v1386, 0
    %v1388 = vsel %vm1387, %v1386, 0
    %v1389 = vshrl.u32 %v1388, 5
    %v1390 = vand.u32 %v1388, 31
    %v1391 = vsub.s32 32, %v1390
    %v1392 = vshrl.u32 683565275, %v1391
    %v1393 = vshll.u32 683565275, %v1390
    %v1394 = vshrl.u32 2475754826, %v1391
    %v1395 = vor.u32 %v1393, %v1394
    %v1396 = vshll.u32 2475754826, %v1390
    %v1397 = vshrl.u32 2131351028, %v1391
    %v1398 = vor.u32 %v1396, %v1397
    %v1399 = vshll.u32 2131351028, %v1390
    %v1400 = vshrl.u32 2102212464, %v1391
    %v1401 = vor.u32 %v1399, %v1400
    %v1402 = vshll.u32 2102212464, %v1390
    %v1403 = vshrl.u32 920167782, %v1391
    %v1404 = vor.u32 %v1402, %v1403
    %v1405 = vshll.u32 920167782, %v1390
    %v1406 = vshrl.u32 1326507024, %v1391
    %v1407 = vor.u32 %v1405, %v1406
    %vm1408 = vcmp.lt.s32.totalorder %v1389, 1
    %vm1409 = vcmp.lt.s32.totalorder %v1389, 2
    %vm1410 = vcmp.lt.s32.totalorder %v1389, 3
    %vm1411 = vcmp.lt.s32.totalorder %v1389, 4
    %v1412 = vsel %vm1408, %v1392, %v1395
    %v1413 = vsel %vm1411, %v1401, 2102212464
    %v1414 = vsel %vm1410, %v1398, %v1413
    %v1415 = vsel %vm1409, %v1412, %v1414
    %v1416 = vsel %vm1408, %v1395, %v1398
    %v1417 = vsel %vm1411, %v1404, 920167782
    %v1418 = vsel %vm1410, %v1401, %v1417
    %v1419 = vsel %vm1409, %v1416, %v1418
    %v1420 = vsel %vm1408, %v1398, %v1401
    %v1421 = vsel %vm1411, %v1407, 1326507024
    %v1422 = vsel %vm1410, %v1404, %v1421
    %v1423 = vsel %vm1409, %v1420, %v1422
    %v1424 = vshll.u32 %v1384, 8
    %v1425 = vmul.u32.u64.compose %v1424, %v1423
    %v1426 = vextract.low.u32 %v1425
    %v1427 = vextract.high.u32 %v1425
    %v1428 = vmul.u32.u64.compose %v1424, %v1419
    %v1429 = vextract.low.u32 %v1428
    %v1430 = vextract.high.u32 %v1428
    %v1431 = vmul.u32 %v1424, %v1415
    %v1432 = vadd.s32 %v1427, %v1429
    %vm1433 = vc.u32 %v1427, %v1429
    %v1434 = vadd.s32 %v1430, 1
    %v1435 = vsel %vm1433, %v1434, %v1430
    %v1436 = vadd.s32 %v1431, %v1435
    %v1437 = vadd.s32 %v1436, 536870912
    %v1438 = vshrl.u32 %v1437, 30
    %v1439 = vshll.u32 %v1438, 30
    %v1440 = vsub.s32 %v1436, %v1439
    %vm1441 = vcmp.lt.s32.totalorder %v1440, 0
    %v1442 = vsub.s32 0, %v1440
    %v1443 = vsel %vm1441, %v1442, %v1440
    %v1444 = vclz %v1443
    %v1445 = vsub.s32 %v1444, 2
    %vm1446 = vcmp.gt.s32.totalorder 0, %v1445
    %v1447 = vsel %vm1446, 0, %v1445
    %v1448 = vsub.s32 32, %v1447
    %v1449 = vshll.u32 %v1440, %v1447
    %v1450 = vshrl.u32 %v1432, %v1448
    %v1451 = vor.u32 %v1449, %v1450
    %v1452 = vsub.s32 4294967266, %v1447
    %v1453 = vadd.s32 %v1452, 127
    %v1454 = vshll.u32 %v1453, 23
    %v1455 = vor.u32 4788187, %v1454
    %v1456 = vand.u32 2147483647, %v1455
    %v1458 = vcvt.s32.f32 %v1451
    %v1459 = vmul.f32 %v1458, %v1456
    %v1460 = vxor.u32 %v1459, 2147483648
    %v1461 = vsel %vm1378, %v1460, %v1459
    %v1462 = vsub.s32 4, %v1438
    %v1463 = vsel %vm1378, %v1462, %v1438
    %v1464 = vsel %vm1377, %v488, %v1461
    %v1465 = vsel %vm1377, 0, %v1463
    %v1466 = vcosq.f32.pop %v1464
    %v1467 = vsinq.f32.pop %v1464
    %vm1468 = vweird.f32 %v488
    %v1469 = vadd.s32 %v1465, 3
    %v1470 = vand.u32 %v1469, 3
    %vm1471 = vcmp.lt.s32.totalorder %v1470, 2
    %vm1472 = vcmp.eq.s32.totalorder %v1470, 0
    %v1473 = vxor.u32 %v1467, 2147483648
    %v1474 = vsel %vm1472, %v1466, %v1473
    %vm1475 = vcmp.eq.s32.totalorder %v1470, 2
    %v1476 = vxor.u32 %v1466, 2147483648
    %v1477 = vsel %vm1475, %v1476, %v1467
    %v1478 = vsel %vm1471, %v1474, %v1477
    %v1479 = vsel %vm1468, nan, %v1478
    %v1480 = vand.u32 2147483647, %v489
    %vm1481 = vcmp.le.f32.partialorder %v1480, 0.7853982
    %vm1482 = vcmp.lt.s32.totalorder %v489, 0
    %v1483 = vand.u32 %v489, 2139095040
    %v1484 = vshrl.u32 %v1483, 23
    %v1485 = vsub.s32 %v1484, 127
    %v1486 = vand.u32 2147483647, %v489
    %v1487 = vand.u32 %v1486, 8388607
    %v1488 = vor.u32 %v1487, 8388608
    %v1489 = vsub.s32 0, %v1488
    %v1490 = vadd.s32 %v1485, 1
    %vm1491 = vcmp.gt.s32.totalorder %v1490, 0
    %v1492 = vsel %vm1491, %v1490, 0
    %v1493 = vshrl.u32 %v1492, 5
    %v1494 = vand.u32 %v1492, 31
    %v1495 = vsub.s32 32, %v1494
    %v1496 = vshrl.u32 683565275, %v1495
    %v1497 = vshll.u32 683565275, %v1494
    %v1498 = vshrl.u32 2475754826, %v1495
    %v1499 = vor.u32 %v1497, %v1498
    %v1500 = vshll.u32 2475754826, %v1494
    %v1501 = vshrl.u32 2131351028, %v1495
    %v1502 = vor.u32 %v1500, %v1501
    %v1503 = vshll.u32 2131351028, %v1494
    %v1504 = vshrl.u32 2102212464, %v1495
    %v1505 = vor.u32 %v1503, %v1504
    %v1506 = vshll.u32 2102212464, %v1494
    %v1507 = vshrl.u32 920167782, %v1495
    %v1508 = vor.u32 %v1506, %v1507
    %v1509 = vshll.u32 920167782, %v1494
    %v1510 = vshrl.u32 1326507024, %v1495
    %v1511 = vor.u32 %v1509, %v1510
    %vm1512 = vcmp.lt.s32.totalorder %v1493, 1
    %vm1513 = vcmp.lt.s32.totalorder %v1493, 2
    %vm1514 = vcmp.lt.s32.totalorder %v1493, 3
    %vm1515 = vcmp.lt.s32.totalorder %v1493, 4
    %v1516 = vsel %vm1512, %v1496, %v1499
    %v1517 = vsel %vm1515, %v1505, 2102212464
    %v1518 = vsel %vm1514, %v1502, %v1517
    %v1519 = vsel %vm1513, %v1516, %v1518
    %v1520 = vsel %vm1512, %v1499, %v1502
    %v1521 = vsel %vm1515, %v1508, 920167782
    %v1522 = vsel %vm1514, %v1505, %v1521
    %v1523 = vsel %vm1513, %v1520, %v1522
    %v1524 = vsel %vm1512, %v1502, %v1505
    %v1525 = vsel %vm1515, %v1511, 1326507024
    %v1526 = vsel %vm1514, %v1508, %v1525
    %v1527 = vsel %vm1513, %v1524, %v1526
    %v1528 = vshll.u32 %v1488, 8
    %v1529 = vmul.u32.u64.compose %v1528, %v1527
    %v1530 = vextract.low.u32 %v1529
    %v1531 = vextract.high.u32 %v1529
    %v1532 = vmul.u32.u64.compose %v1528, %v1523
    %v1533 = vextract.low.u32 %v1532
    %v1534 = vextract.high.u32 %v1532
    %v1535 = vmul.u32 %v1528, %v1519
    %v1536 = vadd.s32 %v1531, %v1533
    %vm1537 = vc.u32 %v1531, %v1533
    %v1538 = vadd.s32 %v1534, 1
    %v1539 = vsel %vm1537, %v1538, %v1534
    %v1540 = vadd.s32 %v1535, %v1539
    %v1541 = vadd.s32 %v1540, 536870912
    %v1542 = vshrl.u32 %v1541, 30
    %v1543 = vshll.u32 %v1542, 30
    %v1544 = vsub.s32 %v1540, %v1543
    %vm1545 = vcmp.lt.s32.totalorder %v1544, 0
    %v1546 = vsub.s32 0, %v1544
    %v1547 = vsel %vm1545, %v1546, %v1544
    %v1548 = vclz %v1547
    %v1549 = vsub.s32 %v1548, 2
    %vm1550 = vcmp.gt.s32.totalorder 0, %v1549
    %v1551 = vsel %vm1550, 0, %v1549
    %v1552 = vsub.s32 32, %v1551
    %v1553 = vshll.u32 %v1544, %v1551
    %v1554 = vshrl.u32 %v1536, %v1552
    %v1555 = vor.u32 %v1553, %v1554
    %v1556 = vsub.s32 4294967266, %v1551
    %v1557 = vadd.s32 %v1556, 127
    %v1558 = vshll.u32 %v1557, 23
    %v1559 = vor.u32 4788187, %v1558
    %v1560 = vand.u32 2147483647, %v1559
    %v1562 = vcvt.s32.f32 %v1555
    %v1563 = vmul.f32 %v1562, %v1560
    %v1564 = vxor.u32 %v1563, 2147483648
    %v1565 = vsel %vm1482, %v1564, %v1563
    %v1566 = vsub.s32 4, %v1542
    %v1567 = vsel %vm1482, %v1566, %v1542
    %v1568 = vsel %vm1481, %v489, %v1565
    %v1569 = vsel %vm1481, 0, %v1567
    %v1570 = vcosq.f32.pop %v1568
    %v1571 = vsinq.f32.pop %v1568
    %vm1572 = vweird.f32 %v489
    %v1573 = vadd.s32 %v1569, 3
    %v1574 = vand.u32 %v1573, 3
    %vm1575 = vcmp.lt.s32.totalorder %v1574, 2
    %vm1576 = vcmp.eq.s32.totalorder %v1574, 0
    %v1577 = vxor.u32 %v1571, 2147483648
    %v1578 = vsel %vm1576, %v1570, %v1577
    %vm1579 = vcmp.eq.s32.totalorder %v1574, 2
    %v1580 = vxor.u32 %v1570, 2147483648
    %v1581 = vsel %vm1579, %v1580, %v1571
    %v1582 = vsel %vm1575, %v1578, %v1581
    %v1583 = vsel %vm1572, nan, %v1582
    %v1584 = vand.u32 2147483647, %v490
    %vm1585 = vcmp.le.f32.partialorder %v1584, 0.7853982
    %vm1586 = vcmp.lt.s32.totalorder %v490, 0
    %v1587 = vand.u32 %v490, 2139095040
    %v1588 = vshrl.u32 %v1587, 23
    %v1589 = vsub.s32 %v1588, 127
    %v1590 = vand.u32 2147483647, %v490
    %v1591 = vand.u32 %v1590, 8388607
    %v1592 = vor.u32 %v1591, 8388608
    %v1593 = vsub.s32 0, %v1592
    %v1594 = vadd.s32 %v1589, 1
    %vm1595 = vcmp.gt.s32.totalorder %v1594, 0
    %v1596 = vsel %vm1595, %v1594, 0
    %v1597 = vshrl.u32 %v1596, 5
    %v1598 = vand.u32 %v1596, 31
    %v1599 = vsub.s32 32, %v1598
    %v1600 = vshrl.u32 683565275, %v1599
    %v1601 = vshll.u32 683565275, %v1598
    %v1602 = vshrl.u32 2475754826, %v1599
    %v1603 = vor.u32 %v1601, %v1602
    %v1604 = vshll.u32 2475754826, %v1598
    %v1605 = vshrl.u32 2131351028, %v1599
    %v1606 = vor.u32 %v1604, %v1605
    %v1607 = vshll.u32 2131351028, %v1598
    %v1608 = vshrl.u32 2102212464, %v1599
    %v1609 = vor.u32 %v1607, %v1608
    %v1610 = vshll.u32 2102212464, %v1598
    %v1611 = vshrl.u32 920167782, %v1599
    %v1612 = vor.u32 %v1610, %v1611
    %v1613 = vshll.u32 920167782, %v1598
    %v1614 = vshrl.u32 1326507024, %v1599
    %v1615 = vor.u32 %v1613, %v1614
    %vm1616 = vcmp.lt.s32.totalorder %v1597, 1
    %vm1617 = vcmp.lt.s32.totalorder %v1597, 2
    %vm1618 = vcmp.lt.s32.totalorder %v1597, 3
    %vm1619 = vcmp.lt.s32.totalorder %v1597, 4
    %v1620 = vsel %vm1616, %v1600, %v1603
    %v1621 = vsel %vm1619, %v1609, 2102212464
    %v1622 = vsel %vm1618, %v1606, %v1621
    %v1623 = vsel %vm1617, %v1620, %v1622
    %v1624 = vsel %vm1616, %v1603, %v1606
    %v1625 = vsel %vm1619, %v1612, 920167782
    %v1626 = vsel %vm1618, %v1609, %v1625
    %v1627 = vsel %vm1617, %v1624, %v1626
    %v1628 = vsel %vm1616, %v1606, %v1609
    %v1629 = vsel %vm1619, %v1615, 1326507024
    %v1630 = vsel %vm1618, %v1612, %v1629
    %v1631 = vsel %vm1617, %v1628, %v1630
    %v1632 = vshll.u32 %v1592, 8
    %v1633 = vmul.u32.u64.compose %v1632, %v1631
    %v1634 = vextract.low.u32 %v1633
    %v1635 = vextract.high.u32 %v1633
    %v1636 = vmul.u32.u64.compose %v1632, %v1627
    %v1637 = vextract.low.u32 %v1636
    %v1638 = vextract.high.u32 %v1636
    %v1639 = vmul.u32 %v1632, %v1623
    %v1640 = vadd.s32 %v1635, %v1637
    %vm1641 = vc.u32 %v1635, %v1637
    %v1642 = vadd.s32 %v1638, 1
    %v1643 = vsel %vm1641, %v1642, %v1638
    %v1644 = vadd.s32 %v1639, %v1643
    %v1645 = vadd.s32 %v1644, 536870912
    %v1646 = vshrl.u32 %v1645, 30
    %v1647 = vshll.u32 %v1646, 30
    %v1648 = vsub.s32 %v1644, %v1647
    %vm1649 = vcmp.lt.s32.totalorder %v1648, 0
    %v1650 = vsub.s32 0, %v1648
    %v1651 = vsel %vm1649, %v1650, %v1648
    %v1652 = vclz %v1651
    %v1653 = vsub.s32 %v1652, 2
    %vm1654 = vcmp.gt.s32.totalorder 0, %v1653
    %v1655 = vsel %vm1654, 0, %v1653
    %v1656 = vsub.s32 32, %v1655
    %v1657 = vshll.u32 %v1648, %v1655
    %v1658 = vshrl.u32 %v1640, %v1656
    %v1659 = vor.u32 %v1657, %v1658
    %v1660 = vsub.s32 4294967266, %v1655
    %v1661 = vadd.s32 %v1660, 127
    %v1662 = vshll.u32 %v1661, 23
    %v1663 = vor.u32 4788187, %v1662
    %v1664 = vand.u32 2147483647, %v1663
    %v1666 = vcvt.s32.f32 %v1659
    %v1667 = vmul.f32 %v1666, %v1664
    %v1668 = vxor.u32 %v1667, 2147483648
    %v1669 = vsel %vm1586, %v1668, %v1667
    %v1670 = vsub.s32 4, %v1646
    %v1671 = vsel %vm1586, %v1670, %v1646
    %v1672 = vsel %vm1585, %v490, %v1669
    %v1673 = vsel %vm1585, 0, %v1671
    %v1674 = vcosq.f32.pop %v1672
    %v1675 = vsinq.f32.pop %v1672
    %vm1676 = vweird.f32 %v490
    %v1677 = vadd.s32 %v1673, 3
    %v1678 = vand.u32 %v1677, 3
    %vm1679 = vcmp.lt.s32.totalorder %v1678, 2
    %vm1680 = vcmp.eq.s32.totalorder %v1678, 0
    %v1681 = vxor.u32 %v1675, 2147483648
    %v1682 = vsel %vm1680, %v1674, %v1681
    %vm1683 = vcmp.eq.s32.totalorder %v1678, 2
    %v1684 = vxor.u32 %v1674, 2147483648
    %v1685 = vsel %vm1683, %v1684, %v1675
    %v1686 = vsel %vm1679, %v1682, %v1685
    %v1687 = vsel %vm1676, nan, %v1686
    %v1688 = vand.u32 2147483647, %v491
    %vm1689 = vcmp.le.f32.partialorder %v1688, 0.7853982
    %vm1690 = vcmp.lt.s32.totalorder %v491, 0
    %v1691 = vand.u32 %v491, 2139095040
    %v1692 = vshrl.u32 %v1691, 23
    %v1693 = vsub.s32 %v1692, 127
    %v1694 = vand.u32 2147483647, %v491
    %v1695 = vand.u32 %v1694, 8388607
    %v1696 = vor.u32 %v1695, 8388608
    %v1697 = vsub.s32 0, %v1696
    %v1698 = vadd.s32 %v1693, 1
    %vm1699 = vcmp.gt.s32.totalorder %v1698, 0
    %v1700 = vsel %vm1699, %v1698, 0
    %v1701 = vshrl.u32 %v1700, 5
    %v1702 = vand.u32 %v1700, 31
    %v1703 = vsub.s32 32, %v1702
    %v1704 = vshrl.u32 683565275, %v1703
    %v1705 = vshll.u32 683565275, %v1702
    %v1706 = vshrl.u32 2475754826, %v1703
    %v1707 = vor.u32 %v1705, %v1706
    %v1708 = vshll.u32 2475754826, %v1702
    %v1709 = vshrl.u32 2131351028, %v1703
    %v1710 = vor.u32 %v1708, %v1709
    %v1711 = vshll.u32 2131351028, %v1702
    %v1712 = vshrl.u32 2102212464, %v1703
    %v1713 = vor.u32 %v1711, %v1712
    %v1714 = vshll.u32 2102212464, %v1702
    %v1715 = vshrl.u32 920167782, %v1703
    %v1716 = vor.u32 %v1714, %v1715
    %v1717 = vshll.u32 920167782, %v1702
    %v1718 = vshrl.u32 1326507024, %v1703
    %v1719 = vor.u32 %v1717, %v1718
    %vm1720 = vcmp.lt.s32.totalorder %v1701, 1
    %vm1721 = vcmp.lt.s32.totalorder %v1701, 2
    %vm1722 = vcmp.lt.s32.totalorder %v1701, 3
    %vm1723 = vcmp.lt.s32.totalorder %v1701, 4
    %v1724 = vsel %vm1720, %v1704, %v1707
    %v1725 = vsel %vm1723, %v1713, 2102212464
    %v1726 = vsel %vm1722, %v1710, %v1725
    %v1727 = vsel %vm1721, %v1724, %v1726
    %v1728 = vsel %vm1720, %v1707, %v1710
    %v1729 = vsel %vm1723, %v1716, 920167782
    %v1730 = vsel %vm1722, %v1713, %v1729
    %v1731 = vsel %vm1721, %v1728, %v1730
    %v1732 = vsel %vm1720, %v1710, %v1713
    %v1733 = vsel %vm1723, %v1719, 1326507024
    %v1734 = vsel %vm1722, %v1716, %v1733
    %v1735 = vsel %vm1721, %v1732, %v1734
    %v1736 = vshll.u32 %v1696, 8
    %v1737 = vmul.u32.u64.compose %v1736, %v1735
    %v1738 = vextract.low.u32 %v1737
    %v1739 = vextract.high.u32 %v1737
    %v1740 = vmul.u32.u64.compose %v1736, %v1731
    %v1741 = vextract.low.u32 %v1740
    %v1742 = vextract.high.u32 %v1740
    %v1743 = vmul.u32 %v1736, %v1727
    %v1744 = vadd.s32 %v1739, %v1741
    %vm1745 = vc.u32 %v1739, %v1741
    %v1746 = vadd.s32 %v1742, 1
    %v1747 = vsel %vm1745, %v1746, %v1742
    %v1748 = vadd.s32 %v1743, %v1747
    %v1749 = vadd.s32 %v1748, 536870912
    %v1750 = vshrl.u32 %v1749, 30
    %v1751 = vshll.u32 %v1750, 30
    %v1752 = vsub.s32 %v1748, %v1751
    %vm1753 = vcmp.lt.s32.totalorder %v1752, 0
    %v1754 = vsub.s32 0, %v1752
    %v1755 = vsel %vm1753, %v1754, %v1752
    %v1756 = vclz %v1755
    %v1757 = vsub.s32 %v1756, 2
    %vm1758 = vcmp.gt.s32.totalorder 0, %v1757
    %v1759 = vsel %vm1758, 0, %v1757
    %v1760 = vsub.s32 32, %v1759
    %v1761 = vshll.u32 %v1752, %v1759
    %v1762 = vshrl.u32 %v1744, %v1760
    %v1763 = vor.u32 %v1761, %v1762
    %v1764 = vsub.s32 4294967266, %v1759
    %v1765 = vadd.s32 %v1764, 127
    %v1766 = vshll.u32 %v1765, 23
    %v1767 = vor.u32 4788187, %v1766
    %v1768 = vand.u32 2147483647, %v1767
    %v1770 = vcvt.s32.f32 %v1763
    %v1771 = vmul.f32 %v1770, %v1768
    %v1772 = vxor.u32 %v1771, 2147483648
    %v1773 = vsel %vm1690, %v1772, %v1771
    %v1774 = vsub.s32 4, %v1750
    %v1775 = vsel %vm1690, %v1774, %v1750
    %v1776 = vsel %vm1689, %v491, %v1773
    %v1777 = vsel %vm1689, 0, %v1775
    %v1778 = vcosq.f32.pop %v1776
    %v1779 = vsinq.f32.pop %v1776
    %vm1780 = vweird.f32 %v491
    %v1781 = vadd.s32 %v1777, 3
    %v1782 = vand.u32 %v1781, 3
    %vm1783 = vcmp.lt.s32.totalorder %v1782, 2
    %vm1784 = vcmp.eq.s32.totalorder %v1782, 0
    %v1785 = vxor.u32 %v1779, 2147483648
    %v1786 = vsel %vm1784, %v1778, %v1785
    %vm1787 = vcmp.eq.s32.totalorder %v1782, 2
    %v1788 = vxor.u32 %v1778, 2147483648
    %v1789 = vsel %vm1787, %v1788, %v1779
    %v1790 = vsel %vm1783, %v1786, %v1789
    %v1791 = vsel %vm1780, nan, %v1790
    %v1792 = vand.u32 2147483647, %v492
    %vm1793 = vcmp.le.f32.partialorder %v1792, 0.7853982
    %vm1794 = vcmp.lt.s32.totalorder %v492, 0
    %v1795 = vand.u32 %v492, 2139095040
    %v1796 = vshrl.u32 %v1795, 23
    %v1797 = vsub.s32 %v1796, 127
    %v1798 = vand.u32 2147483647, %v492
    %v1799 = vand.u32 %v1798, 8388607
    %v1800 = vor.u32 %v1799, 8388608
    %v1801 = vsub.s32 0, %v1800
    %v1802 = vadd.s32 %v1797, 1
    %vm1803 = vcmp.gt.s32.totalorder %v1802, 0
    %v1804 = vsel %vm1803, %v1802, 0
    %v1805 = vshrl.u32 %v1804, 5
    %v1806 = vand.u32 %v1804, 31
    %v1807 = vsub.s32 32, %v1806
    %v1808 = vshrl.u32 683565275, %v1807
    %v1809 = vshll.u32 683565275, %v1806
    %v1810 = vshrl.u32 2475754826, %v1807
    %v1811 = vor.u32 %v1809, %v1810
    %v1812 = vshll.u32 2475754826, %v1806
    %v1813 = vshrl.u32 2131351028, %v1807
    %v1814 = vor.u32 %v1812, %v1813
    %v1815 = vshll.u32 2131351028, %v1806
    %v1816 = vshrl.u32 2102212464, %v1807
    %v1817 = vor.u32 %v1815, %v1816
    %v1818 = vshll.u32 2102212464, %v1806
    %v1819 = vshrl.u32 920167782, %v1807
    %v1820 = vor.u32 %v1818, %v1819
    %v1821 = vshll.u32 920167782, %v1806
    %v1822 = vshrl.u32 1326507024, %v1807
    %v1823 = vor.u32 %v1821, %v1822
    %vm1824 = vcmp.lt.s32.totalorder %v1805, 1
    %vm1825 = vcmp.lt.s32.totalorder %v1805, 2
    %vm1826 = vcmp.lt.s32.totalorder %v1805, 3
    %vm1827 = vcmp.lt.s32.totalorder %v1805, 4
    %v1828 = vsel %vm1824, %v1808, %v1811
    %v1829 = vsel %vm1827, %v1817, 2102212464
    %v1830 = vsel %vm1826, %v1814, %v1829
    %v1831 = vsel %vm1825, %v1828, %v1830
    %v1832 = vsel %vm1824, %v1811, %v1814
    %v1833 = vsel %vm1827, %v1820, 920167782
    %v1834 = vsel %vm1826, %v1817, %v1833
    %v1835 = vsel %vm1825, %v1832, %v1834
    %v1836 = vsel %vm1824, %v1814, %v1817
    %v1837 = vsel %vm1827, %v1823, 1326507024
    %v1838 = vsel %vm1826, %v1820, %v1837
    %v1839 = vsel %vm1825, %v1836, %v1838
    %v1840 = vshll.u32 %v1800, 8
    %v1841 = vmul.u32.u64.compose %v1840, %v1839
    %v1842 = vextract.low.u32 %v1841
    %v1843 = vextract.high.u32 %v1841
    %v1844 = vmul.u32.u64.compose %v1840, %v1835
    %v1845 = vextract.low.u32 %v1844
    %v1846 = vextract.high.u32 %v1844
    %v1847 = vmul.u32 %v1840, %v1831
    %v1848 = vadd.s32 %v1843, %v1845
    %vm1849 = vc.u32 %v1843, %v1845
    %v1850 = vadd.s32 %v1846, 1
    %v1851 = vsel %vm1849, %v1850, %v1846
    %v1852 = vadd.s32 %v1847, %v1851
    %v1853 = vadd.s32 %v1852, 536870912
    %v1854 = vshrl.u32 %v1853, 30
    %v1855 = vshll.u32 %v1854, 30
    %v1856 = vsub.s32 %v1852, %v1855
    %vm1857 = vcmp.lt.s32.totalorder %v1856, 0
    %v1858 = vsub.s32 0, %v1856
    %v1859 = vsel %vm1857, %v1858, %v1856
    %v1860 = vclz %v1859
    %v1861 = vsub.s32 %v1860, 2
    %vm1862 = vcmp.gt.s32.totalorder 0, %v1861
    %v1863 = vsel %vm1862, 0, %v1861
    %v1864 = vsub.s32 32, %v1863
    %v1865 = vshll.u32 %v1856, %v1863
    %v1866 = vshrl.u32 %v1848, %v1864
    %v1867 = vor.u32 %v1865, %v1866
    %v1868 = vsub.s32 4294967266, %v1863
    %v1869 = vadd.s32 %v1868, 127
    %v1870 = vshll.u32 %v1869, 23
    %v1871 = vor.u32 4788187, %v1870
    %v1872 = vand.u32 2147483647, %v1871
    %v1874 = vcvt.s32.f32 %v1867
    %v1875 = vmul.f32 %v1874, %v1872
    %v1876 = vxor.u32 %v1875, 2147483648
    %v1877 = vsel %vm1794, %v1876, %v1875
    %v1878 = vsub.s32 4, %v1854
    %v1879 = vsel %vm1794, %v1878, %v1854
    %v1880 = vsel %vm1793, %v492, %v1877
    %v1881 = vsel %vm1793, 0, %v1879
    %v1882 = vcosq.f32.pop %v1880
    %v1883 = vsinq.f32.pop %v1880
    %vm1884 = vweird.f32 %v492
    %v1885 = vadd.s32 %v1881, 3
    %v1886 = vand.u32 %v1885, 3
    %vm1887 = vcmp.lt.s32.totalorder %v1886, 2
    %vm1888 = vcmp.eq.s32.totalorder %v1886, 0
    %v1889 = vxor.u32 %v1883, 2147483648
    %v1890 = vsel %vm1888, %v1882, %v1889
    %vm1891 = vcmp.eq.s32.totalorder %v1886, 2
    %v1892 = vxor.u32 %v1882, 2147483648
    %v1893 = vsel %vm1891, %v1892, %v1883
    %v1894 = vsel %vm1887, %v1890, %v1893
    %v1895 = vsel %vm1884, nan, %v1894
    %v1896 = vand.u32 2147483647, %v493
    %vm1897 = vcmp.le.f32.partialorder %v1896, 0.7853982
    %vm1898 = vcmp.lt.s32.totalorder %v493, 0
    %v1899 = vand.u32 %v493, 2139095040
    %v1900 = vshrl.u32 %v1899, 23
    %v1901 = vsub.s32 %v1900, 127
    %v1902 = vand.u32 2147483647, %v493
    %v1903 = vand.u32 %v1902, 8388607
    %v1904 = vor.u32 %v1903, 8388608
    %v1905 = vsub.s32 0, %v1904
    %v1906 = vadd.s32 %v1901, 1
    %vm1907 = vcmp.gt.s32.totalorder %v1906, 0
    %v1908 = vsel %vm1907, %v1906, 0
    %v1909 = vshrl.u32 %v1908, 5
    %v1910 = vand.u32 %v1908, 31
    %v1911 = vsub.s32 32, %v1910
    %v1912 = vshrl.u32 683565275, %v1911
    %v1913 = vshll.u32 683565275, %v1910
    %v1914 = vshrl.u32 2475754826, %v1911
    %v1915 = vor.u32 %v1913, %v1914
    %v1916 = vshll.u32 2475754826, %v1910
    %v1917 = vshrl.u32 2131351028, %v1911
    %v1918 = vor.u32 %v1916, %v1917
    %v1919 = vshll.u32 2131351028, %v1910
    %v1920 = vshrl.u32 2102212464, %v1911
    %v1921 = vor.u32 %v1919, %v1920
    %v1922 = vshll.u32 2102212464, %v1910
    %v1923 = vshrl.u32 920167782, %v1911
    %v1924 = vor.u32 %v1922, %v1923
    %v1925 = vshll.u32 920167782, %v1910
    %v1926 = vshrl.u32 1326507024, %v1911
    %v1927 = vor.u32 %v1925, %v1926
    %vm1928 = vcmp.lt.s32.totalorder %v1909, 1
    %vm1929 = vcmp.lt.s32.totalorder %v1909, 2
    %vm1930 = vcmp.lt.s32.totalorder %v1909, 3
    %vm1931 = vcmp.lt.s32.totalorder %v1909, 4
    %v1932 = vsel %vm1928, %v1912, %v1915
    %v1933 = vsel %vm1931, %v1921, 2102212464
    %v1934 = vsel %vm1930, %v1918, %v1933
    %v1935 = vsel %vm1929, %v1932, %v1934
    %v1936 = vsel %vm1928, %v1915, %v1918
    %v1937 = vsel %vm1931, %v1924, 920167782
    %v1938 = vsel %vm1930, %v1921, %v1937
    %v1939 = vsel %vm1929, %v1936, %v1938
    %v1940 = vsel %vm1928, %v1918, %v1921
    %v1941 = vsel %vm1931, %v1927, 1326507024
    %v1942 = vsel %vm1930, %v1924, %v1941
    %v1943 = vsel %vm1929, %v1940, %v1942
    %v1944 = vshll.u32 %v1904, 8
    %v1945 = vmul.u32.u64.compose %v1944, %v1943
    %v1946 = vextract.low.u32 %v1945
    %v1947 = vextract.high.u32 %v1945
    %v1948 = vmul.u32.u64.compose %v1944, %v1939
    %v1949 = vextract.low.u32 %v1948
    %v1950 = vextract.high.u32 %v1948
    %v1951 = vmul.u32 %v1944, %v1935
    %v1952 = vadd.s32 %v1947, %v1949
    %vm1953 = vc.u32 %v1947, %v1949
    %v1954 = vadd.s32 %v1950, 1
    %v1955 = vsel %vm1953, %v1954, %v1950
    %v1956 = vadd.s32 %v1951, %v1955
    %v1957 = vadd.s32 %v1956, 536870912
    %v1958 = vshrl.u32 %v1957, 30
    %v1959 = vshll.u32 %v1958, 30
    %v1960 = vsub.s32 %v1956, %v1959
    %vm1961 = vcmp.lt.s32.totalorder %v1960, 0
    %v1962 = vsub.s32 0, %v1960
    %v1963 = vsel %vm1961, %v1962, %v1960
    %v1964 = vclz %v1963
    %v1965 = vsub.s32 %v1964, 2
    %vm1966 = vcmp.gt.s32.totalorder 0, %v1965
    %v1967 = vsel %vm1966, 0, %v1965
    %v1968 = vsub.s32 32, %v1967
    %v1969 = vshll.u32 %v1960, %v1967
    %v1970 = vshrl.u32 %v1952, %v1968
    %v1971 = vor.u32 %v1969, %v1970
    %v1972 = vsub.s32 4294967266, %v1967
    %v1973 = vadd.s32 %v1972, 127
    %v1974 = vshll.u32 %v1973, 23
    %v1975 = vor.u32 4788187, %v1974
    %v1976 = vand.u32 2147483647, %v1975
    %v1978 = vcvt.s32.f32 %v1971
    %v1979 = vmul.f32 %v1978, %v1976
    %v1980 = vxor.u32 %v1979, 2147483648
    %v1981 = vsel %vm1898, %v1980, %v1979
    %v1982 = vsub.s32 4, %v1958
    %v1983 = vsel %vm1898, %v1982, %v1958
    %v1984 = vsel %vm1897, %v493, %v1981
    %v1985 = vsel %vm1897, 0, %v1983
    %v1986 = vcosq.f32.pop %v1984
    %v1987 = vsinq.f32.pop %v1984
    %vm1988 = vweird.f32 %v493
    %v1989 = vadd.s32 %v1985, 3
    %v1990 = vand.u32 %v1989, 3
    %vm1991 = vcmp.lt.s32.totalorder %v1990, 2
    %vm1992 = vcmp.eq.s32.totalorder %v1990, 0
    %v1993 = vxor.u32 %v1987, 2147483648
    %v1994 = vsel %vm1992, %v1986, %v1993
    %vm1995 = vcmp.eq.s32.totalorder %v1990, 2
    %v1996 = vxor.u32 %v1986, 2147483648
    %v1997 = vsel %vm1995, %v1996, %v1987
    %v1998 = vsel %vm1991, %v1994, %v1997
    %v1999 = vsel %vm1988, nan, %v1998
    %v2000 = vand.u32 2147483647, %v494
    %vm2001 = vcmp.le.f32.partialorder %v2000, 0.7853982
    %vm2002 = vcmp.lt.s32.totalorder %v494, 0
    %v2003 = vand.u32 %v494, 2139095040
    %v2004 = vshrl.u32 %v2003, 23
    %v2005 = vsub.s32 %v2004, 127
    %v2006 = vand.u32 2147483647, %v494
    %v2007 = vand.u32 %v2006, 8388607
    %v2008 = vor.u32 %v2007, 8388608
    %v2009 = vsub.s32 0, %v2008
    %v2010 = vadd.s32 %v2005, 1
    %vm2011 = vcmp.gt.s32.totalorder %v2010, 0
    %v2012 = vsel %vm2011, %v2010, 0
    %v2013 = vshrl.u32 %v2012, 5
    %v2014 = vand.u32 %v2012, 31
    %v2015 = vsub.s32 32, %v2014
    %v2016 = vshrl.u32 683565275, %v2015
    %v2017 = vshll.u32 683565275, %v2014
    %v2018 = vshrl.u32 2475754826, %v2015
    %v2019 = vor.u32 %v2017, %v2018
    %v2020 = vshll.u32 2475754826, %v2014
    %v2021 = vshrl.u32 2131351028, %v2015
    %v2022 = vor.u32 %v2020, %v2021
    %v2023 = vshll.u32 2131351028, %v2014
    %v2024 = vshrl.u32 2102212464, %v2015
    %v2025 = vor.u32 %v2023, %v2024
    %v2026 = vshll.u32 2102212464, %v2014
    %v2027 = vshrl.u32 920167782, %v2015
    %v2028 = vor.u32 %v2026, %v2027
    %v2029 = vshll.u32 920167782, %v2014
    %v2030 = vshrl.u32 1326507024, %v2015
    %v2031 = vor.u32 %v2029, %v2030
    %vm2032 = vcmp.lt.s32.totalorder %v2013, 1
    %vm2033 = vcmp.lt.s32.totalorder %v2013, 2
    %vm2034 = vcmp.lt.s32.totalorder %v2013, 3
    %vm2035 = vcmp.lt.s32.totalorder %v2013, 4
    %v2036 = vsel %vm2032, %v2016, %v2019
    %v2037 = vsel %vm2035, %v2025, 2102212464
    %v2038 = vsel %vm2034, %v2022, %v2037
    %v2039 = vsel %vm2033, %v2036, %v2038
    %v2040 = vsel %vm2032, %v2019, %v2022
    %v2041 = vsel %vm2035, %v2028, 920167782
    %v2042 = vsel %vm2034, %v2025, %v2041
    %v2043 = vsel %vm2033, %v2040, %v2042
    %v2044 = vsel %vm2032, %v2022, %v2025
    %v2045 = vsel %vm2035, %v2031, 1326507024
    %v2046 = vsel %vm2034, %v2028, %v2045
    %v2047 = vsel %vm2033, %v2044, %v2046
    %v2048 = vshll.u32 %v2008, 8
    %v2049 = vmul.u32.u64.compose %v2048, %v2047
    %v2050 = vextract.low.u32 %v2049
    %v2051 = vextract.high.u32 %v2049
    %v2052 = vmul.u32.u64.compose %v2048, %v2043
    %v2053 = vextract.low.u32 %v2052
    %v2054 = vextract.high.u32 %v2052
    %v2055 = vmul.u32 %v2048, %v2039
    %v2056 = vadd.s32 %v2051, %v2053
    %vm2057 = vc.u32 %v2051, %v2053
    %v2058 = vadd.s32 %v2054, 1
    %v2059 = vsel %vm2057, %v2058, %v2054
    %v2060 = vadd.s32 %v2055, %v2059
    %v2061 = vadd.s32 %v2060, 536870912
    %v2062 = vshrl.u32 %v2061, 30
    %v2063 = vshll.u32 %v2062, 30
    %v2064 = vsub.s32 %v2060, %v2063
    %vm2065 = vcmp.lt.s32.totalorder %v2064, 0
    %v2066 = vsub.s32 0, %v2064
    %v2067 = vsel %vm2065, %v2066, %v2064
    %v2068 = vclz %v2067
    %v2069 = vsub.s32 %v2068, 2
    %vm2070 = vcmp.gt.s32.totalorder 0, %v2069
    %v2071 = vsel %vm2070, 0, %v2069
    %v2072 = vsub.s32 32, %v2071
    %v2073 = vshll.u32 %v2064, %v2071
    %v2074 = vshrl.u32 %v2056, %v2072
    %v2075 = vor.u32 %v2073, %v2074
    %v2076 = vsub.s32 4294967266, %v2071
    %v2077 = vadd.s32 %v2076, 127
    %v2078 = vshll.u32 %v2077, 23
    %v2079 = vor.u32 4788187, %v2078
    %v2080 = vand.u32 2147483647, %v2079
    %v2082 = vcvt.s32.f32 %v2075
    %v2083 = vmul.f32 %v2082, %v2080
    %v2084 = vxor.u32 %v2083, 2147483648
    %v2085 = vsel %vm2002, %v2084, %v2083
    %v2086 = vsub.s32 4, %v2062
    %v2087 = vsel %vm2002, %v2086, %v2062
    %v2088 = vsel %vm2001, %v494, %v2085
    %v2089 = vsel %vm2001, 0, %v2087
    %v2090 = vcosq.f32.pop %v2088
    %v2091 = vsinq.f32.pop %v2088
    %vm2092 = vweird.f32 %v494
    %v2093 = vadd.s32 %v2089, 3
    %v2094 = vand.u32 %v2093, 3
    %vm2095 = vcmp.lt.s32.totalorder %v2094, 2
    %vm2096 = vcmp.eq.s32.totalorder %v2094, 0
    %v2097 = vxor.u32 %v2091, 2147483648
    %v2098 = vsel %vm2096, %v2090, %v2097
    %vm2099 = vcmp.eq.s32.totalorder %v2094, 2
    %v2100 = vxor.u32 %v2090, 2147483648
    %v2101 = vsel %vm2099, %v2100, %v2091
    %v2102 = vsel %vm2095, %v2098, %v2101
    %v2103 = vsel %vm2092, nan, %v2102
    %v2104 = vand.u32 2147483647, %v495
    %vm2105 = vcmp.le.f32.partialorder %v2104, 0.7853982
    %vm2106 = vcmp.lt.s32.totalorder %v495, 0
    %v2107 = vand.u32 %v495, 2139095040
    %v2108 = vshrl.u32 %v2107, 23
    %v2109 = vsub.s32 %v2108, 127
    %v2110 = vand.u32 2147483647, %v495
    %v2111 = vand.u32 %v2110, 8388607
    %v2112 = vor.u32 %v2111, 8388608
    %v2113 = vsub.s32 0, %v2112
    %v2114 = vadd.s32 %v2109, 1
    %vm2115 = vcmp.gt.s32.totalorder %v2114, 0
    %v2116 = vsel %vm2115, %v2114, 0
    %v2117 = vshrl.u32 %v2116, 5
    %v2118 = vand.u32 %v2116, 31
    %v2119 = vsub.s32 32, %v2118
    %v2120 = vshrl.u32 683565275, %v2119
    %v2121 = vshll.u32 683565275, %v2118
    %v2122 = vshrl.u32 2475754826, %v2119
    %v2123 = vor.u32 %v2121, %v2122
    %v2124 = vshll.u32 2475754826, %v2118
    %v2125 = vshrl.u32 2131351028, %v2119
    %v2126 = vor.u32 %v2124, %v2125
    %v2127 = vshll.u32 2131351028, %v2118
    %v2128 = vshrl.u32 2102212464, %v2119
    %v2129 = vor.u32 %v2127, %v2128
    %v2130 = vshll.u32 2102212464, %v2118
    %v2131 = vshrl.u32 920167782, %v2119
    %v2132 = vor.u32 %v2130, %v2131
    %v2133 = vshll.u32 920167782, %v2118
    %v2134 = vshrl.u32 1326507024, %v2119
    %v2135 = vor.u32 %v2133, %v2134
    %vm2136 = vcmp.lt.s32.totalorder %v2117, 1
    %vm2137 = vcmp.lt.s32.totalorder %v2117, 2
    %vm2138 = vcmp.lt.s32.totalorder %v2117, 3
    %vm2139 = vcmp.lt.s32.totalorder %v2117, 4
    %v2140 = vsel %vm2136, %v2120, %v2123
    %v2141 = vsel %vm2139, %v2129, 2102212464
    %v2142 = vsel %vm2138, %v2126, %v2141
    %v2143 = vsel %vm2137, %v2140, %v2142
    %v2144 = vsel %vm2136, %v2123, %v2126
    %v2145 = vsel %vm2139, %v2132, 920167782
    %v2146 = vsel %vm2138, %v2129, %v2145
    %v2147 = vsel %vm2137, %v2144, %v2146
    %v2148 = vsel %vm2136, %v2126, %v2129
    %v2149 = vsel %vm2139, %v2135, 1326507024
    %v2150 = vsel %vm2138, %v2132, %v2149
    %v2151 = vsel %vm2137, %v2148, %v2150
    %v2152 = vshll.u32 %v2112, 8
    %v2153 = vmul.u32.u64.compose %v2152, %v2151
    %v2154 = vextract.low.u32 %v2153
    %v2155 = vextract.high.u32 %v2153
    %v2156 = vmul.u32.u64.compose %v2152, %v2147
    %v2157 = vextract.low.u32 %v2156
    %v2158 = vextract.high.u32 %v2156
    %v2159 = vmul.u32 %v2152, %v2143
    %v2160 = vadd.s32 %v2155, %v2157
    %vm2161 = vc.u32 %v2155, %v2157
    %v2162 = vadd.s32 %v2158, 1
    %v2163 = vsel %vm2161, %v2162, %v2158
    %v2164 = vadd.s32 %v2159, %v2163
    %v2165 = vadd.s32 %v2164, 536870912
    %v2166 = vshrl.u32 %v2165, 30
    %v2167 = vshll.u32 %v2166, 30
    %v2168 = vsub.s32 %v2164, %v2167
    %vm2169 = vcmp.lt.s32.totalorder %v2168, 0
    %v2170 = vsub.s32 0, %v2168
    %v2171 = vsel %vm2169, %v2170, %v2168
    %v2172 = vclz %v2171
    %v2173 = vsub.s32 %v2172, 2
    %vm2174 = vcmp.gt.s32.totalorder 0, %v2173
    %v2175 = vsel %vm2174, 0, %v2173
    %v2176 = vsub.s32 32, %v2175
    %v2177 = vshll.u32 %v2168, %v2175
    %v2178 = vshrl.u32 %v2160, %v2176
    %v2179 = vor.u32 %v2177, %v2178
    %v2180 = vsub.s32 4294967266, %v2175
    %v2181 = vadd.s32 %v2180, 127
    %v2182 = vshll.u32 %v2181, 23
    %v2183 = vor.u32 4788187, %v2182
    %v2184 = vand.u32 2147483647, %v2183
    %v2186 = vcvt.s32.f32 %v2179
    %v2187 = vmul.f32 %v2186, %v2184
    %v2188 = vxor.u32 %v2187, 2147483648
    %v2189 = vsel %vm2106, %v2188, %v2187
    %v2190 = vsub.s32 4, %v2166
    %v2191 = vsel %vm2106, %v2190, %v2166
    %v2192 = vsel %vm2105, %v495, %v2189
    %v2193 = vsel %vm2105, 0, %v2191
    %v2194 = vcosq.f32.pop %v2192
    %v2195 = vsinq.f32.pop %v2192
    %vm2196 = vweird.f32 %v495
    %v2197 = vadd.s32 %v2193, 3
    %v2198 = vand.u32 %v2197, 3
    %vm2199 = vcmp.lt.s32.totalorder %v2198, 2
    %vm2200 = vcmp.eq.s32.totalorder %v2198, 0
    %v2201 = vxor.u32 %v2195, 2147483648
    %v2202 = vsel %vm2200, %v2194, %v2201
    %vm2203 = vcmp.eq.s32.totalorder %v2198, 2
    %v2204 = vxor.u32 %v2194, 2147483648
    %v2205 = vsel %vm2203, %v2204, %v2195
    %v2206 = vsel %vm2199, %v2202, %v2205
    %v2207 = vsel %vm2196, nan, %v2206
    %v2208 = vand.u32 2147483647, %v496
    %vm2209 = vcmp.le.f32.partialorder %v2208, 0.7853982
    %vm2210 = vcmp.lt.s32.totalorder %v496, 0
    %v2211 = vand.u32 %v496, 2139095040
    %v2212 = vshrl.u32 %v2211, 23
    %v2213 = vsub.s32 %v2212, 127
    %v2214 = vand.u32 2147483647, %v496
    %v2215 = vand.u32 %v2214, 8388607
    %v2216 = vor.u32 %v2215, 8388608
    %v2217 = vsub.s32 0, %v2216
    %v2218 = vadd.s32 %v2213, 1
    %vm2219 = vcmp.gt.s32.totalorder %v2218, 0
    %v2220 = vsel %vm2219, %v2218, 0
    %v2221 = vshrl.u32 %v2220, 5
    %v2222 = vand.u32 %v2220, 31
    %v2223 = vsub.s32 32, %v2222
    %v2224 = vshrl.u32 683565275, %v2223
    %v2225 = vshll.u32 683565275, %v2222
    %v2226 = vshrl.u32 2475754826, %v2223
    %v2227 = vor.u32 %v2225, %v2226
    %v2228 = vshll.u32 2475754826, %v2222
    %v2229 = vshrl.u32 2131351028, %v2223
    %v2230 = vor.u32 %v2228, %v2229
    %v2231 = vshll.u32 2131351028, %v2222
    %v2232 = vshrl.u32 2102212464, %v2223
    %v2233 = vor.u32 %v2231, %v2232
    %v2234 = vshll.u32 2102212464, %v2222
    %v2235 = vshrl.u32 920167782, %v2223
    %v2236 = vor.u32 %v2234, %v2235
    %v2237 = vshll.u32 920167782, %v2222
    %v2238 = vshrl.u32 1326507024, %v2223
    %v2239 = vor.u32 %v2237, %v2238
    %vm2240 = vcmp.lt.s32.totalorder %v2221, 1
    %vm2241 = vcmp.lt.s32.totalorder %v2221, 2
    %vm2242 = vcmp.lt.s32.totalorder %v2221, 3
    %vm2243 = vcmp.lt.s32.totalorder %v2221, 4
    %v2244 = vsel %vm2240, %v2224, %v2227
    %v2245 = vsel %vm2243, %v2233, 2102212464
    %v2246 = vsel %vm2242, %v2230, %v2245
    %v2247 = vsel %vm2241, %v2244, %v2246
    %v2248 = vsel %vm2240, %v2227, %v2230
    %v2249 = vsel %vm2243, %v2236, 920167782
    %v2250 = vsel %vm2242, %v2233, %v2249
    %v2251 = vsel %vm2241, %v2248, %v2250
    %v2252 = vsel %vm2240, %v2230, %v2233
    %v2253 = vsel %vm2243, %v2239, 1326507024
    %v2254 = vsel %vm2242, %v2236, %v2253
    %v2255 = vsel %vm2241, %v2252, %v2254
    %v2256 = vshll.u32 %v2216, 8
    %v2257 = vmul.u32.u64.compose %v2256, %v2255
    %v2258 = vextract.low.u32 %v2257
    %v2259 = vextract.high.u32 %v2257
    %v2260 = vmul.u32.u64.compose %v2256, %v2251
    %v2261 = vextract.low.u32 %v2260
    %v2262 = vextract.high.u32 %v2260
    %v2263 = vmul.u32 %v2256, %v2247
    %v2264 = vadd.s32 %v2259, %v2261
    %vm2265 = vc.u32 %v2259, %v2261
    %v2266 = vadd.s32 %v2262, 1
    %v2267 = vsel %vm2265, %v2266, %v2262
    %v2268 = vadd.s32 %v2263, %v2267
    %v2269 = vadd.s32 %v2268, 536870912
    %v2270 = vshrl.u32 %v2269, 30
    %v2271 = vshll.u32 %v2270, 30
    %v2272 = vsub.s32 %v2268, %v2271
    %vm2273 = vcmp.lt.s32.totalorder %v2272, 0
    %v2274 = vsub.s32 0, %v2272
    %v2275 = vsel %vm2273, %v2274, %v2272
    %v2276 = vclz %v2275
    %v2277 = vsub.s32 %v2276, 2
    %vm2278 = vcmp.gt.s32.totalorder 0, %v2277
    %v2279 = vsel %vm2278, 0, %v2277
    %v2280 = vsub.s32 32, %v2279
    %v2281 = vshll.u32 %v2272, %v2279
    %v2282 = vshrl.u32 %v2264, %v2280
    %v2283 = vor.u32 %v2281, %v2282
    %v2284 = vsub.s32 4294967266, %v2279
    %v2285 = vadd.s32 %v2284, 127
    %v2286 = vshll.u32 %v2285, 23
    %v2287 = vor.u32 4788187, %v2286
    %v2288 = vand.u32 2147483647, %v2287
    %v2290 = vcvt.s32.f32 %v2283
    %v2291 = vmul.f32 %v2290, %v2288
    %v2292 = vxor.u32 %v2291, 2147483648
    %v2293 = vsel %vm2210, %v2292, %v2291
    %v2294 = vsub.s32 4, %v2270
    %v2295 = vsel %vm2210, %v2294, %v2270
    %v2296 = vsel %vm2209, %v496, %v2293
    %v2297 = vsel %vm2209, 0, %v2295
    %v2298 = vcosq.f32.pop %v2296
    %v2299 = vsinq.f32.pop %v2296
    %vm2300 = vweird.f32 %v496
    %v2301 = vadd.s32 %v2297, 3
    %v2302 = vand.u32 %v2301, 3
    %vm2303 = vcmp.lt.s32.totalorder %v2302, 2
    %vm2304 = vcmp.eq.s32.totalorder %v2302, 0
    %v2305 = vxor.u32 %v2299, 2147483648
    %v2306 = vsel %vm2304, %v2298, %v2305
    %vm2307 = vcmp.eq.s32.totalorder %v2302, 2
    %v2308 = vxor.u32 %v2298, 2147483648
    %v2309 = vsel %vm2307, %v2308, %v2299
    %v2310 = vsel %vm2303, %v2306, %v2309
    %v2311 = vsel %vm2300, nan, %v2310
    %v2312 = vand.u32 2147483647, %v497
    %vm2313 = vcmp.le.f32.partialorder %v2312, 0.7853982
    %vm2314 = vcmp.lt.s32.totalorder %v497, 0
    %v2315 = vand.u32 %v497, 2139095040
    %v2316 = vshrl.u32 %v2315, 23
    %v2317 = vsub.s32 %v2316, 127
    %v2318 = vand.u32 2147483647, %v497
    %v2319 = vand.u32 %v2318, 8388607
    %v2320 = vor.u32 %v2319, 8388608
    %v2321 = vsub.s32 0, %v2320
    %v2322 = vadd.s32 %v2317, 1
    %vm2323 = vcmp.gt.s32.totalorder %v2322, 0
    %v2324 = vsel %vm2323, %v2322, 0
    %v2325 = vshrl.u32 %v2324, 5
    %v2326 = vand.u32 %v2324, 31
    %v2327 = vsub.s32 32, %v2326
    %v2328 = vshrl.u32 683565275, %v2327
    %v2329 = vshll.u32 683565275, %v2326
    %v2330 = vshrl.u32 2475754826, %v2327
    %v2331 = vor.u32 %v2329, %v2330
    %v2332 = vshll.u32 2475754826, %v2326
    %v2333 = vshrl.u32 2131351028, %v2327
    %v2334 = vor.u32 %v2332, %v2333
    %v2335 = vshll.u32 2131351028, %v2326
    %v2336 = vshrl.u32 2102212464, %v2327
    %v2337 = vor.u32 %v2335, %v2336
    %v2338 = vshll.u32 2102212464, %v2326
    %v2339 = vshrl.u32 920167782, %v2327
    %v2340 = vor.u32 %v2338, %v2339
    %v2341 = vshll.u32 920167782, %v2326
    %v2342 = vshrl.u32 1326507024, %v2327
    %v2343 = vor.u32 %v2341, %v2342
    %vm2344 = vcmp.lt.s32.totalorder %v2325, 1
    %vm2345 = vcmp.lt.s32.totalorder %v2325, 2
    %vm2346 = vcmp.lt.s32.totalorder %v2325, 3
    %vm2347 = vcmp.lt.s32.totalorder %v2325, 4
    %v2348 = vsel %vm2344, %v2328, %v2331
    %v2349 = vsel %vm2347, %v2337, 2102212464
    %v2350 = vsel %vm2346, %v2334, %v2349
    %v2351 = vsel %vm2345, %v2348, %v2350
    %v2352 = vsel %vm2344, %v2331, %v2334
    %v2353 = vsel %vm2347, %v2340, 920167782
    %v2354 = vsel %vm2346, %v2337, %v2353
    %v2355 = vsel %vm2345, %v2352, %v2354
    %v2356 = vsel %vm2344, %v2334, %v2337
    %v2357 = vsel %vm2347, %v2343, 1326507024
    %v2358 = vsel %vm2346, %v2340, %v2357
    %v2359 = vsel %vm2345, %v2356, %v2358
    %v2360 = vshll.u32 %v2320, 8
    %v2361 = vmul.u32.u64.compose %v2360, %v2359
    %v2362 = vextract.low.u32 %v2361
    %v2363 = vextract.high.u32 %v2361
    %v2364 = vmul.u32.u64.compose %v2360, %v2355
    %v2365 = vextract.low.u32 %v2364
    %v2366 = vextract.high.u32 %v2364
    %v2367 = vmul.u32 %v2360, %v2351
    %v2368 = vadd.s32 %v2363, %v2365
    %vm2369 = vc.u32 %v2363, %v2365
    %v2370 = vadd.s32 %v2366, 1
    %v2371 = vsel %vm2369, %v2370, %v2366
    %v2372 = vadd.s32 %v2367, %v2371
    %v2373 = vadd.s32 %v2372, 536870912
    %v2374 = vshrl.u32 %v2373, 30
    %v2375 = vshll.u32 %v2374, 30
    %v2376 = vsub.s32 %v2372, %v2375
    %vm2377 = vcmp.lt.s32.totalorder %v2376, 0
    %v2378 = vsub.s32 0, %v2376
    %v2379 = vsel %vm2377, %v2378, %v2376
    %v2380 = vclz %v2379
    %v2381 = vsub.s32 %v2380, 2
    %vm2382 = vcmp.gt.s32.totalorder 0, %v2381
    %v2383 = vsel %vm2382, 0, %v2381
    %v2384 = vsub.s32 32, %v2383
    %v2385 = vshll.u32 %v2376, %v2383
    %v2386 = vshrl.u32 %v2368, %v2384
    %v2387 = vor.u32 %v2385, %v2386
    %v2388 = vsub.s32 4294967266, %v2383
    %v2389 = vadd.s32 %v2388, 127
    %v2390 = vshll.u32 %v2389, 23
    %v2391 = vor.u32 4788187, %v2390
    %v2392 = vand.u32 2147483647, %v2391
    %v2394 = vcvt.s32.f32 %v2387
    %v2395 = vmul.f32 %v2394, %v2392
    %v2396 = vxor.u32 %v2395, 2147483648
    %v2397 = vsel %vm2314, %v2396, %v2395
    %v2398 = vsub.s32 4, %v2374
    %v2399 = vsel %vm2314, %v2398, %v2374
    %v2400 = vsel %vm2313, %v497, %v2397
    %v2401 = vsel %vm2313, 0, %v2399
    %v2402 = vcosq.f32.pop %v2400
    %v2403 = vsinq.f32.pop %v2400
    %vm2404 = vweird.f32 %v497
    %v2405 = vadd.s32 %v2401, 3
    %v2406 = vand.u32 %v2405, 3
    %vm2407 = vcmp.lt.s32.totalorder %v2406, 2
    %vm2408 = vcmp.eq.s32.totalorder %v2406, 0
    %v2409 = vxor.u32 %v2403, 2147483648
    %v2410 = vsel %vm2408, %v2402, %v2409
    %vm2411 = vcmp.eq.s32.totalorder %v2406, 2
    %v2412 = vxor.u32 %v2402, 2147483648
    %v2413 = vsel %vm2411, %v2412, %v2403
    %v2414 = vsel %vm2407, %v2410, %v2413
    %v2415 = vsel %vm2404, nan, %v2414
    %v2416 = vand.u32 2147483647, %v498
    %vm2417 = vcmp.le.f32.partialorder %v2416, 0.7853982
    %vm2418 = vcmp.lt.s32.totalorder %v498, 0
    %v2419 = vand.u32 %v498, 2139095040
    %v2420 = vshrl.u32 %v2419, 23
    %v2421 = vsub.s32 %v2420, 127
    %v2422 = vand.u32 2147483647, %v498
    %v2423 = vand.u32 %v2422, 8388607
    %v2424 = vor.u32 %v2423, 8388608
    %v2425 = vsub.s32 0, %v2424
    %v2426 = vadd.s32 %v2421, 1
    %vm2427 = vcmp.gt.s32.totalorder %v2426, 0
    %v2428 = vsel %vm2427, %v2426, 0
    %v2429 = vshrl.u32 %v2428, 5
    %v2430 = vand.u32 %v2428, 31
    %v2431 = vsub.s32 32, %v2430
    %v2432 = vshrl.u32 683565275, %v2431
    %v2433 = vshll.u32 683565275, %v2430
    %v2434 = vshrl.u32 2475754826, %v2431
    %v2435 = vor.u32 %v2433, %v2434
    %v2436 = vshll.u32 2475754826, %v2430
    %v2437 = vshrl.u32 2131351028, %v2431
    %v2438 = vor.u32 %v2436, %v2437
    %v2439 = vshll.u32 2131351028, %v2430
    %v2440 = vshrl.u32 2102212464, %v2431
    %v2441 = vor.u32 %v2439, %v2440
    %v2442 = vshll.u32 2102212464, %v2430
    %v2443 = vshrl.u32 920167782, %v2431
    %v2444 = vor.u32 %v2442, %v2443
    %v2445 = vshll.u32 920167782, %v2430
    %v2446 = vshrl.u32 1326507024, %v2431
    %v2447 = vor.u32 %v2445, %v2446
    %vm2448 = vcmp.lt.s32.totalorder %v2429, 1
    %vm2449 = vcmp.lt.s32.totalorder %v2429, 2
    %vm2450 = vcmp.lt.s32.totalorder %v2429, 3
    %vm2451 = vcmp.lt.s32.totalorder %v2429, 4
    %v2452 = vsel %vm2448, %v2432, %v2435
    %v2453 = vsel %vm2451, %v2441, 2102212464
    %v2454 = vsel %vm2450, %v2438, %v2453
    %v2455 = vsel %vm2449, %v2452, %v2454
    %v2456 = vsel %vm2448, %v2435, %v2438
    %v2457 = vsel %vm2451, %v2444, 920167782
    %v2458 = vsel %vm2450, %v2441, %v2457
    %v2459 = vsel %vm2449, %v2456, %v2458
    %v2460 = vsel %vm2448, %v2438, %v2441
    %v2461 = vsel %vm2451, %v2447, 1326507024
    %v2462 = vsel %vm2450, %v2444, %v2461
    %v2463 = vsel %vm2449, %v2460, %v2462
    %v2464 = vshll.u32 %v2424, 8
    %v2465 = vmul.u32.u64.compose %v2464, %v2463
    %v2466 = vextract.low.u32 %v2465
    %v2467 = vextract.high.u32 %v2465
    %v2468 = vmul.u32.u64.compose %v2464, %v2459
    %v2469 = vextract.low.u32 %v2468
    %v2470 = vextract.high.u32 %v2468
    %v2471 = vmul.u32 %v2464, %v2455
    %v2472 = vadd.s32 %v2467, %v2469
    %vm2473 = vc.u32 %v2467, %v2469
    %v2474 = vadd.s32 %v2470, 1
    %v2475 = vsel %vm2473, %v2474, %v2470
    %v2476 = vadd.s32 %v2471, %v2475
    %v2477 = vadd.s32 %v2476, 536870912
    %v2478 = vshrl.u32 %v2477, 30
    %v2479 = vshll.u32 %v2478, 30
    %v2480 = vsub.s32 %v2476, %v2479
    %vm2481 = vcmp.lt.s32.totalorder %v2480, 0
    %v2482 = vsub.s32 0, %v2480
    %v2483 = vsel %vm2481, %v2482, %v2480
    %v2484 = vclz %v2483
    %v2485 = vsub.s32 %v2484, 2
    %vm2486 = vcmp.gt.s32.totalorder 0, %v2485
    %v2487 = vsel %vm2486, 0, %v2485
    %v2488 = vsub.s32 32, %v2487
    %v2489 = vshll.u32 %v2480, %v2487
    %v2490 = vshrl.u32 %v2472, %v2488
    %v2491 = vor.u32 %v2489, %v2490
    %v2492 = vsub.s32 4294967266, %v2487
    %v2493 = vadd.s32 %v2492, 127
    %v2494 = vshll.u32 %v2493, 23
    %v2495 = vor.u32 4788187, %v2494
    %v2496 = vand.u32 2147483647, %v2495
    %v2498 = vcvt.s32.f32 %v2491
    %v2499 = vmul.f32 %v2498, %v2496
    %v2500 = vxor.u32 %v2499, 2147483648
    %v2501 = vsel %vm2418, %v2500, %v2499
    %v2502 = vsub.s32 4, %v2478
    %v2503 = vsel %vm2418, %v2502, %v2478
    %v2504 = vsel %vm2417, %v498, %v2501
    %v2505 = vsel %vm2417, 0, %v2503
    %v2506 = vcosq.f32.pop %v2504
    %v2507 = vsinq.f32.pop %v2504
    %vm2508 = vweird.f32 %v498
    %v2509 = vadd.s32 %v2505, 3
    %v2510 = vand.u32 %v2509, 3
    %vm2511 = vcmp.lt.s32.totalorder %v2510, 2
    %vm2512 = vcmp.eq.s32.totalorder %v2510, 0
    %v2513 = vxor.u32 %v2507, 2147483648
    %v2514 = vsel %vm2512, %v2506, %v2513
    %vm2515 = vcmp.eq.s32.totalorder %v2510, 2
    %v2516 = vxor.u32 %v2506, 2147483648
    %v2517 = vsel %vm2515, %v2516, %v2507
    %v2518 = vsel %vm2511, %v2514, %v2517
    %v2519 = vsel %vm2508, nan, %v2518
    %v2520 = vand.u32 2147483647, %v499
    %vm2521 = vcmp.le.f32.partialorder %v2520, 0.7853982
    %vm2522 = vcmp.lt.s32.totalorder %v499, 0
    %v2523 = vand.u32 %v499, 2139095040
    %v2524 = vshrl.u32 %v2523, 23
    %v2525 = vsub.s32 %v2524, 127
    %v2526 = vand.u32 2147483647, %v499
    %v2527 = vand.u32 %v2526, 8388607
    %v2528 = vor.u32 %v2527, 8388608
    %v2529 = vsub.s32 0, %v2528
    %v2530 = vadd.s32 %v2525, 1
    %vm2531 = vcmp.gt.s32.totalorder %v2530, 0
    %v2532 = vsel %vm2531, %v2530, 0
    %v2533 = vshrl.u32 %v2532, 5
    %v2534 = vand.u32 %v2532, 31
    %v2535 = vsub.s32 32, %v2534
    %v2536 = vshrl.u32 683565275, %v2535
    %v2537 = vshll.u32 683565275, %v2534
    %v2538 = vshrl.u32 2475754826, %v2535
    %v2539 = vor.u32 %v2537, %v2538
    %v2540 = vshll.u32 2475754826, %v2534
    %v2541 = vshrl.u32 2131351028, %v2535
    %v2542 = vor.u32 %v2540, %v2541
    %v2543 = vshll.u32 2131351028, %v2534
    %v2544 = vshrl.u32 2102212464, %v2535
    %v2545 = vor.u32 %v2543, %v2544
    %v2546 = vshll.u32 2102212464, %v2534
    %v2547 = vshrl.u32 920167782, %v2535
    %v2548 = vor.u32 %v2546, %v2547
    %v2549 = vshll.u32 920167782, %v2534
    %v2550 = vshrl.u32 1326507024, %v2535
    %v2551 = vor.u32 %v2549, %v2550
    %vm2552 = vcmp.lt.s32.totalorder %v2533, 1
    %vm2553 = vcmp.lt.s32.totalorder %v2533, 2
    %vm2554 = vcmp.lt.s32.totalorder %v2533, 3
    %vm2555 = vcmp.lt.s32.totalorder %v2533, 4
    %v2556 = vsel %vm2552, %v2536, %v2539
    %v2557 = vsel %vm2555, %v2545, 2102212464
    %v2558 = vsel %vm2554, %v2542, %v2557
    %v2559 = vsel %vm2553, %v2556, %v2558
    %v2560 = vsel %vm2552, %v2539, %v2542
    %v2561 = vsel %vm2555, %v2548, 920167782
    %v2562 = vsel %vm2554, %v2545, %v2561
    %v2563 = vsel %vm2553, %v2560, %v2562
    %v2564 = vsel %vm2552, %v2542, %v2545
    %v2565 = vsel %vm2555, %v2551, 1326507024
    %v2566 = vsel %vm2554, %v2548, %v2565
    %v2567 = vsel %vm2553, %v2564, %v2566
    %v2568 = vshll.u32 %v2528, 8
    %v2569 = vmul.u32.u64.compose %v2568, %v2567
    %v2570 = vextract.low.u32 %v2569
    %v2571 = vextract.high.u32 %v2569
    %v2572 = vmul.u32.u64.compose %v2568, %v2563
    %v2573 = vextract.low.u32 %v2572
    %v2574 = vextract.high.u32 %v2572
    %v2575 = vmul.u32 %v2568, %v2559
    %v2576 = vadd.s32 %v2571, %v2573
    %vm2577 = vc.u32 %v2571, %v2573
    %v2578 = vadd.s32 %v2574, 1
    %v2579 = vsel %vm2577, %v2578, %v2574
    %v2580 = vadd.s32 %v2575, %v2579
    %v2581 = vadd.s32 %v2580, 536870912
    %v2582 = vshrl.u32 %v2581, 30
    %v2583 = vshll.u32 %v2582, 30
    %v2584 = vsub.s32 %v2580, %v2583
    %vm2585 = vcmp.lt.s32.totalorder %v2584, 0
    %v2586 = vsub.s32 0, %v2584
    %v2587 = vsel %vm2585, %v2586, %v2584
    %v2588 = vclz %v2587
    %v2589 = vsub.s32 %v2588, 2
    %vm2590 = vcmp.gt.s32.totalorder 0, %v2589
    %v2591 = vsel %vm2590, 0, %v2589
    %v2592 = vsub.s32 32, %v2591
    %v2593 = vshll.u32 %v2584, %v2591
    %v2594 = vshrl.u32 %v2576, %v2592
    %v2595 = vor.u32 %v2593, %v2594
    %v2596 = vsub.s32 4294967266, %v2591
    %v2597 = vadd.s32 %v2596, 127
    %v2598 = vshll.u32 %v2597, 23
    %v2599 = vor.u32 4788187, %v2598
    %v2600 = vand.u32 2147483647, %v2599
    %v2602 = vcvt.s32.f32 %v2595
    %v2603 = vmul.f32 %v2602, %v2600
    %v2604 = vxor.u32 %v2603, 2147483648
    %v2605 = vsel %vm2522, %v2604, %v2603
    %v2606 = vsub.s32 4, %v2582
    %v2607 = vsel %vm2522, %v2606, %v2582
    %v2608 = vsel %vm2521, %v499, %v2605
    %v2609 = vsel %vm2521, 0, %v2607
    %v2610 = vcosq.f32.pop %v2608
    %v2611 = vsinq.f32.pop %v2608
    %vm2612 = vweird.f32 %v499
    %v2613 = vadd.s32 %v2609, 3
    %v2614 = vand.u32 %v2613, 3
    %vm2615 = vcmp.lt.s32.totalorder %v2614, 2
    %vm2616 = vcmp.eq.s32.totalorder %v2614, 0
    %v2617 = vxor.u32 %v2611, 2147483648
    %v2618 = vsel %vm2616, %v2610, %v2617
    %vm2619 = vcmp.eq.s32.totalorder %v2614, 2
    %v2620 = vxor.u32 %v2610, 2147483648
    %v2621 = vsel %vm2619, %v2620, %v2611
    %v2622 = vsel %vm2615, %v2618, %v2621
    %v2623 = vsel %vm2612, nan, %v2622
    %v2624 = vand.u32 2147483647, %v500
    %vm2625 = vcmp.le.f32.partialorder %v2624, 0.7853982
    %vm2626 = vcmp.lt.s32.totalorder %v500, 0
    %v2627 = vand.u32 %v500, 2139095040
    %v2628 = vshrl.u32 %v2627, 23
    %v2629 = vsub.s32 %v2628, 127
    %v2630 = vand.u32 2147483647, %v500
    %v2631 = vand.u32 %v2630, 8388607
    %v2632 = vor.u32 %v2631, 8388608
    %v2633 = vsub.s32 0, %v2632
    %v2634 = vadd.s32 %v2629, 1
    %vm2635 = vcmp.gt.s32.totalorder %v2634, 0
    %v2636 = vsel %vm2635, %v2634, 0
    %v2637 = vshrl.u32 %v2636, 5
    %v2638 = vand.u32 %v2636, 31
    %v2639 = vsub.s32 32, %v2638
    %v2640 = vshrl.u32 683565275, %v2639
    %v2641 = vshll.u32 683565275, %v2638
    %v2642 = vshrl.u32 2475754826, %v2639
    %v2643 = vor.u32 %v2641, %v2642
    %v2644 = vshll.u32 2475754826, %v2638
    %v2645 = vshrl.u32 2131351028, %v2639
    %v2646 = vor.u32 %v2644, %v2645
    %v2647 = vshll.u32 2131351028, %v2638
    %v2648 = vshrl.u32 2102212464, %v2639
    %v2649 = vor.u32 %v2647, %v2648
    %v2650 = vshll.u32 2102212464, %v2638
    %v2651 = vshrl.u32 920167782, %v2639
    %v2652 = vor.u32 %v2650, %v2651
    %v2653 = vshll.u32 920167782, %v2638
    %v2654 = vshrl.u32 1326507024, %v2639
    %v2655 = vor.u32 %v2653, %v2654
    %vm2656 = vcmp.lt.s32.totalorder %v2637, 1
    %vm2657 = vcmp.lt.s32.totalorder %v2637, 2
    %vm2658 = vcmp.lt.s32.totalorder %v2637, 3
    %vm2659 = vcmp.lt.s32.totalorder %v2637, 4
    %v2660 = vsel %vm2656, %v2640, %v2643
    %v2661 = vsel %vm2659, %v2649, 2102212464
    %v2662 = vsel %vm2658, %v2646, %v2661
    %v2663 = vsel %vm2657, %v2660, %v2662
    %v2664 = vsel %vm2656, %v2643, %v2646
    %v2665 = vsel %vm2659, %v2652, 920167782
    %v2666 = vsel %vm2658, %v2649, %v2665
    %v2667 = vsel %vm2657, %v2664, %v2666
    %v2668 = vsel %vm2656, %v2646, %v2649
    %v2669 = vsel %vm2659, %v2655, 1326507024
    %v2670 = vsel %vm2658, %v2652, %v2669
    %v2671 = vsel %vm2657, %v2668, %v2670
    %v2672 = vshll.u32 %v2632, 8
    %v2673 = vmul.u32.u64.compose %v2672, %v2671
    %v2674 = vextract.low.u32 %v2673
    %v2675 = vextract.high.u32 %v2673
    %v2676 = vmul.u32.u64.compose %v2672, %v2667
    %v2677 = vextract.low.u32 %v2676
    %v2678 = vextract.high.u32 %v2676
    %v2679 = vmul.u32 %v2672, %v2663
    %v2680 = vadd.s32 %v2675, %v2677
    %vm2681 = vc.u32 %v2675, %v2677
    %v2682 = vadd.s32 %v2678, 1
    %v2683 = vsel %vm2681, %v2682, %v2678
    %v2684 = vadd.s32 %v2679, %v2683
    %v2685 = vadd.s32 %v2684, 536870912
    %v2686 = vshrl.u32 %v2685, 30
    %v2687 = vshll.u32 %v2686, 30
    %v2688 = vsub.s32 %v2684, %v2687
    %vm2689 = vcmp.lt.s32.totalorder %v2688, 0
    %v2690 = vsub.s32 0, %v2688
    %v2691 = vsel %vm2689, %v2690, %v2688
    %v2692 = vclz %v2691
    %v2693 = vsub.s32 %v2692, 2
    %vm2694 = vcmp.gt.s32.totalorder 0, %v2693
    %v2695 = vsel %vm2694, 0, %v2693
    %v2696 = vsub.s32 32, %v2695
    %v2697 = vshll.u32 %v2688, %v2695
    %v2698 = vshrl.u32 %v2680, %v2696
    %v2699 = vor.u32 %v2697, %v2698
    %v2700 = vsub.s32 4294967266, %v2695
    %v2701 = vadd.s32 %v2700, 127
    %v2702 = vshll.u32 %v2701, 23
    %v2703 = vor.u32 4788187, %v2702
    %v2704 = vand.u32 2147483647, %v2703
    %v2706 = vcvt.s32.f32 %v2699
    %v2707 = vmul.f32 %v2706, %v2704
    %v2708 = vxor.u32 %v2707, 2147483648
    %v2709 = vsel %vm2626, %v2708, %v2707
    %v2710 = vsub.s32 4, %v2686
    %v2711 = vsel %vm2626, %v2710, %v2686
    %v2712 = vsel %vm2625, %v500, %v2709
    %v2713 = vsel %vm2625, 0, %v2711
    %v2714 = vcosq.f32.pop %v2712
    %v2715 = vsinq.f32.pop %v2712
    %vm2716 = vweird.f32 %v500
    %v2717 = vadd.s32 %v2713, 3
    %v2718 = vand.u32 %v2717, 3
    %vm2719 = vcmp.lt.s32.totalorder %v2718, 2
    %vm2720 = vcmp.eq.s32.totalorder %v2718, 0
    %v2721 = vxor.u32 %v2715, 2147483648
    %v2722 = vsel %vm2720, %v2714, %v2721
    %vm2723 = vcmp.eq.s32.totalorder %v2718, 2
    %v2724 = vxor.u32 %v2714, 2147483648
    %v2725 = vsel %vm2723, %v2724, %v2715
    %v2726 = vsel %vm2719, %v2722, %v2725
    %v2727 = vsel %vm2716, nan, %v2726
    %v2728 = vand.u32 2147483647, %v501
    %vm2729 = vcmp.le.f32.partialorder %v2728, 0.7853982
    %vm2730 = vcmp.lt.s32.totalorder %v501, 0
    %v2731 = vand.u32 %v501, 2139095040
    %v2732 = vshrl.u32 %v2731, 23
    %v2733 = vsub.s32 %v2732, 127
    %v2734 = vand.u32 2147483647, %v501
    %v2735 = vand.u32 %v2734, 8388607
    %v2736 = vor.u32 %v2735, 8388608
    %v2737 = vsub.s32 0, %v2736
    %v2738 = vadd.s32 %v2733, 1
    %vm2739 = vcmp.gt.s32.totalorder %v2738, 0
    %v2740 = vsel %vm2739, %v2738, 0
    %v2741 = vshrl.u32 %v2740, 5
    %v2742 = vand.u32 %v2740, 31
    %v2743 = vsub.s32 32, %v2742
    %v2744 = vshrl.u32 683565275, %v2743
    %v2745 = vshll.u32 683565275, %v2742
    %v2746 = vshrl.u32 2475754826, %v2743
    %v2747 = vor.u32 %v2745, %v2746
    %v2748 = vshll.u32 2475754826, %v2742
    %v2749 = vshrl.u32 2131351028, %v2743
    %v2750 = vor.u32 %v2748, %v2749
    %v2751 = vshll.u32 2131351028, %v2742
    %v2752 = vshrl.u32 2102212464, %v2743
    %v2753 = vor.u32 %v2751, %v2752
    %v2754 = vshll.u32 2102212464, %v2742
    %v2755 = vshrl.u32 920167782, %v2743
    %v2756 = vor.u32 %v2754, %v2755
    %v2757 = vshll.u32 920167782, %v2742
    %v2758 = vshrl.u32 1326507024, %v2743
    %v2759 = vor.u32 %v2757, %v2758
    %vm2760 = vcmp.lt.s32.totalorder %v2741, 1
    %vm2761 = vcmp.lt.s32.totalorder %v2741, 2
    %vm2762 = vcmp.lt.s32.totalorder %v2741, 3
    %vm2763 = vcmp.lt.s32.totalorder %v2741, 4
    %v2764 = vsel %vm2760, %v2744, %v2747
    %v2765 = vsel %vm2763, %v2753, 2102212464
    %v2766 = vsel %vm2762, %v2750, %v2765
    %v2767 = vsel %vm2761, %v2764, %v2766
    %v2768 = vsel %vm2760, %v2747, %v2750
    %v2769 = vsel %vm2763, %v2756, 920167782
    %v2770 = vsel %vm2762, %v2753, %v2769
    %v2771 = vsel %vm2761, %v2768, %v2770
    %v2772 = vsel %vm2760, %v2750, %v2753
    %v2773 = vsel %vm2763, %v2759, 1326507024
    %v2774 = vsel %vm2762, %v2756, %v2773
    %v2775 = vsel %vm2761, %v2772, %v2774
    %v2776 = vshll.u32 %v2736, 8
    %v2777 = vmul.u32.u64.compose %v2776, %v2775
    %v2778 = vextract.low.u32 %v2777
    %v2779 = vextract.high.u32 %v2777
    %v2780 = vmul.u32.u64.compose %v2776, %v2771
    %v2781 = vextract.low.u32 %v2780
    %v2782 = vextract.high.u32 %v2780
    %v2783 = vmul.u32 %v2776, %v2767
    %v2784 = vadd.s32 %v2779, %v2781
    %vm2785 = vc.u32 %v2779, %v2781
    %v2786 = vadd.s32 %v2782, 1
    %v2787 = vsel %vm2785, %v2786, %v2782
    %v2788 = vadd.s32 %v2783, %v2787
    %v2789 = vadd.s32 %v2788, 536870912
    %v2790 = vshrl.u32 %v2789, 30
    %v2791 = vshll.u32 %v2790, 30
    %v2792 = vsub.s32 %v2788, %v2791
    %vm2793 = vcmp.lt.s32.totalorder %v2792, 0
    %v2794 = vsub.s32 0, %v2792
    %v2795 = vsel %vm2793, %v2794, %v2792
    %v2796 = vclz %v2795
    %v2797 = vsub.s32 %v2796, 2
    %vm2798 = vcmp.gt.s32.totalorder 0, %v2797
    %v2799 = vsel %vm2798, 0, %v2797
    %v2800 = vsub.s32 32, %v2799
    %v2801 = vshll.u32 %v2792, %v2799
    %v2802 = vshrl.u32 %v2784, %v2800
    %v2803 = vor.u32 %v2801, %v2802
    %v2804 = vsub.s32 4294967266, %v2799
    %v2805 = vadd.s32 %v2804, 127
    %v2806 = vshll.u32 %v2805, 23
    %v2807 = vor.u32 4788187, %v2806
    %v2808 = vand.u32 2147483647, %v2807
    %v2810 = vcvt.s32.f32 %v2803
    %v2811 = vmul.f32 %v2810, %v2808
    %v2812 = vxor.u32 %v2811, 2147483648
    %v2813 = vsel %vm2730, %v2812, %v2811
    %v2814 = vsub.s32 4, %v2790
    %v2815 = vsel %vm2730, %v2814, %v2790
    %v2816 = vsel %vm2729, %v501, %v2813
    %v2817 = vsel %vm2729, 0, %v2815
    %v2818 = vcosq.f32.pop %v2816
    %v2819 = vsinq.f32.pop %v2816
    %vm2820 = vweird.f32 %v501
    %v2821 = vadd.s32 %v2817, 3
    %v2822 = vand.u32 %v2821, 3
    %vm2823 = vcmp.lt.s32.totalorder %v2822, 2
    %vm2824 = vcmp.eq.s32.totalorder %v2822, 0
    %v2825 = vxor.u32 %v2819, 2147483648
    %v2826 = vsel %vm2824, %v2818, %v2825
    %vm2827 = vcmp.eq.s32.totalorder %v2822, 2
    %v2828 = vxor.u32 %v2818, 2147483648
    %v2829 = vsel %vm2827, %v2828, %v2819
    %v2830 = vsel %vm2823, %v2826, %v2829
    %v2831 = vsel %vm2820, nan, %v2830
    %v2832 = vand.u32 2147483647, %v502
    %vm2833 = vcmp.le.f32.partialorder %v2832, 0.7853982
    %vm2834 = vcmp.lt.s32.totalorder %v502, 0
    %v2835 = vand.u32 %v502, 2139095040
    %v2836 = vshrl.u32 %v2835, 23
    %v2837 = vsub.s32 %v2836, 127
    %v2838 = vand.u32 2147483647, %v502
    %v2839 = vand.u32 %v2838, 8388607
    %v2840 = vor.u32 %v2839, 8388608
    %v2841 = vsub.s32 0, %v2840
    %v2842 = vadd.s32 %v2837, 1
    %vm2843 = vcmp.gt.s32.totalorder %v2842, 0
    %v2844 = vsel %vm2843, %v2842, 0
    %v2845 = vshrl.u32 %v2844, 5
    %v2846 = vand.u32 %v2844, 31
    %v2847 = vsub.s32 32, %v2846
    %v2848 = vshrl.u32 683565275, %v2847
    %v2849 = vshll.u32 683565275, %v2846
    %v2850 = vshrl.u32 2475754826, %v2847
    %v2851 = vor.u32 %v2849, %v2850
    %v2852 = vshll.u32 2475754826, %v2846
    %v2853 = vshrl.u32 2131351028, %v2847
    %v2854 = vor.u32 %v2852, %v2853
    %v2855 = vshll.u32 2131351028, %v2846
    %v2856 = vshrl.u32 2102212464, %v2847
    %v2857 = vor.u32 %v2855, %v2856
    %v2858 = vshll.u32 2102212464, %v2846
    %v2859 = vshrl.u32 920167782, %v2847
    %v2860 = vor.u32 %v2858, %v2859
    %v2861 = vshll.u32 920167782, %v2846
    %v2862 = vshrl.u32 1326507024, %v2847
    %v2863 = vor.u32 %v2861, %v2862
    %vm2864 = vcmp.lt.s32.totalorder %v2845, 1
    %vm2865 = vcmp.lt.s32.totalorder %v2845, 2
    %vm2866 = vcmp.lt.s32.totalorder %v2845, 3
    %vm2867 = vcmp.lt.s32.totalorder %v2845, 4
    %v2868 = vsel %vm2864, %v2848, %v2851
    %v2869 = vsel %vm2867, %v2857, 2102212464
    %v2870 = vsel %vm2866, %v2854, %v2869
    %v2871 = vsel %vm2865, %v2868, %v2870
    %v2872 = vsel %vm2864, %v2851, %v2854
    %v2873 = vsel %vm2867, %v2860, 920167782
    %v2874 = vsel %vm2866, %v2857, %v2873
    %v2875 = vsel %vm2865, %v2872, %v2874
    %v2876 = vsel %vm2864, %v2854, %v2857
    %v2877 = vsel %vm2867, %v2863, 1326507024
    %v2878 = vsel %vm2866, %v2860, %v2877
    %v2879 = vsel %vm2865, %v2876, %v2878
    %v2880 = vshll.u32 %v2840, 8
    %v2881 = vmul.u32.u64.compose %v2880, %v2879
    %v2882 = vextract.low.u32 %v2881
    %v2883 = vextract.high.u32 %v2881
    %v2884 = vmul.u32.u64.compose %v2880, %v2875
    %v2885 = vextract.low.u32 %v2884
    %v2886 = vextract.high.u32 %v2884
    %v2887 = vmul.u32 %v2880, %v2871
    %v2888 = vadd.s32 %v2883, %v2885
    %vm2889 = vc.u32 %v2883, %v2885
    %v2890 = vadd.s32 %v2886, 1
    %v2891 = vsel %vm2889, %v2890, %v2886
    %v2892 = vadd.s32 %v2887, %v2891
    %v2893 = vadd.s32 %v2892, 536870912
    %v2894 = vshrl.u32 %v2893, 30
    %v2895 = vshll.u32 %v2894, 30
    %v2896 = vsub.s32 %v2892, %v2895
    %vm2897 = vcmp.lt.s32.totalorder %v2896, 0
    %v2898 = vsub.s32 0, %v2896
    %v2899 = vsel %vm2897, %v2898, %v2896
    %v2900 = vclz %v2899
    %v2901 = vsub.s32 %v2900, 2
    %vm2902 = vcmp.gt.s32.totalorder 0, %v2901
    %v2903 = vsel %vm2902, 0, %v2901
    %v2904 = vsub.s32 32, %v2903
    %v2905 = vshll.u32 %v2896, %v2903
    %v2906 = vshrl.u32 %v2888, %v2904
    %v2907 = vor.u32 %v2905, %v2906
    %v2908 = vsub.s32 4294967266, %v2903
    %v2909 = vadd.s32 %v2908, 127
    %v2910 = vshll.u32 %v2909, 23
    %v2911 = vor.u32 4788187, %v2910
    %v2912 = vand.u32 2147483647, %v2911
    %v2914 = vcvt.s32.f32 %v2907
    %v2915 = vmul.f32 %v2914, %v2912
    %v2916 = vxor.u32 %v2915, 2147483648
    %v2917 = vsel %vm2834, %v2916, %v2915
    %v2918 = vsub.s32 4, %v2894
    %v2919 = vsel %vm2834, %v2918, %v2894
    %v2920 = vsel %vm2833, %v502, %v2917
    %v2921 = vsel %vm2833, 0, %v2919
    %v2922 = vcosq.f32.pop %v2920
    %v2923 = vsinq.f32.pop %v2920
    %vm2924 = vweird.f32 %v502
    %v2925 = vadd.s32 %v2921, 3
    %v2926 = vand.u32 %v2925, 3
    %vm2927 = vcmp.lt.s32.totalorder %v2926, 2
    %vm2928 = vcmp.eq.s32.totalorder %v2926, 0
    %v2929 = vxor.u32 %v2923, 2147483648
    %v2930 = vsel %vm2928, %v2922, %v2929
    %vm2931 = vcmp.eq.s32.totalorder %v2926, 2
    %v2932 = vxor.u32 %v2922, 2147483648
    %v2933 = vsel %vm2931, %v2932, %v2923
    %v2934 = vsel %vm2927, %v2930, %v2933
    %v2935 = vsel %vm2924, nan, %v2934
    %v2936 = vand.u32 2147483647, %v503
    %vm2937 = vcmp.le.f32.partialorder %v2936, 0.7853982
    %vm2938 = vcmp.lt.s32.totalorder %v503, 0
    %v2939 = vand.u32 %v503, 2139095040
    %v2940 = vshrl.u32 %v2939, 23
    %v2941 = vsub.s32 %v2940, 127
    %v2942 = vand.u32 2147483647, %v503
    %v2943 = vand.u32 %v2942, 8388607
    %v2944 = vor.u32 %v2943, 8388608
    %v2945 = vsub.s32 0, %v2944
    %v2946 = vadd.s32 %v2941, 1
    %vm2947 = vcmp.gt.s32.totalorder %v2946, 0
    %v2948 = vsel %vm2947, %v2946, 0
    %v2949 = vshrl.u32 %v2948, 5
    %v2950 = vand.u32 %v2948, 31
    %v2951 = vsub.s32 32, %v2950
    %v2952 = vshrl.u32 683565275, %v2951
    %v2953 = vshll.u32 683565275, %v2950
    %v2954 = vshrl.u32 2475754826, %v2951
    %v2955 = vor.u32 %v2953, %v2954
    %v2956 = vshll.u32 2475754826, %v2950
    %v2957 = vshrl.u32 2131351028, %v2951
    %v2958 = vor.u32 %v2956, %v2957
    %v2959 = vshll.u32 2131351028, %v2950
    %v2960 = vshrl.u32 2102212464, %v2951
    %v2961 = vor.u32 %v2959, %v2960
    %v2962 = vshll.u32 2102212464, %v2950
    %v2963 = vshrl.u32 920167782, %v2951
    %v2964 = vor.u32 %v2962, %v2963
    %v2965 = vshll.u32 920167782, %v2950
    %v2966 = vshrl.u32 1326507024, %v2951
    %v2967 = vor.u32 %v2965, %v2966
    %vm2968 = vcmp.lt.s32.totalorder %v2949, 1
    %vm2969 = vcmp.lt.s32.totalorder %v2949, 2
    %vm2970 = vcmp.lt.s32.totalorder %v2949, 3
    %vm2971 = vcmp.lt.s32.totalorder %v2949, 4
    %v2972 = vsel %vm2968, %v2952, %v2955
    %v2973 = vsel %vm2971, %v2961, 2102212464
    %v2974 = vsel %vm2970, %v2958, %v2973
    %v2975 = vsel %vm2969, %v2972, %v2974
    %v2976 = vsel %vm2968, %v2955, %v2958
    %v2977 = vsel %vm2971, %v2964, 920167782
    %v2978 = vsel %vm2970, %v2961, %v2977
    %v2979 = vsel %vm2969, %v2976, %v2978
    %v2980 = vsel %vm2968, %v2958, %v2961
    %v2981 = vsel %vm2971, %v2967, 1326507024
    %v2982 = vsel %vm2970, %v2964, %v2981
    %v2983 = vsel %vm2969, %v2980, %v2982
    %v2984 = vshll.u32 %v2944, 8
    %v2985 = vmul.u32.u64.compose %v2984, %v2983
    %v2986 = vextract.low.u32 %v2985
    %v2987 = vextract.high.u32 %v2985
    %v2988 = vmul.u32.u64.compose %v2984, %v2979
    %v2989 = vextract.low.u32 %v2988
    %v2990 = vextract.high.u32 %v2988
    %v2991 = vmul.u32 %v2984, %v2975
    %v2992 = vadd.s32 %v2987, %v2989
    %vm2993 = vc.u32 %v2987, %v2989
    %v2994 = vadd.s32 %v2990, 1
    %v2995 = vsel %vm2993, %v2994, %v2990
    %v2996 = vadd.s32 %v2991, %v2995
    %v2997 = vadd.s32 %v2996, 536870912
    %v2998 = vshrl.u32 %v2997, 30
    %v2999 = vshll.u32 %v2998, 30
    %v3000 = vsub.s32 %v2996, %v2999
    %vm3001 = vcmp.lt.s32.totalorder %v3000, 0
    %v3002 = vsub.s32 0, %v3000
    %v3003 = vsel %vm3001, %v3002, %v3000
    %v3004 = vclz %v3003
    %v3005 = vsub.s32 %v3004, 2
    %vm3006 = vcmp.gt.s32.totalorder 0, %v3005
    %v3007 = vsel %vm3006, 0, %v3005
    %v3008 = vsub.s32 32, %v3007
    %v3009 = vshll.u32 %v3000, %v3007
    %v3010 = vshrl.u32 %v2992, %v3008
    %v3011 = vor.u32 %v3009, %v3010
    %v3012 = vsub.s32 4294967266, %v3007
    %v3013 = vadd.s32 %v3012, 127
    %v3014 = vshll.u32 %v3013, 23
    %v3015 = vor.u32 4788187, %v3014
    %v3016 = vand.u32 2147483647, %v3015
    %v3018 = vcvt.s32.f32 %v3011
    %v3019 = vmul.f32 %v3018, %v3016
    %v3020 = vxor.u32 %v3019, 2147483648
    %v3021 = vsel %vm2938, %v3020, %v3019
    %v3022 = vsub.s32 4, %v2998
    %v3023 = vsel %vm2938, %v3022, %v2998
    %v3024 = vsel %vm2937, %v503, %v3021
    %v3025 = vsel %vm2937, 0, %v3023
    %v3026 = vcosq.f32.pop %v3024
    %v3027 = vsinq.f32.pop %v3024
    %vm3028 = vweird.f32 %v503
    %v3029 = vadd.s32 %v3025, 3
    %v3030 = vand.u32 %v3029, 3
    %vm3031 = vcmp.lt.s32.totalorder %v3030, 2
    %vm3032 = vcmp.eq.s32.totalorder %v3030, 0
    %v3033 = vxor.u32 %v3027, 2147483648
    %v3034 = vsel %vm3032, %v3026, %v3033
    %vm3035 = vcmp.eq.s32.totalorder %v3030, 2
    %v3036 = vxor.u32 %v3026, 2147483648
    %v3037 = vsel %vm3035, %v3036, %v3027
    %v3038 = vsel %vm3031, %v3034, %v3037
    %v3039 = vsel %vm3028, nan, %v3038
    %v3040 = vand.u32 2147483647, %v504
    %vm3041 = vcmp.le.f32.partialorder %v3040, 0.7853982
    %vm3042 = vcmp.lt.s32.totalorder %v504, 0
    %v3043 = vand.u32 %v504, 2139095040
    %v3044 = vshrl.u32 %v3043, 23
    %v3045 = vsub.s32 %v3044, 127
    %v3046 = vand.u32 2147483647, %v504
    %v3047 = vand.u32 %v3046, 8388607
    %v3048 = vor.u32 %v3047, 8388608
    %v3049 = vsub.s32 0, %v3048
    %v3050 = vadd.s32 %v3045, 1
    %vm3051 = vcmp.gt.s32.totalorder %v3050, 0
    %v3052 = vsel %vm3051, %v3050, 0
    %v3053 = vshrl.u32 %v3052, 5
    %v3054 = vand.u32 %v3052, 31
    %v3055 = vsub.s32 32, %v3054
    %v3056 = vshrl.u32 683565275, %v3055
    %v3057 = vshll.u32 683565275, %v3054
    %v3058 = vshrl.u32 2475754826, %v3055
    %v3059 = vor.u32 %v3057, %v3058
    %v3060 = vshll.u32 2475754826, %v3054
    %v3061 = vshrl.u32 2131351028, %v3055
    %v3062 = vor.u32 %v3060, %v3061
    %v3063 = vshll.u32 2131351028, %v3054
    %v3064 = vshrl.u32 2102212464, %v3055
    %v3065 = vor.u32 %v3063, %v3064
    %v3066 = vshll.u32 2102212464, %v3054
    %v3067 = vshrl.u32 920167782, %v3055
    %v3068 = vor.u32 %v3066, %v3067
    %v3069 = vshll.u32 920167782, %v3054
    %v3070 = vshrl.u32 1326507024, %v3055
    %v3071 = vor.u32 %v3069, %v3070
    %vm3072 = vcmp.lt.s32.totalorder %v3053, 1
    %vm3073 = vcmp.lt.s32.totalorder %v3053, 2
    %vm3074 = vcmp.lt.s32.totalorder %v3053, 3
    %vm3075 = vcmp.lt.s32.totalorder %v3053, 4
    %v3076 = vsel %vm3072, %v3056, %v3059
    %v3077 = vsel %vm3075, %v3065, 2102212464
    %v3078 = vsel %vm3074, %v3062, %v3077
    %v3079 = vsel %vm3073, %v3076, %v3078
    %v3080 = vsel %vm3072, %v3059, %v3062
    %v3081 = vsel %vm3075, %v3068, 920167782
    %v3082 = vsel %vm3074, %v3065, %v3081
    %v3083 = vsel %vm3073, %v3080, %v3082
    %v3084 = vsel %vm3072, %v3062, %v3065
    %v3085 = vsel %vm3075, %v3071, 1326507024
    %v3086 = vsel %vm3074, %v3068, %v3085
    %v3087 = vsel %vm3073, %v3084, %v3086
    %v3088 = vshll.u32 %v3048, 8
    %v3089 = vmul.u32.u64.compose %v3088, %v3087
    %v3090 = vextract.low.u32 %v3089
    %v3091 = vextract.high.u32 %v3089
    %v3092 = vmul.u32.u64.compose %v3088, %v3083
    %v3093 = vextract.low.u32 %v3092
    %v3094 = vextract.high.u32 %v3092
    %v3095 = vmul.u32 %v3088, %v3079
    %v3096 = vadd.s32 %v3091, %v3093
    %vm3097 = vc.u32 %v3091, %v3093
    %v3098 = vadd.s32 %v3094, 1
    %v3099 = vsel %vm3097, %v3098, %v3094
    %v3100 = vadd.s32 %v3095, %v3099
    %v3101 = vadd.s32 %v3100, 536870912
    %v3102 = vshrl.u32 %v3101, 30
    %v3103 = vshll.u32 %v3102, 30
    %v3104 = vsub.s32 %v3100, %v3103
    %vm3105 = vcmp.lt.s32.totalorder %v3104, 0
    %v3106 = vsub.s32 0, %v3104
    %v3107 = vsel %vm3105, %v3106, %v3104
    %v3108 = vclz %v3107
    %v3109 = vsub.s32 %v3108, 2
    %vm3110 = vcmp.gt.s32.totalorder 0, %v3109
    %v3111 = vsel %vm3110, 0, %v3109
    %v3112 = vsub.s32 32, %v3111
    %v3113 = vshll.u32 %v3104, %v3111
    %v3114 = vshrl.u32 %v3096, %v3112
    %v3115 = vor.u32 %v3113, %v3114
    %v3116 = vsub.s32 4294967266, %v3111
    %v3117 = vadd.s32 %v3116, 127
    %v3118 = vshll.u32 %v3117, 23
    %v3119 = vor.u32 4788187, %v3118
    %v3120 = vand.u32 2147483647, %v3119
    %v3122 = vcvt.s32.f32 %v3115
    %v3123 = vmul.f32 %v3122, %v3120
    %v3124 = vxor.u32 %v3123, 2147483648
    %v3125 = vsel %vm3042, %v3124, %v3123
    %v3126 = vsub.s32 4, %v3102
    %v3127 = vsel %vm3042, %v3126, %v3102
    %v3128 = vsel %vm3041, %v504, %v3125
    %v3129 = vsel %vm3041, 0, %v3127
    %v3130 = vcosq.f32.pop %v3128
    %v3131 = vsinq.f32.pop %v3128
    %vm3132 = vweird.f32 %v504
    %v3133 = vadd.s32 %v3129, 3
    %v3134 = vand.u32 %v3133, 3
    %vm3135 = vcmp.lt.s32.totalorder %v3134, 2
    %vm3136 = vcmp.eq.s32.totalorder %v3134, 0
    %v3137 = vxor.u32 %v3131, 2147483648
    %v3138 = vsel %vm3136, %v3130, %v3137
    %vm3139 = vcmp.eq.s32.totalorder %v3134, 2
    %v3140 = vxor.u32 %v3130, 2147483648
    %v3141 = vsel %vm3139, %v3140, %v3131
    %v3142 = vsel %vm3135, %v3138, %v3141
    %v3143 = vsel %vm3132, nan, %v3142
    %v3144 = vand.u32 2147483647, %v505
    %vm3145 = vcmp.le.f32.partialorder %v3144, 0.7853982
    %vm3146 = vcmp.lt.s32.totalorder %v505, 0
    %v3147 = vand.u32 %v505, 2139095040
    %v3148 = vshrl.u32 %v3147, 23
    %v3149 = vsub.s32 %v3148, 127
    %v3150 = vand.u32 2147483647, %v505
    %v3151 = vand.u32 %v3150, 8388607
    %v3152 = vor.u32 %v3151, 8388608
    %v3153 = vsub.s32 0, %v3152
    %v3154 = vadd.s32 %v3149, 1
    %vm3155 = vcmp.gt.s32.totalorder %v3154, 0
    %v3156 = vsel %vm3155, %v3154, 0
    %v3157 = vshrl.u32 %v3156, 5
    %v3158 = vand.u32 %v3156, 31
    %v3159 = vsub.s32 32, %v3158
    %v3160 = vshrl.u32 683565275, %v3159
    %v3161 = vshll.u32 683565275, %v3158
    %v3162 = vshrl.u32 2475754826, %v3159
    %v3163 = vor.u32 %v3161, %v3162
    %v3164 = vshll.u32 2475754826, %v3158
    %v3165 = vshrl.u32 2131351028, %v3159
    %v3166 = vor.u32 %v3164, %v3165
    %v3167 = vshll.u32 2131351028, %v3158
    %v3168 = vshrl.u32 2102212464, %v3159
    %v3169 = vor.u32 %v3167, %v3168
    %v3170 = vshll.u32 2102212464, %v3158
    %v3171 = vshrl.u32 920167782, %v3159
    %v3172 = vor.u32 %v3170, %v3171
    %v3173 = vshll.u32 920167782, %v3158
    %v3174 = vshrl.u32 1326507024, %v3159
    %v3175 = vor.u32 %v3173, %v3174
    %vm3176 = vcmp.lt.s32.totalorder %v3157, 1
    %vm3177 = vcmp.lt.s32.totalorder %v3157, 2
    %vm3178 = vcmp.lt.s32.totalorder %v3157, 3
    %vm3179 = vcmp.lt.s32.totalorder %v3157, 4
    %v3180 = vsel %vm3176, %v3160, %v3163
    %v3181 = vsel %vm3179, %v3169, 2102212464
    %v3182 = vsel %vm3178, %v3166, %v3181
    %v3183 = vsel %vm3177, %v3180, %v3182
    %v3184 = vsel %vm3176, %v3163, %v3166
    %v3185 = vsel %vm3179, %v3172, 920167782
    %v3186 = vsel %vm3178, %v3169, %v3185
    %v3187 = vsel %vm3177, %v3184, %v3186
    %v3188 = vsel %vm3176, %v3166, %v3169
    %v3189 = vsel %vm3179, %v3175, 1326507024
    %v3190 = vsel %vm3178, %v3172, %v3189
    %v3191 = vsel %vm3177, %v3188, %v3190
    %v3192 = vshll.u32 %v3152, 8
    %v3193 = vmul.u32.u64.compose %v3192, %v3191
    %v3194 = vextract.low.u32 %v3193
    %v3195 = vextract.high.u32 %v3193
    %v3196 = vmul.u32.u64.compose %v3192, %v3187
    %v3197 = vextract.low.u32 %v3196
    %v3198 = vextract.high.u32 %v3196
    %v3199 = vmul.u32 %v3192, %v3183
    %v3200 = vadd.s32 %v3195, %v3197
    %vm3201 = vc.u32 %v3195, %v3197
    %v3202 = vadd.s32 %v3198, 1
    %v3203 = vsel %vm3201, %v3202, %v3198
    %v3204 = vadd.s32 %v3199, %v3203
    %v3205 = vadd.s32 %v3204, 536870912
    %v3206 = vshrl.u32 %v3205, 30
    %v3207 = vshll.u32 %v3206, 30
    %v3208 = vsub.s32 %v3204, %v3207
    %vm3209 = vcmp.lt.s32.totalorder %v3208, 0
    %v3210 = vsub.s32 0, %v3208
    %v3211 = vsel %vm3209, %v3210, %v3208
    %v3212 = vclz %v3211
    %v3213 = vsub.s32 %v3212, 2
    %vm3214 = vcmp.gt.s32.totalorder 0, %v3213
    %v3215 = vsel %vm3214, 0, %v3213
    %v3216 = vsub.s32 32, %v3215
    %v3217 = vshll.u32 %v3208, %v3215
    %v3218 = vshrl.u32 %v3200, %v3216
    %v3219 = vor.u32 %v3217, %v3218
    %v3220 = vsub.s32 4294967266, %v3215
    %v3221 = vadd.s32 %v3220, 127
    %v3222 = vshll.u32 %v3221, 23
    %v3223 = vor.u32 4788187, %v3222
    %v3224 = vand.u32 2147483647, %v3223
    %v3226 = vcvt.s32.f32 %v3219
    %v3227 = vmul.f32 %v3226, %v3224
    %v3228 = vxor.u32 %v3227, 2147483648
    %v3229 = vsel %vm3146, %v3228, %v3227
    %v3230 = vsub.s32 4, %v3206
    %v3231 = vsel %vm3146, %v3230, %v3206
    %v3232 = vsel %vm3145, %v505, %v3229
    %v3233 = vsel %vm3145, 0, %v3231
    %v3234 = vcosq.f32.pop %v3232
    %v3235 = vsinq.f32.pop %v3232
    %vm3236 = vweird.f32 %v505
    %v3237 = vadd.s32 %v3233, 3
    %v3238 = vand.u32 %v3237, 3
    %vm3239 = vcmp.lt.s32.totalorder %v3238, 2
    %vm3240 = vcmp.eq.s32.totalorder %v3238, 0
    %v3241 = vxor.u32 %v3235, 2147483648
    %v3242 = vsel %vm3240, %v3234, %v3241
    %vm3243 = vcmp.eq.s32.totalorder %v3238, 2
    %v3244 = vxor.u32 %v3234, 2147483648
    %v3245 = vsel %vm3243, %v3244, %v3235
    %v3246 = vsel %vm3239, %v3242, %v3245
    %v3247 = vsel %vm3236, nan, %v3246
    %v3248 = vand.u32 2147483647, %v506
    %vm3249 = vcmp.le.f32.partialorder %v3248, 0.7853982
    %vm3250 = vcmp.lt.s32.totalorder %v506, 0
    %v3251 = vand.u32 %v506, 2139095040
    %v3252 = vshrl.u32 %v3251, 23
    %v3253 = vsub.s32 %v3252, 127
    %v3254 = vand.u32 2147483647, %v506
    %v3255 = vand.u32 %v3254, 8388607
    %v3256 = vor.u32 %v3255, 8388608
    %v3257 = vsub.s32 0, %v3256
    %v3258 = vadd.s32 %v3253, 1
    %vm3259 = vcmp.gt.s32.totalorder %v3258, 0
    %v3260 = vsel %vm3259, %v3258, 0
    %v3261 = vshrl.u32 %v3260, 5
    %v3262 = vand.u32 %v3260, 31
    %v3263 = vsub.s32 32, %v3262
    %v3264 = vshrl.u32 683565275, %v3263
    %v3265 = vshll.u32 683565275, %v3262
    %v3266 = vshrl.u32 2475754826, %v3263
    %v3267 = vor.u32 %v3265, %v3266
    %v3268 = vshll.u32 2475754826, %v3262
    %v3269 = vshrl.u32 2131351028, %v3263
    %v3270 = vor.u32 %v3268, %v3269
    %v3271 = vshll.u32 2131351028, %v3262
    %v3272 = vshrl.u32 2102212464, %v3263
    %v3273 = vor.u32 %v3271, %v3272
    %v3274 = vshll.u32 2102212464, %v3262
    %v3275 = vshrl.u32 920167782, %v3263
    %v3276 = vor.u32 %v3274, %v3275
    %v3277 = vshll.u32 920167782, %v3262
    %v3278 = vshrl.u32 1326507024, %v3263
    %v3279 = vor.u32 %v3277, %v3278
    %vm3280 = vcmp.lt.s32.totalorder %v3261, 1
    %vm3281 = vcmp.lt.s32.totalorder %v3261, 2
    %vm3282 = vcmp.lt.s32.totalorder %v3261, 3
    %vm3283 = vcmp.lt.s32.totalorder %v3261, 4
    %v3284 = vsel %vm3280, %v3264, %v3267
    %v3285 = vsel %vm3283, %v3273, 2102212464
    %v3286 = vsel %vm3282, %v3270, %v3285
    %v3287 = vsel %vm3281, %v3284, %v3286
    %v3288 = vsel %vm3280, %v3267, %v3270
    %v3289 = vsel %vm3283, %v3276, 920167782
    %v3290 = vsel %vm3282, %v3273, %v3289
    %v3291 = vsel %vm3281, %v3288, %v3290
    %v3292 = vsel %vm3280, %v3270, %v3273
    %v3293 = vsel %vm3283, %v3279, 1326507024
    %v3294 = vsel %vm3282, %v3276, %v3293
    %v3295 = vsel %vm3281, %v3292, %v3294
    %v3296 = vshll.u32 %v3256, 8
    %v3297 = vmul.u32.u64.compose %v3296, %v3295
    %v3298 = vextract.low.u32 %v3297
    %v3299 = vextract.high.u32 %v3297
    %v3300 = vmul.u32.u64.compose %v3296, %v3291
    %v3301 = vextract.low.u32 %v3300
    %v3302 = vextract.high.u32 %v3300
    %v3303 = vmul.u32 %v3296, %v3287
    %v3304 = vadd.s32 %v3299, %v3301
    %vm3305 = vc.u32 %v3299, %v3301
    %v3306 = vadd.s32 %v3302, 1
    %v3307 = vsel %vm3305, %v3306, %v3302
    %v3308 = vadd.s32 %v3303, %v3307
    %v3309 = vadd.s32 %v3308, 536870912
    %v3310 = vshrl.u32 %v3309, 30
    %v3311 = vshll.u32 %v3310, 30
    %v3312 = vsub.s32 %v3308, %v3311
    %vm3313 = vcmp.lt.s32.totalorder %v3312, 0
    %v3314 = vsub.s32 0, %v3312
    %v3315 = vsel %vm3313, %v3314, %v3312
    %v3316 = vclz %v3315
    %v3317 = vsub.s32 %v3316, 2
    %vm3318 = vcmp.gt.s32.totalorder 0, %v3317
    %v3319 = vsel %vm3318, 0, %v3317
    %v3320 = vsub.s32 32, %v3319
    %v3321 = vshll.u32 %v3312, %v3319
    %v3322 = vshrl.u32 %v3304, %v3320
    %v3323 = vor.u32 %v3321, %v3322
    %v3324 = vsub.s32 4294967266, %v3319
    %v3325 = vadd.s32 %v3324, 127
    %v3326 = vshll.u32 %v3325, 23
    %v3327 = vor.u32 4788187, %v3326
    %v3328 = vand.u32 2147483647, %v3327
    %v3330 = vcvt.s32.f32 %v3323
    %v3331 = vmul.f32 %v3330, %v3328
    %v3332 = vxor.u32 %v3331, 2147483648
    %v3333 = vsel %vm3250, %v3332, %v3331
    %v3334 = vsub.s32 4, %v3310
    %v3335 = vsel %vm3250, %v3334, %v3310
    %v3336 = vsel %vm3249, %v506, %v3333
    %v3337 = vsel %vm3249, 0, %v3335
    %v3338 = vcosq.f32.pop %v3336
    %v3339 = vsinq.f32.pop %v3336
    %vm3340 = vweird.f32 %v506
    %v3341 = vadd.s32 %v3337, 3
    %v3342 = vand.u32 %v3341, 3
    %vm3343 = vcmp.lt.s32.totalorder %v3342, 2
    %vm3344 = vcmp.eq.s32.totalorder %v3342, 0
    %v3345 = vxor.u32 %v3339, 2147483648
    %v3346 = vsel %vm3344, %v3338, %v3345
    %vm3347 = vcmp.eq.s32.totalorder %v3342, 2
    %v3348 = vxor.u32 %v3338, 2147483648
    %v3349 = vsel %vm3347, %v3348, %v3339
    %v3350 = vsel %vm3343, %v3346, %v3349
    %v3351 = vsel %vm3340, nan, %v3350
    %v3352 = vand.u32 2147483647, %v507
    %vm3353 = vcmp.le.f32.partialorder %v3352, 0.7853982
    %vm3354 = vcmp.lt.s32.totalorder %v507, 0
    %v3355 = vand.u32 %v507, 2139095040
    %v3356 = vshrl.u32 %v3355, 23
    %v3357 = vsub.s32 %v3356, 127
    %v3358 = vand.u32 2147483647, %v507
    %v3359 = vand.u32 %v3358, 8388607
    %v3360 = vor.u32 %v3359, 8388608
    %v3361 = vsub.s32 0, %v3360
    %v3362 = vadd.s32 %v3357, 1
    %vm3363 = vcmp.gt.s32.totalorder %v3362, 0
    %v3364 = vsel %vm3363, %v3362, 0
    %v3365 = vshrl.u32 %v3364, 5
    %v3366 = vand.u32 %v3364, 31
    %v3367 = vsub.s32 32, %v3366
    %v3368 = vshrl.u32 683565275, %v3367
    %v3369 = vshll.u32 683565275, %v3366
    %v3370 = vshrl.u32 2475754826, %v3367
    %v3371 = vor.u32 %v3369, %v3370
    %v3372 = vshll.u32 2475754826, %v3366
    %v3373 = vshrl.u32 2131351028, %v3367
    %v3374 = vor.u32 %v3372, %v3373
    %v3375 = vshll.u32 2131351028, %v3366
    %v3376 = vshrl.u32 2102212464, %v3367
    %v3377 = vor.u32 %v3375, %v3376
    %v3378 = vshll.u32 2102212464, %v3366
    %v3379 = vshrl.u32 920167782, %v3367
    %v3380 = vor.u32 %v3378, %v3379
    %v3381 = vshll.u32 920167782, %v3366
    %v3382 = vshrl.u32 1326507024, %v3367
    %v3383 = vor.u32 %v3381, %v3382
    %vm3384 = vcmp.lt.s32.totalorder %v3365, 1
    %vm3385 = vcmp.lt.s32.totalorder %v3365, 2
    %vm3386 = vcmp.lt.s32.totalorder %v3365, 3
    %vm3387 = vcmp.lt.s32.totalorder %v3365, 4
    %v3388 = vsel %vm3384, %v3368, %v3371
    %v3389 = vsel %vm3387, %v3377, 2102212464
    %v3390 = vsel %vm3386, %v3374, %v3389
    %v3391 = vsel %vm3385, %v3388, %v3390
    %v3392 = vsel %vm3384, %v3371, %v3374
    %v3393 = vsel %vm3387, %v3380, 920167782
    %v3394 = vsel %vm3386, %v3377, %v3393
    %v3395 = vsel %vm3385, %v3392, %v3394
    %v3396 = vsel %vm3384, %v3374, %v3377
    %v3397 = vsel %vm3387, %v3383, 1326507024
    %v3398 = vsel %vm3386, %v3380, %v3397
    %v3399 = vsel %vm3385, %v3396, %v3398
    %v3400 = vshll.u32 %v3360, 8
    %v3401 = vmul.u32.u64.compose %v3400, %v3399
    %v3402 = vextract.low.u32 %v3401
    %v3403 = vextract.high.u32 %v3401
    %v3404 = vmul.u32.u64.compose %v3400, %v3395
    %v3405 = vextract.low.u32 %v3404
    %v3406 = vextract.high.u32 %v3404
    %v3407 = vmul.u32 %v3400, %v3391
    %v3408 = vadd.s32 %v3403, %v3405
    %vm3409 = vc.u32 %v3403, %v3405
    %v3410 = vadd.s32 %v3406, 1
    %v3411 = vsel %vm3409, %v3410, %v3406
    %v3412 = vadd.s32 %v3407, %v3411
    %v3413 = vadd.s32 %v3412, 536870912
    %v3414 = vshrl.u32 %v3413, 30
    %v3415 = vshll.u32 %v3414, 30
    %v3416 = vsub.s32 %v3412, %v3415
    %vm3417 = vcmp.lt.s32.totalorder %v3416, 0
    %v3418 = vsub.s32 0, %v3416
    %v3419 = vsel %vm3417, %v3418, %v3416
    %v3420 = vclz %v3419
    %v3421 = vsub.s32 %v3420, 2
    %vm3422 = vcmp.gt.s32.totalorder 0, %v3421
    %v3423 = vsel %vm3422, 0, %v3421
    %v3424 = vsub.s32 32, %v3423
    %v3425 = vshll.u32 %v3416, %v3423
    %v3426 = vshrl.u32 %v3408, %v3424
    %v3427 = vor.u32 %v3425, %v3426
    %v3428 = vsub.s32 4294967266, %v3423
    %v3429 = vadd.s32 %v3428, 127
    %v3430 = vshll.u32 %v3429, 23
    %v3431 = vor.u32 4788187, %v3430
    %v3432 = vand.u32 2147483647, %v3431
    %v3434 = vcvt.s32.f32 %v3427
    %v3435 = vmul.f32 %v3434, %v3432
    %v3436 = vxor.u32 %v3435, 2147483648
    %v3437 = vsel %vm3354, %v3436, %v3435
    %v3438 = vsub.s32 4, %v3414
    %v3439 = vsel %vm3354, %v3438, %v3414
    %v3440 = vsel %vm3353, %v507, %v3437
    %v3441 = vsel %vm3353, 0, %v3439
    %v3442 = vcosq.f32.pop %v3440
    %v3443 = vsinq.f32.pop %v3440
    %vm3444 = vweird.f32 %v507
    %v3445 = vadd.s32 %v3441, 3
    %v3446 = vand.u32 %v3445, 3
    %vm3447 = vcmp.lt.s32.totalorder %v3446, 2
    %vm3448 = vcmp.eq.s32.totalorder %v3446, 0
    %v3449 = vxor.u32 %v3443, 2147483648
    %v3450 = vsel %vm3448, %v3442, %v3449
    %vm3451 = vcmp.eq.s32.totalorder %v3446, 2
    %v3452 = vxor.u32 %v3442, 2147483648
    %v3453 = vsel %vm3451, %v3452, %v3443
    %v3454 = vsel %vm3447, %v3450, %v3453
    %v3455 = vsel %vm3444, nan, %v3454
    %v3456 = vand.u32 2147483647, %v508
    %vm3457 = vcmp.le.f32.partialorder %v3456, 0.7853982
    %vm3458 = vcmp.lt.s32.totalorder %v508, 0
    %v3459 = vand.u32 %v508, 2139095040
    %v3460 = vshrl.u32 %v3459, 23
    %v3461 = vsub.s32 %v3460, 127
    %v3462 = vand.u32 2147483647, %v508
    %v3463 = vand.u32 %v3462, 8388607
    %v3464 = vor.u32 %v3463, 8388608
    %v3465 = vsub.s32 0, %v3464
    %v3466 = vadd.s32 %v3461, 1
    %vm3467 = vcmp.gt.s32.totalorder %v3466, 0
    %v3468 = vsel %vm3467, %v3466, 0
    %v3469 = vshrl.u32 %v3468, 5
    %v3470 = vand.u32 %v3468, 31
    %v3471 = vsub.s32 32, %v3470
    %v3472 = vshrl.u32 683565275, %v3471
    %v3473 = vshll.u32 683565275, %v3470
    %v3474 = vshrl.u32 2475754826, %v3471
    %v3475 = vor.u32 %v3473, %v3474
    %v3476 = vshll.u32 2475754826, %v3470
    %v3477 = vshrl.u32 2131351028, %v3471
    %v3478 = vor.u32 %v3476, %v3477
    %v3479 = vshll.u32 2131351028, %v3470
    %v3480 = vshrl.u32 2102212464, %v3471
    %v3481 = vor.u32 %v3479, %v3480
    %v3482 = vshll.u32 2102212464, %v3470
    %v3483 = vshrl.u32 920167782, %v3471
    %v3484 = vor.u32 %v3482, %v3483
    %v3485 = vshll.u32 920167782, %v3470
    %v3486 = vshrl.u32 1326507024, %v3471
    %v3487 = vor.u32 %v3485, %v3486
    %vm3488 = vcmp.lt.s32.totalorder %v3469, 1
    %vm3489 = vcmp.lt.s32.totalorder %v3469, 2
    %vm3490 = vcmp.lt.s32.totalorder %v3469, 3
    %vm3491 = vcmp.lt.s32.totalorder %v3469, 4
    %v3492 = vsel %vm3488, %v3472, %v3475
    %v3493 = vsel %vm3491, %v3481, 2102212464
    %v3494 = vsel %vm3490, %v3478, %v3493
    %v3495 = vsel %vm3489, %v3492, %v3494
    %v3496 = vsel %vm3488, %v3475, %v3478
    %v3497 = vsel %vm3491, %v3484, 920167782
    %v3498 = vsel %vm3490, %v3481, %v3497
    %v3499 = vsel %vm3489, %v3496, %v3498
    %v3500 = vsel %vm3488, %v3478, %v3481
    %v3501 = vsel %vm3491, %v3487, 1326507024
    %v3502 = vsel %vm3490, %v3484, %v3501
    %v3503 = vsel %vm3489, %v3500, %v3502
    %v3504 = vshll.u32 %v3464, 8
    %v3505 = vmul.u32.u64.compose %v3504, %v3503
    %v3506 = vextract.low.u32 %v3505
    %v3507 = vextract.high.u32 %v3505
    %v3508 = vmul.u32.u64.compose %v3504, %v3499
    %v3509 = vextract.low.u32 %v3508
    %v3510 = vextract.high.u32 %v3508
    %v3511 = vmul.u32 %v3504, %v3495
    %v3512 = vadd.s32 %v3507, %v3509
    %vm3513 = vc.u32 %v3507, %v3509
    %v3514 = vadd.s32 %v3510, 1
    %v3515 = vsel %vm3513, %v3514, %v3510
    %v3516 = vadd.s32 %v3511, %v3515
    %v3517 = vadd.s32 %v3516, 536870912
    %v3518 = vshrl.u32 %v3517, 30
    %v3519 = vshll.u32 %v3518, 30
    %v3520 = vsub.s32 %v3516, %v3519
    %vm3521 = vcmp.lt.s32.totalorder %v3520, 0
    %v3522 = vsub.s32 0, %v3520
    %v3523 = vsel %vm3521, %v3522, %v3520
    %v3524 = vclz %v3523
    %v3525 = vsub.s32 %v3524, 2
    %vm3526 = vcmp.gt.s32.totalorder 0, %v3525
    %v3527 = vsel %vm3526, 0, %v3525
    %v3528 = vsub.s32 32, %v3527
    %v3529 = vshll.u32 %v3520, %v3527
    %v3530 = vshrl.u32 %v3512, %v3528
    %v3531 = vor.u32 %v3529, %v3530
    %v3532 = vsub.s32 4294967266, %v3527
    %v3533 = vadd.s32 %v3532, 127
    %v3534 = vshll.u32 %v3533, 23
    %v3535 = vor.u32 4788187, %v3534
    %v3536 = vand.u32 2147483647, %v3535
    %v3538 = vcvt.s32.f32 %v3531
    %v3539 = vmul.f32 %v3538, %v3536
    %v3540 = vxor.u32 %v3539, 2147483648
    %v3541 = vsel %vm3458, %v3540, %v3539
    %v3542 = vsub.s32 4, %v3518
    %v3543 = vsel %vm3458, %v3542, %v3518
    %v3544 = vsel %vm3457, %v508, %v3541
    %v3545 = vsel %vm3457, 0, %v3543
    %v3546 = vcosq.f32.pop %v3544
    %v3547 = vsinq.f32.pop %v3544
    %vm3548 = vweird.f32 %v508
    %v3549 = vadd.s32 %v3545, 3
    %v3550 = vand.u32 %v3549, 3
    %vm3551 = vcmp.lt.s32.totalorder %v3550, 2
    %vm3552 = vcmp.eq.s32.totalorder %v3550, 0
    %v3553 = vxor.u32 %v3547, 2147483648
    %v3554 = vsel %vm3552, %v3546, %v3553
    %vm3555 = vcmp.eq.s32.totalorder %v3550, 2
    %v3556 = vxor.u32 %v3546, 2147483648
    %v3557 = vsel %vm3555, %v3556, %v3547
    %v3558 = vsel %vm3551, %v3554, %v3557
    %v3559 = vsel %vm3548, nan, %v3558
    %v3560 = vand.u32 2147483647, %v509
    %vm3561 = vcmp.le.f32.partialorder %v3560, 0.7853982
    %vm3562 = vcmp.lt.s32.totalorder %v509, 0
    %v3563 = vand.u32 %v509, 2139095040
    %v3564 = vshrl.u32 %v3563, 23
    %v3565 = vsub.s32 %v3564, 127
    %v3566 = vand.u32 2147483647, %v509
    %v3567 = vand.u32 %v3566, 8388607
    %v3568 = vor.u32 %v3567, 8388608
    %v3569 = vsub.s32 0, %v3568
    %v3570 = vadd.s32 %v3565, 1
    %vm3571 = vcmp.gt.s32.totalorder %v3570, 0
    %v3572 = vsel %vm3571, %v3570, 0
    %v3573 = vshrl.u32 %v3572, 5
    %v3574 = vand.u32 %v3572, 31
    %v3575 = vsub.s32 32, %v3574
    %v3576 = vshrl.u32 683565275, %v3575
    %v3577 = vshll.u32 683565275, %v3574
    %v3578 = vshrl.u32 2475754826, %v3575
    %v3579 = vor.u32 %v3577, %v3578
    %v3580 = vshll.u32 2475754826, %v3574
    %v3581 = vshrl.u32 2131351028, %v3575
    %v3582 = vor.u32 %v3580, %v3581
    %v3583 = vshll.u32 2131351028, %v3574
    %v3584 = vshrl.u32 2102212464, %v3575
    %v3585 = vor.u32 %v3583, %v3584
    %v3586 = vshll.u32 2102212464, %v3574
    %v3587 = vshrl.u32 920167782, %v3575
    %v3588 = vor.u32 %v3586, %v3587
    %v3589 = vshll.u32 920167782, %v3574
    %v3590 = vshrl.u32 1326507024, %v3575
    %v3591 = vor.u32 %v3589, %v3590
    %vm3592 = vcmp.lt.s32.totalorder %v3573, 1
    %vm3593 = vcmp.lt.s32.totalorder %v3573, 2
    %vm3594 = vcmp.lt.s32.totalorder %v3573, 3
    %vm3595 = vcmp.lt.s32.totalorder %v3573, 4
    %v3596 = vsel %vm3592, %v3576, %v3579
    %v3597 = vsel %vm3595, %v3585, 2102212464
    %v3598 = vsel %vm3594, %v3582, %v3597
    %v3599 = vsel %vm3593, %v3596, %v3598
    %v3600 = vsel %vm3592, %v3579, %v3582
    %v3601 = vsel %vm3595, %v3588, 920167782
    %v3602 = vsel %vm3594, %v3585, %v3601
    %v3603 = vsel %vm3593, %v3600, %v3602
    %v3604 = vsel %vm3592, %v3582, %v3585
    %v3605 = vsel %vm3595, %v3591, 1326507024
    %v3606 = vsel %vm3594, %v3588, %v3605
    %v3607 = vsel %vm3593, %v3604, %v3606
    %v3608 = vshll.u32 %v3568, 8
    %v3609 = vmul.u32.u64.compose %v3608, %v3607
    %v3610 = vextract.low.u32 %v3609
    %v3611 = vextract.high.u32 %v3609
    %v3612 = vmul.u32.u64.compose %v3608, %v3603
    %v3613 = vextract.low.u32 %v3612
    %v3614 = vextract.high.u32 %v3612
    %v3615 = vmul.u32 %v3608, %v3599
    %v3616 = vadd.s32 %v3611, %v3613
    %vm3617 = vc.u32 %v3611, %v3613
    %v3618 = vadd.s32 %v3614, 1
    %v3619 = vsel %vm3617, %v3618, %v3614
    %v3620 = vadd.s32 %v3615, %v3619
    %v3621 = vadd.s32 %v3620, 536870912
    %v3622 = vshrl.u32 %v3621, 30
    %v3623 = vshll.u32 %v3622, 30
    %v3624 = vsub.s32 %v3620, %v3623
    %vm3625 = vcmp.lt.s32.totalorder %v3624, 0
    %v3626 = vsub.s32 0, %v3624
    %v3627 = vsel %vm3625, %v3626, %v3624
    %v3628 = vclz %v3627
    %v3629 = vsub.s32 %v3628, 2
    %vm3630 = vcmp.gt.s32.totalorder 0, %v3629
    %v3631 = vsel %vm3630, 0, %v3629
    %v3632 = vsub.s32 32, %v3631
    %v3633 = vshll.u32 %v3624, %v3631
    %v3634 = vshrl.u32 %v3616, %v3632
    %v3635 = vor.u32 %v3633, %v3634
    %v3636 = vsub.s32 4294967266, %v3631
    %v3637 = vadd.s32 %v3636, 127
    %v3638 = vshll.u32 %v3637, 23
    %v3639 = vor.u32 4788187, %v3638
    %v3640 = vand.u32 2147483647, %v3639
    %v3642 = vcvt.s32.f32 %v3635
    %v3643 = vmul.f32 %v3642, %v3640
    %v3644 = vxor.u32 %v3643, 2147483648
    %v3645 = vsel %vm3562, %v3644, %v3643
    %v3646 = vsub.s32 4, %v3622
    %v3647 = vsel %vm3562, %v3646, %v3622
    %v3648 = vsel %vm3561, %v509, %v3645
    %v3649 = vsel %vm3561, 0, %v3647
    %v3650 = vcosq.f32.pop %v3648
    %v3651 = vsinq.f32.pop %v3648
    %vm3652 = vweird.f32 %v509
    %v3653 = vadd.s32 %v3649, 3
    %v3654 = vand.u32 %v3653, 3
    %vm3655 = vcmp.lt.s32.totalorder %v3654, 2
    %vm3656 = vcmp.eq.s32.totalorder %v3654, 0
    %v3657 = vxor.u32 %v3651, 2147483648
    %v3658 = vsel %vm3656, %v3650, %v3657
    %vm3659 = vcmp.eq.s32.totalorder %v3654, 2
    %v3660 = vxor.u32 %v3650, 2147483648
    %v3661 = vsel %vm3659, %v3660, %v3651
    %v3662 = vsel %vm3655, %v3658, %v3661
    %v3663 = vsel %vm3652, nan, %v3662
    %v3664 = vand.u32 2147483647, %v510
    %vm3665 = vcmp.le.f32.partialorder %v3664, 0.7853982
    %vm3666 = vcmp.lt.s32.totalorder %v510, 0
    %v3667 = vand.u32 %v510, 2139095040
    %v3668 = vshrl.u32 %v3667, 23
    %v3669 = vsub.s32 %v3668, 127
    %v3670 = vand.u32 2147483647, %v510
    %v3671 = vand.u32 %v3670, 8388607
    %v3672 = vor.u32 %v3671, 8388608
    %v3673 = vsub.s32 0, %v3672
    %v3674 = vadd.s32 %v3669, 1
    %vm3675 = vcmp.gt.s32.totalorder %v3674, 0
    %v3676 = vsel %vm3675, %v3674, 0
    %v3677 = vshrl.u32 %v3676, 5
    %v3678 = vand.u32 %v3676, 31
    %v3679 = vsub.s32 32, %v3678
    %v3680 = vshrl.u32 683565275, %v3679
    %v3681 = vshll.u32 683565275, %v3678
    %v3682 = vshrl.u32 2475754826, %v3679
    %v3683 = vor.u32 %v3681, %v3682
    %v3684 = vshll.u32 2475754826, %v3678
    %v3685 = vshrl.u32 2131351028, %v3679
    %v3686 = vor.u32 %v3684, %v3685
    %v3687 = vshll.u32 2131351028, %v3678
    %v3688 = vshrl.u32 2102212464, %v3679
    %v3689 = vor.u32 %v3687, %v3688
    %v3690 = vshll.u32 2102212464, %v3678
    %v3691 = vshrl.u32 920167782, %v3679
    %v3692 = vor.u32 %v3690, %v3691
    %v3693 = vshll.u32 920167782, %v3678
    %v3694 = vshrl.u32 1326507024, %v3679
    %v3695 = vor.u32 %v3693, %v3694
    %vm3696 = vcmp.lt.s32.totalorder %v3677, 1
    %vm3697 = vcmp.lt.s32.totalorder %v3677, 2
    %vm3698 = vcmp.lt.s32.totalorder %v3677, 3
    %vm3699 = vcmp.lt.s32.totalorder %v3677, 4
    %v3700 = vsel %vm3696, %v3680, %v3683
    %v3701 = vsel %vm3699, %v3689, 2102212464
    %v3702 = vsel %vm3698, %v3686, %v3701
    %v3703 = vsel %vm3697, %v3700, %v3702
    %v3704 = vsel %vm3696, %v3683, %v3686
    %v3705 = vsel %vm3699, %v3692, 920167782
    %v3706 = vsel %vm3698, %v3689, %v3705
    %v3707 = vsel %vm3697, %v3704, %v3706
    %v3708 = vsel %vm3696, %v3686, %v3689
    %v3709 = vsel %vm3699, %v3695, 1326507024
    %v3710 = vsel %vm3698, %v3692, %v3709
    %v3711 = vsel %vm3697, %v3708, %v3710
    %v3712 = vshll.u32 %v3672, 8
    %v3713 = vmul.u32.u64.compose %v3712, %v3711
    %v3714 = vextract.low.u32 %v3713
    %v3715 = vextract.high.u32 %v3713
    %v3716 = vmul.u32.u64.compose %v3712, %v3707
    %v3717 = vextract.low.u32 %v3716
    %v3718 = vextract.high.u32 %v3716
    %v3719 = vmul.u32 %v3712, %v3703
    %v3720 = vadd.s32 %v3715, %v3717
    %vm3721 = vc.u32 %v3715, %v3717
    %v3722 = vadd.s32 %v3718, 1
    %v3723 = vsel %vm3721, %v3722, %v3718
    %v3724 = vadd.s32 %v3719, %v3723
    %v3725 = vadd.s32 %v3724, 536870912
    %v3726 = vshrl.u32 %v3725, 30
    %v3727 = vshll.u32 %v3726, 30
    %v3728 = vsub.s32 %v3724, %v3727
    %vm3729 = vcmp.lt.s32.totalorder %v3728, 0
    %v3730 = vsub.s32 0, %v3728
    %v3731 = vsel %vm3729, %v3730, %v3728
    %v3732 = vclz %v3731
    %v3733 = vsub.s32 %v3732, 2
    %vm3734 = vcmp.gt.s32.totalorder 0, %v3733
    %v3735 = vsel %vm3734, 0, %v3733
    %v3736 = vsub.s32 32, %v3735
    %v3737 = vshll.u32 %v3728, %v3735
    %v3738 = vshrl.u32 %v3720, %v3736
    %v3739 = vor.u32 %v3737, %v3738
    %v3740 = vsub.s32 4294967266, %v3735
    %v3741 = vadd.s32 %v3740, 127
    %v3742 = vshll.u32 %v3741, 23
    %v3743 = vor.u32 4788187, %v3742
    %v3744 = vand.u32 2147483647, %v3743
    %v3746 = vcvt.s32.f32 %v3739
    %v3747 = vmul.f32 %v3746, %v3744
    %v3748 = vxor.u32 %v3747, 2147483648
    %v3749 = vsel %vm3666, %v3748, %v3747
    %v3750 = vsub.s32 4, %v3726
    %v3751 = vsel %vm3666, %v3750, %v3726
    %v3752 = vsel %vm3665, %v510, %v3749
    %v3753 = vsel %vm3665, 0, %v3751
    %v3754 = vcosq.f32.pop %v3752
    %v3755 = vsinq.f32.pop %v3752
    %vm3756 = vweird.f32 %v510
    %v3757 = vadd.s32 %v3753, 3
    %v3758 = vand.u32 %v3757, 3
    %vm3759 = vcmp.lt.s32.totalorder %v3758, 2
    %vm3760 = vcmp.eq.s32.totalorder %v3758, 0
    %v3761 = vxor.u32 %v3755, 2147483648
    %v3762 = vsel %vm3760, %v3754, %v3761
    %vm3763 = vcmp.eq.s32.totalorder %v3758, 2
    %v3764 = vxor.u32 %v3754, 2147483648
    %v3765 = vsel %vm3763, %v3764, %v3755
    %v3766 = vsel %vm3759, %v3762, %v3765
    %v3767 = vsel %vm3756, nan, %v3766
    %v3768 = vand.u32 2147483647, %v511
    %vm3769 = vcmp.le.f32.partialorder %v3768, 0.7853982
    %vm3770 = vcmp.lt.s32.totalorder %v511, 0
    %v3771 = vand.u32 %v511, 2139095040
    %v3772 = vshrl.u32 %v3771, 23
    %v3773 = vsub.s32 %v3772, 127
    %v3774 = vand.u32 2147483647, %v511
    %v3775 = vand.u32 %v3774, 8388607
    %v3776 = vor.u32 %v3775, 8388608
    %v3777 = vsub.s32 0, %v3776
    %v3778 = vadd.s32 %v3773, 1
    %vm3779 = vcmp.gt.s32.totalorder %v3778, 0
    %v3780 = vsel %vm3779, %v3778, 0
    %v3781 = vshrl.u32 %v3780, 5
    %v3782 = vand.u32 %v3780, 31
    %v3783 = vsub.s32 32, %v3782
    %v3784 = vshrl.u32 683565275, %v3783
    %v3785 = vshll.u32 683565275, %v3782
    %v3786 = vshrl.u32 2475754826, %v3783
    %v3787 = vor.u32 %v3785, %v3786
    %v3788 = vshll.u32 2475754826, %v3782
    %v3789 = vshrl.u32 2131351028, %v3783
    %v3790 = vor.u32 %v3788, %v3789
    %v3791 = vshll.u32 2131351028, %v3782
    %v3792 = vshrl.u32 2102212464, %v3783
    %v3793 = vor.u32 %v3791, %v3792
    %v3794 = vshll.u32 2102212464, %v3782
    %v3795 = vshrl.u32 920167782, %v3783
    %v3796 = vor.u32 %v3794, %v3795
    %v3797 = vshll.u32 920167782, %v3782
    %v3798 = vshrl.u32 1326507024, %v3783
    %v3799 = vor.u32 %v3797, %v3798
    %vm3800 = vcmp.lt.s32.totalorder %v3781, 1
    %vm3801 = vcmp.lt.s32.totalorder %v3781, 2
    %vm3802 = vcmp.lt.s32.totalorder %v3781, 3
    %vm3803 = vcmp.lt.s32.totalorder %v3781, 4
    %v3804 = vsel %vm3800, %v3784, %v3787
    %v3805 = vsel %vm3803, %v3793, 2102212464
    %v3806 = vsel %vm3802, %v3790, %v3805
    %v3807 = vsel %vm3801, %v3804, %v3806
    %v3808 = vsel %vm3800, %v3787, %v3790
    %v3809 = vsel %vm3803, %v3796, 920167782
    %v3810 = vsel %vm3802, %v3793, %v3809
    %v3811 = vsel %vm3801, %v3808, %v3810
    %v3812 = vsel %vm3800, %v3790, %v3793
    %v3813 = vsel %vm3803, %v3799, 1326507024
    %v3814 = vsel %vm3802, %v3796, %v3813
    %v3815 = vsel %vm3801, %v3812, %v3814
    %v3816 = vshll.u32 %v3776, 8
    %v3817 = vmul.u32.u64.compose %v3816, %v3815
    %v3818 = vextract.low.u32 %v3817
    %v3819 = vextract.high.u32 %v3817
    %v3820 = vmul.u32.u64.compose %v3816, %v3811
    %v3821 = vextract.low.u32 %v3820
    %v3822 = vextract.high.u32 %v3820
    %v3823 = vmul.u32 %v3816, %v3807
    %v3824 = vadd.s32 %v3819, %v3821
    %vm3825 = vc.u32 %v3819, %v3821
    %v3826 = vadd.s32 %v3822, 1
    %v3827 = vsel %vm3825, %v3826, %v3822
    %v3828 = vadd.s32 %v3823, %v3827
    %v3829 = vadd.s32 %v3828, 536870912
    %v3830 = vshrl.u32 %v3829, 30
    %v3831 = vshll.u32 %v3830, 30
    %v3832 = vsub.s32 %v3828, %v3831
    %vm3833 = vcmp.lt.s32.totalorder %v3832, 0
    %v3834 = vsub.s32 0, %v3832
    %v3835 = vsel %vm3833, %v3834, %v3832
    %v3836 = vclz %v3835
    %v3837 = vsub.s32 %v3836, 2
    %vm3838 = vcmp.gt.s32.totalorder 0, %v3837
    %v3839 = vsel %vm3838, 0, %v3837
    %v3840 = vsub.s32 32, %v3839
    %v3841 = vshll.u32 %v3832, %v3839
    %v3842 = vshrl.u32 %v3824, %v3840
    %v3843 = vor.u32 %v3841, %v3842
    %v3844 = vsub.s32 4294967266, %v3839
    %v3845 = vadd.s32 %v3844, 127
    %v3846 = vshll.u32 %v3845, 23
    %v3847 = vor.u32 4788187, %v3846
    %v3848 = vand.u32 2147483647, %v3847
    %v3850 = vcvt.s32.f32 %v3843
    %v3851 = vmul.f32 %v3850, %v3848
    %v3852 = vxor.u32 %v3851, 2147483648
    %v3853 = vsel %vm3770, %v3852, %v3851
    %v3854 = vsub.s32 4, %v3830
    %v3855 = vsel %vm3770, %v3854, %v3830
    %v3856 = vsel %vm3769, %v511, %v3853
    %v3857 = vsel %vm3769, 0, %v3855
    %v3858 = vcosq.f32.pop %v3856
    %v3859 = vsinq.f32.pop %v3856
    %vm3860 = vweird.f32 %v511
    %v3861 = vadd.s32 %v3857, 3
    %v3862 = vand.u32 %v3861, 3
    %vm3863 = vcmp.lt.s32.totalorder %v3862, 2
    %vm3864 = vcmp.eq.s32.totalorder %v3862, 0
    %v3865 = vxor.u32 %v3859, 2147483648
    %v3866 = vsel %vm3864, %v3858, %v3865
    %vm3867 = vcmp.eq.s32.totalorder %v3862, 2
    %v3868 = vxor.u32 %v3858, 2147483648
    %v3869 = vsel %vm3867, %v3868, %v3859
    %v3870 = vsel %vm3863, %v3866, %v3869
    %v3871 = vsel %vm3860, nan, %v3870
    %v3872 = vand.u32 2147483647, %v512
    %vm3873 = vcmp.le.f32.partialorder %v3872, 0.7853982
    %vm3874 = vcmp.lt.s32.totalorder %v512, 0
    %v3875 = vand.u32 %v512, 2139095040
    %v3876 = vshrl.u32 %v3875, 23
    %v3877 = vsub.s32 %v3876, 127
    %v3878 = vand.u32 2147483647, %v512
    %v3879 = vand.u32 %v3878, 8388607
    %v3880 = vor.u32 %v3879, 8388608
    %v3881 = vsub.s32 0, %v3880
    %v3882 = vadd.s32 %v3877, 1
    %vm3883 = vcmp.gt.s32.totalorder %v3882, 0
    %v3884 = vsel %vm3883, %v3882, 0
    %v3885 = vshrl.u32 %v3884, 5
    %v3886 = vand.u32 %v3884, 31
    %v3887 = vsub.s32 32, %v3886
    %v3888 = vshrl.u32 683565275, %v3887
    %v3889 = vshll.u32 683565275, %v3886
    %v3890 = vshrl.u32 2475754826, %v3887
    %v3891 = vor.u32 %v3889, %v3890
    %v3892 = vshll.u32 2475754826, %v3886
    %v3893 = vshrl.u32 2131351028, %v3887
    %v3894 = vor.u32 %v3892, %v3893
    %v3895 = vshll.u32 2131351028, %v3886
    %v3896 = vshrl.u32 2102212464, %v3887
    %v3897 = vor.u32 %v3895, %v3896
    %v3898 = vshll.u32 2102212464, %v3886
    %v3899 = vshrl.u32 920167782, %v3887
    %v3900 = vor.u32 %v3898, %v3899
    %v3901 = vshll.u32 920167782, %v3886
    %v3902 = vshrl.u32 1326507024, %v3887
    %v3903 = vor.u32 %v3901, %v3902
    %vm3904 = vcmp.lt.s32.totalorder %v3885, 1
    %vm3905 = vcmp.lt.s32.totalorder %v3885, 2
    %vm3906 = vcmp.lt.s32.totalorder %v3885, 3
    %vm3907 = vcmp.lt.s32.totalorder %v3885, 4
    %v3908 = vsel %vm3904, %v3888, %v3891
    %v3909 = vsel %vm3907, %v3897, 2102212464
    %v3910 = vsel %vm3906, %v3894, %v3909
    %v3911 = vsel %vm3905, %v3908, %v3910
    %v3912 = vsel %vm3904, %v3891, %v3894
    %v3913 = vsel %vm3907, %v3900, 920167782
    %v3914 = vsel %vm3906, %v3897, %v3913
    %v3915 = vsel %vm3905, %v3912, %v3914
    %v3916 = vsel %vm3904, %v3894, %v3897
    %v3917 = vsel %vm3907, %v3903, 1326507024
    %v3918 = vsel %vm3906, %v3900, %v3917
    %v3919 = vsel %vm3905, %v3916, %v3918
    %v3920 = vshll.u32 %v3880, 8
    %v3921 = vmul.u32.u64.compose %v3920, %v3919
    %v3922 = vextract.low.u32 %v3921
    %v3923 = vextract.high.u32 %v3921
    %v3924 = vmul.u32.u64.compose %v3920, %v3915
    %v3925 = vextract.low.u32 %v3924
    %v3926 = vextract.high.u32 %v3924
    %v3927 = vmul.u32 %v3920, %v3911
    %v3928 = vadd.s32 %v3923, %v3925
    %vm3929 = vc.u32 %v3923, %v3925
    %v3930 = vadd.s32 %v3926, 1
    %v3931 = vsel %vm3929, %v3930, %v3926
    %v3932 = vadd.s32 %v3927, %v3931
    %v3933 = vadd.s32 %v3932, 536870912
    %v3934 = vshrl.u32 %v3933, 30
    %v3935 = vshll.u32 %v3934, 30
    %v3936 = vsub.s32 %v3932, %v3935
    %vm3937 = vcmp.lt.s32.totalorder %v3936, 0
    %v3938 = vsub.s32 0, %v3936
    %v3939 = vsel %vm3937, %v3938, %v3936
    %v3940 = vclz %v3939
    %v3941 = vsub.s32 %v3940, 2
    %vm3942 = vcmp.gt.s32.totalorder 0, %v3941
    %v3943 = vsel %vm3942, 0, %v3941
    %v3944 = vsub.s32 32, %v3943
    %v3945 = vshll.u32 %v3936, %v3943
    %v3946 = vshrl.u32 %v3928, %v3944
    %v3947 = vor.u32 %v3945, %v3946
    %v3948 = vsub.s32 4294967266, %v3943
    %v3949 = vadd.s32 %v3948, 127
    %v3950 = vshll.u32 %v3949, 23
    %v3951 = vor.u32 4788187, %v3950
    %v3952 = vand.u32 2147483647, %v3951
    %v3954 = vcvt.s32.f32 %v3947
    %v3955 = vmul.f32 %v3954, %v3952
    %v3956 = vxor.u32 %v3955, 2147483648
    %v3957 = vsel %vm3874, %v3956, %v3955
    %v3958 = vsub.s32 4, %v3934
    %v3959 = vsel %vm3874, %v3958, %v3934
    %v3960 = vsel %vm3873, %v512, %v3957
    %v3961 = vsel %vm3873, 0, %v3959
    %v3962 = vcosq.f32.pop %v3960
    %v3963 = vsinq.f32.pop %v3960
    %vm3964 = vweird.f32 %v512
    %v3965 = vadd.s32 %v3961, 3
    %v3966 = vand.u32 %v3965, 3
    %vm3967 = vcmp.lt.s32.totalorder %v3966, 2
    %vm3968 = vcmp.eq.s32.totalorder %v3966, 0
    %v3969 = vxor.u32 %v3963, 2147483648
    %v3970 = vsel %vm3968, %v3962, %v3969
    %vm3971 = vcmp.eq.s32.totalorder %v3966, 2
    %v3972 = vxor.u32 %v3962, 2147483648
    %v3973 = vsel %vm3971, %v3972, %v3963
    %v3974 = vsel %vm3967, %v3970, %v3973
    %v3975 = vsel %vm3964, nan, %v3974
    %v3976 = vand.u32 2147483647, %v513
    %vm3977 = vcmp.le.f32.partialorder %v3976, 0.7853982
    %vm3978 = vcmp.lt.s32.totalorder %v513, 0
    %v3979 = vand.u32 %v513, 2139095040
    %v3980 = vshrl.u32 %v3979, 23
    %v3981 = vsub.s32 %v3980, 127
    %v3982 = vand.u32 2147483647, %v513
    %v3983 = vand.u32 %v3982, 8388607
    %v3984 = vor.u32 %v3983, 8388608
    %v3985 = vsub.s32 0, %v3984
    %v3986 = vadd.s32 %v3981, 1
    %vm3987 = vcmp.gt.s32.totalorder %v3986, 0
    %v3988 = vsel %vm3987, %v3986, 0
    %v3989 = vshrl.u32 %v3988, 5
    %v3990 = vand.u32 %v3988, 31
    %v3991 = vsub.s32 32, %v3990
    %v3992 = vshrl.u32 683565275, %v3991
    %v3993 = vshll.u32 683565275, %v3990
    %v3994 = vshrl.u32 2475754826, %v3991
    %v3995 = vor.u32 %v3993, %v3994
    %v3996 = vshll.u32 2475754826, %v3990
    %v3997 = vshrl.u32 2131351028, %v3991
    %v3998 = vor.u32 %v3996, %v3997
    %v3999 = vshll.u32 2131351028, %v3990
    %v4000 = vshrl.u32 2102212464, %v3991
    %v4001 = vor.u32 %v3999, %v4000
    %v4002 = vshll.u32 2102212464, %v3990
    %v4003 = vshrl.u32 920167782, %v3991
    %v4004 = vor.u32 %v4002, %v4003
    %v4005 = vshll.u32 920167782, %v3990
    %v4006 = vshrl.u32 1326507024, %v3991
    %v4007 = vor.u32 %v4005, %v4006
    %vm4008 = vcmp.lt.s32.totalorder %v3989, 1
    %vm4009 = vcmp.lt.s32.totalorder %v3989, 2
    %vm4010 = vcmp.lt.s32.totalorder %v3989, 3
    %vm4011 = vcmp.lt.s32.totalorder %v3989, 4
    %v4012 = vsel %vm4008, %v3992, %v3995
    %v4013 = vsel %vm4011, %v4001, 2102212464
    %v4014 = vsel %vm4010, %v3998, %v4013
    %v4015 = vsel %vm4009, %v4012, %v4014
    %v4016 = vsel %vm4008, %v3995, %v3998
    %v4017 = vsel %vm4011, %v4004, 920167782
    %v4018 = vsel %vm4010, %v4001, %v4017
    %v4019 = vsel %vm4009, %v4016, %v4018
    %v4020 = vsel %vm4008, %v3998, %v4001
    %v4021 = vsel %vm4011, %v4007, 1326507024
    %v4022 = vsel %vm4010, %v4004, %v4021
    %v4023 = vsel %vm4009, %v4020, %v4022
    %v4024 = vshll.u32 %v3984, 8
    %v4025 = vmul.u32.u64.compose %v4024, %v4023
    %v4026 = vextract.low.u32 %v4025
    %v4027 = vextract.high.u32 %v4025
    %v4028 = vmul.u32.u64.compose %v4024, %v4019
    %v4029 = vextract.low.u32 %v4028
    %v4030 = vextract.high.u32 %v4028
    %v4031 = vmul.u32 %v4024, %v4015
    %v4032 = vadd.s32 %v4027, %v4029
    %vm4033 = vc.u32 %v4027, %v4029
    %v4034 = vadd.s32 %v4030, 1
    %v4035 = vsel %vm4033, %v4034, %v4030
    %v4036 = vadd.s32 %v4031, %v4035
    %v4037 = vadd.s32 %v4036, 536870912
    %v4038 = vshrl.u32 %v4037, 30
    %v4039 = vshll.u32 %v4038, 30
    %v4040 = vsub.s32 %v4036, %v4039
    %vm4041 = vcmp.lt.s32.totalorder %v4040, 0
    %v4042 = vsub.s32 0, %v4040
    %v4043 = vsel %vm4041, %v4042, %v4040
    %v4044 = vclz %v4043
    %v4045 = vsub.s32 %v4044, 2
    %vm4046 = vcmp.gt.s32.totalorder 0, %v4045
    %v4047 = vsel %vm4046, 0, %v4045
    %v4048 = vsub.s32 32, %v4047
    %v4049 = vshll.u32 %v4040, %v4047
    %v4050 = vshrl.u32 %v4032, %v4048
    %v4051 = vor.u32 %v4049, %v4050
    %v4052 = vsub.s32 4294967266, %v4047
    %v4053 = vadd.s32 %v4052, 127
    %v4054 = vshll.u32 %v4053, 23
    %v4055 = vor.u32 4788187, %v4054
    %v4056 = vand.u32 2147483647, %v4055
    %v4058 = vcvt.s32.f32 %v4051
    %v4059 = vmul.f32 %v4058, %v4056
    %v4060 = vxor.u32 %v4059, 2147483648
    %v4061 = vsel %vm3978, %v4060, %v4059
    %v4062 = vsub.s32 4, %v4038
    %v4063 = vsel %vm3978, %v4062, %v4038
    %v4064 = vsel %vm3977, %v513, %v4061
    %v4065 = vsel %vm3977, 0, %v4063
    %v4066 = vcosq.f32.pop %v4064
    %v4067 = vsinq.f32.pop %v4064
    %vm4068 = vweird.f32 %v513
    %v4069 = vadd.s32 %v4065, 3
    %v4070 = vand.u32 %v4069, 3
    %vm4071 = vcmp.lt.s32.totalorder %v4070, 2
    %vm4072 = vcmp.eq.s32.totalorder %v4070, 0
    %v4073 = vxor.u32 %v4067, 2147483648
    %v4074 = vsel %vm4072, %v4066, %v4073
    %vm4075 = vcmp.eq.s32.totalorder %v4070, 2
    %v4076 = vxor.u32 %v4066, 2147483648
    %v4077 = vsel %vm4075, %v4076, %v4067
    %v4078 = vsel %vm4071, %v4074, %v4077
    %v4079 = vsel %vm4068, nan, %v4078
    %v4080 = vand.u32 2147483647, %v514
    %vm4081 = vcmp.le.f32.partialorder %v4080, 0.7853982
    %vm4082 = vcmp.lt.s32.totalorder %v514, 0
    %v4083 = vand.u32 %v514, 2139095040
    %v4084 = vshrl.u32 %v4083, 23
    %v4085 = vsub.s32 %v4084, 127
    %v4086 = vand.u32 2147483647, %v514
    %v4087 = vand.u32 %v4086, 8388607
    %v4088 = vor.u32 %v4087, 8388608
    %v4089 = vsub.s32 0, %v4088
    %v4090 = vadd.s32 %v4085, 1
    %vm4091 = vcmp.gt.s32.totalorder %v4090, 0
    %v4092 = vsel %vm4091, %v4090, 0
    %v4093 = vshrl.u32 %v4092, 5
    %v4094 = vand.u32 %v4092, 31
    %v4095 = vsub.s32 32, %v4094
    %v4096 = vshrl.u32 683565275, %v4095
    %v4097 = vshll.u32 683565275, %v4094
    %v4098 = vshrl.u32 2475754826, %v4095
    %v4099 = vor.u32 %v4097, %v4098
    %v4100 = vshll.u32 2475754826, %v4094
    %v4101 = vshrl.u32 2131351028, %v4095
    %v4102 = vor.u32 %v4100, %v4101
    %v4103 = vshll.u32 2131351028, %v4094
    %v4104 = vshrl.u32 2102212464, %v4095
    %v4105 = vor.u32 %v4103, %v4104
    %v4106 = vshll.u32 2102212464, %v4094
    %v4107 = vshrl.u32 920167782, %v4095
    %v4108 = vor.u32 %v4106, %v4107
    %v4109 = vshll.u32 920167782, %v4094
    %v4110 = vshrl.u32 1326507024, %v4095
    %v4111 = vor.u32 %v4109, %v4110
    %vm4112 = vcmp.lt.s32.totalorder %v4093, 1
    %vm4113 = vcmp.lt.s32.totalorder %v4093, 2
    %vm4114 = vcmp.lt.s32.totalorder %v4093, 3
    %vm4115 = vcmp.lt.s32.totalorder %v4093, 4
    %v4116 = vsel %vm4112, %v4096, %v4099
    %v4117 = vsel %vm4115, %v4105, 2102212464
    %v4118 = vsel %vm4114, %v4102, %v4117
    %v4119 = vsel %vm4113, %v4116, %v4118
    %v4120 = vsel %vm4112, %v4099, %v4102
    %v4121 = vsel %vm4115, %v4108, 920167782
    %v4122 = vsel %vm4114, %v4105, %v4121
    %v4123 = vsel %vm4113, %v4120, %v4122
    %v4124 = vsel %vm4112, %v4102, %v4105
    %v4125 = vsel %vm4115, %v4111, 1326507024
    %v4126 = vsel %vm4114, %v4108, %v4125
    %v4127 = vsel %vm4113, %v4124, %v4126
    %v4128 = vshll.u32 %v4088, 8
    %v4129 = vmul.u32.u64.compose %v4128, %v4127
    %v4130 = vextract.low.u32 %v4129
    %v4131 = vextract.high.u32 %v4129
    %v4132 = vmul.u32.u64.compose %v4128, %v4123
    %v4133 = vextract.low.u32 %v4132
    %v4134 = vextract.high.u32 %v4132
    %v4135 = vmul.u32 %v4128, %v4119
    %v4136 = vadd.s32 %v4131, %v4133
    %vm4137 = vc.u32 %v4131, %v4133
    %v4138 = vadd.s32 %v4134, 1
    %v4139 = vsel %vm4137, %v4138, %v4134
    %v4140 = vadd.s32 %v4135, %v4139
    %v4141 = vadd.s32 %v4140, 536870912
    %v4142 = vshrl.u32 %v4141, 30
    %v4143 = vshll.u32 %v4142, 30
    %v4144 = vsub.s32 %v4140, %v4143
    %vm4145 = vcmp.lt.s32.totalorder %v4144, 0
    %v4146 = vsub.s32 0, %v4144
    %v4147 = vsel %vm4145, %v4146, %v4144
    %v4148 = vclz %v4147
    %v4149 = vsub.s32 %v4148, 2
    %vm4150 = vcmp.gt.s32.totalorder 0, %v4149
    %v4151 = vsel %vm4150, 0, %v4149
    %v4152 = vsub.s32 32, %v4151
    %v4153 = vshll.u32 %v4144, %v4151
    %v4154 = vshrl.u32 %v4136, %v4152
    %v4155 = vor.u32 %v4153, %v4154
    %v4156 = vsub.s32 4294967266, %v4151
    %v4157 = vadd.s32 %v4156, 127
    %v4158 = vshll.u32 %v4157, 23
    %v4159 = vor.u32 4788187, %v4158
    %v4160 = vand.u32 2147483647, %v4159
    %v4162 = vcvt.s32.f32 %v4155
    %v4163 = vmul.f32 %v4162, %v4160
    %v4164 = vxor.u32 %v4163, 2147483648
    %v4165 = vsel %vm4082, %v4164, %v4163
    %v4166 = vsub.s32 4, %v4142
    %v4167 = vsel %vm4082, %v4166, %v4142
    %v4168 = vsel %vm4081, %v514, %v4165
    %v4169 = vsel %vm4081, 0, %v4167
    %v4170 = vcosq.f32.pop %v4168
    %v4171 = vsinq.f32.pop %v4168
    %vm4172 = vweird.f32 %v514
    %v4173 = vadd.s32 %v4169, 3
    %v4174 = vand.u32 %v4173, 3
    %vm4175 = vcmp.lt.s32.totalorder %v4174, 2
    %vm4176 = vcmp.eq.s32.totalorder %v4174, 0
    %v4177 = vxor.u32 %v4171, 2147483648
    %v4178 = vsel %vm4176, %v4170, %v4177
    %vm4179 = vcmp.eq.s32.totalorder %v4174, 2
    %v4180 = vxor.u32 %v4170, 2147483648
    %v4181 = vsel %vm4179, %v4180, %v4171
    %v4182 = vsel %vm4175, %v4178, %v4181
    %v4183 = vsel %vm4172, nan, %v4182
    %v4184 = vand.u32 2147483647, %v515
    %vm4185 = vcmp.le.f32.partialorder %v4184, 0.7853982
    %vm4186 = vcmp.lt.s32.totalorder %v515, 0
    %v4187 = vand.u32 %v515, 2139095040
    %v4188 = vshrl.u32 %v4187, 23
    %v4189 = vsub.s32 %v4188, 127
    %v4190 = vand.u32 2147483647, %v515
    %v4191 = vand.u32 %v4190, 8388607
    %v4192 = vor.u32 %v4191, 8388608
    %v4193 = vsub.s32 0, %v4192
    %v4194 = vadd.s32 %v4189, 1
    %vm4195 = vcmp.gt.s32.totalorder %v4194, 0
    %v4196 = vsel %vm4195, %v4194, 0
    %v4197 = vshrl.u32 %v4196, 5
    %v4198 = vand.u32 %v4196, 31
    %v4199 = vsub.s32 32, %v4198
    %v4200 = vshrl.u32 683565275, %v4199
    %v4201 = vshll.u32 683565275, %v4198
    %v4202 = vshrl.u32 2475754826, %v4199
    %v4203 = vor.u32 %v4201, %v4202
    %v4204 = vshll.u32 2475754826, %v4198
    %v4205 = vshrl.u32 2131351028, %v4199
    %v4206 = vor.u32 %v4204, %v4205
    %v4207 = vshll.u32 2131351028, %v4198
    %v4208 = vshrl.u32 2102212464, %v4199
    %v4209 = vor.u32 %v4207, %v4208
    %v4210 = vshll.u32 2102212464, %v4198
    %v4211 = vshrl.u32 920167782, %v4199
    %v4212 = vor.u32 %v4210, %v4211
    %v4213 = vshll.u32 920167782, %v4198
    %v4214 = vshrl.u32 1326507024, %v4199
    %v4215 = vor.u32 %v4213, %v4214
    %vm4216 = vcmp.lt.s32.totalorder %v4197, 1
    %vm4217 = vcmp.lt.s32.totalorder %v4197, 2
    %vm4218 = vcmp.lt.s32.totalorder %v4197, 3
    %vm4219 = vcmp.lt.s32.totalorder %v4197, 4
    %v4220 = vsel %vm4216, %v4200, %v4203
    %v4221 = vsel %vm4219, %v4209, 2102212464
    %v4222 = vsel %vm4218, %v4206, %v4221
    %v4223 = vsel %vm4217, %v4220, %v4222
    %v4224 = vsel %vm4216, %v4203, %v4206
    %v4225 = vsel %vm4219, %v4212, 920167782
    %v4226 = vsel %vm4218, %v4209, %v4225
    %v4227 = vsel %vm4217, %v4224, %v4226
    %v4228 = vsel %vm4216, %v4206, %v4209
    %v4229 = vsel %vm4219, %v4215, 1326507024
    %v4230 = vsel %vm4218, %v4212, %v4229
    %v4231 = vsel %vm4217, %v4228, %v4230
    %v4232 = vshll.u32 %v4192, 8
    %v4233 = vmul.u32.u64.compose %v4232, %v4231
    %v4234 = vextract.low.u32 %v4233
    %v4235 = vextract.high.u32 %v4233
    %v4236 = vmul.u32.u64.compose %v4232, %v4227
    %v4237 = vextract.low.u32 %v4236
    %v4238 = vextract.high.u32 %v4236
    %v4239 = vmul.u32 %v4232, %v4223
    %v4240 = vadd.s32 %v4235, %v4237
    %vm4241 = vc.u32 %v4235, %v4237
    %v4242 = vadd.s32 %v4238, 1
    %v4243 = vsel %vm4241, %v4242, %v4238
    %v4244 = vadd.s32 %v4239, %v4243
    %v4245 = vadd.s32 %v4244, 536870912
    %v4246 = vshrl.u32 %v4245, 30
    %v4247 = vshll.u32 %v4246, 30
    %v4248 = vsub.s32 %v4244, %v4247
    %vm4249 = vcmp.lt.s32.totalorder %v4248, 0
    %v4250 = vsub.s32 0, %v4248
    %v4251 = vsel %vm4249, %v4250, %v4248
    %v4252 = vclz %v4251
    %v4253 = vsub.s32 %v4252, 2
    %vm4254 = vcmp.gt.s32.totalorder 0, %v4253
    %v4255 = vsel %vm4254, 0, %v4253
    %v4256 = vsub.s32 32, %v4255
    %v4257 = vshll.u32 %v4248, %v4255
    %v4258 = vshrl.u32 %v4240, %v4256
    %v4259 = vor.u32 %v4257, %v4258
    %v4260 = vsub.s32 4294967266, %v4255
    %v4261 = vadd.s32 %v4260, 127
    %v4262 = vshll.u32 %v4261, 23
    %v4263 = vor.u32 4788187, %v4262
    %v4264 = vand.u32 2147483647, %v4263
    %v4266 = vcvt.s32.f32 %v4259
    %v4267 = vmul.f32 %v4266, %v4264
    %v4268 = vxor.u32 %v4267, 2147483648
    %v4269 = vsel %vm4186, %v4268, %v4267
    %v4270 = vsub.s32 4, %v4246
    %v4271 = vsel %vm4186, %v4270, %v4246
    %v4272 = vsel %vm4185, %v515, %v4269
    %v4273 = vsel %vm4185, 0, %v4271
    %v4274 = vcosq.f32.pop %v4272
    %v4275 = vsinq.f32.pop %v4272
    %vm4276 = vweird.f32 %v515
    %v4277 = vadd.s32 %v4273, 3
    %v4278 = vand.u32 %v4277, 3
    %vm4279 = vcmp.lt.s32.totalorder %v4278, 2
    %vm4280 = vcmp.eq.s32.totalorder %v4278, 0
    %v4281 = vxor.u32 %v4275, 2147483648
    %v4282 = vsel %vm4280, %v4274, %v4281
    %vm4283 = vcmp.eq.s32.totalorder %v4278, 2
    %v4284 = vxor.u32 %v4274, 2147483648
    %v4285 = vsel %vm4283, %v4284, %v4275
    %v4286 = vsel %vm4279, %v4282, %v4285
    %v4287 = vsel %vm4276, nan, %v4286
    %v4288 = vand.u32 2147483647, %v516
    %vm4289 = vcmp.le.f32.partialorder %v4288, 0.7853982
    %vm4290 = vcmp.lt.s32.totalorder %v516, 0
    %v4291 = vand.u32 %v516, 2139095040
    %v4292 = vshrl.u32 %v4291, 23
    %v4293 = vsub.s32 %v4292, 127
    %v4294 = vand.u32 2147483647, %v516
    %v4295 = vand.u32 %v4294, 8388607
    %v4296 = vor.u32 %v4295, 8388608
    %v4297 = vsub.s32 0, %v4296
    %v4298 = vadd.s32 %v4293, 1
    %vm4299 = vcmp.gt.s32.totalorder %v4298, 0
    %v4300 = vsel %vm4299, %v4298, 0
    %v4301 = vshrl.u32 %v4300, 5
    %v4302 = vand.u32 %v4300, 31
    %v4303 = vsub.s32 32, %v4302
    %v4304 = vshrl.u32 683565275, %v4303
    %v4305 = vshll.u32 683565275, %v4302
    %v4306 = vshrl.u32 2475754826, %v4303
    %v4307 = vor.u32 %v4305, %v4306
    %v4308 = vshll.u32 2475754826, %v4302
    %v4309 = vshrl.u32 2131351028, %v4303
    %v4310 = vor.u32 %v4308, %v4309
    %v4311 = vshll.u32 2131351028, %v4302
    %v4312 = vshrl.u32 2102212464, %v4303
    %v4313 = vor.u32 %v4311, %v4312
    %v4314 = vshll.u32 2102212464, %v4302
    %v4315 = vshrl.u32 920167782, %v4303
    %v4316 = vor.u32 %v4314, %v4315
    %v4317 = vshll.u32 920167782, %v4302
    %v4318 = vshrl.u32 1326507024, %v4303
    %v4319 = vor.u32 %v4317, %v4318
    %vm4320 = vcmp.lt.s32.totalorder %v4301, 1
    %vm4321 = vcmp.lt.s32.totalorder %v4301, 2
    %vm4322 = vcmp.lt.s32.totalorder %v4301, 3
    %vm4323 = vcmp.lt.s32.totalorder %v4301, 4
    %v4324 = vsel %vm4320, %v4304, %v4307
    %v4325 = vsel %vm4323, %v4313, 2102212464
    %v4326 = vsel %vm4322, %v4310, %v4325
    %v4327 = vsel %vm4321, %v4324, %v4326
    %v4328 = vsel %vm4320, %v4307, %v4310
    %v4329 = vsel %vm4323, %v4316, 920167782
    %v4330 = vsel %vm4322, %v4313, %v4329
    %v4331 = vsel %vm4321, %v4328, %v4330
    %v4332 = vsel %vm4320, %v4310, %v4313
    %v4333 = vsel %vm4323, %v4319, 1326507024
    %v4334 = vsel %vm4322, %v4316, %v4333
    %v4335 = vsel %vm4321, %v4332, %v4334
    %v4336 = vshll.u32 %v4296, 8
    %v4337 = vmul.u32.u64.compose %v4336, %v4335
    %v4338 = vextract.low.u32 %v4337
    %v4339 = vextract.high.u32 %v4337
    %v4340 = vmul.u32.u64.compose %v4336, %v4331
    %v4341 = vextract.low.u32 %v4340
    %v4342 = vextract.high.u32 %v4340
    %v4343 = vmul.u32 %v4336, %v4327
    %v4344 = vadd.s32 %v4339, %v4341
    %vm4345 = vc.u32 %v4339, %v4341
    %v4346 = vadd.s32 %v4342, 1
    %v4347 = vsel %vm4345, %v4346, %v4342
    %v4348 = vadd.s32 %v4343, %v4347
    %v4349 = vadd.s32 %v4348, 536870912
    %v4350 = vshrl.u32 %v4349, 30
    %v4351 = vshll.u32 %v4350, 30
    %v4352 = vsub.s32 %v4348, %v4351
    %vm4353 = vcmp.lt.s32.totalorder %v4352, 0
    %v4354 = vsub.s32 0, %v4352
    %v4355 = vsel %vm4353, %v4354, %v4352
    %v4356 = vclz %v4355
    %v4357 = vsub.s32 %v4356, 2
    %vm4358 = vcmp.gt.s32.totalorder 0, %v4357
    %v4359 = vsel %vm4358, 0, %v4357
    %v4360 = vsub.s32 32, %v4359
    %v4361 = vshll.u32 %v4352, %v4359
    %v4362 = vshrl.u32 %v4344, %v4360
    %v4363 = vor.u32 %v4361, %v4362
    %v4364 = vsub.s32 4294967266, %v4359
    %v4365 = vadd.s32 %v4364, 127
    %v4366 = vshll.u32 %v4365, 23
    %v4367 = vor.u32 4788187, %v4366
    %v4368 = vand.u32 2147483647, %v4367
    %v4370 = vcvt.s32.f32 %v4363
    %v4371 = vmul.f32 %v4370, %v4368
    %v4372 = vxor.u32 %v4371, 2147483648
    %v4373 = vsel %vm4290, %v4372, %v4371
    %v4374 = vsub.s32 4, %v4350
    %v4375 = vsel %vm4290, %v4374, %v4350
    %v4376 = vsel %vm4289, %v516, %v4373
    %v4377 = vsel %vm4289, 0, %v4375
    %v4378 = vcosq.f32.pop %v4376
    %v4379 = vsinq.f32.pop %v4376
    %vm4380 = vweird.f32 %v516
    %v4381 = vadd.s32 %v4377, 3
    %v4382 = vand.u32 %v4381, 3
    %vm4383 = vcmp.lt.s32.totalorder %v4382, 2
    %vm4384 = vcmp.eq.s32.totalorder %v4382, 0
    %v4385 = vxor.u32 %v4379, 2147483648
    %v4386 = vsel %vm4384, %v4378, %v4385
    %vm4387 = vcmp.eq.s32.totalorder %v4382, 2
    %v4388 = vxor.u32 %v4378, 2147483648
    %v4389 = vsel %vm4387, %v4388, %v4379
    %v4390 = vsel %vm4383, %v4386, %v4389
    %v4391 = vsel %vm4380, nan, %v4390
    %v4392 = vand.u32 2147483647, %v517
    %vm4393 = vcmp.le.f32.partialorder %v4392, 0.7853982
    %vm4394 = vcmp.lt.s32.totalorder %v517, 0
    %v4395 = vand.u32 %v517, 2139095040
    %v4396 = vshrl.u32 %v4395, 23
    %v4397 = vsub.s32 %v4396, 127
    %v4398 = vand.u32 2147483647, %v517
    %v4399 = vand.u32 %v4398, 8388607
    %v4400 = vor.u32 %v4399, 8388608
    %v4401 = vsub.s32 0, %v4400
    %v4402 = vadd.s32 %v4397, 1
    %vm4403 = vcmp.gt.s32.totalorder %v4402, 0
    %v4404 = vsel %vm4403, %v4402, 0
    %v4405 = vshrl.u32 %v4404, 5
    %v4406 = vand.u32 %v4404, 31
    %v4407 = vsub.s32 32, %v4406
    %v4408 = vshrl.u32 683565275, %v4407
    %v4409 = vshll.u32 683565275, %v4406
    %v4410 = vshrl.u32 2475754826, %v4407
    %v4411 = vor.u32 %v4409, %v4410
    %v4412 = vshll.u32 2475754826, %v4406
    %v4413 = vshrl.u32 2131351028, %v4407
    %v4414 = vor.u32 %v4412, %v4413
    %v4415 = vshll.u32 2131351028, %v4406
    %v4416 = vshrl.u32 2102212464, %v4407
    %v4417 = vor.u32 %v4415, %v4416
    %v4418 = vshll.u32 2102212464, %v4406
    %v4419 = vshrl.u32 920167782, %v4407
    %v4420 = vor.u32 %v4418, %v4419
    %v4421 = vshll.u32 920167782, %v4406
    %v4422 = vshrl.u32 1326507024, %v4407
    %v4423 = vor.u32 %v4421, %v4422
    %vm4424 = vcmp.lt.s32.totalorder %v4405, 1
    %vm4425 = vcmp.lt.s32.totalorder %v4405, 2
    %vm4426 = vcmp.lt.s32.totalorder %v4405, 3
    %vm4427 = vcmp.lt.s32.totalorder %v4405, 4
    %v4428 = vsel %vm4424, %v4408, %v4411
    %v4429 = vsel %vm4427, %v4417, 2102212464
    %v4430 = vsel %vm4426, %v4414, %v4429
    %v4431 = vsel %vm4425, %v4428, %v4430
    %v4432 = vsel %vm4424, %v4411, %v4414
    %v4433 = vsel %vm4427, %v4420, 920167782
    %v4434 = vsel %vm4426, %v4417, %v4433
    %v4435 = vsel %vm4425, %v4432, %v4434
    %v4436 = vsel %vm4424, %v4414, %v4417
    %v4437 = vsel %vm4427, %v4423, 1326507024
    %v4438 = vsel %vm4426, %v4420, %v4437
    %v4439 = vsel %vm4425, %v4436, %v4438
    %v4440 = vshll.u32 %v4400, 8
    %v4441 = vmul.u32.u64.compose %v4440, %v4439
    %v4442 = vextract.low.u32 %v4441
    %v4443 = vextract.high.u32 %v4441
    %v4444 = vmul.u32.u64.compose %v4440, %v4435
    %v4445 = vextract.low.u32 %v4444
    %v4446 = vextract.high.u32 %v4444
    %v4447 = vmul.u32 %v4440, %v4431
    %v4448 = vadd.s32 %v4443, %v4445
    %vm4449 = vc.u32 %v4443, %v4445
    %v4450 = vadd.s32 %v4446, 1
    %v4451 = vsel %vm4449, %v4450, %v4446
    %v4452 = vadd.s32 %v4447, %v4451
    %v4453 = vadd.s32 %v4452, 536870912
    %v4454 = vshrl.u32 %v4453, 30
    %v4455 = vshll.u32 %v4454, 30
    %v4456 = vsub.s32 %v4452, %v4455
    %vm4457 = vcmp.lt.s32.totalorder %v4456, 0
    %v4458 = vsub.s32 0, %v4456
    %v4459 = vsel %vm4457, %v4458, %v4456
    %v4460 = vclz %v4459
    %v4461 = vsub.s32 %v4460, 2
    %vm4462 = vcmp.gt.s32.totalorder 0, %v4461
    %v4463 = vsel %vm4462, 0, %v4461
    %v4464 = vsub.s32 32, %v4463
    %v4465 = vshll.u32 %v4456, %v4463
    %v4466 = vshrl.u32 %v4448, %v4464
    %v4467 = vor.u32 %v4465, %v4466
    %v4468 = vsub.s32 4294967266, %v4463
    %v4469 = vadd.s32 %v4468, 127
    %v4470 = vshll.u32 %v4469, 23
    %v4471 = vor.u32 4788187, %v4470
    %v4472 = vand.u32 2147483647, %v4471
    %v4474 = vcvt.s32.f32 %v4467
    %v4475 = vmul.f32 %v4474, %v4472
    %v4476 = vxor.u32 %v4475, 2147483648
    %v4477 = vsel %vm4394, %v4476, %v4475
    %v4478 = vsub.s32 4, %v4454
    %v4479 = vsel %vm4394, %v4478, %v4454
    %v4480 = vsel %vm4393, %v517, %v4477
    %v4481 = vsel %vm4393, 0, %v4479
    %v4482 = vcosq.f32.pop %v4480
    %v4483 = vsinq.f32.pop %v4480
    %vm4484 = vweird.f32 %v517
    %v4485 = vadd.s32 %v4481, 3
    %v4486 = vand.u32 %v4485, 3
    %vm4487 = vcmp.lt.s32.totalorder %v4486, 2
    %vm4488 = vcmp.eq.s32.totalorder %v4486, 0
    %v4489 = vxor.u32 %v4483, 2147483648
    %v4490 = vsel %vm4488, %v4482, %v4489
    %vm4491 = vcmp.eq.s32.totalorder %v4486, 2
    %v4492 = vxor.u32 %v4482, 2147483648
    %v4493 = vsel %vm4491, %v4492, %v4483
    %v4494 = vsel %vm4487, %v4490, %v4493
    %v4495 = vsel %vm4484, nan, %v4494
    %v4496 = vand.u32 2147483647, %v518
    %vm4497 = vcmp.le.f32.partialorder %v4496, 0.7853982
    %vm4498 = vcmp.lt.s32.totalorder %v518, 0
    %v4499 = vand.u32 %v518, 2139095040
    %v4500 = vshrl.u32 %v4499, 23
    %v4501 = vsub.s32 %v4500, 127
    %v4502 = vand.u32 2147483647, %v518
    %v4503 = vand.u32 %v4502, 8388607
    %v4504 = vor.u32 %v4503, 8388608
    %v4505 = vsub.s32 0, %v4504
    %v4506 = vadd.s32 %v4501, 1
    %vm4507 = vcmp.gt.s32.totalorder %v4506, 0
    %v4508 = vsel %vm4507, %v4506, 0
    %v4509 = vshrl.u32 %v4508, 5
    %v4510 = vand.u32 %v4508, 31
    %v4511 = vsub.s32 32, %v4510
    %v4512 = vshrl.u32 683565275, %v4511
    %v4513 = vshll.u32 683565275, %v4510
    %v4514 = vshrl.u32 2475754826, %v4511
    %v4515 = vor.u32 %v4513, %v4514
    %v4516 = vshll.u32 2475754826, %v4510
    %v4517 = vshrl.u32 2131351028, %v4511
    %v4518 = vor.u32 %v4516, %v4517
    %v4519 = vshll.u32 2131351028, %v4510
    %v4520 = vshrl.u32 2102212464, %v4511
    %v4521 = vor.u32 %v4519, %v4520
    %v4522 = vshll.u32 2102212464, %v4510
    %v4523 = vshrl.u32 920167782, %v4511
    %v4524 = vor.u32 %v4522, %v4523
    %v4525 = vshll.u32 920167782, %v4510
    %v4526 = vshrl.u32 1326507024, %v4511
    %v4527 = vor.u32 %v4525, %v4526
    %vm4528 = vcmp.lt.s32.totalorder %v4509, 1
    %vm4529 = vcmp.lt.s32.totalorder %v4509, 2
    %vm4530 = vcmp.lt.s32.totalorder %v4509, 3
    %vm4531 = vcmp.lt.s32.totalorder %v4509, 4
    %v4532 = vsel %vm4528, %v4512, %v4515
    %v4533 = vsel %vm4531, %v4521, 2102212464
    %v4534 = vsel %vm4530, %v4518, %v4533
    %v4535 = vsel %vm4529, %v4532, %v4534
    %v4536 = vsel %vm4528, %v4515, %v4518
    %v4537 = vsel %vm4531, %v4524, 920167782
    %v4538 = vsel %vm4530, %v4521, %v4537
    %v4539 = vsel %vm4529, %v4536, %v4538
    %v4540 = vsel %vm4528, %v4518, %v4521
    %v4541 = vsel %vm4531, %v4527, 1326507024
    %v4542 = vsel %vm4530, %v4524, %v4541
    %v4543 = vsel %vm4529, %v4540, %v4542
    %v4544 = vshll.u32 %v4504, 8
    %v4545 = vmul.u32.u64.compose %v4544, %v4543
    %v4546 = vextract.low.u32 %v4545
    %v4547 = vextract.high.u32 %v4545
    %v4548 = vmul.u32.u64.compose %v4544, %v4539
    %v4549 = vextract.low.u32 %v4548
    %v4550 = vextract.high.u32 %v4548
    %v4551 = vmul.u32 %v4544, %v4535
    %v4552 = vadd.s32 %v4547, %v4549
    %vm4553 = vc.u32 %v4547, %v4549
    %v4554 = vadd.s32 %v4550, 1
    %v4555 = vsel %vm4553, %v4554, %v4550
    %v4556 = vadd.s32 %v4551, %v4555
    %v4557 = vadd.s32 %v4556, 536870912
    %v4558 = vshrl.u32 %v4557, 30
    %v4559 = vshll.u32 %v4558, 30
    %v4560 = vsub.s32 %v4556, %v4559
    %vm4561 = vcmp.lt.s32.totalorder %v4560, 0
    %v4562 = vsub.s32 0, %v4560
    %v4563 = vsel %vm4561, %v4562, %v4560
    %v4564 = vclz %v4563
    %v4565 = vsub.s32 %v4564, 2
    %vm4566 = vcmp.gt.s32.totalorder 0, %v4565
    %v4567 = vsel %vm4566, 0, %v4565
    %v4568 = vsub.s32 32, %v4567
    %v4569 = vshll.u32 %v4560, %v4567
    %v4570 = vshrl.u32 %v4552, %v4568
    %v4571 = vor.u32 %v4569, %v4570
    %v4572 = vsub.s32 4294967266, %v4567
    %v4573 = vadd.s32 %v4572, 127
    %v4574 = vshll.u32 %v4573, 23
    %v4575 = vor.u32 4788187, %v4574
    %v4576 = vand.u32 2147483647, %v4575
    %v4578 = vcvt.s32.f32 %v4571
    %v4579 = vmul.f32 %v4578, %v4576
    %v4580 = vxor.u32 %v4579, 2147483648
    %v4581 = vsel %vm4498, %v4580, %v4579
    %v4582 = vsub.s32 4, %v4558
    %v4583 = vsel %vm4498, %v4582, %v4558
    %v4584 = vsel %vm4497, %v518, %v4581
    %v4585 = vsel %vm4497, 0, %v4583
    %v4586 = vcosq.f32.pop %v4584
    %v4587 = vsinq.f32.pop %v4584
    %vm4588 = vweird.f32 %v518
    %v4589 = vadd.s32 %v4585, 3
    %v4590 = vand.u32 %v4589, 3
    %vm4591 = vcmp.lt.s32.totalorder %v4590, 2
    %vm4592 = vcmp.eq.s32.totalorder %v4590, 0
    %v4593 = vxor.u32 %v4587, 2147483648
    %v4594 = vsel %vm4592, %v4586, %v4593
    %vm4595 = vcmp.eq.s32.totalorder %v4590, 2
    %v4596 = vxor.u32 %v4586, 2147483648
    %v4597 = vsel %vm4595, %v4596, %v4587
    %v4598 = vsel %vm4591, %v4594, %v4597
    %v4599 = vsel %vm4588, nan, %v4598
    %v4600 = vand.u32 2147483647, %v519
    %vm4601 = vcmp.le.f32.partialorder %v4600, 0.7853982
    %vm4602 = vcmp.lt.s32.totalorder %v519, 0
    %v4603 = vand.u32 %v519, 2139095040
    %v4604 = vshrl.u32 %v4603, 23
    %v4605 = vsub.s32 %v4604, 127
    %v4606 = vand.u32 2147483647, %v519
    %v4607 = vand.u32 %v4606, 8388607
    %v4608 = vor.u32 %v4607, 8388608
    %v4609 = vsub.s32 0, %v4608
    %v4610 = vadd.s32 %v4605, 1
    %vm4611 = vcmp.gt.s32.totalorder %v4610, 0
    %v4612 = vsel %vm4611, %v4610, 0
    %v4613 = vshrl.u32 %v4612, 5
    %v4614 = vand.u32 %v4612, 31
    %v4615 = vsub.s32 32, %v4614
    %v4616 = vshrl.u32 683565275, %v4615
    %v4617 = vshll.u32 683565275, %v4614
    %v4618 = vshrl.u32 2475754826, %v4615
    %v4619 = vor.u32 %v4617, %v4618
    %v4620 = vshll.u32 2475754826, %v4614
    %v4621 = vshrl.u32 2131351028, %v4615
    %v4622 = vor.u32 %v4620, %v4621
    %v4623 = vshll.u32 2131351028, %v4614
    %v4624 = vshrl.u32 2102212464, %v4615
    %v4625 = vor.u32 %v4623, %v4624
    %v4626 = vshll.u32 2102212464, %v4614
    %v4627 = vshrl.u32 920167782, %v4615
    %v4628 = vor.u32 %v4626, %v4627
    %v4629 = vshll.u32 920167782, %v4614
    %v4630 = vshrl.u32 1326507024, %v4615
    %v4631 = vor.u32 %v4629, %v4630
    %vm4632 = vcmp.lt.s32.totalorder %v4613, 1
    %vm4633 = vcmp.lt.s32.totalorder %v4613, 2
    %vm4634 = vcmp.lt.s32.totalorder %v4613, 3
    %vm4635 = vcmp.lt.s32.totalorder %v4613, 4
    %v4636 = vsel %vm4632, %v4616, %v4619
    %v4637 = vsel %vm4635, %v4625, 2102212464
    %v4638 = vsel %vm4634, %v4622, %v4637
    %v4639 = vsel %vm4633, %v4636, %v4638
    %v4640 = vsel %vm4632, %v4619, %v4622
    %v4641 = vsel %vm4635, %v4628, 920167782
    %v4642 = vsel %vm4634, %v4625, %v4641
    %v4643 = vsel %vm4633, %v4640, %v4642
    %v4644 = vsel %vm4632, %v4622, %v4625
    %v4645 = vsel %vm4635, %v4631, 1326507024
    %v4646 = vsel %vm4634, %v4628, %v4645
    %v4647 = vsel %vm4633, %v4644, %v4646
    %v4648 = vshll.u32 %v4608, 8
    %v4649 = vmul.u32.u64.compose %v4648, %v4647
    %v4650 = vextract.low.u32 %v4649
    %v4651 = vextract.high.u32 %v4649
    %v4652 = vmul.u32.u64.compose %v4648, %v4643
    %v4653 = vextract.low.u32 %v4652
    %v4654 = vextract.high.u32 %v4652
    %v4655 = vmul.u32 %v4648, %v4639
    %v4656 = vadd.s32 %v4651, %v4653
    %vm4657 = vc.u32 %v4651, %v4653
    %v4658 = vadd.s32 %v4654, 1
    %v4659 = vsel %vm4657, %v4658, %v4654
    %v4660 = vadd.s32 %v4655, %v4659
    %v4661 = vadd.s32 %v4660, 536870912
    %v4662 = vshrl.u32 %v4661, 30
    %v4663 = vshll.u32 %v4662, 30
    %v4664 = vsub.s32 %v4660, %v4663
    %vm4665 = vcmp.lt.s32.totalorder %v4664, 0
    %v4666 = vsub.s32 0, %v4664
    %v4667 = vsel %vm4665, %v4666, %v4664
    %v4668 = vclz %v4667
    %v4669 = vsub.s32 %v4668, 2
    %vm4670 = vcmp.gt.s32.totalorder 0, %v4669
    %v4671 = vsel %vm4670, 0, %v4669
    %v4672 = vsub.s32 32, %v4671
    %v4673 = vshll.u32 %v4664, %v4671
    %v4674 = vshrl.u32 %v4656, %v4672
    %v4675 = vor.u32 %v4673, %v4674
    %v4676 = vsub.s32 4294967266, %v4671
    %v4677 = vadd.s32 %v4676, 127
    %v4678 = vshll.u32 %v4677, 23
    %v4679 = vor.u32 4788187, %v4678
    %v4680 = vand.u32 2147483647, %v4679
    %v4682 = vcvt.s32.f32 %v4675
    %v4683 = vmul.f32 %v4682, %v4680
    %v4684 = vxor.u32 %v4683, 2147483648
    %v4685 = vsel %vm4602, %v4684, %v4683
    %v4686 = vsub.s32 4, %v4662
    %v4687 = vsel %vm4602, %v4686, %v4662
    %v4688 = vsel %vm4601, %v519, %v4685
    %v4689 = vsel %vm4601, 0, %v4687
    %v4690 = vcosq.f32.pop %v4688
    %v4691 = vsinq.f32.pop %v4688
    %vm4692 = vweird.f32 %v519
    %v4693 = vadd.s32 %v4689, 3
    %v4694 = vand.u32 %v4693, 3
    %vm4695 = vcmp.lt.s32.totalorder %v4694, 2
    %vm4696 = vcmp.eq.s32.totalorder %v4694, 0
    %v4697 = vxor.u32 %v4691, 2147483648
    %v4698 = vsel %vm4696, %v4690, %v4697
    %vm4699 = vcmp.eq.s32.totalorder %v4694, 2
    %v4700 = vxor.u32 %v4690, 2147483648
    %v4701 = vsel %vm4699, %v4700, %v4691
    %v4702 = vsel %vm4695, %v4698, %v4701
    %v4703 = vsel %vm4692, nan, %v4702
    %v4704 = vand.u32 2147483647, %v520
    %vm4705 = vcmp.le.f32.partialorder %v4704, 0.7853982
    %vm4706 = vcmp.lt.s32.totalorder %v520, 0
    %v4707 = vand.u32 %v520, 2139095040
    %v4708 = vshrl.u32 %v4707, 23
    %v4709 = vsub.s32 %v4708, 127
    %v4710 = vand.u32 2147483647, %v520
    %v4711 = vand.u32 %v4710, 8388607
    %v4712 = vor.u32 %v4711, 8388608
    %v4713 = vsub.s32 0, %v4712
    %v4714 = vadd.s32 %v4709, 1
    %vm4715 = vcmp.gt.s32.totalorder %v4714, 0
    %v4716 = vsel %vm4715, %v4714, 0
    %v4717 = vshrl.u32 %v4716, 5
    %v4718 = vand.u32 %v4716, 31
    %v4719 = vsub.s32 32, %v4718
    %v4720 = vshrl.u32 683565275, %v4719
    %v4721 = vshll.u32 683565275, %v4718
    %v4722 = vshrl.u32 2475754826, %v4719
    %v4723 = vor.u32 %v4721, %v4722
    %v4724 = vshll.u32 2475754826, %v4718
    %v4725 = vshrl.u32 2131351028, %v4719
    %v4726 = vor.u32 %v4724, %v4725
    %v4727 = vshll.u32 2131351028, %v4718
    %v4728 = vshrl.u32 2102212464, %v4719
    %v4729 = vor.u32 %v4727, %v4728
    %v4730 = vshll.u32 2102212464, %v4718
    %v4731 = vshrl.u32 920167782, %v4719
    %v4732 = vor.u32 %v4730, %v4731
    %v4733 = vshll.u32 920167782, %v4718
    %v4734 = vshrl.u32 1326507024, %v4719
    %v4735 = vor.u32 %v4733, %v4734
    %vm4736 = vcmp.lt.s32.totalorder %v4717, 1
    %vm4737 = vcmp.lt.s32.totalorder %v4717, 2
    %vm4738 = vcmp.lt.s32.totalorder %v4717, 3
    %vm4739 = vcmp.lt.s32.totalorder %v4717, 4
    %v4740 = vsel %vm4736, %v4720, %v4723
    %v4741 = vsel %vm4739, %v4729, 2102212464
    %v4742 = vsel %vm4738, %v4726, %v4741
    %v4743 = vsel %vm4737, %v4740, %v4742
    %v4744 = vsel %vm4736, %v4723, %v4726
    %v4745 = vsel %vm4739, %v4732, 920167782
    %v4746 = vsel %vm4738, %v4729, %v4745
    %v4747 = vsel %vm4737, %v4744, %v4746
    %v4748 = vsel %vm4736, %v4726, %v4729
    %v4749 = vsel %vm4739, %v4735, 1326507024
    %v4750 = vsel %vm4738, %v4732, %v4749
    %v4751 = vsel %vm4737, %v4748, %v4750
    %v4752 = vshll.u32 %v4712, 8
    %v4753 = vmul.u32.u64.compose %v4752, %v4751
    %v4754 = vextract.low.u32 %v4753
    %v4755 = vextract.high.u32 %v4753
    %v4756 = vmul.u32.u64.compose %v4752, %v4747
    %v4757 = vextract.low.u32 %v4756
    %v4758 = vextract.high.u32 %v4756
    %v4759 = vmul.u32 %v4752, %v4743
    %v4760 = vadd.s32 %v4755, %v4757
    %vm4761 = vc.u32 %v4755, %v4757
    %v4762 = vadd.s32 %v4758, 1
    %v4763 = vsel %vm4761, %v4762, %v4758
    %v4764 = vadd.s32 %v4759, %v4763
    %v4765 = vadd.s32 %v4764, 536870912
    %v4766 = vshrl.u32 %v4765, 30
    %v4767 = vshll.u32 %v4766, 30
    %v4768 = vsub.s32 %v4764, %v4767
    %vm4769 = vcmp.lt.s32.totalorder %v4768, 0
    %v4770 = vsub.s32 0, %v4768
    %v4771 = vsel %vm4769, %v4770, %v4768
    %v4772 = vclz %v4771
    %v4773 = vsub.s32 %v4772, 2
    %vm4774 = vcmp.gt.s32.totalorder 0, %v4773
    %v4775 = vsel %vm4774, 0, %v4773
    %v4776 = vsub.s32 32, %v4775
    %v4777 = vshll.u32 %v4768, %v4775
    %v4778 = vshrl.u32 %v4760, %v4776
    %v4779 = vor.u32 %v4777, %v4778
    %v4780 = vsub.s32 4294967266, %v4775
    %v4781 = vadd.s32 %v4780, 127
    %v4782 = vshll.u32 %v4781, 23
    %v4783 = vor.u32 4788187, %v4782
    %v4784 = vand.u32 2147483647, %v4783
    %v4786 = vcvt.s32.f32 %v4779
    %v4787 = vmul.f32 %v4786, %v4784
    %v4788 = vxor.u32 %v4787, 2147483648
    %v4789 = vsel %vm4706, %v4788, %v4787
    %v4790 = vsub.s32 4, %v4766
    %v4791 = vsel %vm4706, %v4790, %v4766
    %v4792 = vsel %vm4705, %v520, %v4789
    %v4793 = vsel %vm4705, 0, %v4791
    %v4794 = vcosq.f32.pop %v4792
    %v4795 = vsinq.f32.pop %v4792
    %vm4796 = vweird.f32 %v520
    %v4797 = vadd.s32 %v4793, 3
    %v4798 = vand.u32 %v4797, 3
    %vm4799 = vcmp.lt.s32.totalorder %v4798, 2
    %vm4800 = vcmp.eq.s32.totalorder %v4798, 0
    %v4801 = vxor.u32 %v4795, 2147483648
    %v4802 = vsel %vm4800, %v4794, %v4801
    %vm4803 = vcmp.eq.s32.totalorder %v4798, 2
    %v4804 = vxor.u32 %v4794, 2147483648
    %v4805 = vsel %vm4803, %v4804, %v4795
    %v4806 = vsel %vm4799, %v4802, %v4805
    %v4807 = vsel %vm4796, nan, %v4806
    %v4808 = vand.u32 2147483647, %v521
    %vm4809 = vcmp.le.f32.partialorder %v4808, 0.7853982
    %vm4810 = vcmp.lt.s32.totalorder %v521, 0
    %v4811 = vand.u32 %v521, 2139095040
    %v4812 = vshrl.u32 %v4811, 23
    %v4813 = vsub.s32 %v4812, 127
    %v4814 = vand.u32 2147483647, %v521
    %v4815 = vand.u32 %v4814, 8388607
    %v4816 = vor.u32 %v4815, 8388608
    %v4817 = vsub.s32 0, %v4816
    %v4818 = vadd.s32 %v4813, 1
    %vm4819 = vcmp.gt.s32.totalorder %v4818, 0
    %v4820 = vsel %vm4819, %v4818, 0
    %v4821 = vshrl.u32 %v4820, 5
    %v4822 = vand.u32 %v4820, 31
    %v4823 = vsub.s32 32, %v4822
    %v4824 = vshrl.u32 683565275, %v4823
    %v4825 = vshll.u32 683565275, %v4822
    %v4826 = vshrl.u32 2475754826, %v4823
    %v4827 = vor.u32 %v4825, %v4826
    %v4828 = vshll.u32 2475754826, %v4822
    %v4829 = vshrl.u32 2131351028, %v4823
    %v4830 = vor.u32 %v4828, %v4829
    %v4831 = vshll.u32 2131351028, %v4822
    %v4832 = vshrl.u32 2102212464, %v4823
    %v4833 = vor.u32 %v4831, %v4832
    %v4834 = vshll.u32 2102212464, %v4822
    %v4835 = vshrl.u32 920167782, %v4823
    %v4836 = vor.u32 %v4834, %v4835
    %v4837 = vshll.u32 920167782, %v4822
    %v4838 = vshrl.u32 1326507024, %v4823
    %v4839 = vor.u32 %v4837, %v4838
    %vm4840 = vcmp.lt.s32.totalorder %v4821, 1
    %vm4841 = vcmp.lt.s32.totalorder %v4821, 2
    %vm4842 = vcmp.lt.s32.totalorder %v4821, 3
    %vm4843 = vcmp.lt.s32.totalorder %v4821, 4
    %v4844 = vsel %vm4840, %v4824, %v4827
    %v4845 = vsel %vm4843, %v4833, 2102212464
    %v4846 = vsel %vm4842, %v4830, %v4845
    %v4847 = vsel %vm4841, %v4844, %v4846
    %v4848 = vsel %vm4840, %v4827, %v4830
    %v4849 = vsel %vm4843, %v4836, 920167782
    %v4850 = vsel %vm4842, %v4833, %v4849
    %v4851 = vsel %vm4841, %v4848, %v4850
    %v4852 = vsel %vm4840, %v4830, %v4833
    %v4853 = vsel %vm4843, %v4839, 1326507024
    %v4854 = vsel %vm4842, %v4836, %v4853
    %v4855 = vsel %vm4841, %v4852, %v4854
    %v4856 = vshll.u32 %v4816, 8
    %v4857 = vmul.u32.u64.compose %v4856, %v4855
    %v4858 = vextract.low.u32 %v4857
    %v4859 = vextract.high.u32 %v4857
    %v4860 = vmul.u32.u64.compose %v4856, %v4851
    %v4861 = vextract.low.u32 %v4860
    %v4862 = vextract.high.u32 %v4860
    %v4863 = vmul.u32 %v4856, %v4847
    %v4864 = vadd.s32 %v4859, %v4861
    %vm4865 = vc.u32 %v4859, %v4861
    %v4866 = vadd.s32 %v4862, 1
    %v4867 = vsel %vm4865, %v4866, %v4862
    %v4868 = vadd.s32 %v4863, %v4867
    %v4869 = vadd.s32 %v4868, 536870912
    %v4870 = vshrl.u32 %v4869, 30
    %v4871 = vshll.u32 %v4870, 30
    %v4872 = vsub.s32 %v4868, %v4871
    %vm4873 = vcmp.lt.s32.totalorder %v4872, 0
    %v4874 = vsub.s32 0, %v4872
    %v4875 = vsel %vm4873, %v4874, %v4872
    %v4876 = vclz %v4875
    %v4877 = vsub.s32 %v4876, 2
    %vm4878 = vcmp.gt.s32.totalorder 0, %v4877
    %v4879 = vsel %vm4878, 0, %v4877
    %v4880 = vsub.s32 32, %v4879
    %v4881 = vshll.u32 %v4872, %v4879
    %v4882 = vshrl.u32 %v4864, %v4880
    %v4883 = vor.u32 %v4881, %v4882
    %v4884 = vsub.s32 4294967266, %v4879
    %v4885 = vadd.s32 %v4884, 127
    %v4886 = vshll.u32 %v4885, 23
    %v4887 = vor.u32 4788187, %v4886
    %v4888 = vand.u32 2147483647, %v4887
    %v4890 = vcvt.s32.f32 %v4883
    %v4891 = vmul.f32 %v4890, %v4888
    %v4892 = vxor.u32 %v4891, 2147483648
    %v4893 = vsel %vm4810, %v4892, %v4891
    %v4894 = vsub.s32 4, %v4870
    %v4895 = vsel %vm4810, %v4894, %v4870
    %v4896 = vsel %vm4809, %v521, %v4893
    %v4897 = vsel %vm4809, 0, %v4895
    %v4898 = vcosq.f32.pop %v4896
    %v4899 = vsinq.f32.pop %v4896
    %vm4900 = vweird.f32 %v521
    %v4901 = vadd.s32 %v4897, 3
    %v4902 = vand.u32 %v4901, 3
    %vm4903 = vcmp.lt.s32.totalorder %v4902, 2
    %vm4904 = vcmp.eq.s32.totalorder %v4902, 0
    %v4905 = vxor.u32 %v4899, 2147483648
    %v4906 = vsel %vm4904, %v4898, %v4905
    %vm4907 = vcmp.eq.s32.totalorder %v4902, 2
    %v4908 = vxor.u32 %v4898, 2147483648
    %v4909 = vsel %vm4907, %v4908, %v4899
    %v4910 = vsel %vm4903, %v4906, %v4909
    %v4911 = vsel %vm4900, nan, %v4910
    %v4912 = vand.u32 2147483647, %v522
    %vm4913 = vcmp.le.f32.partialorder %v4912, 0.7853982
    %vm4914 = vcmp.lt.s32.totalorder %v522, 0
    %v4915 = vand.u32 %v522, 2139095040
    %v4916 = vshrl.u32 %v4915, 23
    %v4917 = vsub.s32 %v4916, 127
    %v4918 = vand.u32 2147483647, %v522
    %v4919 = vand.u32 %v4918, 8388607
    %v4920 = vor.u32 %v4919, 8388608
    %v4921 = vsub.s32 0, %v4920
    %v4922 = vadd.s32 %v4917, 1
    %vm4923 = vcmp.gt.s32.totalorder %v4922, 0
    %v4924 = vsel %vm4923, %v4922, 0
    %v4925 = vshrl.u32 %v4924, 5
    %v4926 = vand.u32 %v4924, 31
    %v4927 = vsub.s32 32, %v4926
    %v4928 = vshrl.u32 683565275, %v4927
    %v4929 = vshll.u32 683565275, %v4926
    %v4930 = vshrl.u32 2475754826, %v4927
    %v4931 = vor.u32 %v4929, %v4930
    %v4932 = vshll.u32 2475754826, %v4926
    %v4933 = vshrl.u32 2131351028, %v4927
    %v4934 = vor.u32 %v4932, %v4933
    %v4935 = vshll.u32 2131351028, %v4926
    %v4936 = vshrl.u32 2102212464, %v4927
    %v4937 = vor.u32 %v4935, %v4936
    %v4938 = vshll.u32 2102212464, %v4926
    %v4939 = vshrl.u32 920167782, %v4927
    %v4940 = vor.u32 %v4938, %v4939
    %v4941 = vshll.u32 920167782, %v4926
    %v4942 = vshrl.u32 1326507024, %v4927
    %v4943 = vor.u32 %v4941, %v4942
    %vm4944 = vcmp.lt.s32.totalorder %v4925, 1
    %vm4945 = vcmp.lt.s32.totalorder %v4925, 2
    %vm4946 = vcmp.lt.s32.totalorder %v4925, 3
    %vm4947 = vcmp.lt.s32.totalorder %v4925, 4
    %v4948 = vsel %vm4944, %v4928, %v4931
    %v4949 = vsel %vm4947, %v4937, 2102212464
    %v4950 = vsel %vm4946, %v4934, %v4949
    %v4951 = vsel %vm4945, %v4948, %v4950
    %v4952 = vsel %vm4944, %v4931, %v4934
    %v4953 = vsel %vm4947, %v4940, 920167782
    %v4954 = vsel %vm4946, %v4937, %v4953
    %v4955 = vsel %vm4945, %v4952, %v4954
    %v4956 = vsel %vm4944, %v4934, %v4937
    %v4957 = vsel %vm4947, %v4943, 1326507024
    %v4958 = vsel %vm4946, %v4940, %v4957
    %v4959 = vsel %vm4945, %v4956, %v4958
    %v4960 = vshll.u32 %v4920, 8
    %v4961 = vmul.u32.u64.compose %v4960, %v4959
    %v4962 = vextract.low.u32 %v4961
    %v4963 = vextract.high.u32 %v4961
    %v4964 = vmul.u32.u64.compose %v4960, %v4955
    %v4965 = vextract.low.u32 %v4964
    %v4966 = vextract.high.u32 %v4964
    %v4967 = vmul.u32 %v4960, %v4951
    %v4968 = vadd.s32 %v4963, %v4965
    %vm4969 = vc.u32 %v4963, %v4965
    %v4970 = vadd.s32 %v4966, 1
    %v4971 = vsel %vm4969, %v4970, %v4966
    %v4972 = vadd.s32 %v4967, %v4971
    %v4973 = vadd.s32 %v4972, 536870912
    %v4974 = vshrl.u32 %v4973, 30
    %v4975 = vshll.u32 %v4974, 30
    %v4976 = vsub.s32 %v4972, %v4975
    %vm4977 = vcmp.lt.s32.totalorder %v4976, 0
    %v4978 = vsub.s32 0, %v4976
    %v4979 = vsel %vm4977, %v4978, %v4976
    %v4980 = vclz %v4979
    %v4981 = vsub.s32 %v4980, 2
    %vm4982 = vcmp.gt.s32.totalorder 0, %v4981
    %v4983 = vsel %vm4982, 0, %v4981
    %v4984 = vsub.s32 32, %v4983
    %v4985 = vshll.u32 %v4976, %v4983
    %v4986 = vshrl.u32 %v4968, %v4984
    %v4987 = vor.u32 %v4985, %v4986
    %v4988 = vsub.s32 4294967266, %v4983
    %v4989 = vadd.s32 %v4988, 127
    %v4990 = vshll.u32 %v4989, 23
    %v4991 = vor.u32 4788187, %v4990
    %v4992 = vand.u32 2147483647, %v4991
    %v4994 = vcvt.s32.f32 %v4987
    %v4995 = vmul.f32 %v4994, %v4992
    %v4996 = vxor.u32 %v4995, 2147483648
    %v4997 = vsel %vm4914, %v4996, %v4995
    %v4998 = vsub.s32 4, %v4974
    %v4999 = vsel %vm4914, %v4998, %v4974
    %v5000 = vsel %vm4913, %v522, %v4997
    %v5001 = vsel %vm4913, 0, %v4999
    %v5002 = vcosq.f32.pop %v5000
    %v5003 = vsinq.f32.pop %v5000
    %vm5004 = vweird.f32 %v522
    %v5005 = vadd.s32 %v5001, 3
    %v5006 = vand.u32 %v5005, 3
    %vm5007 = vcmp.lt.s32.totalorder %v5006, 2
    %vm5008 = vcmp.eq.s32.totalorder %v5006, 0
    %v5009 = vxor.u32 %v5003, 2147483648
    %v5010 = vsel %vm5008, %v5002, %v5009
    %vm5011 = vcmp.eq.s32.totalorder %v5006, 2
    %v5012 = vxor.u32 %v5002, 2147483648
    %v5013 = vsel %vm5011, %v5012, %v5003
    %v5014 = vsel %vm5007, %v5010, %v5013
    %v5015 = vsel %vm5004, nan, %v5014
    %v5016 = vand.u32 2147483647, %v523
    %vm5017 = vcmp.le.f32.partialorder %v5016, 0.7853982
    %vm5018 = vcmp.lt.s32.totalorder %v523, 0
    %v5019 = vand.u32 %v523, 2139095040
    %v5020 = vshrl.u32 %v5019, 23
    %v5021 = vsub.s32 %v5020, 127
    %v5022 = vand.u32 2147483647, %v523
    %v5023 = vand.u32 %v5022, 8388607
    %v5024 = vor.u32 %v5023, 8388608
    %v5025 = vsub.s32 0, %v5024
    %v5026 = vadd.s32 %v5021, 1
    %vm5027 = vcmp.gt.s32.totalorder %v5026, 0
    %v5028 = vsel %vm5027, %v5026, 0
    %v5029 = vshrl.u32 %v5028, 5
    %v5030 = vand.u32 %v5028, 31
    %v5031 = vsub.s32 32, %v5030
    %v5032 = vshrl.u32 683565275, %v5031
    %v5033 = vshll.u32 683565275, %v5030
    %v5034 = vshrl.u32 2475754826, %v5031
    %v5035 = vor.u32 %v5033, %v5034
    %v5036 = vshll.u32 2475754826, %v5030
    %v5037 = vshrl.u32 2131351028, %v5031
    %v5038 = vor.u32 %v5036, %v5037
    %v5039 = vshll.u32 2131351028, %v5030
    %v5040 = vshrl.u32 2102212464, %v5031
    %v5041 = vor.u32 %v5039, %v5040
    %v5042 = vshll.u32 2102212464, %v5030
    %v5043 = vshrl.u32 920167782, %v5031
    %v5044 = vor.u32 %v5042, %v5043
    %v5045 = vshll.u32 920167782, %v5030
    %v5046 = vshrl.u32 1326507024, %v5031
    %v5047 = vor.u32 %v5045, %v5046
    %vm5048 = vcmp.lt.s32.totalorder %v5029, 1
    %vm5049 = vcmp.lt.s32.totalorder %v5029, 2
    %vm5050 = vcmp.lt.s32.totalorder %v5029, 3
    %vm5051 = vcmp.lt.s32.totalorder %v5029, 4
    %v5052 = vsel %vm5048, %v5032, %v5035
    %v5053 = vsel %vm5051, %v5041, 2102212464
    %v5054 = vsel %vm5050, %v5038, %v5053
    %v5055 = vsel %vm5049, %v5052, %v5054
    %v5056 = vsel %vm5048, %v5035, %v5038
    %v5057 = vsel %vm5051, %v5044, 920167782
    %v5058 = vsel %vm5050, %v5041, %v5057
    %v5059 = vsel %vm5049, %v5056, %v5058
    %v5060 = vsel %vm5048, %v5038, %v5041
    %v5061 = vsel %vm5051, %v5047, 1326507024
    %v5062 = vsel %vm5050, %v5044, %v5061
    %v5063 = vsel %vm5049, %v5060, %v5062
    %v5064 = vshll.u32 %v5024, 8
    %v5065 = vmul.u32.u64.compose %v5064, %v5063
    %v5066 = vextract.low.u32 %v5065
    %v5067 = vextract.high.u32 %v5065
    %v5068 = vmul.u32.u64.compose %v5064, %v5059
    %v5069 = vextract.low.u32 %v5068
    %v5070 = vextract.high.u32 %v5068
    %v5071 = vmul.u32 %v5064, %v5055
    %v5072 = vadd.s32 %v5067, %v5069
    %vm5073 = vc.u32 %v5067, %v5069
    %v5074 = vadd.s32 %v5070, 1
    %v5075 = vsel %vm5073, %v5074, %v5070
    %v5076 = vadd.s32 %v5071, %v5075
    %v5077 = vadd.s32 %v5076, 536870912
    %v5078 = vshrl.u32 %v5077, 30
    %v5079 = vshll.u32 %v5078, 30
    %v5080 = vsub.s32 %v5076, %v5079
    %vm5081 = vcmp.lt.s32.totalorder %v5080, 0
    %v5082 = vsub.s32 0, %v5080
    %v5083 = vsel %vm5081, %v5082, %v5080
    %v5084 = vclz %v5083
    %v5085 = vsub.s32 %v5084, 2
    %vm5086 = vcmp.gt.s32.totalorder 0, %v5085
    %v5087 = vsel %vm5086, 0, %v5085
    %v5088 = vsub.s32 32, %v5087
    %v5089 = vshll.u32 %v5080, %v5087
    %v5090 = vshrl.u32 %v5072, %v5088
    %v5091 = vor.u32 %v5089, %v5090
    %v5092 = vsub.s32 4294967266, %v5087
    %v5093 = vadd.s32 %v5092, 127
    %v5094 = vshll.u32 %v5093, 23
    %v5095 = vor.u32 4788187, %v5094
    %v5096 = vand.u32 2147483647, %v5095
    %v5098 = vcvt.s32.f32 %v5091
    %v5099 = vmul.f32 %v5098, %v5096
    %v5100 = vxor.u32 %v5099, 2147483648
    %v5101 = vsel %vm5018, %v5100, %v5099
    %v5102 = vsub.s32 4, %v5078
    %v5103 = vsel %vm5018, %v5102, %v5078
    %v5104 = vsel %vm5017, %v523, %v5101
    %v5105 = vsel %vm5017, 0, %v5103
    %v5106 = vcosq.f32.pop %v5104
    %v5107 = vsinq.f32.pop %v5104
    %vm5108 = vweird.f32 %v523
    %v5109 = vadd.s32 %v5105, 3
    %v5110 = vand.u32 %v5109, 3
    %vm5111 = vcmp.lt.s32.totalorder %v5110, 2
    %vm5112 = vcmp.eq.s32.totalorder %v5110, 0
    %v5113 = vxor.u32 %v5107, 2147483648
    %v5114 = vsel %vm5112, %v5106, %v5113
    %vm5115 = vcmp.eq.s32.totalorder %v5110, 2
    %v5116 = vxor.u32 %v5106, 2147483648
    %v5117 = vsel %vm5115, %v5116, %v5107
    %v5118 = vsel %vm5111, %v5114, %v5117
    %v5119 = vsel %vm5108, nan, %v5118
    %v5120 = vand.u32 2147483647, %v524
    %vm5121 = vcmp.le.f32.partialorder %v5120, 0.7853982
    %vm5122 = vcmp.lt.s32.totalorder %v524, 0
    %v5123 = vand.u32 %v524, 2139095040
    %v5124 = vshrl.u32 %v5123, 23
    %v5125 = vsub.s32 %v5124, 127
    %v5126 = vand.u32 2147483647, %v524
    %v5127 = vand.u32 %v5126, 8388607
    %v5128 = vor.u32 %v5127, 8388608
    %v5129 = vsub.s32 0, %v5128
    %v5130 = vadd.s32 %v5125, 1
    %vm5131 = vcmp.gt.s32.totalorder %v5130, 0
    %v5132 = vsel %vm5131, %v5130, 0
    %v5133 = vshrl.u32 %v5132, 5
    %v5134 = vand.u32 %v5132, 31
    %v5135 = vsub.s32 32, %v5134
    %v5136 = vshrl.u32 683565275, %v5135
    %v5137 = vshll.u32 683565275, %v5134
    %v5138 = vshrl.u32 2475754826, %v5135
    %v5139 = vor.u32 %v5137, %v5138
    %v5140 = vshll.u32 2475754826, %v5134
    %v5141 = vshrl.u32 2131351028, %v5135
    %v5142 = vor.u32 %v5140, %v5141
    %v5143 = vshll.u32 2131351028, %v5134
    %v5144 = vshrl.u32 2102212464, %v5135
    %v5145 = vor.u32 %v5143, %v5144
    %v5146 = vshll.u32 2102212464, %v5134
    %v5147 = vshrl.u32 920167782, %v5135
    %v5148 = vor.u32 %v5146, %v5147
    %v5149 = vshll.u32 920167782, %v5134
    %v5150 = vshrl.u32 1326507024, %v5135
    %v5151 = vor.u32 %v5149, %v5150
    %vm5152 = vcmp.lt.s32.totalorder %v5133, 1
    %vm5153 = vcmp.lt.s32.totalorder %v5133, 2
    %vm5154 = vcmp.lt.s32.totalorder %v5133, 3
    %vm5155 = vcmp.lt.s32.totalorder %v5133, 4
    %v5156 = vsel %vm5152, %v5136, %v5139
    %v5157 = vsel %vm5155, %v5145, 2102212464
    %v5158 = vsel %vm5154, %v5142, %v5157
    %v5159 = vsel %vm5153, %v5156, %v5158
    %v5160 = vsel %vm5152, %v5139, %v5142
    %v5161 = vsel %vm5155, %v5148, 920167782
    %v5162 = vsel %vm5154, %v5145, %v5161
    %v5163 = vsel %vm5153, %v5160, %v5162
    %v5164 = vsel %vm5152, %v5142, %v5145
    %v5165 = vsel %vm5155, %v5151, 1326507024
    %v5166 = vsel %vm5154, %v5148, %v5165
    %v5167 = vsel %vm5153, %v5164, %v5166
    %v5168 = vshll.u32 %v5128, 8
    %v5169 = vmul.u32.u64.compose %v5168, %v5167
    %v5170 = vextract.low.u32 %v5169
    %v5171 = vextract.high.u32 %v5169
    %v5172 = vmul.u32.u64.compose %v5168, %v5163
    %v5173 = vextract.low.u32 %v5172
    %v5174 = vextract.high.u32 %v5172
    %v5175 = vmul.u32 %v5168, %v5159
    %v5176 = vadd.s32 %v5171, %v5173
    %vm5177 = vc.u32 %v5171, %v5173
    %v5178 = vadd.s32 %v5174, 1
    %v5179 = vsel %vm5177, %v5178, %v5174
    %v5180 = vadd.s32 %v5175, %v5179
    %v5181 = vadd.s32 %v5180, 536870912
    %v5182 = vshrl.u32 %v5181, 30
    %v5183 = vshll.u32 %v5182, 30
    %v5184 = vsub.s32 %v5180, %v5183
    %vm5185 = vcmp.lt.s32.totalorder %v5184, 0
    %v5186 = vsub.s32 0, %v5184
    %v5187 = vsel %vm5185, %v5186, %v5184
    %v5188 = vclz %v5187
    %v5189 = vsub.s32 %v5188, 2
    %vm5190 = vcmp.gt.s32.totalorder 0, %v5189
    %v5191 = vsel %vm5190, 0, %v5189
    %v5192 = vsub.s32 32, %v5191
    %v5193 = vshll.u32 %v5184, %v5191
    %v5194 = vshrl.u32 %v5176, %v5192
    %v5195 = vor.u32 %v5193, %v5194
    %v5196 = vsub.s32 4294967266, %v5191
    %v5197 = vadd.s32 %v5196, 127
    %v5198 = vshll.u32 %v5197, 23
    %v5199 = vor.u32 4788187, %v5198
    %v5200 = vand.u32 2147483647, %v5199
    %v5202 = vcvt.s32.f32 %v5195
    %v5203 = vmul.f32 %v5202, %v5200
    %v5204 = vxor.u32 %v5203, 2147483648
    %v5205 = vsel %vm5122, %v5204, %v5203
    %v5206 = vsub.s32 4, %v5182
    %v5207 = vsel %vm5122, %v5206, %v5182
    %v5208 = vsel %vm5121, %v524, %v5205
    %v5209 = vsel %vm5121, 0, %v5207
    %v5210 = vcosq.f32.pop %v5208
    %v5211 = vsinq.f32.pop %v5208
    %vm5212 = vweird.f32 %v524
    %v5213 = vadd.s32 %v5209, 3
    %v5214 = vand.u32 %v5213, 3
    %vm5215 = vcmp.lt.s32.totalorder %v5214, 2
    %vm5216 = vcmp.eq.s32.totalorder %v5214, 0
    %v5217 = vxor.u32 %v5211, 2147483648
    %v5218 = vsel %vm5216, %v5210, %v5217
    %vm5219 = vcmp.eq.s32.totalorder %v5214, 2
    %v5220 = vxor.u32 %v5210, 2147483648
    %v5221 = vsel %vm5219, %v5220, %v5211
    %v5222 = vsel %vm5215, %v5218, %v5221
    %v5223 = vsel %vm5212, nan, %v5222
    %v5224 = vand.u32 2147483647, %v525
    %vm5225 = vcmp.le.f32.partialorder %v5224, 0.7853982
    %vm5226 = vcmp.lt.s32.totalorder %v525, 0
    %v5227 = vand.u32 %v525, 2139095040
    %v5228 = vshrl.u32 %v5227, 23
    %v5229 = vsub.s32 %v5228, 127
    %v5230 = vand.u32 2147483647, %v525
    %v5231 = vand.u32 %v5230, 8388607
    %v5232 = vor.u32 %v5231, 8388608
    %v5233 = vsub.s32 0, %v5232
    %v5234 = vadd.s32 %v5229, 1
    %vm5235 = vcmp.gt.s32.totalorder %v5234, 0
    %v5236 = vsel %vm5235, %v5234, 0
    %v5237 = vshrl.u32 %v5236, 5
    %v5238 = vand.u32 %v5236, 31
    %v5239 = vsub.s32 32, %v5238
    %v5240 = vshrl.u32 683565275, %v5239
    %v5241 = vshll.u32 683565275, %v5238
    %v5242 = vshrl.u32 2475754826, %v5239
    %v5243 = vor.u32 %v5241, %v5242
    %v5244 = vshll.u32 2475754826, %v5238
    %v5245 = vshrl.u32 2131351028, %v5239
    %v5246 = vor.u32 %v5244, %v5245
    %v5247 = vshll.u32 2131351028, %v5238
    %v5248 = vshrl.u32 2102212464, %v5239
    %v5249 = vor.u32 %v5247, %v5248
    %v5250 = vshll.u32 2102212464, %v5238
    %v5251 = vshrl.u32 920167782, %v5239
    %v5252 = vor.u32 %v5250, %v5251
    %v5253 = vshll.u32 920167782, %v5238
    %v5254 = vshrl.u32 1326507024, %v5239
    %v5255 = vor.u32 %v5253, %v5254
    %vm5256 = vcmp.lt.s32.totalorder %v5237, 1
    %vm5257 = vcmp.lt.s32.totalorder %v5237, 2
    %vm5258 = vcmp.lt.s32.totalorder %v5237, 3
    %vm5259 = vcmp.lt.s32.totalorder %v5237, 4
    %v5260 = vsel %vm5256, %v5240, %v5243
    %v5261 = vsel %vm5259, %v5249, 2102212464
    %v5262 = vsel %vm5258, %v5246, %v5261
    %v5263 = vsel %vm5257, %v5260, %v5262
    %v5264 = vsel %vm5256, %v5243, %v5246
    %v5265 = vsel %vm5259, %v5252, 920167782
    %v5266 = vsel %vm5258, %v5249, %v5265
    %v5267 = vsel %vm5257, %v5264, %v5266
    %v5268 = vsel %vm5256, %v5246, %v5249
    %v5269 = vsel %vm5259, %v5255, 1326507024
    %v5270 = vsel %vm5258, %v5252, %v5269
    %v5271 = vsel %vm5257, %v5268, %v5270
    %v5272 = vshll.u32 %v5232, 8
    %v5273 = vmul.u32.u64.compose %v5272, %v5271
    %v5274 = vextract.low.u32 %v5273
    %v5275 = vextract.high.u32 %v5273
    %v5276 = vmul.u32.u64.compose %v5272, %v5267
    %v5277 = vextract.low.u32 %v5276
    %v5278 = vextract.high.u32 %v5276
    %v5279 = vmul.u32 %v5272, %v5263
    %v5280 = vadd.s32 %v5275, %v5277
    %vm5281 = vc.u32 %v5275, %v5277
    %v5282 = vadd.s32 %v5278, 1
    %v5283 = vsel %vm5281, %v5282, %v5278
    %v5284 = vadd.s32 %v5279, %v5283
    %v5285 = vadd.s32 %v5284, 536870912
    %v5286 = vshrl.u32 %v5285, 30
    %v5287 = vshll.u32 %v5286, 30
    %v5288 = vsub.s32 %v5284, %v5287
    %vm5289 = vcmp.lt.s32.totalorder %v5288, 0
    %v5290 = vsub.s32 0, %v5288
    %v5291 = vsel %vm5289, %v5290, %v5288
    %v5292 = vclz %v5291
    %v5293 = vsub.s32 %v5292, 2
    %vm5294 = vcmp.gt.s32.totalorder 0, %v5293
    %v5295 = vsel %vm5294, 0, %v5293
    %v5296 = vsub.s32 32, %v5295
    %v5297 = vshll.u32 %v5288, %v5295
    %v5298 = vshrl.u32 %v5280, %v5296
    %v5299 = vor.u32 %v5297, %v5298
    %v5300 = vsub.s32 4294967266, %v5295
    %v5301 = vadd.s32 %v5300, 127
    %v5302 = vshll.u32 %v5301, 23
    %v5303 = vor.u32 4788187, %v5302
    %v5304 = vand.u32 2147483647, %v5303
    %v5306 = vcvt.s32.f32 %v5299
    %v5307 = vmul.f32 %v5306, %v5304
    %v5308 = vxor.u32 %v5307, 2147483648
    %v5309 = vsel %vm5226, %v5308, %v5307
    %v5310 = vsub.s32 4, %v5286
    %v5311 = vsel %vm5226, %v5310, %v5286
    %v5312 = vsel %vm5225, %v525, %v5309
    %v5313 = vsel %vm5225, 0, %v5311
    %v5314 = vcosq.f32.pop %v5312
    %v5315 = vsinq.f32.pop %v5312
    %vm5316 = vweird.f32 %v525
    %v5317 = vadd.s32 %v5313, 3
    %v5318 = vand.u32 %v5317, 3
    %vm5319 = vcmp.lt.s32.totalorder %v5318, 2
    %vm5320 = vcmp.eq.s32.totalorder %v5318, 0
    %v5321 = vxor.u32 %v5315, 2147483648
    %v5322 = vsel %vm5320, %v5314, %v5321
    %vm5323 = vcmp.eq.s32.totalorder %v5318, 2
    %v5324 = vxor.u32 %v5314, 2147483648
    %v5325 = vsel %vm5323, %v5324, %v5315
    %v5326 = vsel %vm5319, %v5322, %v5325
    %v5327 = vsel %vm5316, nan, %v5326
    %v5328 = vand.u32 2147483647, %v526
    %vm5329 = vcmp.le.f32.partialorder %v5328, 0.7853982
    %vm5330 = vcmp.lt.s32.totalorder %v526, 0
    %v5331 = vand.u32 %v526, 2139095040
    %v5332 = vshrl.u32 %v5331, 23
    %v5333 = vsub.s32 %v5332, 127
    %v5334 = vand.u32 2147483647, %v526
    %v5335 = vand.u32 %v5334, 8388607
    %v5336 = vor.u32 %v5335, 8388608
    %v5337 = vsub.s32 0, %v5336
    %v5338 = vadd.s32 %v5333, 1
    %vm5339 = vcmp.gt.s32.totalorder %v5338, 0
    %v5340 = vsel %vm5339, %v5338, 0
    %v5341 = vshrl.u32 %v5340, 5
    %v5342 = vand.u32 %v5340, 31
    %v5343 = vsub.s32 32, %v5342
    %v5344 = vshrl.u32 683565275, %v5343
    %v5345 = vshll.u32 683565275, %v5342
    %v5346 = vshrl.u32 2475754826, %v5343
    %v5347 = vor.u32 %v5345, %v5346
    %v5348 = vshll.u32 2475754826, %v5342
    %v5349 = vshrl.u32 2131351028, %v5343
    %v5350 = vor.u32 %v5348, %v5349
    %v5351 = vshll.u32 2131351028, %v5342
    %v5352 = vshrl.u32 2102212464, %v5343
    %v5353 = vor.u32 %v5351, %v5352
    %v5354 = vshll.u32 2102212464, %v5342
    %v5355 = vshrl.u32 920167782, %v5343
    %v5356 = vor.u32 %v5354, %v5355
    %v5357 = vshll.u32 920167782, %v5342
    %v5358 = vshrl.u32 1326507024, %v5343
    %v5359 = vor.u32 %v5357, %v5358
    %vm5360 = vcmp.lt.s32.totalorder %v5341, 1
    %vm5361 = vcmp.lt.s32.totalorder %v5341, 2
    %vm5362 = vcmp.lt.s32.totalorder %v5341, 3
    %vm5363 = vcmp.lt.s32.totalorder %v5341, 4
    %v5364 = vsel %vm5360, %v5344, %v5347
    %v5365 = vsel %vm5363, %v5353, 2102212464
    %v5366 = vsel %vm5362, %v5350, %v5365
    %v5367 = vsel %vm5361, %v5364, %v5366
    %v5368 = vsel %vm5360, %v5347, %v5350
    %v5369 = vsel %vm5363, %v5356, 920167782
    %v5370 = vsel %vm5362, %v5353, %v5369
    %v5371 = vsel %vm5361, %v5368, %v5370
    %v5372 = vsel %vm5360, %v5350, %v5353
    %v5373 = vsel %vm5363, %v5359, 1326507024
    %v5374 = vsel %vm5362, %v5356, %v5373
    %v5375 = vsel %vm5361, %v5372, %v5374
    %v5376 = vshll.u32 %v5336, 8
    %v5377 = vmul.u32.u64.compose %v5376, %v5375
    %v5378 = vextract.low.u32 %v5377
    %v5379 = vextract.high.u32 %v5377
    %v5380 = vmul.u32.u64.compose %v5376, %v5371
    %v5381 = vextract.low.u32 %v5380
    %v5382 = vextract.high.u32 %v5380
    %v5383 = vmul.u32 %v5376, %v5367
    %v5384 = vadd.s32 %v5379, %v5381
    %vm5385 = vc.u32 %v5379, %v5381
    %v5386 = vadd.s32 %v5382, 1
    %v5387 = vsel %vm5385, %v5386, %v5382
    %v5388 = vadd.s32 %v5383, %v5387
    %v5389 = vadd.s32 %v5388, 536870912
    %v5390 = vshrl.u32 %v5389, 30
    %v5391 = vshll.u32 %v5390, 30
    %v5392 = vsub.s32 %v5388, %v5391
    %vm5393 = vcmp.lt.s32.totalorder %v5392, 0
    %v5394 = vsub.s32 0, %v5392
    %v5395 = vsel %vm5393, %v5394, %v5392
    %v5396 = vclz %v5395
    %v5397 = vsub.s32 %v5396, 2
    %vm5398 = vcmp.gt.s32.totalorder 0, %v5397
    %v5399 = vsel %vm5398, 0, %v5397
    %v5400 = vsub.s32 32, %v5399
    %v5401 = vshll.u32 %v5392, %v5399
    %v5402 = vshrl.u32 %v5384, %v5400
    %v5403 = vor.u32 %v5401, %v5402
    %v5404 = vsub.s32 4294967266, %v5399
    %v5405 = vadd.s32 %v5404, 127
    %v5406 = vshll.u32 %v5405, 23
    %v5407 = vor.u32 4788187, %v5406
    %v5408 = vand.u32 2147483647, %v5407
    %v5410 = vcvt.s32.f32 %v5403
    %v5411 = vmul.f32 %v5410, %v5408
    %v5412 = vxor.u32 %v5411, 2147483648
    %v5413 = vsel %vm5330, %v5412, %v5411
    %v5414 = vsub.s32 4, %v5390
    %v5415 = vsel %vm5330, %v5414, %v5390
    %v5416 = vsel %vm5329, %v526, %v5413
    %v5417 = vsel %vm5329, 0, %v5415
    %v5418 = vcosq.f32.pop %v5416
    %v5419 = vsinq.f32.pop %v5416
    %vm5420 = vweird.f32 %v526
    %v5421 = vadd.s32 %v5417, 3
    %v5422 = vand.u32 %v5421, 3
    %vm5423 = vcmp.lt.s32.totalorder %v5422, 2
    %vm5424 = vcmp.eq.s32.totalorder %v5422, 0
    %v5425 = vxor.u32 %v5419, 2147483648
    %v5426 = vsel %vm5424, %v5418, %v5425
    %vm5427 = vcmp.eq.s32.totalorder %v5422, 2
    %v5428 = vxor.u32 %v5418, 2147483648
    %v5429 = vsel %vm5427, %v5428, %v5419
    %v5430 = vsel %vm5423, %v5426, %v5429
    %v5431 = vsel %vm5420, nan, %v5430
    %v5432 = vand.u32 2147483647, %v527
    %vm5433 = vcmp.le.f32.partialorder %v5432, 0.7853982
    %vm5434 = vcmp.lt.s32.totalorder %v527, 0
    %v5435 = vand.u32 %v527, 2139095040
    %v5436 = vshrl.u32 %v5435, 23
    %v5437 = vsub.s32 %v5436, 127
    %v5438 = vand.u32 2147483647, %v527
    %v5439 = vand.u32 %v5438, 8388607
    %v5440 = vor.u32 %v5439, 8388608
    %v5441 = vsub.s32 0, %v5440
    %v5442 = vadd.s32 %v5437, 1
    %vm5443 = vcmp.gt.s32.totalorder %v5442, 0
    %v5444 = vsel %vm5443, %v5442, 0
    %v5445 = vshrl.u32 %v5444, 5
    %v5446 = vand.u32 %v5444, 31
    %v5447 = vsub.s32 32, %v5446
    %v5448 = vshrl.u32 683565275, %v5447
    %v5449 = vshll.u32 683565275, %v5446
    %v5450 = vshrl.u32 2475754826, %v5447
    %v5451 = vor.u32 %v5449, %v5450
    %v5452 = vshll.u32 2475754826, %v5446
    %v5453 = vshrl.u32 2131351028, %v5447
    %v5454 = vor.u32 %v5452, %v5453
    %v5455 = vshll.u32 2131351028, %v5446
    %v5456 = vshrl.u32 2102212464, %v5447
    %v5457 = vor.u32 %v5455, %v5456
    %v5458 = vshll.u32 2102212464, %v5446
    %v5459 = vshrl.u32 920167782, %v5447
    %v5460 = vor.u32 %v5458, %v5459
    %v5461 = vshll.u32 920167782, %v5446
    %v5462 = vshrl.u32 1326507024, %v5447
    %v5463 = vor.u32 %v5461, %v5462
    %vm5464 = vcmp.lt.s32.totalorder %v5445, 1
    %vm5465 = vcmp.lt.s32.totalorder %v5445, 2
    %vm5466 = vcmp.lt.s32.totalorder %v5445, 3
    %vm5467 = vcmp.lt.s32.totalorder %v5445, 4
    %v5468 = vsel %vm5464, %v5448, %v5451
    %v5469 = vsel %vm5467, %v5457, 2102212464
    %v5470 = vsel %vm5466, %v5454, %v5469
    %v5471 = vsel %vm5465, %v5468, %v5470
    %v5472 = vsel %vm5464, %v5451, %v5454
    %v5473 = vsel %vm5467, %v5460, 920167782
    %v5474 = vsel %vm5466, %v5457, %v5473
    %v5475 = vsel %vm5465, %v5472, %v5474
    %v5476 = vsel %vm5464, %v5454, %v5457
    %v5477 = vsel %vm5467, %v5463, 1326507024
    %v5478 = vsel %vm5466, %v5460, %v5477
    %v5479 = vsel %vm5465, %v5476, %v5478
    %v5480 = vshll.u32 %v5440, 8
    %v5481 = vmul.u32.u64.compose %v5480, %v5479
    %v5482 = vextract.low.u32 %v5481
    %v5483 = vextract.high.u32 %v5481
    %v5484 = vmul.u32.u64.compose %v5480, %v5475
    %v5485 = vextract.low.u32 %v5484
    %v5486 = vextract.high.u32 %v5484
    %v5487 = vmul.u32 %v5480, %v5471
    %v5488 = vadd.s32 %v5483, %v5485
    %vm5489 = vc.u32 %v5483, %v5485
    %v5490 = vadd.s32 %v5486, 1
    %v5491 = vsel %vm5489, %v5490, %v5486
    %v5492 = vadd.s32 %v5487, %v5491
    %v5493 = vadd.s32 %v5492, 536870912
    %v5494 = vshrl.u32 %v5493, 30
    %v5495 = vshll.u32 %v5494, 30
    %v5496 = vsub.s32 %v5492, %v5495
    %vm5497 = vcmp.lt.s32.totalorder %v5496, 0
    %v5498 = vsub.s32 0, %v5496
    %v5499 = vsel %vm5497, %v5498, %v5496
    %v5500 = vclz %v5499
    %v5501 = vsub.s32 %v5500, 2
    %vm5502 = vcmp.gt.s32.totalorder 0, %v5501
    %v5503 = vsel %vm5502, 0, %v5501
    %v5504 = vsub.s32 32, %v5503
    %v5505 = vshll.u32 %v5496, %v5503
    %v5506 = vshrl.u32 %v5488, %v5504
    %v5507 = vor.u32 %v5505, %v5506
    %v5508 = vsub.s32 4294967266, %v5503
    %v5509 = vadd.s32 %v5508, 127
    %v5510 = vshll.u32 %v5509, 23
    %v5511 = vor.u32 4788187, %v5510
    %v5512 = vand.u32 2147483647, %v5511
    %v5514 = vcvt.s32.f32 %v5507
    %v5515 = vmul.f32 %v5514, %v5512
    %v5516 = vxor.u32 %v5515, 2147483648
    %v5517 = vsel %vm5434, %v5516, %v5515
    %v5518 = vsub.s32 4, %v5494
    %v5519 = vsel %vm5434, %v5518, %v5494
    %v5520 = vsel %vm5433, %v527, %v5517
    %v5521 = vsel %vm5433, 0, %v5519
    %v5522 = vcosq.f32.pop %v5520
    %v5523 = vsinq.f32.pop %v5520
    %vm5524 = vweird.f32 %v527
    %v5525 = vadd.s32 %v5521, 3
    %v5526 = vand.u32 %v5525, 3
    %vm5527 = vcmp.lt.s32.totalorder %v5526, 2
    %vm5528 = vcmp.eq.s32.totalorder %v5526, 0
    %v5529 = vxor.u32 %v5523, 2147483648
    %v5530 = vsel %vm5528, %v5522, %v5529
    %vm5531 = vcmp.eq.s32.totalorder %v5526, 2
    %v5532 = vxor.u32 %v5522, 2147483648
    %v5533 = vsel %vm5531, %v5532, %v5523
    %v5534 = vsel %vm5527, %v5530, %v5533
    %v5535 = vsel %vm5524, nan, %v5534
    %v5536 = vand.u32 2147483647, %v528
    %vm5537 = vcmp.le.f32.partialorder %v5536, 0.7853982
    %vm5538 = vcmp.lt.s32.totalorder %v528, 0
    %v5539 = vand.u32 %v528, 2139095040
    %v5540 = vshrl.u32 %v5539, 23
    %v5541 = vsub.s32 %v5540, 127
    %v5542 = vand.u32 2147483647, %v528
    %v5543 = vand.u32 %v5542, 8388607
    %v5544 = vor.u32 %v5543, 8388608
    %v5545 = vsub.s32 0, %v5544
    %v5546 = vadd.s32 %v5541, 1
    %vm5547 = vcmp.gt.s32.totalorder %v5546, 0
    %v5548 = vsel %vm5547, %v5546, 0
    %v5549 = vshrl.u32 %v5548, 5
    %v5550 = vand.u32 %v5548, 31
    %v5551 = vsub.s32 32, %v5550
    %v5552 = vshrl.u32 683565275, %v5551
    %v5553 = vshll.u32 683565275, %v5550
    %v5554 = vshrl.u32 2475754826, %v5551
    %v5555 = vor.u32 %v5553, %v5554
    %v5556 = vshll.u32 2475754826, %v5550
    %v5557 = vshrl.u32 2131351028, %v5551
    %v5558 = vor.u32 %v5556, %v5557
    %v5559 = vshll.u32 2131351028, %v5550
    %v5560 = vshrl.u32 2102212464, %v5551
    %v5561 = vor.u32 %v5559, %v5560
    %v5562 = vshll.u32 2102212464, %v5550
    %v5563 = vshrl.u32 920167782, %v5551
    %v5564 = vor.u32 %v5562, %v5563
    %v5565 = vshll.u32 920167782, %v5550
    %v5566 = vshrl.u32 1326507024, %v5551
    %v5567 = vor.u32 %v5565, %v5566
    %vm5568 = vcmp.lt.s32.totalorder %v5549, 1
    %vm5569 = vcmp.lt.s32.totalorder %v5549, 2
    %vm5570 = vcmp.lt.s32.totalorder %v5549, 3
    %vm5571 = vcmp.lt.s32.totalorder %v5549, 4
    %v5572 = vsel %vm5568, %v5552, %v5555
    %v5573 = vsel %vm5571, %v5561, 2102212464
    %v5574 = vsel %vm5570, %v5558, %v5573
    %v5575 = vsel %vm5569, %v5572, %v5574
    %v5576 = vsel %vm5568, %v5555, %v5558
    %v5577 = vsel %vm5571, %v5564, 920167782
    %v5578 = vsel %vm5570, %v5561, %v5577
    %v5579 = vsel %vm5569, %v5576, %v5578
    %v5580 = vsel %vm5568, %v5558, %v5561
    %v5581 = vsel %vm5571, %v5567, 1326507024
    %v5582 = vsel %vm5570, %v5564, %v5581
    %v5583 = vsel %vm5569, %v5580, %v5582
    %v5584 = vshll.u32 %v5544, 8
    %v5585 = vmul.u32.u64.compose %v5584, %v5583
    %v5586 = vextract.low.u32 %v5585
    %v5587 = vextract.high.u32 %v5585
    %v5588 = vmul.u32.u64.compose %v5584, %v5579
    %v5589 = vextract.low.u32 %v5588
    %v5590 = vextract.high.u32 %v5588
    %v5591 = vmul.u32 %v5584, %v5575
    %v5592 = vadd.s32 %v5587, %v5589
    %vm5593 = vc.u32 %v5587, %v5589
    %v5594 = vadd.s32 %v5590, 1
    %v5595 = vsel %vm5593, %v5594, %v5590
    %v5596 = vadd.s32 %v5591, %v5595
    %v5597 = vadd.s32 %v5596, 536870912
    %v5598 = vshrl.u32 %v5597, 30
    %v5599 = vshll.u32 %v5598, 30
    %v5600 = vsub.s32 %v5596, %v5599
    %vm5601 = vcmp.lt.s32.totalorder %v5600, 0
    %v5602 = vsub.s32 0, %v5600
    %v5603 = vsel %vm5601, %v5602, %v5600
    %v5604 = vclz %v5603
    %v5605 = vsub.s32 %v5604, 2
    %vm5606 = vcmp.gt.s32.totalorder 0, %v5605
    %v5607 = vsel %vm5606, 0, %v5605
    %v5608 = vsub.s32 32, %v5607
    %v5609 = vshll.u32 %v5600, %v5607
    %v5610 = vshrl.u32 %v5592, %v5608
    %v5611 = vor.u32 %v5609, %v5610
    %v5612 = vsub.s32 4294967266, %v5607
    %v5613 = vadd.s32 %v5612, 127
    %v5614 = vshll.u32 %v5613, 23
    %v5615 = vor.u32 4788187, %v5614
    %v5616 = vand.u32 2147483647, %v5615
    %v5618 = vcvt.s32.f32 %v5611
    %v5619 = vmul.f32 %v5618, %v5616
    %v5620 = vxor.u32 %v5619, 2147483648
    %v5621 = vsel %vm5538, %v5620, %v5619
    %v5622 = vsub.s32 4, %v5598
    %v5623 = vsel %vm5538, %v5622, %v5598
    %v5624 = vsel %vm5537, %v528, %v5621
    %v5625 = vsel %vm5537, 0, %v5623
    %v5626 = vcosq.f32.pop %v5624
    %v5627 = vsinq.f32.pop %v5624
    %vm5628 = vweird.f32 %v528
    %v5629 = vadd.s32 %v5625, 3
    %v5630 = vand.u32 %v5629, 3
    %vm5631 = vcmp.lt.s32.totalorder %v5630, 2
    %vm5632 = vcmp.eq.s32.totalorder %v5630, 0
    %v5633 = vxor.u32 %v5627, 2147483648
    %v5634 = vsel %vm5632, %v5626, %v5633
    %vm5635 = vcmp.eq.s32.totalorder %v5630, 2
    %v5636 = vxor.u32 %v5626, 2147483648
    %v5637 = vsel %vm5635, %v5636, %v5627
    %v5638 = vsel %vm5631, %v5634, %v5637
    %v5639 = vsel %vm5628, nan, %v5638
    %v5640 = vand.u32 2147483647, %v529
    %vm5641 = vcmp.le.f32.partialorder %v5640, 0.7853982
    %vm5642 = vcmp.lt.s32.totalorder %v529, 0
    %v5643 = vand.u32 %v529, 2139095040
    %v5644 = vshrl.u32 %v5643, 23
    %v5645 = vsub.s32 %v5644, 127
    %v5646 = vand.u32 2147483647, %v529
    %v5647 = vand.u32 %v5646, 8388607
    %v5648 = vor.u32 %v5647, 8388608
    %v5649 = vsub.s32 0, %v5648
    %v5650 = vadd.s32 %v5645, 1
    %vm5651 = vcmp.gt.s32.totalorder %v5650, 0
    %v5652 = vsel %vm5651, %v5650, 0
    %v5653 = vshrl.u32 %v5652, 5
    %v5654 = vand.u32 %v5652, 31
    %v5655 = vsub.s32 32, %v5654
    %v5656 = vshrl.u32 683565275, %v5655
    %v5657 = vshll.u32 683565275, %v5654
    %v5658 = vshrl.u32 2475754826, %v5655
    %v5659 = vor.u32 %v5657, %v5658
    %v5660 = vshll.u32 2475754826, %v5654
    %v5661 = vshrl.u32 2131351028, %v5655
    %v5662 = vor.u32 %v5660, %v5661
    %v5663 = vshll.u32 2131351028, %v5654
    %v5664 = vshrl.u32 2102212464, %v5655
    %v5665 = vor.u32 %v5663, %v5664
    %v5666 = vshll.u32 2102212464, %v5654
    %v5667 = vshrl.u32 920167782, %v5655
    %v5668 = vor.u32 %v5666, %v5667
    %v5669 = vshll.u32 920167782, %v5654
    %v5670 = vshrl.u32 1326507024, %v5655
    %v5671 = vor.u32 %v5669, %v5670
    %vm5672 = vcmp.lt.s32.totalorder %v5653, 1
    %vm5673 = vcmp.lt.s32.totalorder %v5653, 2
    %vm5674 = vcmp.lt.s32.totalorder %v5653, 3
    %vm5675 = vcmp.lt.s32.totalorder %v5653, 4
    %v5676 = vsel %vm5672, %v5656, %v5659
    %v5677 = vsel %vm5675, %v5665, 2102212464
    %v5678 = vsel %vm5674, %v5662, %v5677
    %v5679 = vsel %vm5673, %v5676, %v5678
    %v5680 = vsel %vm5672, %v5659, %v5662
    %v5681 = vsel %vm5675, %v5668, 920167782
    %v5682 = vsel %vm5674, %v5665, %v5681
    %v5683 = vsel %vm5673, %v5680, %v5682
    %v5684 = vsel %vm5672, %v5662, %v5665
    %v5685 = vsel %vm5675, %v5671, 1326507024
    %v5686 = vsel %vm5674, %v5668, %v5685
    %v5687 = vsel %vm5673, %v5684, %v5686
    %v5688 = vshll.u32 %v5648, 8
    %v5689 = vmul.u32.u64.compose %v5688, %v5687
    %v5690 = vextract.low.u32 %v5689
    %v5691 = vextract.high.u32 %v5689
    %v5692 = vmul.u32.u64.compose %v5688, %v5683
    %v5693 = vextract.low.u32 %v5692
    %v5694 = vextract.high.u32 %v5692
    %v5695 = vmul.u32 %v5688, %v5679
    %v5696 = vadd.s32 %v5691, %v5693
    %vm5697 = vc.u32 %v5691, %v5693
    %v5698 = vadd.s32 %v5694, 1
    %v5699 = vsel %vm5697, %v5698, %v5694
    %v5700 = vadd.s32 %v5695, %v5699
    %v5701 = vadd.s32 %v5700, 536870912
    %v5702 = vshrl.u32 %v5701, 30
    %v5703 = vshll.u32 %v5702, 30
    %v5704 = vsub.s32 %v5700, %v5703
    %vm5705 = vcmp.lt.s32.totalorder %v5704, 0
    %v5706 = vsub.s32 0, %v5704
    %v5707 = vsel %vm5705, %v5706, %v5704
    %v5708 = vclz %v5707
    %v5709 = vsub.s32 %v5708, 2
    %vm5710 = vcmp.gt.s32.totalorder 0, %v5709
    %v5711 = vsel %vm5710, 0, %v5709
    %v5712 = vsub.s32 32, %v5711
    %v5713 = vshll.u32 %v5704, %v5711
    %v5714 = vshrl.u32 %v5696, %v5712
    %v5715 = vor.u32 %v5713, %v5714
    %v5716 = vsub.s32 4294967266, %v5711
    %v5717 = vadd.s32 %v5716, 127
    %v5718 = vshll.u32 %v5717, 23
    %v5719 = vor.u32 4788187, %v5718
    %v5720 = vand.u32 2147483647, %v5719
    %v5722 = vcvt.s32.f32 %v5715
    %v5723 = vmul.f32 %v5722, %v5720
    %v5724 = vxor.u32 %v5723, 2147483648
    %v5725 = vsel %vm5642, %v5724, %v5723
    %v5726 = vsub.s32 4, %v5702
    %v5727 = vsel %vm5642, %v5726, %v5702
    %v5728 = vsel %vm5641, %v529, %v5725
    %v5729 = vsel %vm5641, 0, %v5727
    %v5730 = vcosq.f32.pop %v5728
    %v5731 = vsinq.f32.pop %v5728
    %vm5732 = vweird.f32 %v529
    %v5733 = vadd.s32 %v5729, 3
    %v5734 = vand.u32 %v5733, 3
    %vm5735 = vcmp.lt.s32.totalorder %v5734, 2
    %vm5736 = vcmp.eq.s32.totalorder %v5734, 0
    %v5737 = vxor.u32 %v5731, 2147483648
    %v5738 = vsel %vm5736, %v5730, %v5737
    %vm5739 = vcmp.eq.s32.totalorder %v5734, 2
    %v5740 = vxor.u32 %v5730, 2147483648
    %v5741 = vsel %vm5739, %v5740, %v5731
    %v5742 = vsel %vm5735, %v5738, %v5741
    %v5743 = vsel %vm5732, nan, %v5742
    %v5744 = vand.u32 2147483647, %v530
    %vm5745 = vcmp.le.f32.partialorder %v5744, 0.7853982
    %vm5746 = vcmp.lt.s32.totalorder %v530, 0
    %v5747 = vand.u32 %v530, 2139095040
    %v5748 = vshrl.u32 %v5747, 23
    %v5749 = vsub.s32 %v5748, 127
    %v5750 = vand.u32 2147483647, %v530
    %v5751 = vand.u32 %v5750, 8388607
    %v5752 = vor.u32 %v5751, 8388608
    %v5753 = vsub.s32 0, %v5752
    %v5754 = vadd.s32 %v5749, 1
    %vm5755 = vcmp.gt.s32.totalorder %v5754, 0
    %v5756 = vsel %vm5755, %v5754, 0
    %v5757 = vshrl.u32 %v5756, 5
    %v5758 = vand.u32 %v5756, 31
    %v5759 = vsub.s32 32, %v5758
    %v5760 = vshrl.u32 683565275, %v5759
    %v5761 = vshll.u32 683565275, %v5758
    %v5762 = vshrl.u32 2475754826, %v5759
    %v5763 = vor.u32 %v5761, %v5762
    %v5764 = vshll.u32 2475754826, %v5758
    %v5765 = vshrl.u32 2131351028, %v5759
    %v5766 = vor.u32 %v5764, %v5765
    %v5767 = vshll.u32 2131351028, %v5758
    %v5768 = vshrl.u32 2102212464, %v5759
    %v5769 = vor.u32 %v5767, %v5768
    %v5770 = vshll.u32 2102212464, %v5758
    %v5771 = vshrl.u32 920167782, %v5759
    %v5772 = vor.u32 %v5770, %v5771
    %v5773 = vshll.u32 920167782, %v5758
    %v5774 = vshrl.u32 1326507024, %v5759
    %v5775 = vor.u32 %v5773, %v5774
    %vm5776 = vcmp.lt.s32.totalorder %v5757, 1
    %vm5777 = vcmp.lt.s32.totalorder %v5757, 2
    %vm5778 = vcmp.lt.s32.totalorder %v5757, 3
    %vm5779 = vcmp.lt.s32.totalorder %v5757, 4
    %v5780 = vsel %vm5776, %v5760, %v5763
    %v5781 = vsel %vm5779, %v5769, 2102212464
    %v5782 = vsel %vm5778, %v5766, %v5781
    %v5783 = vsel %vm5777, %v5780, %v5782
    %v5784 = vsel %vm5776, %v5763, %v5766
    %v5785 = vsel %vm5779, %v5772, 920167782
    %v5786 = vsel %vm5778, %v5769, %v5785
    %v5787 = vsel %vm5777, %v5784, %v5786
    %v5788 = vsel %vm5776, %v5766, %v5769
    %v5789 = vsel %vm5779, %v5775, 1326507024
    %v5790 = vsel %vm5778, %v5772, %v5789
    %v5791 = vsel %vm5777, %v5788, %v5790
    %v5792 = vshll.u32 %v5752, 8
    %v5793 = vmul.u32.u64.compose %v5792, %v5791
    %v5794 = vextract.low.u32 %v5793
    %v5795 = vextract.high.u32 %v5793
    %v5796 = vmul.u32.u64.compose %v5792, %v5787
    %v5797 = vextract.low.u32 %v5796
    %v5798 = vextract.high.u32 %v5796
    %v5799 = vmul.u32 %v5792, %v5783
    %v5800 = vadd.s32 %v5795, %v5797
    %vm5801 = vc.u32 %v5795, %v5797
    %v5802 = vadd.s32 %v5798, 1
    %v5803 = vsel %vm5801, %v5802, %v5798
    %v5804 = vadd.s32 %v5799, %v5803
    %v5805 = vadd.s32 %v5804, 536870912
    %v5806 = vshrl.u32 %v5805, 30
    %v5807 = vshll.u32 %v5806, 30
    %v5808 = vsub.s32 %v5804, %v5807
    %vm5809 = vcmp.lt.s32.totalorder %v5808, 0
    %v5810 = vsub.s32 0, %v5808
    %v5811 = vsel %vm5809, %v5810, %v5808
    %v5812 = vclz %v5811
    %v5813 = vsub.s32 %v5812, 2
    %vm5814 = vcmp.gt.s32.totalorder 0, %v5813
    %v5815 = vsel %vm5814, 0, %v5813
    %v5816 = vsub.s32 32, %v5815
    %v5817 = vshll.u32 %v5808, %v5815
    %v5818 = vshrl.u32 %v5800, %v5816
    %v5819 = vor.u32 %v5817, %v5818
    %v5820 = vsub.s32 4294967266, %v5815
    %v5821 = vadd.s32 %v5820, 127
    %v5822 = vshll.u32 %v5821, 23
    %v5823 = vor.u32 4788187, %v5822
    %v5824 = vand.u32 2147483647, %v5823
    %v5826 = vcvt.s32.f32 %v5819
    %v5827 = vmul.f32 %v5826, %v5824
    %v5828 = vxor.u32 %v5827, 2147483648
    %v5829 = vsel %vm5746, %v5828, %v5827
    %v5830 = vsub.s32 4, %v5806
    %v5831 = vsel %vm5746, %v5830, %v5806
    %v5832 = vsel %vm5745, %v530, %v5829
    %v5833 = vsel %vm5745, 0, %v5831
    %v5834 = vcosq.f32.pop %v5832
    %v5835 = vsinq.f32.pop %v5832
    %vm5836 = vweird.f32 %v530
    %v5837 = vadd.s32 %v5833, 3
    %v5838 = vand.u32 %v5837, 3
    %vm5839 = vcmp.lt.s32.totalorder %v5838, 2
    %vm5840 = vcmp.eq.s32.totalorder %v5838, 0
    %v5841 = vxor.u32 %v5835, 2147483648
    %v5842 = vsel %vm5840, %v5834, %v5841
    %vm5843 = vcmp.eq.s32.totalorder %v5838, 2
    %v5844 = vxor.u32 %v5834, 2147483648
    %v5845 = vsel %vm5843, %v5844, %v5835
    %v5846 = vsel %vm5839, %v5842, %v5845
    %v5847 = vsel %vm5836, nan, %v5846
    %v5848 = vand.u32 2147483647, %v531
    %vm5849 = vcmp.le.f32.partialorder %v5848, 0.7853982
    %vm5850 = vcmp.lt.s32.totalorder %v531, 0
    %v5851 = vand.u32 %v531, 2139095040
    %v5852 = vshrl.u32 %v5851, 23
    %v5853 = vsub.s32 %v5852, 127
    %v5854 = vand.u32 2147483647, %v531
    %v5855 = vand.u32 %v5854, 8388607
    %v5856 = vor.u32 %v5855, 8388608
    %v5857 = vsub.s32 0, %v5856
    %v5858 = vadd.s32 %v5853, 1
    %vm5859 = vcmp.gt.s32.totalorder %v5858, 0
    %v5860 = vsel %vm5859, %v5858, 0
    %v5861 = vshrl.u32 %v5860, 5
    %v5862 = vand.u32 %v5860, 31
    %v5863 = vsub.s32 32, %v5862
    %v5864 = vshrl.u32 683565275, %v5863
    %v5865 = vshll.u32 683565275, %v5862
    %v5866 = vshrl.u32 2475754826, %v5863
    %v5867 = vor.u32 %v5865, %v5866
    %v5868 = vshll.u32 2475754826, %v5862
    %v5869 = vshrl.u32 2131351028, %v5863
    %v5870 = vor.u32 %v5868, %v5869
    %v5871 = vshll.u32 2131351028, %v5862
    %v5872 = vshrl.u32 2102212464, %v5863
    %v5873 = vor.u32 %v5871, %v5872
    %v5874 = vshll.u32 2102212464, %v5862
    %v5875 = vshrl.u32 920167782, %v5863
    %v5876 = vor.u32 %v5874, %v5875
    %v5877 = vshll.u32 920167782, %v5862
    %v5878 = vshrl.u32 1326507024, %v5863
    %v5879 = vor.u32 %v5877, %v5878
    %vm5880 = vcmp.lt.s32.totalorder %v5861, 1
    %vm5881 = vcmp.lt.s32.totalorder %v5861, 2
    %vm5882 = vcmp.lt.s32.totalorder %v5861, 3
    %vm5883 = vcmp.lt.s32.totalorder %v5861, 4
    %v5884 = vsel %vm5880, %v5864, %v5867
    %v5885 = vsel %vm5883, %v5873, 2102212464
    %v5886 = vsel %vm5882, %v5870, %v5885
    %v5887 = vsel %vm5881, %v5884, %v5886
    %v5888 = vsel %vm5880, %v5867, %v5870
    %v5889 = vsel %vm5883, %v5876, 920167782
    %v5890 = vsel %vm5882, %v5873, %v5889
    %v5891 = vsel %vm5881, %v5888, %v5890
    %v5892 = vsel %vm5880, %v5870, %v5873
    %v5893 = vsel %vm5883, %v5879, 1326507024
    %v5894 = vsel %vm5882, %v5876, %v5893
    %v5895 = vsel %vm5881, %v5892, %v5894
    %v5896 = vshll.u32 %v5856, 8
    %v5897 = vmul.u32.u64.compose %v5896, %v5895
    %v5898 = vextract.low.u32 %v5897
    %v5899 = vextract.high.u32 %v5897
    %v5900 = vmul.u32.u64.compose %v5896, %v5891
    %v5901 = vextract.low.u32 %v5900
    %v5902 = vextract.high.u32 %v5900
    %v5903 = vmul.u32 %v5896, %v5887
    %v5904 = vadd.s32 %v5899, %v5901
    %vm5905 = vc.u32 %v5899, %v5901
    %v5906 = vadd.s32 %v5902, 1
    %v5907 = vsel %vm5905, %v5906, %v5902
    %v5908 = vadd.s32 %v5903, %v5907
    %v5909 = vadd.s32 %v5908, 536870912
    %v5910 = vshrl.u32 %v5909, 30
    %v5911 = vshll.u32 %v5910, 30
    %v5912 = vsub.s32 %v5908, %v5911
    %vm5913 = vcmp.lt.s32.totalorder %v5912, 0
    %v5914 = vsub.s32 0, %v5912
    %v5915 = vsel %vm5913, %v5914, %v5912
    %v5916 = vclz %v5915
    %v5917 = vsub.s32 %v5916, 2
    %vm5918 = vcmp.gt.s32.totalorder 0, %v5917
    %v5919 = vsel %vm5918, 0, %v5917
    %v5920 = vsub.s32 32, %v5919
    %v5921 = vshll.u32 %v5912, %v5919
    %v5922 = vshrl.u32 %v5904, %v5920
    %v5923 = vor.u32 %v5921, %v5922
    %v5924 = vsub.s32 4294967266, %v5919
    %v5925 = vadd.s32 %v5924, 127
    %v5926 = vshll.u32 %v5925, 23
    %v5927 = vor.u32 4788187, %v5926
    %v5928 = vand.u32 2147483647, %v5927
    %v5930 = vcvt.s32.f32 %v5923
    %v5931 = vmul.f32 %v5930, %v5928
    %v5932 = vxor.u32 %v5931, 2147483648
    %v5933 = vsel %vm5850, %v5932, %v5931
    %v5934 = vsub.s32 4, %v5910
    %v5935 = vsel %vm5850, %v5934, %v5910
    %v5936 = vsel %vm5849, %v531, %v5933
    %v5937 = vsel %vm5849, 0, %v5935
    %v5938 = vcosq.f32.pop %v5936
    %v5939 = vsinq.f32.pop %v5936
    %vm5940 = vweird.f32 %v531
    %v5941 = vadd.s32 %v5937, 3
    %v5942 = vand.u32 %v5941, 3
    %vm5943 = vcmp.lt.s32.totalorder %v5942, 2
    %vm5944 = vcmp.eq.s32.totalorder %v5942, 0
    %v5945 = vxor.u32 %v5939, 2147483648
    %v5946 = vsel %vm5944, %v5938, %v5945
    %vm5947 = vcmp.eq.s32.totalorder %v5942, 2
    %v5948 = vxor.u32 %v5938, 2147483648
    %v5949 = vsel %vm5947, %v5948, %v5939
    %v5950 = vsel %vm5943, %v5946, %v5949
    %v5951 = vsel %vm5940, nan, %v5950
    %v5952 = vand.u32 2147483647, %v532
    %vm5953 = vcmp.le.f32.partialorder %v5952, 0.7853982
    %vm5954 = vcmp.lt.s32.totalorder %v532, 0
    %v5955 = vand.u32 %v532, 2139095040
    %v5956 = vshrl.u32 %v5955, 23
    %v5957 = vsub.s32 %v5956, 127
    %v5958 = vand.u32 2147483647, %v532
    %v5959 = vand.u32 %v5958, 8388607
    %v5960 = vor.u32 %v5959, 8388608
    %v5961 = vsub.s32 0, %v5960
    %v5962 = vadd.s32 %v5957, 1
    %vm5963 = vcmp.gt.s32.totalorder %v5962, 0
    %v5964 = vsel %vm5963, %v5962, 0
    %v5965 = vshrl.u32 %v5964, 5
    %v5966 = vand.u32 %v5964, 31
    %v5967 = vsub.s32 32, %v5966
    %v5968 = vshrl.u32 683565275, %v5967
    %v5969 = vshll.u32 683565275, %v5966
    %v5970 = vshrl.u32 2475754826, %v5967
    %v5971 = vor.u32 %v5969, %v5970
    %v5972 = vshll.u32 2475754826, %v5966
    %v5973 = vshrl.u32 2131351028, %v5967
    %v5974 = vor.u32 %v5972, %v5973
    %v5975 = vshll.u32 2131351028, %v5966
    %v5976 = vshrl.u32 2102212464, %v5967
    %v5977 = vor.u32 %v5975, %v5976
    %v5978 = vshll.u32 2102212464, %v5966
    %v5979 = vshrl.u32 920167782, %v5967
    %v5980 = vor.u32 %v5978, %v5979
    %v5981 = vshll.u32 920167782, %v5966
    %v5982 = vshrl.u32 1326507024, %v5967
    %v5983 = vor.u32 %v5981, %v5982
    %vm5984 = vcmp.lt.s32.totalorder %v5965, 1
    %vm5985 = vcmp.lt.s32.totalorder %v5965, 2
    %vm5986 = vcmp.lt.s32.totalorder %v5965, 3
    %vm5987 = vcmp.lt.s32.totalorder %v5965, 4
    %v5988 = vsel %vm5984, %v5968, %v5971
    %v5989 = vsel %vm5987, %v5977, 2102212464
    %v5990 = vsel %vm5986, %v5974, %v5989
    %v5991 = vsel %vm5985, %v5988, %v5990
    %v5992 = vsel %vm5984, %v5971, %v5974
    %v5993 = vsel %vm5987, %v5980, 920167782
    %v5994 = vsel %vm5986, %v5977, %v5993
    %v5995 = vsel %vm5985, %v5992, %v5994
    %v5996 = vsel %vm5984, %v5974, %v5977
    %v5997 = vsel %vm5987, %v5983, 1326507024
    %v5998 = vsel %vm5986, %v5980, %v5997
    %v5999 = vsel %vm5985, %v5996, %v5998
    %v6000 = vshll.u32 %v5960, 8
    %v6001 = vmul.u32.u64.compose %v6000, %v5999
    %v6002 = vextract.low.u32 %v6001
    %v6003 = vextract.high.u32 %v6001
    %v6004 = vmul.u32.u64.compose %v6000, %v5995
    %v6005 = vextract.low.u32 %v6004
    %v6006 = vextract.high.u32 %v6004
    %v6007 = vmul.u32 %v6000, %v5991
    %v6008 = vadd.s32 %v6003, %v6005
    %vm6009 = vc.u32 %v6003, %v6005
    %v6010 = vadd.s32 %v6006, 1
    %v6011 = vsel %vm6009, %v6010, %v6006
    %v6012 = vadd.s32 %v6007, %v6011
    %v6013 = vadd.s32 %v6012, 536870912
    %v6014 = vshrl.u32 %v6013, 30
    %v6015 = vshll.u32 %v6014, 30
    %v6016 = vsub.s32 %v6012, %v6015
    %vm6017 = vcmp.lt.s32.totalorder %v6016, 0
    %v6018 = vsub.s32 0, %v6016
    %v6019 = vsel %vm6017, %v6018, %v6016
    %v6020 = vclz %v6019
    %v6021 = vsub.s32 %v6020, 2
    %vm6022 = vcmp.gt.s32.totalorder 0, %v6021
    %v6023 = vsel %vm6022, 0, %v6021
    %v6024 = vsub.s32 32, %v6023
    %v6025 = vshll.u32 %v6016, %v6023
    %v6026 = vshrl.u32 %v6008, %v6024
    %v6027 = vor.u32 %v6025, %v6026
    %v6028 = vsub.s32 4294967266, %v6023
    %v6029 = vadd.s32 %v6028, 127
    %v6030 = vshll.u32 %v6029, 23
    %v6031 = vor.u32 4788187, %v6030
    %v6032 = vand.u32 2147483647, %v6031
    %v6034 = vcvt.s32.f32 %v6027
    %v6035 = vmul.f32 %v6034, %v6032
    %v6036 = vxor.u32 %v6035, 2147483648
    %v6037 = vsel %vm5954, %v6036, %v6035
    %v6038 = vsub.s32 4, %v6014
    %v6039 = vsel %vm5954, %v6038, %v6014
    %v6040 = vsel %vm5953, %v532, %v6037
    %v6041 = vsel %vm5953, 0, %v6039
    %v6042 = vcosq.f32.pop %v6040
    %v6043 = vsinq.f32.pop %v6040
    %vm6044 = vweird.f32 %v532
    %v6045 = vadd.s32 %v6041, 3
    %v6046 = vand.u32 %v6045, 3
    %vm6047 = vcmp.lt.s32.totalorder %v6046, 2
    %vm6048 = vcmp.eq.s32.totalorder %v6046, 0
    %v6049 = vxor.u32 %v6043, 2147483648
    %v6050 = vsel %vm6048, %v6042, %v6049
    %vm6051 = vcmp.eq.s32.totalorder %v6046, 2
    %v6052 = vxor.u32 %v6042, 2147483648
    %v6053 = vsel %vm6051, %v6052, %v6043
    %v6054 = vsel %vm6047, %v6050, %v6053
    %v6055 = vsel %vm6044, nan, %v6054
    %v6056 = vand.u32 2147483647, %v533
    %vm6057 = vcmp.le.f32.partialorder %v6056, 0.7853982
    %vm6058 = vcmp.lt.s32.totalorder %v533, 0
    %v6059 = vand.u32 %v533, 2139095040
    %v6060 = vshrl.u32 %v6059, 23
    %v6061 = vsub.s32 %v6060, 127
    %v6062 = vand.u32 2147483647, %v533
    %v6063 = vand.u32 %v6062, 8388607
    %v6064 = vor.u32 %v6063, 8388608
    %v6065 = vsub.s32 0, %v6064
    %v6066 = vadd.s32 %v6061, 1
    %vm6067 = vcmp.gt.s32.totalorder %v6066, 0
    %v6068 = vsel %vm6067, %v6066, 0
    %v6069 = vshrl.u32 %v6068, 5
    %v6070 = vand.u32 %v6068, 31
    %v6071 = vsub.s32 32, %v6070
    %v6072 = vshrl.u32 683565275, %v6071
    %v6073 = vshll.u32 683565275, %v6070
    %v6074 = vshrl.u32 2475754826, %v6071
    %v6075 = vor.u32 %v6073, %v6074
    %v6076 = vshll.u32 2475754826, %v6070
    %v6077 = vshrl.u32 2131351028, %v6071
    %v6078 = vor.u32 %v6076, %v6077
    %v6079 = vshll.u32 2131351028, %v6070
    %v6080 = vshrl.u32 2102212464, %v6071
    %v6081 = vor.u32 %v6079, %v6080
    %v6082 = vshll.u32 2102212464, %v6070
    %v6083 = vshrl.u32 920167782, %v6071
    %v6084 = vor.u32 %v6082, %v6083
    %v6085 = vshll.u32 920167782, %v6070
    %v6086 = vshrl.u32 1326507024, %v6071
    %v6087 = vor.u32 %v6085, %v6086
    %vm6088 = vcmp.lt.s32.totalorder %v6069, 1
    %vm6089 = vcmp.lt.s32.totalorder %v6069, 2
    %vm6090 = vcmp.lt.s32.totalorder %v6069, 3
    %vm6091 = vcmp.lt.s32.totalorder %v6069, 4
    %v6092 = vsel %vm6088, %v6072, %v6075
    %v6093 = vsel %vm6091, %v6081, 2102212464
    %v6094 = vsel %vm6090, %v6078, %v6093
    %v6095 = vsel %vm6089, %v6092, %v6094
    %v6096 = vsel %vm6088, %v6075, %v6078
    %v6097 = vsel %vm6091, %v6084, 920167782
    %v6098 = vsel %vm6090, %v6081, %v6097
    %v6099 = vsel %vm6089, %v6096, %v6098
    %v6100 = vsel %vm6088, %v6078, %v6081
    %v6101 = vsel %vm6091, %v6087, 1326507024
    %v6102 = vsel %vm6090, %v6084, %v6101
    %v6103 = vsel %vm6089, %v6100, %v6102
    %v6104 = vshll.u32 %v6064, 8
    %v6105 = vmul.u32.u64.compose %v6104, %v6103
    %v6106 = vextract.low.u32 %v6105
    %v6107 = vextract.high.u32 %v6105
    %v6108 = vmul.u32.u64.compose %v6104, %v6099
    %v6109 = vextract.low.u32 %v6108
    %v6110 = vextract.high.u32 %v6108
    %v6111 = vmul.u32 %v6104, %v6095
    %v6112 = vadd.s32 %v6107, %v6109
    %vm6113 = vc.u32 %v6107, %v6109
    %v6114 = vadd.s32 %v6110, 1
    %v6115 = vsel %vm6113, %v6114, %v6110
    %v6116 = vadd.s32 %v6111, %v6115
    %v6117 = vadd.s32 %v6116, 536870912
    %v6118 = vshrl.u32 %v6117, 30
    %v6119 = vshll.u32 %v6118, 30
    %v6120 = vsub.s32 %v6116, %v6119
    %vm6121 = vcmp.lt.s32.totalorder %v6120, 0
    %v6122 = vsub.s32 0, %v6120
    %v6123 = vsel %vm6121, %v6122, %v6120
    %v6124 = vclz %v6123
    %v6125 = vsub.s32 %v6124, 2
    %vm6126 = vcmp.gt.s32.totalorder 0, %v6125
    %v6127 = vsel %vm6126, 0, %v6125
    %v6128 = vsub.s32 32, %v6127
    %v6129 = vshll.u32 %v6120, %v6127
    %v6130 = vshrl.u32 %v6112, %v6128
    %v6131 = vor.u32 %v6129, %v6130
    %v6132 = vsub.s32 4294967266, %v6127
    %v6133 = vadd.s32 %v6132, 127
    %v6134 = vshll.u32 %v6133, 23
    %v6135 = vor.u32 4788187, %v6134
    %v6136 = vand.u32 2147483647, %v6135
    %v6138 = vcvt.s32.f32 %v6131
    %v6139 = vmul.f32 %v6138, %v6136
    %v6140 = vxor.u32 %v6139, 2147483648
    %v6141 = vsel %vm6058, %v6140, %v6139
    %v6142 = vsub.s32 4, %v6118
    %v6143 = vsel %vm6058, %v6142, %v6118
    %v6144 = vsel %vm6057, %v533, %v6141
    %v6145 = vsel %vm6057, 0, %v6143
    %v6146 = vcosq.f32.pop %v6144
    %v6147 = vsinq.f32.pop %v6144
    %vm6148 = vweird.f32 %v533
    %v6149 = vadd.s32 %v6145, 3
    %v6150 = vand.u32 %v6149, 3
    %vm6151 = vcmp.lt.s32.totalorder %v6150, 2
    %vm6152 = vcmp.eq.s32.totalorder %v6150, 0
    %v6153 = vxor.u32 %v6147, 2147483648
    %v6154 = vsel %vm6152, %v6146, %v6153
    %vm6155 = vcmp.eq.s32.totalorder %v6150, 2
    %v6156 = vxor.u32 %v6146, 2147483648
    %v6157 = vsel %vm6155, %v6156, %v6147
    %v6158 = vsel %vm6151, %v6154, %v6157
    %v6159 = vsel %vm6148, nan, %v6158
    %v6160 = vand.u32 2147483647, %v534
    %vm6161 = vcmp.le.f32.partialorder %v6160, 0.7853982
    %vm6162 = vcmp.lt.s32.totalorder %v534, 0
    %v6163 = vand.u32 %v534, 2139095040
    %v6164 = vshrl.u32 %v6163, 23
    %v6165 = vsub.s32 %v6164, 127
    %v6166 = vand.u32 2147483647, %v534
    %v6167 = vand.u32 %v6166, 8388607
    %v6168 = vor.u32 %v6167, 8388608
    %v6169 = vsub.s32 0, %v6168
    %v6170 = vadd.s32 %v6165, 1
    %vm6171 = vcmp.gt.s32.totalorder %v6170, 0
    %v6172 = vsel %vm6171, %v6170, 0
    %v6173 = vshrl.u32 %v6172, 5
    %v6174 = vand.u32 %v6172, 31
    %v6175 = vsub.s32 32, %v6174
    %v6176 = vshrl.u32 683565275, %v6175
    %v6177 = vshll.u32 683565275, %v6174
    %v6178 = vshrl.u32 2475754826, %v6175
    %v6179 = vor.u32 %v6177, %v6178
    %v6180 = vshll.u32 2475754826, %v6174
    %v6181 = vshrl.u32 2131351028, %v6175
    %v6182 = vor.u32 %v6180, %v6181
    %v6183 = vshll.u32 2131351028, %v6174
    %v6184 = vshrl.u32 2102212464, %v6175
    %v6185 = vor.u32 %v6183, %v6184
    %v6186 = vshll.u32 2102212464, %v6174
    %v6187 = vshrl.u32 920167782, %v6175
    %v6188 = vor.u32 %v6186, %v6187
    %v6189 = vshll.u32 920167782, %v6174
    %v6190 = vshrl.u32 1326507024, %v6175
    %v6191 = vor.u32 %v6189, %v6190
    %vm6192 = vcmp.lt.s32.totalorder %v6173, 1
    %vm6193 = vcmp.lt.s32.totalorder %v6173, 2
    %vm6194 = vcmp.lt.s32.totalorder %v6173, 3
    %vm6195 = vcmp.lt.s32.totalorder %v6173, 4
    %v6196 = vsel %vm6192, %v6176, %v6179
    %v6197 = vsel %vm6195, %v6185, 2102212464
    %v6198 = vsel %vm6194, %v6182, %v6197
    %v6199 = vsel %vm6193, %v6196, %v6198
    %v6200 = vsel %vm6192, %v6179, %v6182
    %v6201 = vsel %vm6195, %v6188, 920167782
    %v6202 = vsel %vm6194, %v6185, %v6201
    %v6203 = vsel %vm6193, %v6200, %v6202
    %v6204 = vsel %vm6192, %v6182, %v6185
    %v6205 = vsel %vm6195, %v6191, 1326507024
    %v6206 = vsel %vm6194, %v6188, %v6205
    %v6207 = vsel %vm6193, %v6204, %v6206
    %v6208 = vshll.u32 %v6168, 8
    %v6209 = vmul.u32.u64.compose %v6208, %v6207
    %v6210 = vextract.low.u32 %v6209
    %v6211 = vextract.high.u32 %v6209
    %v6212 = vmul.u32.u64.compose %v6208, %v6203
    %v6213 = vextract.low.u32 %v6212
    %v6214 = vextract.high.u32 %v6212
    %v6215 = vmul.u32 %v6208, %v6199
    %v6216 = vadd.s32 %v6211, %v6213
    %vm6217 = vc.u32 %v6211, %v6213
    %v6218 = vadd.s32 %v6214, 1
    %v6219 = vsel %vm6217, %v6218, %v6214
    %v6220 = vadd.s32 %v6215, %v6219
    %v6221 = vadd.s32 %v6220, 536870912
    %v6222 = vshrl.u32 %v6221, 30
    %v6223 = vshll.u32 %v6222, 30
    %v6224 = vsub.s32 %v6220, %v6223
    %vm6225 = vcmp.lt.s32.totalorder %v6224, 0
    %v6226 = vsub.s32 0, %v6224
    %v6227 = vsel %vm6225, %v6226, %v6224
    %v6228 = vclz %v6227
    %v6229 = vsub.s32 %v6228, 2
    %vm6230 = vcmp.gt.s32.totalorder 0, %v6229
    %v6231 = vsel %vm6230, 0, %v6229
    %v6232 = vsub.s32 32, %v6231
    %v6233 = vshll.u32 %v6224, %v6231
    %v6234 = vshrl.u32 %v6216, %v6232
    %v6235 = vor.u32 %v6233, %v6234
    %v6236 = vsub.s32 4294967266, %v6231
    %v6237 = vadd.s32 %v6236, 127
    %v6238 = vshll.u32 %v6237, 23
    %v6239 = vor.u32 4788187, %v6238
    %v6240 = vand.u32 2147483647, %v6239
    %v6242 = vcvt.s32.f32 %v6235
    %v6243 = vmul.f32 %v6242, %v6240
    %v6244 = vxor.u32 %v6243, 2147483648
    %v6245 = vsel %vm6162, %v6244, %v6243
    %v6246 = vsub.s32 4, %v6222
    %v6247 = vsel %vm6162, %v6246, %v6222
    %v6248 = vsel %vm6161, %v534, %v6245
    %v6249 = vsel %vm6161, 0, %v6247
    %v6250 = vcosq.f32.pop %v6248
    %v6251 = vsinq.f32.pop %v6248
    %vm6252 = vweird.f32 %v534
    %v6253 = vadd.s32 %v6249, 3
    %v6254 = vand.u32 %v6253, 3
    %vm6255 = vcmp.lt.s32.totalorder %v6254, 2
    %vm6256 = vcmp.eq.s32.totalorder %v6254, 0
    %v6257 = vxor.u32 %v6251, 2147483648
    %v6258 = vsel %vm6256, %v6250, %v6257
    %vm6259 = vcmp.eq.s32.totalorder %v6254, 2
    %v6260 = vxor.u32 %v6250, 2147483648
    %v6261 = vsel %vm6259, %v6260, %v6251
    %v6262 = vsel %vm6255, %v6258, %v6261
    %v6263 = vsel %vm6252, nan, %v6262
    %v6264 = vand.u32 2147483647, %v535
    %vm6265 = vcmp.le.f32.partialorder %v6264, 0.7853982
    %vm6266 = vcmp.lt.s32.totalorder %v535, 0
    %v6267 = vand.u32 %v535, 2139095040
    %v6268 = vshrl.u32 %v6267, 23
    %v6269 = vsub.s32 %v6268, 127
    %v6270 = vand.u32 2147483647, %v535
    %v6271 = vand.u32 %v6270, 8388607
    %v6272 = vor.u32 %v6271, 8388608
    %v6273 = vsub.s32 0, %v6272
    %v6274 = vadd.s32 %v6269, 1
    %vm6275 = vcmp.gt.s32.totalorder %v6274, 0
    %v6276 = vsel %vm6275, %v6274, 0
    %v6277 = vshrl.u32 %v6276, 5
    %v6278 = vand.u32 %v6276, 31
    %v6279 = vsub.s32 32, %v6278
    %v6280 = vshrl.u32 683565275, %v6279
    %v6281 = vshll.u32 683565275, %v6278
    %v6282 = vshrl.u32 2475754826, %v6279
    %v6283 = vor.u32 %v6281, %v6282
    %v6284 = vshll.u32 2475754826, %v6278
    %v6285 = vshrl.u32 2131351028, %v6279
    %v6286 = vor.u32 %v6284, %v6285
    %v6287 = vshll.u32 2131351028, %v6278
    %v6288 = vshrl.u32 2102212464, %v6279
    %v6289 = vor.u32 %v6287, %v6288
    %v6290 = vshll.u32 2102212464, %v6278
    %v6291 = vshrl.u32 920167782, %v6279
    %v6292 = vor.u32 %v6290, %v6291
    %v6293 = vshll.u32 920167782, %v6278
    %v6294 = vshrl.u32 1326507024, %v6279
    %v6295 = vor.u32 %v6293, %v6294
    %vm6296 = vcmp.lt.s32.totalorder %v6277, 1
    %vm6297 = vcmp.lt.s32.totalorder %v6277, 2
    %vm6298 = vcmp.lt.s32.totalorder %v6277, 3
    %vm6299 = vcmp.lt.s32.totalorder %v6277, 4
    %v6300 = vsel %vm6296, %v6280, %v6283
    %v6301 = vsel %vm6299, %v6289, 2102212464
    %v6302 = vsel %vm6298, %v6286, %v6301
    %v6303 = vsel %vm6297, %v6300, %v6302
    %v6304 = vsel %vm6296, %v6283, %v6286
    %v6305 = vsel %vm6299, %v6292, 920167782
    %v6306 = vsel %vm6298, %v6289, %v6305
    %v6307 = vsel %vm6297, %v6304, %v6306
    %v6308 = vsel %vm6296, %v6286, %v6289
    %v6309 = vsel %vm6299, %v6295, 1326507024
    %v6310 = vsel %vm6298, %v6292, %v6309
    %v6311 = vsel %vm6297, %v6308, %v6310
    %v6312 = vshll.u32 %v6272, 8
    %v6313 = vmul.u32.u64.compose %v6312, %v6311
    %v6314 = vextract.low.u32 %v6313
    %v6315 = vextract.high.u32 %v6313
    %v6316 = vmul.u32.u64.compose %v6312, %v6307
    %v6317 = vextract.low.u32 %v6316
    %v6318 = vextract.high.u32 %v6316
    %v6319 = vmul.u32 %v6312, %v6303
    %v6320 = vadd.s32 %v6315, %v6317
    %vm6321 = vc.u32 %v6315, %v6317
    %v6322 = vadd.s32 %v6318, 1
    %v6323 = vsel %vm6321, %v6322, %v6318
    %v6324 = vadd.s32 %v6319, %v6323
    %v6325 = vadd.s32 %v6324, 536870912
    %v6326 = vshrl.u32 %v6325, 30
    %v6327 = vshll.u32 %v6326, 30
    %v6328 = vsub.s32 %v6324, %v6327
    %vm6329 = vcmp.lt.s32.totalorder %v6328, 0
    %v6330 = vsub.s32 0, %v6328
    %v6331 = vsel %vm6329, %v6330, %v6328
    %v6332 = vclz %v6331
    %v6333 = vsub.s32 %v6332, 2
    %vm6334 = vcmp.gt.s32.totalorder 0, %v6333
    %v6335 = vsel %vm6334, 0, %v6333
    %v6336 = vsub.s32 32, %v6335
    %v6337 = vshll.u32 %v6328, %v6335
    %v6338 = vshrl.u32 %v6320, %v6336
    %v6339 = vor.u32 %v6337, %v6338
    %v6340 = vsub.s32 4294967266, %v6335
    %v6341 = vadd.s32 %v6340, 127
    %v6342 = vshll.u32 %v6341, 23
    %v6343 = vor.u32 4788187, %v6342
    %v6344 = vand.u32 2147483647, %v6343
    %v6346 = vcvt.s32.f32 %v6339
    %v6347 = vmul.f32 %v6346, %v6344
    %v6348 = vxor.u32 %v6347, 2147483648
    %v6349 = vsel %vm6266, %v6348, %v6347
    %v6350 = vsub.s32 4, %v6326
    %v6351 = vsel %vm6266, %v6350, %v6326
    %v6352 = vsel %vm6265, %v535, %v6349
    %v6353 = vsel %vm6265, 0, %v6351
    %v6354 = vcosq.f32.pop %v6352
    %v6355 = vsinq.f32.pop %v6352
    %vm6356 = vweird.f32 %v535
    %v6357 = vadd.s32 %v6353, 3
    %v6358 = vand.u32 %v6357, 3
    %vm6359 = vcmp.lt.s32.totalorder %v6358, 2
    %vm6360 = vcmp.eq.s32.totalorder %v6358, 0
    %v6361 = vxor.u32 %v6355, 2147483648
    %v6362 = vsel %vm6360, %v6354, %v6361
    %vm6363 = vcmp.eq.s32.totalorder %v6358, 2
    %v6364 = vxor.u32 %v6354, 2147483648
    %v6365 = vsel %vm6363, %v6364, %v6355
    %v6366 = vsel %vm6359, %v6362, %v6365
    %v6367 = vsel %vm6356, nan, %v6366
    %v6368 = vand.u32 2147483647, %v536
    %vm6369 = vcmp.le.f32.partialorder %v6368, 0.7853982
    %vm6370 = vcmp.lt.s32.totalorder %v536, 0
    %v6371 = vand.u32 %v536, 2139095040
    %v6372 = vshrl.u32 %v6371, 23
    %v6373 = vsub.s32 %v6372, 127
    %v6374 = vand.u32 2147483647, %v536
    %v6375 = vand.u32 %v6374, 8388607
    %v6376 = vor.u32 %v6375, 8388608
    %v6377 = vsub.s32 0, %v6376
    %v6378 = vadd.s32 %v6373, 1
    %vm6379 = vcmp.gt.s32.totalorder %v6378, 0
    %v6380 = vsel %vm6379, %v6378, 0
    %v6381 = vshrl.u32 %v6380, 5
    %v6382 = vand.u32 %v6380, 31
    %v6383 = vsub.s32 32, %v6382
    %v6384 = vshrl.u32 683565275, %v6383
    %v6385 = vshll.u32 683565275, %v6382
    %v6386 = vshrl.u32 2475754826, %v6383
    %v6387 = vor.u32 %v6385, %v6386
    %v6388 = vshll.u32 2475754826, %v6382
    %v6389 = vshrl.u32 2131351028, %v6383
    %v6390 = vor.u32 %v6388, %v6389
    %v6391 = vshll.u32 2131351028, %v6382
    %v6392 = vshrl.u32 2102212464, %v6383
    %v6393 = vor.u32 %v6391, %v6392
    %v6394 = vshll.u32 2102212464, %v6382
    %v6395 = vshrl.u32 920167782, %v6383
    %v6396 = vor.u32 %v6394, %v6395
    %v6397 = vshll.u32 920167782, %v6382
    %v6398 = vshrl.u32 1326507024, %v6383
    %v6399 = vor.u32 %v6397, %v6398
    %vm6400 = vcmp.lt.s32.totalorder %v6381, 1
    %vm6401 = vcmp.lt.s32.totalorder %v6381, 2
    %vm6402 = vcmp.lt.s32.totalorder %v6381, 3
    %vm6403 = vcmp.lt.s32.totalorder %v6381, 4
    %v6404 = vsel %vm6400, %v6384, %v6387
    %v6405 = vsel %vm6403, %v6393, 2102212464
    %v6406 = vsel %vm6402, %v6390, %v6405
    %v6407 = vsel %vm6401, %v6404, %v6406
    %v6408 = vsel %vm6400, %v6387, %v6390
    %v6409 = vsel %vm6403, %v6396, 920167782
    %v6410 = vsel %vm6402, %v6393, %v6409
    %v6411 = vsel %vm6401, %v6408, %v6410
    %v6412 = vsel %vm6400, %v6390, %v6393
    %v6413 = vsel %vm6403, %v6399, 1326507024
    %v6414 = vsel %vm6402, %v6396, %v6413
    %v6415 = vsel %vm6401, %v6412, %v6414
    %v6416 = vshll.u32 %v6376, 8
    %v6417 = vmul.u32.u64.compose %v6416, %v6415
    %v6418 = vextract.low.u32 %v6417
    %v6419 = vextract.high.u32 %v6417
    %v6420 = vmul.u32.u64.compose %v6416, %v6411
    %v6421 = vextract.low.u32 %v6420
    %v6422 = vextract.high.u32 %v6420
    %v6423 = vmul.u32 %v6416, %v6407
    %v6424 = vadd.s32 %v6419, %v6421
    %vm6425 = vc.u32 %v6419, %v6421
    %v6426 = vadd.s32 %v6422, 1
    %v6427 = vsel %vm6425, %v6426, %v6422
    %v6428 = vadd.s32 %v6423, %v6427
    %v6429 = vadd.s32 %v6428, 536870912
    %v6430 = vshrl.u32 %v6429, 30
    %v6431 = vshll.u32 %v6430, 30
    %v6432 = vsub.s32 %v6428, %v6431
    %vm6433 = vcmp.lt.s32.totalorder %v6432, 0
    %v6434 = vsub.s32 0, %v6432
    %v6435 = vsel %vm6433, %v6434, %v6432
    %v6436 = vclz %v6435
    %v6437 = vsub.s32 %v6436, 2
    %vm6438 = vcmp.gt.s32.totalorder 0, %v6437
    %v6439 = vsel %vm6438, 0, %v6437
    %v6440 = vsub.s32 32, %v6439
    %v6441 = vshll.u32 %v6432, %v6439
    %v6442 = vshrl.u32 %v6424, %v6440
    %v6443 = vor.u32 %v6441, %v6442
    %v6444 = vsub.s32 4294967266, %v6439
    %v6445 = vadd.s32 %v6444, 127
    %v6446 = vshll.u32 %v6445, 23
    %v6447 = vor.u32 4788187, %v6446
    %v6448 = vand.u32 2147483647, %v6447
    %v6450 = vcvt.s32.f32 %v6443
    %v6451 = vmul.f32 %v6450, %v6448
    %v6452 = vxor.u32 %v6451, 2147483648
    %v6453 = vsel %vm6370, %v6452, %v6451
    %v6454 = vsub.s32 4, %v6430
    %v6455 = vsel %vm6370, %v6454, %v6430
    %v6456 = vsel %vm6369, %v536, %v6453
    %v6457 = vsel %vm6369, 0, %v6455
    %v6458 = vcosq.f32.pop %v6456
    %v6459 = vsinq.f32.pop %v6456
    %vm6460 = vweird.f32 %v536
    %v6461 = vadd.s32 %v6457, 3
    %v6462 = vand.u32 %v6461, 3
    %vm6463 = vcmp.lt.s32.totalorder %v6462, 2
    %vm6464 = vcmp.eq.s32.totalorder %v6462, 0
    %v6465 = vxor.u32 %v6459, 2147483648
    %v6466 = vsel %vm6464, %v6458, %v6465
    %vm6467 = vcmp.eq.s32.totalorder %v6462, 2
    %v6468 = vxor.u32 %v6458, 2147483648
    %v6469 = vsel %vm6467, %v6468, %v6459
    %v6470 = vsel %vm6463, %v6466, %v6469
    %v6471 = vsel %vm6460, nan, %v6470
    %v6472 = vand.u32 2147483647, %v537
    %vm6473 = vcmp.le.f32.partialorder %v6472, 0.7853982
    %vm6474 = vcmp.lt.s32.totalorder %v537, 0
    %v6475 = vand.u32 %v537, 2139095040
    %v6476 = vshrl.u32 %v6475, 23
    %v6477 = vsub.s32 %v6476, 127
    %v6478 = vand.u32 2147483647, %v537
    %v6479 = vand.u32 %v6478, 8388607
    %v6480 = vor.u32 %v6479, 8388608
    %v6481 = vsub.s32 0, %v6480
    %v6482 = vadd.s32 %v6477, 1
    %vm6483 = vcmp.gt.s32.totalorder %v6482, 0
    %v6484 = vsel %vm6483, %v6482, 0
    %v6485 = vshrl.u32 %v6484, 5
    %v6486 = vand.u32 %v6484, 31
    %v6487 = vsub.s32 32, %v6486
    %v6488 = vshrl.u32 683565275, %v6487
    %v6489 = vshll.u32 683565275, %v6486
    %v6490 = vshrl.u32 2475754826, %v6487
    %v6491 = vor.u32 %v6489, %v6490
    %v6492 = vshll.u32 2475754826, %v6486
    %v6493 = vshrl.u32 2131351028, %v6487
    %v6494 = vor.u32 %v6492, %v6493
    %v6495 = vshll.u32 2131351028, %v6486
    %v6496 = vshrl.u32 2102212464, %v6487
    %v6497 = vor.u32 %v6495, %v6496
    %v6498 = vshll.u32 2102212464, %v6486
    %v6499 = vshrl.u32 920167782, %v6487
    %v6500 = vor.u32 %v6498, %v6499
    %v6501 = vshll.u32 920167782, %v6486
    %v6502 = vshrl.u32 1326507024, %v6487
    %v6503 = vor.u32 %v6501, %v6502
    %vm6504 = vcmp.lt.s32.totalorder %v6485, 1
    %vm6505 = vcmp.lt.s32.totalorder %v6485, 2
    %vm6506 = vcmp.lt.s32.totalorder %v6485, 3
    %vm6507 = vcmp.lt.s32.totalorder %v6485, 4
    %v6508 = vsel %vm6504, %v6488, %v6491
    %v6509 = vsel %vm6507, %v6497, 2102212464
    %v6510 = vsel %vm6506, %v6494, %v6509
    %v6511 = vsel %vm6505, %v6508, %v6510
    %v6512 = vsel %vm6504, %v6491, %v6494
    %v6513 = vsel %vm6507, %v6500, 920167782
    %v6514 = vsel %vm6506, %v6497, %v6513
    %v6515 = vsel %vm6505, %v6512, %v6514
    %v6516 = vsel %vm6504, %v6494, %v6497
    %v6517 = vsel %vm6507, %v6503, 1326507024
    %v6518 = vsel %vm6506, %v6500, %v6517
    %v6519 = vsel %vm6505, %v6516, %v6518
    %v6520 = vshll.u32 %v6480, 8
    %v6521 = vmul.u32.u64.compose %v6520, %v6519
    %v6522 = vextract.low.u32 %v6521
    %v6523 = vextract.high.u32 %v6521
    %v6524 = vmul.u32.u64.compose %v6520, %v6515
    %v6525 = vextract.low.u32 %v6524
    %v6526 = vextract.high.u32 %v6524
    %v6527 = vmul.u32 %v6520, %v6511
    %v6528 = vadd.s32 %v6523, %v6525
    %vm6529 = vc.u32 %v6523, %v6525
    %v6530 = vadd.s32 %v6526, 1
    %v6531 = vsel %vm6529, %v6530, %v6526
    %v6532 = vadd.s32 %v6527, %v6531
    %v6533 = vadd.s32 %v6532, 536870912
    %v6534 = vshrl.u32 %v6533, 30
    %v6535 = vshll.u32 %v6534, 30
    %v6536 = vsub.s32 %v6532, %v6535
    %vm6537 = vcmp.lt.s32.totalorder %v6536, 0
    %v6538 = vsub.s32 0, %v6536
    %v6539 = vsel %vm6537, %v6538, %v6536
    %v6540 = vclz %v6539
    %v6541 = vsub.s32 %v6540, 2
    %vm6542 = vcmp.gt.s32.totalorder 0, %v6541
    %v6543 = vsel %vm6542, 0, %v6541
    %v6544 = vsub.s32 32, %v6543
    %v6545 = vshll.u32 %v6536, %v6543
    %v6546 = vshrl.u32 %v6528, %v6544
    %v6547 = vor.u32 %v6545, %v6546
    %v6548 = vsub.s32 4294967266, %v6543
    %v6549 = vadd.s32 %v6548, 127
    %v6550 = vshll.u32 %v6549, 23
    %v6551 = vor.u32 4788187, %v6550
    %v6552 = vand.u32 2147483647, %v6551
    %v6554 = vcvt.s32.f32 %v6547
    %v6555 = vmul.f32 %v6554, %v6552
    %v6556 = vxor.u32 %v6555, 2147483648
    %v6557 = vsel %vm6474, %v6556, %v6555
    %v6558 = vsub.s32 4, %v6534
    %v6559 = vsel %vm6474, %v6558, %v6534
    %v6560 = vsel %vm6473, %v537, %v6557
    %v6561 = vsel %vm6473, 0, %v6559
    %v6562 = vcosq.f32.pop %v6560
    %v6563 = vsinq.f32.pop %v6560
    %vm6564 = vweird.f32 %v537
    %v6565 = vadd.s32 %v6561, 3
    %v6566 = vand.u32 %v6565, 3
    %vm6567 = vcmp.lt.s32.totalorder %v6566, 2
    %vm6568 = vcmp.eq.s32.totalorder %v6566, 0
    %v6569 = vxor.u32 %v6563, 2147483648
    %v6570 = vsel %vm6568, %v6562, %v6569
    %vm6571 = vcmp.eq.s32.totalorder %v6566, 2
    %v6572 = vxor.u32 %v6562, 2147483648
    %v6573 = vsel %vm6571, %v6572, %v6563
    %v6574 = vsel %vm6567, %v6570, %v6573
    %v6575 = vsel %vm6564, nan, %v6574
    %v6576 = vand.u32 2147483647, %v538
    %vm6577 = vcmp.le.f32.partialorder %v6576, 0.7853982
    %vm6578 = vcmp.lt.s32.totalorder %v538, 0
    %v6579 = vand.u32 %v538, 2139095040
    %v6580 = vshrl.u32 %v6579, 23
    %v6581 = vsub.s32 %v6580, 127
    %v6582 = vand.u32 2147483647, %v538
    %v6583 = vand.u32 %v6582, 8388607
    %v6584 = vor.u32 %v6583, 8388608
    %v6585 = vsub.s32 0, %v6584
    %v6586 = vadd.s32 %v6581, 1
    %vm6587 = vcmp.gt.s32.totalorder %v6586, 0
    %v6588 = vsel %vm6587, %v6586, 0
    %v6589 = vshrl.u32 %v6588, 5
    %v6590 = vand.u32 %v6588, 31
    %v6591 = vsub.s32 32, %v6590
    %v6592 = vshrl.u32 683565275, %v6591
    %v6593 = vshll.u32 683565275, %v6590
    %v6594 = vshrl.u32 2475754826, %v6591
    %v6595 = vor.u32 %v6593, %v6594
    %v6596 = vshll.u32 2475754826, %v6590
    %v6597 = vshrl.u32 2131351028, %v6591
    %v6598 = vor.u32 %v6596, %v6597
    %v6599 = vshll.u32 2131351028, %v6590
    %v6600 = vshrl.u32 2102212464, %v6591
    %v6601 = vor.u32 %v6599, %v6600
    %v6602 = vshll.u32 2102212464, %v6590
    %v6603 = vshrl.u32 920167782, %v6591
    %v6604 = vor.u32 %v6602, %v6603
    %v6605 = vshll.u32 920167782, %v6590
    %v6606 = vshrl.u32 1326507024, %v6591
    %v6607 = vor.u32 %v6605, %v6606
    %vm6608 = vcmp.lt.s32.totalorder %v6589, 1
    %vm6609 = vcmp.lt.s32.totalorder %v6589, 2
    %vm6610 = vcmp.lt.s32.totalorder %v6589, 3
    %vm6611 = vcmp.lt.s32.totalorder %v6589, 4
    %v6612 = vsel %vm6608, %v6592, %v6595
    %v6613 = vsel %vm6611, %v6601, 2102212464
    %v6614 = vsel %vm6610, %v6598, %v6613
    %v6615 = vsel %vm6609, %v6612, %v6614
    %v6616 = vsel %vm6608, %v6595, %v6598
    %v6617 = vsel %vm6611, %v6604, 920167782
    %v6618 = vsel %vm6610, %v6601, %v6617
    %v6619 = vsel %vm6609, %v6616, %v6618
    %v6620 = vsel %vm6608, %v6598, %v6601
    %v6621 = vsel %vm6611, %v6607, 1326507024
    %v6622 = vsel %vm6610, %v6604, %v6621
    %v6623 = vsel %vm6609, %v6620, %v6622
    %v6624 = vshll.u32 %v6584, 8
    %v6625 = vmul.u32.u64.compose %v6624, %v6623
    %v6626 = vextract.low.u32 %v6625
    %v6627 = vextract.high.u32 %v6625
    %v6628 = vmul.u32.u64.compose %v6624, %v6619
    %v6629 = vextract.low.u32 %v6628
    %v6630 = vextract.high.u32 %v6628
    %v6631 = vmul.u32 %v6624, %v6615
    %v6632 = vadd.s32 %v6627, %v6629
    %vm6633 = vc.u32 %v6627, %v6629
    %v6634 = vadd.s32 %v6630, 1
    %v6635 = vsel %vm6633, %v6634, %v6630
    %v6636 = vadd.s32 %v6631, %v6635
    %v6637 = vadd.s32 %v6636, 536870912
    %v6638 = vshrl.u32 %v6637, 30
    %v6639 = vshll.u32 %v6638, 30
    %v6640 = vsub.s32 %v6636, %v6639
    %vm6641 = vcmp.lt.s32.totalorder %v6640, 0
    %v6642 = vsub.s32 0, %v6640
    %v6643 = vsel %vm6641, %v6642, %v6640
    %v6644 = vclz %v6643
    %v6645 = vsub.s32 %v6644, 2
    %vm6646 = vcmp.gt.s32.totalorder 0, %v6645
    %v6647 = vsel %vm6646, 0, %v6645
    %v6648 = vsub.s32 32, %v6647
    %v6649 = vshll.u32 %v6640, %v6647
    %v6650 = vshrl.u32 %v6632, %v6648
    %v6651 = vor.u32 %v6649, %v6650
    %v6652 = vsub.s32 4294967266, %v6647
    %v6653 = vadd.s32 %v6652, 127
    %v6654 = vshll.u32 %v6653, 23
    %v6655 = vor.u32 4788187, %v6654
    %v6656 = vand.u32 2147483647, %v6655
    %v6658 = vcvt.s32.f32 %v6651
    %v6659 = vmul.f32 %v6658, %v6656
    %v6660 = vxor.u32 %v6659, 2147483648
    %v6661 = vsel %vm6578, %v6660, %v6659
    %v6662 = vsub.s32 4, %v6638
    %v6663 = vsel %vm6578, %v6662, %v6638
    %v6664 = vsel %vm6577, %v538, %v6661
    %v6665 = vsel %vm6577, 0, %v6663
    %v6666 = vcosq.f32.pop %v6664
    %v6667 = vsinq.f32.pop %v6664
    %vm6668 = vweird.f32 %v538
    %v6669 = vadd.s32 %v6665, 3
    %v6670 = vand.u32 %v6669, 3
    %vm6671 = vcmp.lt.s32.totalorder %v6670, 2
    %vm6672 = vcmp.eq.s32.totalorder %v6670, 0
    %v6673 = vxor.u32 %v6667, 2147483648
    %v6674 = vsel %vm6672, %v6666, %v6673
    %vm6675 = vcmp.eq.s32.totalorder %v6670, 2
    %v6676 = vxor.u32 %v6666, 2147483648
    %v6677 = vsel %vm6675, %v6676, %v6667
    %v6678 = vsel %vm6671, %v6674, %v6677
    %v6679 = vsel %vm6668, nan, %v6678
    %v6680 = vand.u32 2147483647, %v539
    %vm6681 = vcmp.le.f32.partialorder %v6680, 0.7853982
    %vm6682 = vcmp.lt.s32.totalorder %v539, 0
    %v6683 = vand.u32 %v539, 2139095040
    %v6684 = vshrl.u32 %v6683, 23
    %v6685 = vsub.s32 %v6684, 127
    %v6686 = vand.u32 2147483647, %v539
    %v6687 = vand.u32 %v6686, 8388607
    %v6688 = vor.u32 %v6687, 8388608
    %v6689 = vsub.s32 0, %v6688
    %v6690 = vadd.s32 %v6685, 1
    %vm6691 = vcmp.gt.s32.totalorder %v6690, 0
    %v6692 = vsel %vm6691, %v6690, 0
    %v6693 = vshrl.u32 %v6692, 5
    %v6694 = vand.u32 %v6692, 31
    %v6695 = vsub.s32 32, %v6694
    %v6696 = vshrl.u32 683565275, %v6695
    %v6697 = vshll.u32 683565275, %v6694
    %v6698 = vshrl.u32 2475754826, %v6695
    %v6699 = vor.u32 %v6697, %v6698
    %v6700 = vshll.u32 2475754826, %v6694
    %v6701 = vshrl.u32 2131351028, %v6695
    %v6702 = vor.u32 %v6700, %v6701
    %v6703 = vshll.u32 2131351028, %v6694
    %v6704 = vshrl.u32 2102212464, %v6695
    %v6705 = vor.u32 %v6703, %v6704
    %v6706 = vshll.u32 2102212464, %v6694
    %v6707 = vshrl.u32 920167782, %v6695
    %v6708 = vor.u32 %v6706, %v6707
    %v6709 = vshll.u32 920167782, %v6694
    %v6710 = vshrl.u32 1326507024, %v6695
    %v6711 = vor.u32 %v6709, %v6710
    %vm6712 = vcmp.lt.s32.totalorder %v6693, 1
    %vm6713 = vcmp.lt.s32.totalorder %v6693, 2
    %vm6714 = vcmp.lt.s32.totalorder %v6693, 3
    %vm6715 = vcmp.lt.s32.totalorder %v6693, 4
    %v6716 = vsel %vm6712, %v6696, %v6699
    %v6717 = vsel %vm6715, %v6705, 2102212464
    %v6718 = vsel %vm6714, %v6702, %v6717
    %v6719 = vsel %vm6713, %v6716, %v6718
    %v6720 = vsel %vm6712, %v6699, %v6702
    %v6721 = vsel %vm6715, %v6708, 920167782
    %v6722 = vsel %vm6714, %v6705, %v6721
    %v6723 = vsel %vm6713, %v6720, %v6722
    %v6724 = vsel %vm6712, %v6702, %v6705
    %v6725 = vsel %vm6715, %v6711, 1326507024
    %v6726 = vsel %vm6714, %v6708, %v6725
    %v6727 = vsel %vm6713, %v6724, %v6726
    %v6728 = vshll.u32 %v6688, 8
    %v6729 = vmul.u32.u64.compose %v6728, %v6727
    %v6730 = vextract.low.u32 %v6729
    %v6731 = vextract.high.u32 %v6729
    %v6732 = vmul.u32.u64.compose %v6728, %v6723
    %v6733 = vextract.low.u32 %v6732
    %v6734 = vextract.high.u32 %v6732
    %v6735 = vmul.u32 %v6728, %v6719
    %v6736 = vadd.s32 %v6731, %v6733
    %vm6737 = vc.u32 %v6731, %v6733
    %v6738 = vadd.s32 %v6734, 1
    %v6739 = vsel %vm6737, %v6738, %v6734
    %v6740 = vadd.s32 %v6735, %v6739
    %v6741 = vadd.s32 %v6740, 536870912
    %v6742 = vshrl.u32 %v6741, 30
    %v6743 = vshll.u32 %v6742, 30
    %v6744 = vsub.s32 %v6740, %v6743
    %vm6745 = vcmp.lt.s32.totalorder %v6744, 0
    %v6746 = vsub.s32 0, %v6744
    %v6747 = vsel %vm6745, %v6746, %v6744
    %v6748 = vclz %v6747
    %v6749 = vsub.s32 %v6748, 2
    %vm6750 = vcmp.gt.s32.totalorder 0, %v6749
    %v6751 = vsel %vm6750, 0, %v6749
    %v6752 = vsub.s32 32, %v6751
    %v6753 = vshll.u32 %v6744, %v6751
    %v6754 = vshrl.u32 %v6736, %v6752
    %v6755 = vor.u32 %v6753, %v6754
    %v6756 = vsub.s32 4294967266, %v6751
    %v6757 = vadd.s32 %v6756, 127
    %v6758 = vshll.u32 %v6757, 23
    %v6759 = vor.u32 4788187, %v6758
    %v6760 = vand.u32 2147483647, %v6759
    %v6762 = vcvt.s32.f32 %v6755
    %v6763 = vmul.f32 %v6762, %v6760
    %v6764 = vxor.u32 %v6763, 2147483648
    %v6765 = vsel %vm6682, %v6764, %v6763
    %v6766 = vsub.s32 4, %v6742
    %v6767 = vsel %vm6682, %v6766, %v6742
    %v6768 = vsel %vm6681, %v539, %v6765
    %v6769 = vsel %vm6681, 0, %v6767
    %v6770 = vcosq.f32.pop %v6768
    %v6771 = vsinq.f32.pop %v6768
    %vm6772 = vweird.f32 %v539
    %v6773 = vadd.s32 %v6769, 3
    %v6774 = vand.u32 %v6773, 3
    %vm6775 = vcmp.lt.s32.totalorder %v6774, 2
    %vm6776 = vcmp.eq.s32.totalorder %v6774, 0
    %v6777 = vxor.u32 %v6771, 2147483648
    %v6778 = vsel %vm6776, %v6770, %v6777
    %vm6779 = vcmp.eq.s32.totalorder %v6774, 2
    %v6780 = vxor.u32 %v6770, 2147483648
    %v6781 = vsel %vm6779, %v6780, %v6771
    %v6782 = vsel %vm6775, %v6778, %v6781
    %v6783 = vsel %vm6772, nan, %v6782
    %v6784 = vand.u32 2147483647, %v540
    %vm6785 = vcmp.le.f32.partialorder %v6784, 0.7853982
    %vm6786 = vcmp.lt.s32.totalorder %v540, 0
    %v6787 = vand.u32 %v540, 2139095040
    %v6788 = vshrl.u32 %v6787, 23
    %v6789 = vsub.s32 %v6788, 127
    %v6790 = vand.u32 2147483647, %v540
    %v6791 = vand.u32 %v6790, 8388607
    %v6792 = vor.u32 %v6791, 8388608
    %v6793 = vsub.s32 0, %v6792
    %v6794 = vadd.s32 %v6789, 1
    %vm6795 = vcmp.gt.s32.totalorder %v6794, 0
    %v6796 = vsel %vm6795, %v6794, 0
    %v6797 = vshrl.u32 %v6796, 5
    %v6798 = vand.u32 %v6796, 31
    %v6799 = vsub.s32 32, %v6798
    %v6800 = vshrl.u32 683565275, %v6799
    %v6801 = vshll.u32 683565275, %v6798
    %v6802 = vshrl.u32 2475754826, %v6799
    %v6803 = vor.u32 %v6801, %v6802
    %v6804 = vshll.u32 2475754826, %v6798
    %v6805 = vshrl.u32 2131351028, %v6799
    %v6806 = vor.u32 %v6804, %v6805
    %v6807 = vshll.u32 2131351028, %v6798
    %v6808 = vshrl.u32 2102212464, %v6799
    %v6809 = vor.u32 %v6807, %v6808
    %v6810 = vshll.u32 2102212464, %v6798
    %v6811 = vshrl.u32 920167782, %v6799
    %v6812 = vor.u32 %v6810, %v6811
    %v6813 = vshll.u32 920167782, %v6798
    %v6814 = vshrl.u32 1326507024, %v6799
    %v6815 = vor.u32 %v6813, %v6814
    %vm6816 = vcmp.lt.s32.totalorder %v6797, 1
    %vm6817 = vcmp.lt.s32.totalorder %v6797, 2
    %vm6818 = vcmp.lt.s32.totalorder %v6797, 3
    %vm6819 = vcmp.lt.s32.totalorder %v6797, 4
    %v6820 = vsel %vm6816, %v6800, %v6803
    %v6821 = vsel %vm6819, %v6809, 2102212464
    %v6822 = vsel %vm6818, %v6806, %v6821
    %v6823 = vsel %vm6817, %v6820, %v6822
    %v6824 = vsel %vm6816, %v6803, %v6806
    %v6825 = vsel %vm6819, %v6812, 920167782
    %v6826 = vsel %vm6818, %v6809, %v6825
    %v6827 = vsel %vm6817, %v6824, %v6826
    %v6828 = vsel %vm6816, %v6806, %v6809
    %v6829 = vsel %vm6819, %v6815, 1326507024
    %v6830 = vsel %vm6818, %v6812, %v6829
    %v6831 = vsel %vm6817, %v6828, %v6830
    %v6832 = vshll.u32 %v6792, 8
    %v6833 = vmul.u32.u64.compose %v6832, %v6831
    %v6834 = vextract.low.u32 %v6833
    %v6835 = vextract.high.u32 %v6833
    %v6836 = vmul.u32.u64.compose %v6832, %v6827
    %v6837 = vextract.low.u32 %v6836
    %v6838 = vextract.high.u32 %v6836
    %v6839 = vmul.u32 %v6832, %v6823
    %v6840 = vadd.s32 %v6835, %v6837
    %vm6841 = vc.u32 %v6835, %v6837
    %v6842 = vadd.s32 %v6838, 1
    %v6843 = vsel %vm6841, %v6842, %v6838
    %v6844 = vadd.s32 %v6839, %v6843
    %v6845 = vadd.s32 %v6844, 536870912
    %v6846 = vshrl.u32 %v6845, 30
    %v6847 = vshll.u32 %v6846, 30
    %v6848 = vsub.s32 %v6844, %v6847
    %vm6849 = vcmp.lt.s32.totalorder %v6848, 0
    %v6850 = vsub.s32 0, %v6848
    %v6851 = vsel %vm6849, %v6850, %v6848
    %v6852 = vclz %v6851
    %v6853 = vsub.s32 %v6852, 2
    %vm6854 = vcmp.gt.s32.totalorder 0, %v6853
    %v6855 = vsel %vm6854, 0, %v6853
    %v6856 = vsub.s32 32, %v6855
    %v6857 = vshll.u32 %v6848, %v6855
    %v6858 = vshrl.u32 %v6840, %v6856
    %v6859 = vor.u32 %v6857, %v6858
    %v6860 = vsub.s32 4294967266, %v6855
    %v6861 = vadd.s32 %v6860, 127
    %v6862 = vshll.u32 %v6861, 23
    %v6863 = vor.u32 4788187, %v6862
    %v6864 = vand.u32 2147483647, %v6863
    %v6866 = vcvt.s32.f32 %v6859
    %v6867 = vmul.f32 %v6866, %v6864
    %v6868 = vxor.u32 %v6867, 2147483648
    %v6869 = vsel %vm6786, %v6868, %v6867
    %v6870 = vsub.s32 4, %v6846
    %v6871 = vsel %vm6786, %v6870, %v6846
    %v6872 = vsel %vm6785, %v540, %v6869
    %v6873 = vsel %vm6785, 0, %v6871
    %v6874 = vcosq.f32.pop %v6872
    %v6875 = vsinq.f32.pop %v6872
    %vm6876 = vweird.f32 %v540
    %v6877 = vadd.s32 %v6873, 3
    %v6878 = vand.u32 %v6877, 3
    %vm6879 = vcmp.lt.s32.totalorder %v6878, 2
    %vm6880 = vcmp.eq.s32.totalorder %v6878, 0
    %v6881 = vxor.u32 %v6875, 2147483648
    %v6882 = vsel %vm6880, %v6874, %v6881
    %vm6883 = vcmp.eq.s32.totalorder %v6878, 2
    %v6884 = vxor.u32 %v6874, 2147483648
    %v6885 = vsel %vm6883, %v6884, %v6875
    %v6886 = vsel %vm6879, %v6882, %v6885
    %v6887 = vsel %vm6876, nan, %v6886
    %v6888 = vand.u32 2147483647, %v541
    %vm6889 = vcmp.le.f32.partialorder %v6888, 0.7853982
    %vm6890 = vcmp.lt.s32.totalorder %v541, 0
    %v6891 = vand.u32 %v541, 2139095040
    %v6892 = vshrl.u32 %v6891, 23
    %v6893 = vsub.s32 %v6892, 127
    %v6894 = vand.u32 2147483647, %v541
    %v6895 = vand.u32 %v6894, 8388607
    %v6896 = vor.u32 %v6895, 8388608
    %v6897 = vsub.s32 0, %v6896
    %v6898 = vadd.s32 %v6893, 1
    %vm6899 = vcmp.gt.s32.totalorder %v6898, 0
    %v6900 = vsel %vm6899, %v6898, 0
    %v6901 = vshrl.u32 %v6900, 5
    %v6902 = vand.u32 %v6900, 31
    %v6903 = vsub.s32 32, %v6902
    %v6904 = vshrl.u32 683565275, %v6903
    %v6905 = vshll.u32 683565275, %v6902
    %v6906 = vshrl.u32 2475754826, %v6903
    %v6907 = vor.u32 %v6905, %v6906
    %v6908 = vshll.u32 2475754826, %v6902
    %v6909 = vshrl.u32 2131351028, %v6903
    %v6910 = vor.u32 %v6908, %v6909
    %v6911 = vshll.u32 2131351028, %v6902
    %v6912 = vshrl.u32 2102212464, %v6903
    %v6913 = vor.u32 %v6911, %v6912
    %v6914 = vshll.u32 2102212464, %v6902
    %v6915 = vshrl.u32 920167782, %v6903
    %v6916 = vor.u32 %v6914, %v6915
    %v6917 = vshll.u32 920167782, %v6902
    %v6918 = vshrl.u32 1326507024, %v6903
    %v6919 = vor.u32 %v6917, %v6918
    %vm6920 = vcmp.lt.s32.totalorder %v6901, 1
    %vm6921 = vcmp.lt.s32.totalorder %v6901, 2
    %vm6922 = vcmp.lt.s32.totalorder %v6901, 3
    %vm6923 = vcmp.lt.s32.totalorder %v6901, 4
    %v6924 = vsel %vm6920, %v6904, %v6907
    %v6925 = vsel %vm6923, %v6913, 2102212464
    %v6926 = vsel %vm6922, %v6910, %v6925
    %v6927 = vsel %vm6921, %v6924, %v6926
    %v6928 = vsel %vm6920, %v6907, %v6910
    %v6929 = vsel %vm6923, %v6916, 920167782
    %v6930 = vsel %vm6922, %v6913, %v6929
    %v6931 = vsel %vm6921, %v6928, %v6930
    %v6932 = vsel %vm6920, %v6910, %v6913
    %v6933 = vsel %vm6923, %v6919, 1326507024
    %v6934 = vsel %vm6922, %v6916, %v6933
    %v6935 = vsel %vm6921, %v6932, %v6934
    %v6936 = vshll.u32 %v6896, 8
    %v6937 = vmul.u32.u64.compose %v6936, %v6935
    %v6938 = vextract.low.u32 %v6937
    %v6939 = vextract.high.u32 %v6937
    %v6940 = vmul.u32.u64.compose %v6936, %v6931
    %v6941 = vextract.low.u32 %v6940
    %v6942 = vextract.high.u32 %v6940
    %v6943 = vmul.u32 %v6936, %v6927
    %v6944 = vadd.s32 %v6939, %v6941
    %vm6945 = vc.u32 %v6939, %v6941
    %v6946 = vadd.s32 %v6942, 1
    %v6947 = vsel %vm6945, %v6946, %v6942
    %v6948 = vadd.s32 %v6943, %v6947
    %v6949 = vadd.s32 %v6948, 536870912
    %v6950 = vshrl.u32 %v6949, 30
    %v6951 = vshll.u32 %v6950, 30
    %v6952 = vsub.s32 %v6948, %v6951
    %vm6953 = vcmp.lt.s32.totalorder %v6952, 0
    %v6954 = vsub.s32 0, %v6952
    %v6955 = vsel %vm6953, %v6954, %v6952
    %v6956 = vclz %v6955
    %v6957 = vsub.s32 %v6956, 2
    %vm6958 = vcmp.gt.s32.totalorder 0, %v6957
    %v6959 = vsel %vm6958, 0, %v6957
    %v6960 = vsub.s32 32, %v6959
    %v6961 = vshll.u32 %v6952, %v6959
    %v6962 = vshrl.u32 %v6944, %v6960
    %v6963 = vor.u32 %v6961, %v6962
    %v6964 = vsub.s32 4294967266, %v6959
    %v6965 = vadd.s32 %v6964, 127
    %v6966 = vshll.u32 %v6965, 23
    %v6967 = vor.u32 4788187, %v6966
    %v6968 = vand.u32 2147483647, %v6967
    %v6970 = vcvt.s32.f32 %v6963
    %v6971 = vmul.f32 %v6970, %v6968
    %v6972 = vxor.u32 %v6971, 2147483648
    %v6973 = vsel %vm6890, %v6972, %v6971
    %v6974 = vsub.s32 4, %v6950
    %v6975 = vsel %vm6890, %v6974, %v6950
    %v6976 = vsel %vm6889, %v541, %v6973
    %v6977 = vsel %vm6889, 0, %v6975
    %v6978 = vcosq.f32.pop %v6976
    %v6979 = vsinq.f32.pop %v6976
    %vm6980 = vweird.f32 %v541
    %v6981 = vadd.s32 %v6977, 3
    %v6982 = vand.u32 %v6981, 3
    %vm6983 = vcmp.lt.s32.totalorder %v6982, 2
    %vm6984 = vcmp.eq.s32.totalorder %v6982, 0
    %v6985 = vxor.u32 %v6979, 2147483648
    %v6986 = vsel %vm6984, %v6978, %v6985
    %vm6987 = vcmp.eq.s32.totalorder %v6982, 2
    %v6988 = vxor.u32 %v6978, 2147483648
    %v6989 = vsel %vm6987, %v6988, %v6979
    %v6990 = vsel %vm6983, %v6986, %v6989
    %v6991 = vsel %vm6980, nan, %v6990
    %v6992 = vand.u32 2147483647, %v542
    %vm6993 = vcmp.le.f32.partialorder %v6992, 0.7853982
    %vm6994 = vcmp.lt.s32.totalorder %v542, 0
    %v6995 = vand.u32 %v542, 2139095040
    %v6996 = vshrl.u32 %v6995, 23
    %v6997 = vsub.s32 %v6996, 127
    %v6998 = vand.u32 2147483647, %v542
    %v6999 = vand.u32 %v6998, 8388607
    %v7000 = vor.u32 %v6999, 8388608
    %v7001 = vsub.s32 0, %v7000
    %v7002 = vadd.s32 %v6997, 1
    %vm7003 = vcmp.gt.s32.totalorder %v7002, 0
    %v7004 = vsel %vm7003, %v7002, 0
    %v7005 = vshrl.u32 %v7004, 5
    %v7006 = vand.u32 %v7004, 31
    %v7007 = vsub.s32 32, %v7006
    %v7008 = vshrl.u32 683565275, %v7007
    %v7009 = vshll.u32 683565275, %v7006
    %v7010 = vshrl.u32 2475754826, %v7007
    %v7011 = vor.u32 %v7009, %v7010
    %v7012 = vshll.u32 2475754826, %v7006
    %v7013 = vshrl.u32 2131351028, %v7007
    %v7014 = vor.u32 %v7012, %v7013
    %v7015 = vshll.u32 2131351028, %v7006
    %v7016 = vshrl.u32 2102212464, %v7007
    %v7017 = vor.u32 %v7015, %v7016
    %v7018 = vshll.u32 2102212464, %v7006
    %v7019 = vshrl.u32 920167782, %v7007
    %v7020 = vor.u32 %v7018, %v7019
    %v7021 = vshll.u32 920167782, %v7006
    %v7022 = vshrl.u32 1326507024, %v7007
    %v7023 = vor.u32 %v7021, %v7022
    %vm7024 = vcmp.lt.s32.totalorder %v7005, 1
    %vm7025 = vcmp.lt.s32.totalorder %v7005, 2
    %vm7026 = vcmp.lt.s32.totalorder %v7005, 3
    %vm7027 = vcmp.lt.s32.totalorder %v7005, 4
    %v7028 = vsel %vm7024, %v7008, %v7011
    %v7029 = vsel %vm7027, %v7017, 2102212464
    %v7030 = vsel %vm7026, %v7014, %v7029
    %v7031 = vsel %vm7025, %v7028, %v7030
    %v7032 = vsel %vm7024, %v7011, %v7014
    %v7033 = vsel %vm7027, %v7020, 920167782
    %v7034 = vsel %vm7026, %v7017, %v7033
    %v7035 = vsel %vm7025, %v7032, %v7034
    %v7036 = vsel %vm7024, %v7014, %v7017
    %v7037 = vsel %vm7027, %v7023, 1326507024
    %v7038 = vsel %vm7026, %v7020, %v7037
    %v7039 = vsel %vm7025, %v7036, %v7038
    %v7040 = vshll.u32 %v7000, 8
    %v7041 = vmul.u32.u64.compose %v7040, %v7039
    %v7042 = vextract.low.u32 %v7041
    %v7043 = vextract.high.u32 %v7041
    %v7044 = vmul.u32.u64.compose %v7040, %v7035
    %v7045 = vextract.low.u32 %v7044
    %v7046 = vextract.high.u32 %v7044
    %v7047 = vmul.u32 %v7040, %v7031
    %v7048 = vadd.s32 %v7043, %v7045
    %vm7049 = vc.u32 %v7043, %v7045
    %v7050 = vadd.s32 %v7046, 1
    %v7051 = vsel %vm7049, %v7050, %v7046
    %v7052 = vadd.s32 %v7047, %v7051
    %v7053 = vadd.s32 %v7052, 536870912
    %v7054 = vshrl.u32 %v7053, 30
    %v7055 = vshll.u32 %v7054, 30
    %v7056 = vsub.s32 %v7052, %v7055
    %vm7057 = vcmp.lt.s32.totalorder %v7056, 0
    %v7058 = vsub.s32 0, %v7056
    %v7059 = vsel %vm7057, %v7058, %v7056
    %v7060 = vclz %v7059
    %v7061 = vsub.s32 %v7060, 2
    %vm7062 = vcmp.gt.s32.totalorder 0, %v7061
    %v7063 = vsel %vm7062, 0, %v7061
    %v7064 = vsub.s32 32, %v7063
    %v7065 = vshll.u32 %v7056, %v7063
    %v7066 = vshrl.u32 %v7048, %v7064
    %v7067 = vor.u32 %v7065, %v7066
    %v7068 = vsub.s32 4294967266, %v7063
    %v7069 = vadd.s32 %v7068, 127
    %v7070 = vshll.u32 %v7069, 23
    %v7071 = vor.u32 4788187, %v7070
    %v7072 = vand.u32 2147483647, %v7071
    %v7074 = vcvt.s32.f32 %v7067
    %v7075 = vmul.f32 %v7074, %v7072
    %v7076 = vxor.u32 %v7075, 2147483648
    %v7077 = vsel %vm6994, %v7076, %v7075
    %v7078 = vsub.s32 4, %v7054
    %v7079 = vsel %vm6994, %v7078, %v7054
    %v7080 = vsel %vm6993, %v542, %v7077
    %v7081 = vsel %vm6993, 0, %v7079
    %v7082 = vcosq.f32.pop %v7080
    %v7083 = vsinq.f32.pop %v7080
    %vm7084 = vweird.f32 %v542
    %v7085 = vadd.s32 %v7081, 3
    %v7086 = vand.u32 %v7085, 3
    %vm7087 = vcmp.lt.s32.totalorder %v7086, 2
    %vm7088 = vcmp.eq.s32.totalorder %v7086, 0
    %v7089 = vxor.u32 %v7083, 2147483648
    %v7090 = vsel %vm7088, %v7082, %v7089
    %vm7091 = vcmp.eq.s32.totalorder %v7086, 2
    %v7092 = vxor.u32 %v7082, 2147483648
    %v7093 = vsel %vm7091, %v7092, %v7083
    %v7094 = vsel %vm7087, %v7090, %v7093
    %v7095 = vsel %vm7084, nan, %v7094
    %v7096 = vand.u32 2147483647, %v543
    %vm7097 = vcmp.le.f32.partialorder %v7096, 0.7853982
    %vm7098 = vcmp.lt.s32.totalorder %v543, 0
    %v7099 = vand.u32 %v543, 2139095040
    %v7100 = vshrl.u32 %v7099, 23
    %v7101 = vsub.s32 %v7100, 127
    %v7102 = vand.u32 2147483647, %v543
    %v7103 = vand.u32 %v7102, 8388607
    %v7104 = vor.u32 %v7103, 8388608
    %v7105 = vsub.s32 0, %v7104
    %v7106 = vadd.s32 %v7101, 1
    %vm7107 = vcmp.gt.s32.totalorder %v7106, 0
    %v7108 = vsel %vm7107, %v7106, 0
    %v7109 = vshrl.u32 %v7108, 5
    %v7110 = vand.u32 %v7108, 31
    %v7111 = vsub.s32 32, %v7110
    %v7112 = vshrl.u32 683565275, %v7111
    %v7113 = vshll.u32 683565275, %v7110
    %v7114 = vshrl.u32 2475754826, %v7111
    %v7115 = vor.u32 %v7113, %v7114
    %v7116 = vshll.u32 2475754826, %v7110
    %v7117 = vshrl.u32 2131351028, %v7111
    %v7118 = vor.u32 %v7116, %v7117
    %v7119 = vshll.u32 2131351028, %v7110
    %v7120 = vshrl.u32 2102212464, %v7111
    %v7121 = vor.u32 %v7119, %v7120
    %v7122 = vshll.u32 2102212464, %v7110
    %v7123 = vshrl.u32 920167782, %v7111
    %v7124 = vor.u32 %v7122, %v7123
    %v7125 = vshll.u32 920167782, %v7110
    %v7126 = vshrl.u32 1326507024, %v7111
    %v7127 = vor.u32 %v7125, %v7126
    %vm7128 = vcmp.lt.s32.totalorder %v7109, 1
    %vm7129 = vcmp.lt.s32.totalorder %v7109, 2
    %vm7130 = vcmp.lt.s32.totalorder %v7109, 3
    %vm7131 = vcmp.lt.s32.totalorder %v7109, 4
    %v7132 = vsel %vm7128, %v7112, %v7115
    %v7133 = vsel %vm7131, %v7121, 2102212464
    %v7134 = vsel %vm7130, %v7118, %v7133
    %v7135 = vsel %vm7129, %v7132, %v7134
    %v7136 = vsel %vm7128, %v7115, %v7118
    %v7137 = vsel %vm7131, %v7124, 920167782
    %v7138 = vsel %vm7130, %v7121, %v7137
    %v7139 = vsel %vm7129, %v7136, %v7138
    %v7140 = vsel %vm7128, %v7118, %v7121
    %v7141 = vsel %vm7131, %v7127, 1326507024
    %v7142 = vsel %vm7130, %v7124, %v7141
    %v7143 = vsel %vm7129, %v7140, %v7142
    %v7144 = vshll.u32 %v7104, 8
    %v7145 = vmul.u32.u64.compose %v7144, %v7143
    %v7146 = vextract.low.u32 %v7145
    %v7147 = vextract.high.u32 %v7145
    %v7148 = vmul.u32.u64.compose %v7144, %v7139
    %v7149 = vextract.low.u32 %v7148
    %v7150 = vextract.high.u32 %v7148
    %v7151 = vmul.u32 %v7144, %v7135
    %v7152 = vadd.s32 %v7147, %v7149
    %vm7153 = vc.u32 %v7147, %v7149
    %v7154 = vadd.s32 %v7150, 1
    %v7155 = vsel %vm7153, %v7154, %v7150
    %v7156 = vadd.s32 %v7151, %v7155
    %v7157 = vadd.s32 %v7156, 536870912
    %v7158 = vshrl.u32 %v7157, 30
    %v7159 = vshll.u32 %v7158, 30
    %v7160 = vsub.s32 %v7156, %v7159
    %vm7161 = vcmp.lt.s32.totalorder %v7160, 0
    %v7162 = vsub.s32 0, %v7160
    %v7163 = vsel %vm7161, %v7162, %v7160
    %v7164 = vclz %v7163
    %v7165 = vsub.s32 %v7164, 2
    %vm7166 = vcmp.gt.s32.totalorder 0, %v7165
    %v7167 = vsel %vm7166, 0, %v7165
    %v7168 = vsub.s32 32, %v7167
    %v7169 = vshll.u32 %v7160, %v7167
    %v7170 = vshrl.u32 %v7152, %v7168
    %v7171 = vor.u32 %v7169, %v7170
    %v7172 = vsub.s32 4294967266, %v7167
    %v7173 = vadd.s32 %v7172, 127
    %v7174 = vshll.u32 %v7173, 23
    %v7175 = vor.u32 4788187, %v7174
    %v7176 = vand.u32 2147483647, %v7175
    %v7178 = vcvt.s32.f32 %v7171
    %v7179 = vmul.f32 %v7178, %v7176
    %v7180 = vxor.u32 %v7179, 2147483648
    %v7181 = vsel %vm7098, %v7180, %v7179
    %v7182 = vsub.s32 4, %v7158
    %v7183 = vsel %vm7098, %v7182, %v7158
    %v7184 = vsel %vm7097, %v543, %v7181
    %v7185 = vsel %vm7097, 0, %v7183
    %v7186 = vcosq.f32.pop %v7184
    %v7187 = vsinq.f32.pop %v7184
    %vm7188 = vweird.f32 %v543
    %v7189 = vadd.s32 %v7185, 3
    %v7190 = vand.u32 %v7189, 3
    %vm7191 = vcmp.lt.s32.totalorder %v7190, 2
    %vm7192 = vcmp.eq.s32.totalorder %v7190, 0
    %v7193 = vxor.u32 %v7187, 2147483648
    %v7194 = vsel %vm7192, %v7186, %v7193
    %vm7195 = vcmp.eq.s32.totalorder %v7190, 2
    %v7196 = vxor.u32 %v7186, 2147483648
    %v7197 = vsel %vm7195, %v7196, %v7187
    %v7198 = vsel %vm7191, %v7194, %v7197
    %v7199 = vsel %vm7188, nan, %v7198
    %v7200 = vld [vmem:[%s3] sm:$0x1]
    %vm7201 = vcmp.ne.f32.partialorder %v7200, 0.0
    %v7202 = vsel %vm7201, 1, 0
    %v7203 = vlaneseq
    %v7204 = vshrl.u32 %v7203, 7
    %v7205 = vsub.s32 0, %v7204
    %v7206 = vrot.slane %v7202, %v7205
    %vm7207 = vcmp.eq.s32.totalorder %v7206, 1
    %v7208 = vsel %vm7207, %v647, %v480
    %v7209 = vsel %vm7207, %v751, %v481
    %v7210 = vsel %vm7207, %v855, %v482
    %v7211 = vsel %vm7207, %v959, %v483
    %v7212 = vsel %vm7207, %v1063, %v484
    %v7213 = vsel %vm7207, %v1167, %v485
    %v7214 = vsel %vm7207, %v1271, %v486
    %v7215 = vsel %vm7207, %v1375, %v487
    %v7216 = vsel %vm7207, %v1479, %v488
    %v7217 = vsel %vm7207, %v1583, %v489
    %v7218 = vsel %vm7207, %v1687, %v490
    %v7219 = vsel %vm7207, %v1791, %v491
    %v7220 = vsel %vm7207, %v1895, %v492
    %v7221 = vsel %vm7207, %v1999, %v493
    %v7222 = vsel %vm7207, %v2103, %v494
    %v7223 = vsel %vm7207, %v2207, %v495
    %v7224 = vsel %vm7207, %v2311, %v496
    %v7225 = vsel %vm7207, %v2415, %v497
    %v7226 = vsel %vm7207, %v2519, %v498
    %v7227 = vsel %vm7207, %v2623, %v499
    %v7228 = vsel %vm7207, %v2727, %v500
    %v7229 = vsel %vm7207, %v2831, %v501
    %v7230 = vsel %vm7207, %v2935, %v502
    %v7231 = vsel %vm7207, %v3039, %v503
    %v7232 = vsel %vm7207, %v3143, %v504
    %v7233 = vsel %vm7207, %v3247, %v505
    %v7234 = vsel %vm7207, %v3351, %v506
    %v7235 = vsel %vm7207, %v3455, %v507
    %v7236 = vsel %vm7207, %v3559, %v508
    %v7237 = vsel %vm7207, %v3663, %v509
    %v7238 = vsel %vm7207, %v3767, %v510
    %v7239 = vsel %vm7207, %v3871, %v511
    %v7240 = vsel %vm7207, %v3975, %v512
    %v7241 = vsel %vm7207, %v4079, %v513
    %v7242 = vsel %vm7207, %v4183, %v514
    %v7243 = vsel %vm7207, %v4287, %v515
    %v7244 = vsel %vm7207, %v4391, %v516
    %v7245 = vsel %vm7207, %v4495, %v517
    %v7246 = vsel %vm7207, %v4599, %v518
    %v7247 = vsel %vm7207, %v4703, %v519
    %v7248 = vsel %vm7207, %v4807, %v520
    %v7249 = vsel %vm7207, %v4911, %v521
    %v7250 = vsel %vm7207, %v5015, %v522
    %v7251 = vsel %vm7207, %v5119, %v523
    %v7252 = vsel %vm7207, %v5223, %v524
    %v7253 = vsel %vm7207, %v5327, %v525
    %v7254 = vsel %vm7207, %v5431, %v526
    %v7255 = vsel %vm7207, %v5535, %v527
    %v7256 = vsel %vm7207, %v5639, %v528
    %v7257 = vsel %vm7207, %v5743, %v529
    %v7258 = vsel %vm7207, %v5847, %v530
    %v7259 = vsel %vm7207, %v5951, %v531
    %v7260 = vsel %vm7207, %v6055, %v532
    %v7261 = vsel %vm7207, %v6159, %v533
    %v7262 = vsel %vm7207, %v6263, %v534
    %v7263 = vsel %vm7207, %v6367, %v535
    %v7264 = vsel %vm7207, %v6471, %v536
    %v7265 = vsel %vm7207, %v6575, %v537
    %v7266 = vsel %vm7207, %v6679, %v538
    %v7267 = vsel %vm7207, %v6783, %v539
    %v7268 = vsel %vm7207, %v6887, %v540
    %v7269 = vsel %vm7207, %v6991, %v541
    %v7270 = vsel %vm7207, %v7095, %v542
    %v7271 = vsel %vm7207, %v7199, %v543
    %7272 = vst [vmem:[#allocation2] sm:$0xff] %v7208
    %7273 = vst [vmem:[#allocation2 + $0x8] sm:$0xff] %v7209
    %7274 = vst [vmem:[#allocation2 + $0x10] sm:$0xff] %v7210
    %7275 = vst [vmem:[#allocation2 + $0x18] sm:$0xff] %v7211
    %7276 = vst [vmem:[#allocation2 + $0x20] sm:$0xff] %v7212
    %7277 = vst [vmem:[#allocation2 + $0x28] sm:$0xff] %v7213
    %7278 = vst [vmem:[#allocation2 + $0x30] sm:$0xff] %v7214
    %7279 = vst [vmem:[#allocation2 + $0x38] sm:$0xff] %v7215
    %7280 = vst [vmem:[#allocation2 + $0x40] sm:$0xff] %v7216
    %7281 = vst [vmem:[#allocation2 + $0x48] sm:$0xff] %v7217
    %7282 = vst [vmem:[#allocation2 + $0x50] sm:$0xff] %v7218
    %7283 = vst [vmem:[#allocation2 + $0x58] sm:$0xff] %v7219
    %7284 = vst [vmem:[#allocation2 + $0x60] sm:$0xff] %v7220
    %7285 = vst [vmem:[#allocation2 + $0x68] sm:$0xff] %v7221
    %7286 = vst [vmem:[#allocation2 + $0x70] sm:$0xff] %v7222
    %7287 = vst [vmem:[#allocation2 + $0x78] sm:$0xff] %v7223
    %7288 = vst [vmem:[#allocation2 + $0x80] sm:$0xff] %v7224
    %7289 = vst [vmem:[#allocation2 + $0x88] sm:$0xff] %v7225
    %7290 = vst [vmem:[#allocation2 + $0x90] sm:$0xff] %v7226
    %7291 = vst [vmem:[#allocation2 + $0x98] sm:$0xff] %v7227
    %7292 = vst [vmem:[#allocation2 + $0xa0] sm:$0xff] %v7228
    %7293 = vst [vmem:[#allocation2 + $0xa8] sm:$0xff] %v7229
    %7294 = vst [vmem:[#allocation2 + $0xb0] sm:$0xff] %v7230
    %7295 = vst [vmem:[#allocation2 + $0xb8] sm:$0xff] %v7231
    %7296 = vst [vmem:[#allocation2 + $0xc0] sm:$0xff] %v7232
    %7297 = vst [vmem:[#allocation2 + $0xc8] sm:$0xff] %v7233
    %7298 = vst [vmem:[#allocation2 + $0xd0] sm:$0xff] %v7234
    %7299 = vst [vmem:[#allocation2 + $0xd8] sm:$0xff] %v7235
    %7300 = vst [vmem:[#allocation2 + $0xe0] sm:$0xff] %v7236
    %7301 = vst [vmem:[#allocation2 + $0xe8] sm:$0xff] %v7237
    %7302 = vst [vmem:[#allocation2 + $0xf0] sm:$0xff] %v7238
    %7303 = vst [vmem:[#allocation2 + $0xf8] sm:$0xff] %v7239
    %7304 = vst [vmem:[#allocation2 + $0x100] sm:$0xff] %v7240
    %7305 = vst [vmem:[#allocation2 + $0x108] sm:$0xff] %v7241
    %7306 = vst [vmem:[#allocation2 + $0x110] sm:$0xff] %v7242
    %7307 = vst [vmem:[#allocation2 + $0x118] sm:$0xff] %v7243
    %7308 = vst [vmem:[#allocation2 + $0x120] sm:$0xff] %v7244
    %7309 = vst [vmem:[#allocation2 + $0x128] sm:$0xff] %v7245
    %7310 = vst [vmem:[#allocation2 + $0x130] sm:$0xff] %v7246
    %7311 = vst [vmem:[#allocation2 + $0x138] sm:$0xff] %v7247
    %7312 = vst [vmem:[#allocation2 + $0x140] sm:$0xff] %v7248
    %7313 = vst [vmem:[#allocation2 + $0x148] sm:$0xff] %v7249
    %7314 = vst [vmem:[#allocation2 + $0x150] sm:$0xff] %v7250
    %7315 = vst [vmem:[#allocation2 + $0x158] sm:$0xff] %v7251
    %7316 = vst [vmem:[#allocation2 + $0x160] sm:$0xff] %v7252
    %7317 = vst [vmem:[#allocation2 + $0x168] sm:$0xff] %v7253
    %7318 = vst [vmem:[#allocation2 + $0x170] sm:$0xff] %v7254
    %7319 = vst [vmem:[#allocation2 + $0x178] sm:$0xff] %v7255
    %7320 = vst [vmem:[#allocation2 + $0x180] sm:$0xff] %v7256
    %7321 = vst [vmem:[#allocation2 + $0x188] sm:$0xff] %v7257
    %7322 = vst [vmem:[#allocation2 + $0x190] sm:$0xff] %v7258
    %7323 = vst [vmem:[#allocation2 + $0x198] sm:$0xff] %v7259
    %7324 = vst [vmem:[#allocation2 + $0x1a0] sm:$0xff] %v7260
    %7325 = vst [vmem:[#allocation2 + $0x1a8] sm:$0xff] %v7261
    %7326 = vst [vmem:[#allocation2 + $0x1b0] sm:$0xff] %v7262
    %7327 = vst [vmem:[#allocation2 + $0x1b8] sm:$0xff] %v7263
    %7328 = vst [vmem:[#allocation2 + $0x1c0] sm:$0xff] %v7264
    %7329 = vst [vmem:[#allocation2 + $0x1c8] sm:$0xff] %v7265
    %7330 = vst [vmem:[#allocation2 + $0x1d0] sm:$0xff] %v7266
    %7331 = vst [vmem:[#allocation2 + $0x1d8] sm:$0xff] %v7267
    %7332 = vst [vmem:[#allocation2 + $0x1e0] sm:$0xff] %v7268
    %7333 = vst [vmem:[#allocation2 + $0x1e8] sm:$0xff] %v7269
    %7334 = vst [vmem:[#allocation2 + $0x1f0] sm:$0xff] %v7270
    %7335 = vst [vmem:[#allocation2 + $0x1f8] sm:$0xff] %v7271
    // Predicated region
    $region18: #{tpu_custom_call.1} parent=1 // pred_check
      _
    $region19: #{tpu_custom_call.1} parent=1 // pred_check_branch
      %7337 = sbr.rel (0) target = $region21
    $region20: #{tpu_custom_call.1} parent=1 // pred_region
      %s7339 = ssub.s32 8192, 8192
      %7340 = vsyncadd [#allocation3], %s7339
      %s7341 = sshll.u32 [#allocation2], 4
      %s7342 = int_to_ptr.vmem [resolvable:$true] %s7341
      %7347 = dma.vmem_to_hbm [thread:$0]  %s7342, 8192, %s4, [#allocation3], 128, 128, 8
    $region21: #{tpu_custom_call.1} parent=1 // pred_fallthru
      _
    // Predicated region
    $region22: #{tpu_custom_call.1} parent=1 // pred_check
      _
    $region23: #{tpu_custom_call.1} parent=1 // pred_check_branch
      %7349 = sbr.rel (0) target = $region25
    $region24: #{tpu_custom_call.1} parent=1 // pred_region
      %7350 = dma.done [#allocation3], 8192
    $region25: #{tpu_custom_call.1} parent=1 // pred_fallthru
      _
    %7351 = vsyncpa [#allocation3], 1

</llo_original>
